<compile_context>
chip_gen: v5e
topology: v5e:2x2
jax: 0.10.0
libtpu: 0.0.40
codegen_flags: <defaults>
</compile_context>

<pallas_src>
import functools

import jax
import jax.numpy as jnp
import numpy as np
from jax import lax
from jax.experimental import pallas as pl
from jax.experimental.pallas import tpu as pltpu


def _round_up(x, m):
    return (x + m - 1) // m * m


# ----------------------------------------------------------------------------
# Pallas kernel: fused direct convolution as a static sum of per-tap matmuls.
#
#   x_ref : (1, n_phases, P, Cin)   bf16   row-flattened (phase) planes of the
#                                          spatially padded input image
#   w_ref : (n_taps, Cin, TCO)      bf16   per-tap weight matrices
#   b_ref : (1, TCO)                f32    bias (zeros when the conv has none)
#   o_ref : (1, M, TCO)                    output rows (row-major, incl. a few
#                                          junk boundary columns stripped later)
#
# `taps` is a static tuple of (phase, row_offset, weight_index).  Each tap
# contributes  dot(plane[phase][off : off + M], w_tap)  to the f32 accumulator;
# all slices are contiguous, so the kernel is just n_taps clean MXU matmuls
# plus VPU bias / LeakyReLU.  No im2col patch matrix is ever materialized.
# ----------------------------------------------------------------------------
def _direct_conv_kernel(x_ref, w_ref, b_ref, o_ref, *, taps, m_rows,
                        negative_slope):
    tco = o_ref.shape[-1]
    acc = jnp.zeros((m_rows, tco), jnp.float32)
    for phase, off, widx in taps:
        xs = x_ref[0, phase, pl.ds(off, m_rows), :]          # (M, Cin) bf16
        acc = acc + jnp.dot(xs, w_ref[widx],                 # MXU, f32 acc
                            preferred_element_type=jnp.float32)
    acc = acc + b_ref[...]                                   # (1, TCO) bcast
    if negative_slope is not None:                           # LeakyReLU on VPU
        acc = jnp.where(acc >= 0.0, acc, jnp.float32(negative_slope) * acc)
    o_ref[0] = acc.astype(o_ref.dtype)


def _pick_tco(coutp, cin, n_taps):
    """Largest Cout tile (multiple of 128) keeping the weight block <= 8 MiB."""
    for t in (512, 256, 128):
        if coutp % t == 0 and n_taps * cin * t * 2 <= 8 * 1024 * 1024:
            return t
    return 128


def _direct_conv(planes, w_taps, bias2d, *, taps, m_rows, negative_slope,
                 out_dtype):
    n_img, n_phases, p_rows, cin = planes.shape
    n_taps, _, coutp = w_taps.shape
    tco = _pick_tco(coutp, cin, n_taps)
    # Weight tile on the slow grid axis -> fetched once per Cout tile and
    # reused across the whole batch (weight-dominated late layers).
    grid = (coutp // tco, n_img)
    kern = functools.partial(_direct_conv_kernel, taps=tuple(taps),
                             m_rows=m_rows, negative_slope=negative_slope)
    return pl.pallas_call(
        kern,
        out_shape=jax.ShapeDtypeStruct((n_img, m_rows, coutp), out_dtype),
        grid_spec=pltpu.PrefetchScalarGridSpec(
            num_scalar_prefetch=0,
            grid=grid,
            in_specs=[
                pl.BlockSpec((1, n_phases, p_rows, cin),
                             lambda co, n: (n, 0, 0, 0)),
                pl.BlockSpec((n_taps, cin, tco), lambda co, n: (0, 0, co)),
                pl.BlockSpec((1, tco), lambda co, n: (0, co)),
            ],
            out_specs=pl.BlockSpec((1, m_rows, tco), lambda co, n: (n, 0, co)),
        ),
        compiler_params=pltpu.CompilerParams(
            dimension_semantics=("parallel", "parallel"),
            vmem_limit_bytes=48 * 1024 * 1024,   # safe on v7x (64 MiB/TC)
        ),
    )(planes, w_taps, bias2d)


# ----------------------------------------------------------------------------
# Layer glue (plain JAX, ~1-2 activation-sized HBM passes per layer)
# ----------------------------------------------------------------------------
def conv4x4_s2_leaky(x, w_taps, bias2d):
    """4x4 / stride-2 / pad-1 conv + LeakyReLU(0.01).  x: (N, H, W, Cin) bf16."""
    n, h, w, cin = x.shape
    ho, wo = h // 2, w // 2
    # (1,1) spatial padding is what the conv needs; the 2 extra bottom rows
    # keep the (discarded junk-position) reads of the last taps in bounds.
    xp = jnp.pad(x, ((0, 0), (1, 3), (1, 1), (0, 0)))
    # One transpose copy + free reshapes -> 4 stride-phase planes, row-flattened
    # so every tap inside the kernel is a contiguous slice.
    xr = xp.reshape(n, ho + 2, 2, wo + 1, 2, cin)
    planes = jnp.transpose(xr, (0, 2, 4, 1, 3, 5))
    planes = planes.reshape(n, 4, (ho + 2) * (wo + 1), cin)
    m_rows = ho * (wo + 1)
    taps = []
    for ip in range(2):
        for jq in range(2):
            for ib in range(2):
                for jb in range(2):
                    i, j = 2 * ib + ip, 2 * jb + jq
                    taps.append((2 * ip + jq, ib * (wo + 1) + jb, 4 * i + j))
    out = _direct_conv(planes, w_taps, bias2d, taps=taps, m_rows=m_rows,
                       negative_slope=0.01, out_dtype=jnp.bfloat16)
    # Drop the junk boundary column (XLA fuses this with the next layer's pad).
    return out.reshape(n, ho, wo + 1, -1)[:, :, :wo, :]


def conv3x3_s1(x, w_taps, zero_bias):
    """3x3 / stride-1 / pad-1 conv (adversarial head).  x: (N, H, W, Cin)."""
    n, h, w, cin = x.shape
    wp = w + 2
    # pad 1 each side; one extra bottom row keeps junk-position reads in bounds.
    xp = jnp.pad(x, ((0, 0), (1, 2), (1, 1), (0, 0)))
    planes = xp.reshape(n, 1, (h + 3) * wp, cin)
    m_rows = h * wp
    taps = [(0, i * wp + j, 3 * i + j) for i in range(3) for j in range(3)]
    out = _direct_conv(planes, w_taps, zero_bias, taps=taps, m_rows=m_rows,
                       negative_slope=None, out_dtype=jnp.float32)
    return out.reshape(n, h, wp, -1)[:, :, :w, :]


def cls_head(feature, w2, zero_bias):
    """kernel_size x kernel_size / no-pad conv == one matmul over the batch."""
    # TODO(synk): single grid step -> only one TensorCore on v7x; tiny op.
    n = feature.shape[0]
    k = feature.shape[1] * feature.shape[2] * feature.shape[3]
    planes = feature.reshape(1, 1, n, k)            # free reshape, batch -> M
    out = _direct_conv(planes, w2, zero_bias, taps=[(0, 0, 0)], m_rows=n,
                       negative_slope=None, out_dtype=jnp.float32)
    return out.reshape(n, -1)


# ----------------------------------------------------------------------------
# Parameters: deterministic synthetic init (PyTorch OIHW layout) + one-time
# conversion to kernel-ready (transposed / zero-padded / bf16) layout.
# ----------------------------------------------------------------------------
def init_discriminator_params(key, channel, img_size, c_dim=5, n_strided=6):
    def conv_init(k, out_f, in_f, kh, kw, with_bias=True):
        k1, k2 = jax.random.split(k)
        w = 0.05 * jax.random.normal(k1, (out_f, in_f, kh, kw), jnp.float32)
        b = 0.05 * jax.random.normal(k2, (out_f,), jnp.float32) if with_bias else None
        return w, b

    params = {"blocks": []}
    dim = 64
    key, sub = jax.random.split(key)
    params["blocks"].append(conv_init(sub, dim, channel, 4, 4))
    for _ in range(n_strided - 1):
        key, sub = jax.random.split(key)
        params["blocks"].append(conv_init(sub, dim * 2, dim, 4, 4))
        dim *= 2
    kernel_size = img_size // 2 ** n_strided
    key, k1, k2 = jax.random.split(key, 3)
    params["out1_w"], _ = conv_init(k1, 1, dim, 3, 3, with_bias=False)
    params["out2_w"], _ = conv_init(k2, c_dim, dim, kernel_size, kernel_size,
                                    with_bias=False)
    return params


def prepare_kernel_params(params, channel):
    """One-time (outside jit): weights -> (n_taps, Cin_pad, Cout_pad) bf16.

    Channel counts at every layer boundary are rounded up to multiples of 128
    with zero padding (exact), so activations stay lane-dense between layers
    and no per-step padding of weights/activations ever hits HBM.
    """
    kp = {"blocks": []}
    in_cp = channel                              # first conv keeps natural Cin
    for w, b in params["blocks"]:
        cout, cin, kh, kw = w.shape
        coutp = _round_up(cout, 128)
        wt = jnp.transpose(w, (2, 3, 1, 0))                       # (kh,kw,ci,co)
        wt = jnp.pad(wt, ((0, 0), (0, 0), (0, in_cp - cin), (0, coutp - cout)))
        kp["blocks"].append(
            (wt.reshape(kh * kw, in_cp, coutp).astype(jnp.bfloat16),
             jnp.pad(b, (0, coutp - cout)).astype(jnp.float32).reshape(1, coutp)))
        in_cp = coutp
    dimp = in_cp
    # adversarial head: Cout 1 -> lane-dense 128 (sliced back at the very end)
    w1 = params["out1_w"]
    dim = w1.shape[1]
    w1t = jnp.transpose(w1, (2, 3, 1, 0))
    w1t = jnp.pad(w1t, ((0, 0), (0, 0), (0, dimp - dim), (0, 127)))
    kp["out1_w"] = w1t.reshape(9, dimp, 128).astype(jnp.bfloat16)
    # classification head: flattened to a single (ks*ks*dimp, 128) matmul weight
    w2 = params["out2_w"]
    c_dim, _, ks, _ = w2.shape
    w2t = jnp.transpose(w2, (2, 3, 1, 0))
    w2t = jnp.pad(w2t, ((0, 0), (0, 0), (0, dimp - dim), (0, 128 - c_dim)))
    kp["out2_w"] = w2t.reshape(1, ks * ks * dimp, 128).astype(jnp.bfloat16)
    kp["zero_bias"] = jnp.zeros((1, 128), jnp.float32)
    return kp


# ----------------------------------------------------------------------------
# Forward
# ----------------------------------------------------------------------------
def discriminator_forward(kparams, img_nchw, *, c_dim):
    # NCHW (PyTorch convention) -> NHWC; bf16 activations between layers.
    # TODO(synk): very large first-layer images would want spatial tiling of
    # the per-image planes block (currently one whole image per VMEM block).
    x = jnp.transpose(img_nchw, (0, 2, 3, 1)).astype(jnp.bfloat16)
    for w_taps, b in kparams["blocks"]:
        x = conv4x4_s2_leaky(x, w_taps, b)
    feature = x                                         # (N, ks, ks, dimp) bf16
    adv = conv3x3_s1(feature, kparams["out1_w"], kparams["zero_bias"])
    out_adv = jnp.transpose(adv[:, :, :, :1], (0, 3, 1, 2))        # (N,1,ks,ks)
    cls = cls_head(feature, kparams["out2_w"], kparams["zero_bias"])
    out_cls = cls[:, :c_dim]
    return out_adv, out_cls


# ----------------------------------------------------------------------------
# Pure-JAX f32 reference (NCHW, lax.conv) for correctness validation
# ----------------------------------------------------------------------------
def _conv_ref(x, w, b, stride, padding):
    out = lax.conv_general_dilated(
        x, w, (stride, stride), [(padding, padding)] * 2,
        dimension_numbers=("NCHW", "OIHW", "NCHW"))
    if b is not None:
        out = out + b.reshape(1, -1, 1, 1)
    return out


def discriminator_ref(params, img_nchw):
    x = img_nchw.astype(jnp.float32)
    for w, b in params["blocks"]:
        x = _conv_ref(x, w, b, 2, 1)
        x = jnp.where(x >= 0.0, x, 0.01 * x)
    adv = _conv_ref(x, params["out1_w"], None, 1, 1)
    cls = _conv_ref(x, params["out2_w"], None, 1, 0)
    return adv, cls.reshape(cls.shape[0], -1)


# ----------------------------------------------------------------------------
if __name__ == "__main__":
    # Small-but-consistent config: Discriminator(channel=4, img_size=16,
    # c_dim=5, n_strided=3)  ->  feature (N, 2, 2, 256), kernel_size = 2.
    batch, channel, img_size, c_dim, n_strided = 2, 4, 16, 5, 3

    key = jax.random.PRNGKey(0)
    key, pkey, xkey = jax.random.split(key, 3)
    params = init_discriminator_params(pkey, channel, img_size, c_dim, n_strided)
    kparams = prepare_kernel_params(params, channel)
    img = jax.random.normal(xkey, (batch, channel, img_size, img_size), jnp.float32)

    fwd = jax.jit(functools.partial(discriminator_forward, c_dim=c_dim))
    out_adv, out_cls = fwd(kparams, img)
    jax.block_until_ready((out_adv, out_cls))

    # Sanity check against the pure-JAX f32 reference (bf16 operands in the
    # kernel, f32 accumulation -> slightly looser tolerances).
    ref_adv, ref_cls = jax.jit(discriminator_ref)(params, img)
    jax.block_until_ready((ref_adv, ref_cls))
    assert out_adv.shape == (batch, 1, img_size // 2 ** n_strided,
                             img_size // 2 ** n_strided)
    assert out_cls.shape == (batch, c_dim)
    np.testing.assert_allclose(np.asarray(out_adv), np.asarray(ref_adv),
                               rtol=5e-2, atol=5e-2)
    np.testing.assert_allclose(np.asarray(out_cls), np.asarray(ref_cls),
                               rtol=5e-2, atol=5e-2)

    print("KERNEL_OK")
</pallas_src>

<mosaic_0001>
module attributes {stable_mosaic.version = 11 : i64} {
  func.func @_direct_conv_kernel(%arg0: i32, %arg1: i32, %arg2: memref<1x4x90x4xbf16, #tpu.memory_space<vmem>>, %arg3: memref<16x4x128xbf16, #tpu.memory_space<vmem>>, %arg4: memref<1x128xf32, #tpu.memory_space<vmem>>, %arg5: memref<1x72x128xbf16, #tpu.memory_space<vmem>>) attributes {dimension_semantics = [#tpu.dimension_semantics<parallel>, #tpu.dimension_semantics<parallel>], iteration_bounds = array<i64: 1, 2>, scalar_prefetch = 0 : i64, scratch_operands = 0 : i64, tpu.core_type = #tpu.core_type<tc>, window_params = [{transform_indices = @transform_0, window_bounds = array<i64: 1, 4, 90, 4>}, {transform_indices = @transform_1, window_bounds = array<i64: 16, 4, 128>}, {transform_indices = @transform_2, window_bounds = array<i64: 1, 128>}, {transform_indices = @transform_3, window_bounds = array<i64: 1, 72, 128>}]} {
    %cst = arith.constant 0.000000e+00 : f32
    %0 = vector.broadcast %cst : f32 to vector<72x128xf32>
    %c0 = arith.constant 0 : index
    %c0_0 = arith.constant 0 : index
    %c0_1 = arith.constant 0 : index
    %c0_2 = arith.constant 0 : index
    %1 = vector.load %arg2[%c0, %c0_0, %c0_1, %c0_2] : memref<1x4x90x4xbf16, #tpu.memory_space<vmem>>, vector<1x1x72x4xbf16>
    %2 = vector.shape_cast %1 : vector<1x1x72x4xbf16> to vector<72x4xbf16>
    %c0_3 = arith.constant 0 : index
    %c0_4 = arith.constant 0 : index
    %c0_5 = arith.constant 0 : index
    %3 = vector.load %arg3[%c0_3, %c0_4, %c0_5] : memref<16x4x128xbf16, #tpu.memory_space<vmem>>, vector<1x4x128xbf16>
    %4 = vector.shape_cast %3 : vector<1x4x128xbf16> to vector<4x128xbf16>
    %cst_6 = arith.constant dense<0.000000e+00> : vector<72x128xf32>
    %5 = tpu.matmul %2, %4, %cst_6 {dimension_numbers = #tpu.dot_dimension_numbers<[1], [0], [0], [1], [0, 0, 1, 1], [], []>} : vector<72x4xbf16>, vector<4x128xbf16>, vector<72x128xf32> -> vector<72x128xf32>
    %6 = arith.addf %0, %5 : vector<72x128xf32>
    %c0_7 = arith.constant 0 : index
    %c0_8 = arith.constant 0 : index
    %c1 = arith.constant 1 : index
    %c0_9 = arith.constant 0 : index
    %7 = vector.load %arg2[%c0_7, %c0_8, %c1, %c0_9] : memref<1x4x90x4xbf16, #tpu.memory_space<vmem>>, vector<1x1x72x4xbf16>
    %8 = vector.shape_cast %7 : vector<1x1x72x4xbf16> to vector<72x4xbf16>
    %c2 = arith.constant 2 : index
    %c0_10 = arith.constant 0 : index
    %c0_11 = arith.constant 0 : index
    %9 = vector.load %arg3[%c2, %c0_10, %c0_11] : memref<16x4x128xbf16, #tpu.memory_space<vmem>>, vector<1x4x128xbf16>
    %10 = vector.shape_cast %9 : vector<1x4x128xbf16> to vector<4x128xbf16>
    %cst_12 = arith.constant dense<0.000000e+00> : vector<72x128xf32>
    %11 = tpu.matmul %8, %10, %cst_12 {dimension_numbers = #tpu.dot_dimension_numbers<[1], [0], [0], [1], [0, 0, 1, 1], [], []>} : vector<72x4xbf16>, vector<4x128xbf16>, vector<72x128xf32> -> vector<72x128xf32>
    %12 = arith.addf %6, %11 : vector<72x128xf32>
    %c0_13 = arith.constant 0 : index
    %c0_14 = arith.constant 0 : index
    %c9 = arith.constant 9 : index
    %c0_15 = arith.constant 0 : index
    %13 = vector.load %arg2[%c0_13, %c0_14, %c9, %c0_15] : memref<1x4x90x4xbf16, #tpu.memory_space<vmem>>, vector<1x1x72x4xbf16>
    %14 = vector.shape_cast %13 : vector<1x1x72x4xbf16> to vector<72x4xbf16>
    %c8 = arith.constant 8 : index
    %c0_16 = arith.constant 0 : index
    %c0_17 = arith.constant 0 : index
    %15 = vector.load %arg3[%c8, %c0_16, %c0_17] : memref<16x4x128xbf16, #tpu.memory_space<vmem>>, vector<1x4x128xbf16>
    %16 = vector.shape_cast %15 : vector<1x4x128xbf16> to vector<4x128xbf16>
    %cst_18 = arith.constant dense<0.000000e+00> : vector<72x128xf32>
    %17 = tpu.matmul %14, %16, %cst_18 {dimension_numbers = #tpu.dot_dimension_numbers<[1], [0], [0], [1], [0, 0, 1, 1], [], []>} : vector<72x4xbf16>, vector<4x128xbf16>, vector<72x128xf32> -> vector<72x128xf32>
    %18 = arith.addf %12, %17 : vector<72x128xf32>
    %c0_19 = arith.constant 0 : index
    %c0_20 = arith.constant 0 : index
    %c10 = arith.constant 10 : index
    %c0_21 = arith.constant 0 : index
    %19 = vector.load %arg2[%c0_19, %c0_20, %c10, %c0_21] : memref<1x4x90x4xbf16, #tpu.memory_space<vmem>>, vector<1x1x72x4xbf16>
    %20 = vector.shape_cast %19 : vector<1x1x72x4xbf16> to vector<72x4xbf16>
    %c10_22 = arith.constant 10 : index
    %c0_23 = arith.constant 0 : index
    %c0_24 = arith.constant 0 : index
    %21 = vector.load %arg3[%c10_22, %c0_23, %c0_24] : memref<16x4x128xbf16, #tpu.memory_space<vmem>>, vector<1x4x128xbf16>
    %22 = vector.shape_cast %21 : vector<1x4x128xbf16> to vector<4x128xbf16>
    %cst_25 = arith.constant dense<0.000000e+00> : vector<72x128xf32>
    %23 = tpu.matmul %20, %22, %cst_25 {dimension_numbers = #tpu.dot_dimension_numbers<[1], [0], [0], [1], [0, 0, 1, 1], [], []>} : vector<72x4xbf16>, vector<4x128xbf16>, vector<72x128xf32> -> vector<72x128xf32>
    %24 = arith.addf %18, %23 : vector<72x128xf32>
    %c0_26 = arith.constant 0 : index
    %c1_27 = arith.constant 1 : index
    %c0_28 = arith.constant 0 : index
    %c0_29 = arith.constant 0 : index
    %25 = vector.load %arg2[%c0_26, %c1_27, %c0_28, %c0_29] : memref<1x4x90x4xbf16, #tpu.memory_space<vmem>>, vector<1x1x72x4xbf16>
    %26 = vector.shape_cast %25 : vector<1x1x72x4xbf16> to vector<72x4xbf16>
    %c1_30 = arith.constant 1 : index
    %c0_31 = arith.constant 0 : index
    %c0_32 = arith.constant 0 : index
    %27 = vector.load %arg3[%c1_30, %c0_31, %c0_32] : memref<16x4x128xbf16, #tpu.memory_space<vmem>>, vector<1x4x128xbf16>
    %28 = vector.shape_cast %27 : vector<1x4x128xbf16> to vector<4x128xbf16>
    %cst_33 = arith.constant dense<0.000000e+00> : vector<72x128xf32>
    %29 = tpu.matmul %26, %28, %cst_33 {dimension_numbers = #tpu.dot_dimension_numbers<[1], [0], [0], [1], [0, 0, 1, 1], [], []>} : vector<72x4xbf16>, vector<4x128xbf16>, vector<72x128xf32> -> vector<72x128xf32>
    %30 = arith.addf %24, %29 : vector<72x128xf32>
    %c0_34 = arith.constant 0 : index
    %c1_35 = arith.constant 1 : index
    %c1_36 = arith.constant 1 : index
    %c0_37 = arith.constant 0 : index
    %31 = vector.load %arg2[%c0_34, %c1_35, %c1_36, %c0_37] : memref<1x4x90x4xbf16, #tpu.memory_space<vmem>>, vector<1x1x72x4xbf16>
    %32 = vector.shape_cast %31 : vector<1x1x72x4xbf16> to vector<72x4xbf16>
    %c3 = arith.constant 3 : index
    %c0_38 = arith.constant 0 : index
    %c0_39 = arith.constant 0 : index
    %33 = vector.load %arg3[%c3, %c0_38, %c0_39] : memref<16x4x128xbf16, #tpu.memory_space<vmem>>, vector<1x4x128xbf16>
    %34 = vector.shape_cast %33 : vector<1x4x128xbf16> to vector<4x128xbf16>
    %cst_40 = arith.constant dense<0.000000e+00> : vector<72x128xf32>
    %35 = tpu.matmul %32, %34, %cst_40 {dimension_numbers = #tpu.dot_dimension_numbers<[1], [0], [0], [1], [0, 0, 1, 1], [], []>} : vector<72x4xbf16>, vector<4x128xbf16>, vector<72x128xf32> -> vector<72x128xf32>
    %36 = arith.addf %30, %35 : vector<72x128xf32>
    %c0_41 = arith.constant 0 : index
    %c1_42 = arith.constant 1 : index
    %c9_43 = arith.constant 9 : index
    %c0_44 = arith.constant 0 : index
    %37 = vector.load %arg2[%c0_41, %c1_42, %c9_43, %c0_44] : memref<1x4x90x4xbf16, #tpu.memory_space<vmem>>, vector<1x1x72x4xbf16>
    %38 = vector.shape_cast %37 : vector<1x1x72x4xbf16> to vector<72x4xbf16>
    %c9_45 = arith.constant 9 : index
    %c0_46 = arith.constant 0 : index
    %c0_47 = arith.constant 0 : index
    %39 = vector.load %arg3[%c9_45, %c0_46, %c0_47] : memref<16x4x128xbf16, #tpu.memory_space<vmem>>, vector<1x4x128xbf16>
    %40 = vector.shape_cast %39 : vector<1x4x128xbf16> to vector<4x128xbf16>
    %cst_48 = arith.constant dense<0.000000e+00> : vector<72x128xf32>
    %41 = tpu.matmul %38, %40, %cst_48 {dimension_numbers = #tpu.dot_dimension_numbers<[1], [0], [0], [1], [0, 0, 1, 1], [], []>} : vector<72x4xbf16>, vector<4x128xbf16>, vector<72x128xf32> -> vector<72x128xf32>
    %42 = arith.addf %36, %41 : vector<72x128xf32>
    %c0_49 = arith.constant 0 : index
    %c1_50 = arith.constant 1 : index
    %c10_51 = arith.constant 10 : index
    %c0_52 = arith.constant 0 : index
    %43 = vector.load %arg2[%c0_49, %c1_50, %c10_51, %c0_52] : memref<1x4x90x4xbf16, #tpu.memory_space<vmem>>, vector<1x1x72x4xbf16>
    %44 = vector.shape_cast %43 : vector<1x1x72x4xbf16> to vector<72x4xbf16>
    %c11 = arith.constant 11 : index
    %c0_53 = arith.constant 0 : index
    %c0_54 = arith.constant 0 : index
    %45 = vector.load %arg3[%c11, %c0_53, %c0_54] : memref<16x4x128xbf16, #tpu.memory_space<vmem>>, vector<1x4x128xbf16>
    %46 = vector.shape_cast %45 : vector<1x4x128xbf16> to vector<4x128xbf16>
    %cst_55 = arith.constant dense<0.000000e+00> : vector<72x128xf32>
    %47 = tpu.matmul %44, %46, %cst_55 {dimension_numbers = #tpu.dot_dimension_numbers<[1], [0], [0], [1], [0, 0, 1, 1], [], []>} : vector<72x4xbf16>, vector<4x128xbf16>, vector<72x128xf32> -> vector<72x128xf32>
    %48 = arith.addf %42, %47 : vector<72x128xf32>
    %c0_56 = arith.constant 0 : index
    %c2_57 = arith.constant 2 : index
    %c0_58 = arith.constant 0 : index
    %c0_59 = arith.constant 0 : index
    %49 = vector.load %arg2[%c0_56, %c2_57, %c0_58, %c0_59] : memref<1x4x90x4xbf16, #tpu.memory_space<vmem>>, vector<1x1x72x4xbf16>
    %50 = vector.shape_cast %49 : vector<1x1x72x4xbf16> to vector<72x4xbf16>
    %c4 = arith.constant 4 : index
    %c0_60 = arith.constant 0 : index
    %c0_61 = arith.constant 0 : index
    %51 = vector.load %arg3[%c4, %c0_60, %c0_61] : memref<16x4x128xbf16, #tpu.memory_space<vmem>>, vector<1x4x128xbf16>
    %52 = vector.shape_cast %51 : vector<1x4x128xbf16> to vector<4x128xbf16>
    %cst_62 = arith.constant dense<0.000000e+00> : vector<72x128xf32>
    %53 = tpu.matmul %50, %52, %cst_62 {dimension_numbers = #tpu.dot_dimension_numbers<[1], [0], [0], [1], [0, 0, 1, 1], [], []>} : vector<72x4xbf16>, vector<4x128xbf16>, vector<72x128xf32> -> vector<72x128xf32>
    %54 = arith.addf %48, %53 : vector<72x128xf32>
    %c0_63 = arith.constant 0 : index
    %c2_64 = arith.constant 2 : index
    %c1_65 = arith.constant 1 : index
    %c0_66 = arith.constant 0 : index
    %55 = vector.load %arg2[%c0_63, %c2_64, %c1_65, %c0_66] : memref<1x4x90x4xbf16, #tpu.memory_space<vmem>>, vector<1x1x72x4xbf16>
    %56 = vector.shape_cast %55 : vector<1x1x72x4xbf16> to vector<72x4xbf16>
    %c6 = arith.constant 6 : index
    %c0_67 = arith.constant 0 : index
    %c0_68 = arith.constant 0 : index
    %57 = vector.load %arg3[%c6, %c0_67, %c0_68] : memref<16x4x128xbf16, #tpu.memory_space<vmem>>, vector<1x4x128xbf16>
    %58 = vector.shape_cast %57 : vector<1x4x128xbf16> to vector<4x128xbf16>
    %cst_69 = arith.constant dense<0.000000e+00> : vector<72x128xf32>
    %59 = tpu.matmul %56, %58, %cst_69 {dimension_numbers = #tpu.dot_dimension_numbers<[1], [0], [0], [1], [0, 0, 1, 1], [], []>} : vector<72x4xbf16>, vector<4x128xbf16>, vector<72x128xf32> -> vector<72x128xf32>
    %60 = arith.addf %54, %59 : vector<72x128xf32>
    %c0_70 = arith.constant 0 : index
    %c2_71 = arith.constant 2 : index
    %c9_72 = arith.constant 9 : index
    %c0_73 = arith.constant 0 : index
    %61 = vector.load %arg2[%c0_70, %c2_71, %c9_72, %c0_73] : memref<1x4x90x4xbf16, #tpu.memory_space<vmem>>, vector<1x1x72x4xbf16>
    %62 = vector.shape_cast %61 : vector<1x1x72x4xbf16> to vector<72x4xbf16>
    %c12 = arith.constant 12 : index
    %c0_74 = arith.constant 0 : index
    %c0_75 = arith.constant 0 : index
    %63 = vector.load %arg3[%c12, %c0_74, %c0_75] : memref<16x4x128xbf16, #tpu.memory_space<vmem>>, vector<1x4x128xbf16>
    %64 = vector.shape_cast %63 : vector<1x4x128xbf16> to vector<4x128xbf16>
    %cst_76 = arith.constant dense<0.000000e+00> : vector<72x128xf32>
    %65 = tpu.matmul %62, %64, %cst_76 {dimension_numbers = #tpu.dot_dimension_numbers<[1], [0], [0], [1], [0, 0, 1, 1], [], []>} : vector<72x4xbf16>, vector<4x128xbf16>, vector<72x128xf32> -> vector<72x128xf32>
    %66 = arith.addf %60, %65 : vector<72x128xf32>
    %c0_77 = arith.constant 0 : index
    %c2_78 = arith.constant 2 : index
    %c10_79 = arith.constant 10 : index
    %c0_80 = arith.constant 0 : index
    %67 = vector.load %arg2[%c0_77, %c2_78, %c10_79, %c0_80] : memref<1x4x90x4xbf16, #tpu.memory_space<vmem>>, vector<1x1x72x4xbf16>
    %68 = vector.shape_cast %67 : vector<1x1x72x4xbf16> to vector<72x4xbf16>
    %c14 = arith.constant 14 : index
    %c0_81 = arith.constant 0 : index
    %c0_82 = arith.constant 0 : index
    %69 = vector.load %arg3[%c14, %c0_81, %c0_82] : memref<16x4x128xbf16, #tpu.memory_space<vmem>>, vector<1x4x128xbf16>
    %70 = vector.shape_cast %69 : vector<1x4x128xbf16> to vector<4x128xbf16>
    %cst_83 = arith.constant dense<0.000000e+00> : vector<72x128xf32>
    %71 = tpu.matmul %68, %70, %cst_83 {dimension_numbers = #tpu.dot_dimension_numbers<[1], [0], [0], [1], [0, 0, 1, 1], [], []>} : vector<72x4xbf16>, vector<4x128xbf16>, vector<72x128xf32> -> vector<72x128xf32>
    %72 = arith.addf %66, %71 : vector<72x128xf32>
    %c0_84 = arith.constant 0 : index
    %c3_85 = arith.constant 3 : index
    %c0_86 = arith.constant 0 : index
    %c0_87 = arith.constant 0 : index
    %73 = vector.load %arg2[%c0_84, %c3_85, %c0_86, %c0_87] : memref<1x4x90x4xbf16, #tpu.memory_space<vmem>>, vector<1x1x72x4xbf16>
    %74 = vector.shape_cast %73 : vector<1x1x72x4xbf16> to vector<72x4xbf16>
    %c5 = arith.constant 5 : index
    %c0_88 = arith.constant 0 : index
    %c0_89 = arith.constant 0 : index
    %75 = vector.load %arg3[%c5, %c0_88, %c0_89] : memref<16x4x128xbf16, #tpu.memory_space<vmem>>, vector<1x4x128xbf16>
    %76 = vector.shape_cast %75 : vector<1x4x128xbf16> to vector<4x128xbf16>
    %cst_90 = arith.constant dense<0.000000e+00> : vector<72x128xf32>
    %77 = tpu.matmul %74, %76, %cst_90 {dimension_numbers = #tpu.dot_dimension_numbers<[1], [0], [0], [1], [0, 0, 1, 1], [], []>} : vector<72x4xbf16>, vector<4x128xbf16>, vector<72x128xf32> -> vector<72x128xf32>
    %78 = arith.addf %72, %77 : vector<72x128xf32>
    %c0_91 = arith.constant 0 : index
    %c3_92 = arith.constant 3 : index
    %c1_93 = arith.constant 1 : index
    %c0_94 = arith.constant 0 : index
    %79 = vector.load %arg2[%c0_91, %c3_92, %c1_93, %c0_94] : memref<1x4x90x4xbf16, #tpu.memory_space<vmem>>, vector<1x1x72x4xbf16>
    %80 = vector.shape_cast %79 : vector<1x1x72x4xbf16> to vector<72x4xbf16>
    %c7 = arith.constant 7 : index
    %c0_95 = arith.constant 0 : index
    %c0_96 = arith.constant 0 : index
    %81 = vector.load %arg3[%c7, %c0_95, %c0_96] : memref<16x4x128xbf16, #tpu.memory_space<vmem>>, vector<1x4x128xbf16>
    %82 = vector.shape_cast %81 : vector<1x4x128xbf16> to vector<4x128xbf16>
    %cst_97 = arith.constant dense<0.000000e+00> : vector<72x128xf32>
    %83 = tpu.matmul %80, %82, %cst_97 {dimension_numbers = #tpu.dot_dimension_numbers<[1], [0], [0], [1], [0, 0, 1, 1], [], []>} : vector<72x4xbf16>, vector<4x128xbf16>, vector<72x128xf32> -> vector<72x128xf32>
    %84 = arith.addf %78, %83 : vector<72x128xf32>
    %c0_98 = arith.constant 0 : index
    %c3_99 = arith.constant 3 : index
    %c9_100 = arith.constant 9 : index
    %c0_101 = arith.constant 0 : index
    %85 = vector.load %arg2[%c0_98, %c3_99, %c9_100, %c0_101] : memref<1x4x90x4xbf16, #tpu.memory_space<vmem>>, vector<1x1x72x4xbf16>
    %86 = vector.shape_cast %85 : vector<1x1x72x4xbf16> to vector<72x4xbf16>
    %c13 = arith.constant 13 : index
    %c0_102 = arith.constant 0 : index
    %c0_103 = arith.constant 0 : index
    %87 = vector.load %arg3[%c13, %c0_102, %c0_103] : memref<16x4x128xbf16, #tpu.memory_space<vmem>>, vector<1x4x128xbf16>
    %88 = vector.shape_cast %87 : vector<1x4x128xbf16> to vector<4x128xbf16>
    %cst_104 = arith.constant dense<0.000000e+00> : vector<72x128xf32>
    %89 = tpu.matmul %86, %88, %cst_104 {dimension_numbers = #tpu.dot_dimension_numbers<[1], [0], [0], [1], [0, 0, 1, 1], [], []>} : vector<72x4xbf16>, vector<4x128xbf16>, vector<72x128xf32> -> vector<72x128xf32>
    %90 = arith.addf %84, %89 : vector<72x128xf32>
    %c0_105 = arith.constant 0 : index
    %c3_106 = arith.constant 3 : index
    %c10_107 = arith.constant 10 : index
    %c0_108 = arith.constant 0 : index
    %91 = vector.load %arg2[%c0_105, %c3_106, %c10_107, %c0_108] : memref<1x4x90x4xbf16, #tpu.memory_space<vmem>>, vector<1x1x72x4xbf16>
    %92 = vector.shape_cast %91 : vector<1x1x72x4xbf16> to vector<72x4xbf16>
    %c15 = arith.constant 15 : index
    %c0_109 = arith.constant 0 : index
    %c0_110 = arith.constant 0 : index
    %93 = vector.load %arg3[%c15, %c0_109, %c0_110] : memref<16x4x128xbf16, #tpu.memory_space<vmem>>, vector<1x4x128xbf16>
    %94 = vector.shape_cast %93 : vector<1x4x128xbf16> to vector<4x128xbf16>
    %cst_111 = arith.constant dense<0.000000e+00> : vector<72x128xf32>
    %95 = tpu.matmul %92, %94, %cst_111 {dimension_numbers = #tpu.dot_dimension_numbers<[1], [0], [0], [1], [0, 0, 1, 1], [], []>} : vector<72x4xbf16>, vector<4x128xbf16>, vector<72x128xf32> -> vector<72x128xf32>
    %96 = arith.addf %90, %95 : vector<72x128xf32>
    %c0_112 = arith.constant 0 : index
    %c0_113 = arith.constant 0 : index
    %97 = vector.load %arg4[%c0_112, %c0_113] : memref<1x128xf32, #tpu.memory_space<vmem>>, vector<1x128xf32>
    %98 = vector.broadcast %97 : vector<1x128xf32> to vector<72x128xf32>
    %99 = arith.addf %96, %98 : vector<72x128xf32>
    %cst_114 = arith.constant 0.000000e+00 : f32
    %100 = vector.broadcast %cst_114 : f32 to vector<72x128xf32>
    %101 = arith.cmpf oge, %99, %100 : vector<72x128xf32>
    %cst_115 = arith.constant 0.00999999977 : f32
    %102 = vector.broadcast %cst_115 : f32 to vector<72x128xf32>
    %103 = arith.mulf %102, %99 : vector<72x128xf32>
    %104 = arith.select %101, %99, %103 : vector<72x128xi1>, vector<72x128xf32>
    %105 = arith.truncf %104 : vector<72x128xf32> to vector<72x128xbf16>
    %c0_116 = arith.constant 0 : index
    %c0_117 = arith.constant 0 : index
    %c0_118 = arith.constant 0 : index
    %106 = vector.load %arg5[%c0_116, %c0_117, %c0_118] : memref<1x72x128xbf16, #tpu.memory_space<vmem>>, vector<1x72x128xbf16>
    %107 = vector.shape_cast %106 : vector<1x72x128xbf16> to vector<72x128xbf16>
    %108 = vector.shape_cast %105 : vector<72x128xbf16> to vector<1x72x128xbf16>
    tpu.vector_store %arg5[%c0_116, %c0_117, %c0_118], %108 {strides = array<i32>} : memref<1x72x128xbf16, #tpu.memory_space<vmem>>, vector<1x72x128xbf16>,
    return
  }
  func.func @transform_0(%arg0: i32, %arg1: i32) -> (i32, i32, i32, i32) {
    %c0_i32 = arith.constant 0 : i32
    %c0_i32_0 = arith.constant 0 : i32
    %c0_i32_1 = arith.constant 0 : i32
    %c0_i32_2 = arith.constant 0 : i32
    return %arg1, %c0_i32, %c0_i32_0, %c0_i32_1 : i32, i32, i32, i32
  }
  func.func @transform_1(%arg0: i32, %arg1: i32) -> (i32, i32, i32) {
    %c0_i32 = arith.constant 0 : i32
    %c0_i32_0 = arith.constant 0 : i32
    %c0_i32_1 = arith.constant 0 : i32
    return %c0_i32, %c0_i32_0, %arg0 : i32, i32, i32
  }
  func.func @transform_2(%arg0: i32, %arg1: i32) -> (i32, i32) {
    %c0_i32 = arith.constant 0 : i32
    %c0_i32_0 = arith.constant 0 : i32
    return %c0_i32, %arg0 : i32, i32
  }
  func.func @transform_3(%arg0: i32, %arg1: i32) -> (i32, i32, i32) {
    %c0_i32 = arith.constant 0 : i32
    %c0_i32_0 = arith.constant 0 : i32
    return %arg1, %c0_i32, %arg0 : i32, i32, i32
  }
}

module attributes {stable_mosaic.version = 11 : i64} {
  func.func @_direct_conv_kernel(%arg0: i32, %arg1: i32, %arg2: memref<1x4x30x128xbf16, #tpu.memory_space<vmem>>, %arg3: memref<16x128x128xbf16, #tpu.memory_space<vmem>>, %arg4: memref<1x128xf32, #tpu.memory_space<vmem>>, %arg5: memref<1x20x128xbf16, #tpu.memory_space<vmem>>) attributes {dimension_semantics = [#tpu.dimension_semantics<parallel>, #tpu.dimension_semantics<parallel>], iteration_bounds = array<i64: 1, 2>, scalar_prefetch = 0 : i64, scratch_operands = 0 : i64, tpu.core_type = #tpu.core_type<tc>, window_params = [{transform_indices = @transform_0, window_bounds = array<i64: 1, 4, 30, 128>}, {transform_indices = @transform_1, window_bounds = array<i64: 16, 128, 128>}, {transform_indices = @transform_2, window_bounds = array<i64: 1, 128>}, {transform_indices = @transform_3, window_bounds = array<i64: 1, 20, 128>}]} {
    %cst = arith.constant 0.000000e+00 : f32
    %0 = vector.broadcast %cst : f32 to vector<20x128xf32>
    %c0 = arith.constant 0 : index
    %c0_0 = arith.constant 0 : index
    %c0_1 = arith.constant 0 : index
    %c0_2 = arith.constant 0 : index
    %1 = vector.load %arg2[%c0, %c0_0, %c0_1, %c0_2] : memref<1x4x30x128xbf16, #tpu.memory_space<vmem>>, vector<1x1x20x128xbf16>
    %2 = vector.shape_cast %1 : vector<1x1x20x128xbf16> to vector<20x128xbf16>
    %c0_3 = arith.constant 0 : index
    %c0_4 = arith.constant 0 : index
    %c0_5 = arith.constant 0 : index
    %3 = vector.load %arg3[%c0_3, %c0_4, %c0_5] : memref<16x128x128xbf16, #tpu.memory_space<vmem>>, vector<1x128x128xbf16>
    %4 = vector.shape_cast %3 : vector<1x128x128xbf16> to vector<128x128xbf16>
    %cst_6 = arith.constant dense<0.000000e+00> : vector<20x128xf32>
    %5 = tpu.matmul %2, %4, %cst_6 {dimension_numbers = #tpu.dot_dimension_numbers<[1], [0], [0], [1], [0, 0, 1, 1], [], []>} : vector<20x128xbf16>, vector<128x128xbf16>, vector<20x128xf32> -> vector<20x128xf32>
    %6 = arith.addf %0, %5 : vector<20x128xf32>
    %c0_7 = arith.constant 0 : index
    %c0_8 = arith.constant 0 : index
    %c1 = arith.constant 1 : index
    %c0_9 = arith.constant 0 : index
    %7 = vector.load %arg2[%c0_7, %c0_8, %c1, %c0_9] : memref<1x4x30x128xbf16, #tpu.memory_space<vmem>>, vector<1x1x20x128xbf16>
    %8 = vector.shape_cast %7 : vector<1x1x20x128xbf16> to vector<20x128xbf16>
    %c2 = arith.constant 2 : index
    %c0_10 = arith.constant 0 : index
    %c0_11 = arith.constant 0 : index
    %9 = vector.load %arg3[%c2, %c0_10, %c0_11] : memref<16x128x128xbf16, #tpu.memory_space<vmem>>, vector<1x128x128xbf16>
    %10 = vector.shape_cast %9 : vector<1x128x128xbf16> to vector<128x128xbf16>
    %cst_12 = arith.constant dense<0.000000e+00> : vector<20x128xf32>
    %11 = tpu.matmul %8, %10, %cst_12 {dimension_numbers = #tpu.dot_dimension_numbers<[1], [0], [0], [1], [0, 0, 1, 1], [], []>} : vector<20x128xbf16>, vector<128x128xbf16>, vector<20x128xf32> -> vector<20x128xf32>
    %12 = arith.addf %6, %11 : vector<20x128xf32>
    %c0_13 = arith.constant 0 : index
    %c0_14 = arith.constant 0 : index
    %c5 = arith.constant 5 : index
    %c0_15 = arith.constant 0 : index
    %13 = vector.load %arg2[%c0_13, %c0_14, %c5, %c0_15] : memref<1x4x30x128xbf16, #tpu.memory_space<vmem>>, vector<1x1x20x128xbf16>
    %14 = vector.shape_cast %13 : vector<1x1x20x128xbf16> to vector<20x128xbf16>
    %c8 = arith.constant 8 : index
    %c0_16 = arith.constant 0 : index
    %c0_17 = arith.constant 0 : index
    %15 = vector.load %arg3[%c8, %c0_16, %c0_17] : memref<16x128x128xbf16, #tpu.memory_space<vmem>>, vector<1x128x128xbf16>
    %16 = vector.shape_cast %15 : vector<1x128x128xbf16> to vector<128x128xbf16>
    %cst_18 = arith.constant dense<0.000000e+00> : vector<20x128xf32>
    %17 = tpu.matmul %14, %16, %cst_18 {dimension_numbers = #tpu.dot_dimension_numbers<[1], [0], [0], [1], [0, 0, 1, 1], [], []>} : vector<20x128xbf16>, vector<128x128xbf16>, vector<20x128xf32> -> vector<20x128xf32>
    %18 = arith.addf %12, %17 : vector<20x128xf32>
    %c0_19 = arith.constant 0 : index
    %c0_20 = arith.constant 0 : index
    %c6 = arith.constant 6 : index
    %c0_21 = arith.constant 0 : index
    %19 = vector.load %arg2[%c0_19, %c0_20, %c6, %c0_21] : memref<1x4x30x128xbf16, #tpu.memory_space<vmem>>, vector<1x1x20x128xbf16>
    %20 = vector.shape_cast %19 : vector<1x1x20x128xbf16> to vector<20x128xbf16>
    %c10 = arith.constant 10 : index
    %c0_22 = arith.constant 0 : index
    %c0_23 = arith.constant 0 : index
    %21 = vector.load %arg3[%c10, %c0_22, %c0_23] : memref<16x128x128xbf16, #tpu.memory_space<vmem>>, vector<1x128x128xbf16>
    %22 = vector.shape_cast %21 : vector<1x128x128xbf16> to vector<128x128xbf16>
    %cst_24 = arith.constant dense<0.000000e+00> : vector<20x128xf32>
    %23 = tpu.matmul %20, %22, %cst_24 {dimension_numbers = #tpu.dot_dimension_numbers<[1], [0], [0], [1], [0, 0, 1, 1], [], []>} : vector<20x128xbf16>, vector<128x128xbf16>, vector<20x128xf32> -> vector<20x128xf32>
    %24 = arith.addf %18, %23 : vector<20x128xf32>
    %c0_25 = arith.constant 0 : index
    %c1_26 = arith.constant 1 : index
    %c0_27 = arith.constant 0 : index
    %c0_28 = arith.constant 0 : index
    %25 = vector.load %arg2[%c0_25, %c1_26, %c0_27, %c0_28] : memref<1x4x30x128xbf16, #tpu.memory_space<vmem>>, vector<1x1x20x128xbf16>
    %26 = vector.shape_cast %25 : vector<1x1x20x128xbf16> to vector<20x128xbf16>
    %c1_29 = arith.constant 1 : index
    %c0_30 = arith.constant 0 : index
    %c0_31 = arith.constant 0 : index
    %27 = vector.load %arg3[%c1_29, %c0_30, %c0_31] : memref<16x128x128xbf16, #tpu.memory_space<vmem>>, vector<1x128x128xbf16>
    %28 = vector.shape_cast %27 : vector<1x128x128xbf16> to vector<128x128xbf16>
    %cst_32 = arith.constant dense<0.000000e+00> : vector<20x128xf32>
    %29 = tpu.matmul %26, %28, %cst_32 {dimension_numbers = #tpu.dot_dimension_numbers<[1], [0], [0], [1], [0, 0, 1, 1], [], []>} : vector<20x128xbf16>, vector<128x128xbf16>, vector<20x128xf32> -> vector<20x128xf32>
    %30 = arith.addf %24, %29 : vector<20x128xf32>
    %c0_33 = arith.constant 0 : index
    %c1_34 = arith.constant 1 : index
    %c1_35 = arith.constant 1 : index
    %c0_36 = arith.constant 0 : index
    %31 = vector.load %arg2[%c0_33, %c1_34, %c1_35, %c0_36] : memref<1x4x30x128xbf16, #tpu.memory_space<vmem>>, vector<1x1x20x128xbf16>
    %32 = vector.shape_cast %31 : vector<1x1x20x128xbf16> to vector<20x128xbf16>
    %c3 = arith.constant 3 : index
    %c0_37 = arith.constant 0 : index
    %c0_38 = arith.constant 0 : index
    %33 = vector.load %arg3[%c3, %c0_37, %c0_38] : memref<16x128x128xbf16, #tpu.memory_space<vmem>>, vector<1x128x128xbf16>
    %34 = vector.shape_cast %33 : vector<1x128x128xbf16> to vector<128x128xbf16>
    %cst_39 = arith.constant dense<0.000000e+00> : vector<20x128xf32>
    %35 = tpu.matmul %32, %34, %cst_39 {dimension_numbers = #tpu.dot_dimension_numbers<[1], [0], [0], [1], [0, 0, 1, 1], [], []>} : vector<20x128xbf16>, vector<128x128xbf16>, vector<20x128xf32> -> vector<20x128xf32>
    %36 = arith.addf %30, %35 : vector<20x128xf32>
    %c0_40 = arith.constant 0 : index
    %c1_41 = arith.constant 1 : index
    %c5_42 = arith.constant 5 : index
    %c0_43 = arith.constant 0 : index
    %37 = vector.load %arg2[%c0_40, %c1_41, %c5_42, %c0_43] : memref<1x4x30x128xbf16, #tpu.memory_space<vmem>>, vector<1x1x20x128xbf16>
    %38 = vector.shape_cast %37 : vector<1x1x20x128xbf16> to vector<20x128xbf16>
    %c9 = arith.constant 9 : index
    %c0_44 = arith.constant 0 : index
    %c0_45 = arith.constant 0 : index
    %39 = vector.load %arg3[%c9, %c0_44, %c0_45] : memref<16x128x128xbf16, #tpu.memory_space<vmem>>, vector<1x128x128xbf16>
    %40 = vector.shape_cast %39 : vector<1x128x128xbf16> to vector<128x128xbf16>
    %cst_46 = arith.constant dense<0.000000e+00> : vector<20x128xf32>
    %41 = tpu.matmul %38, %40, %cst_46 {dimension_numbers = #tpu.dot_dimension_numbers<[1], [0], [0], [1], [0, 0, 1, 1], [], []>} : vector<20x128xbf16>, vector<128x128xbf16>, vector<20x128xf32> -> vector<20x128xf32>
    %42 = arith.addf %36, %41 : vector<20x128xf32>
    %c0_47 = arith.constant 0 : index
    %c1_48 = arith.constant 1 : index
    %c6_49 = arith.constant 6 : index
    %c0_50 = arith.constant 0 : index
    %43 = vector.load %arg2[%c0_47, %c1_48, %c6_49, %c0_50] : memref<1x4x30x128xbf16, #tpu.memory_space<vmem>>, vector<1x1x20x128xbf16>
    %44 = vector.shape_cast %43 : vector<1x1x20x128xbf16> to vector<20x128xbf16>
    %c11 = arith.constant 11 : index
    %c0_51 = arith.constant 0 : index
    %c0_52 = arith.constant 0 : index
    %45 = vector.load %arg3[%c11, %c0_51, %c0_52] : memref<16x128x128xbf16, #tpu.memory_space<vmem>>, vector<1x128x128xbf16>
    %46 = vector.shape_cast %45 : vector<1x128x128xbf16> to vector<128x128xbf16>
    %cst_53 = arith.constant dense<0.000000e+00> : vector<20x128xf32>
    %47 = tpu.matmul %44, %46, %cst_53 {dimension_numbers = #tpu.dot_dimension_numbers<[1], [0], [0], [1], [0, 0, 1, 1], [], []>} : vector<20x128xbf16>, vector<128x128xbf16>, vector<20x128xf32> -> vector<20x128xf32>
    %48 = arith.addf %42, %47 : vector<20x128xf32>
    %c0_54 = arith.constant 0 : index
    %c2_55 = arith.constant 2 : index
    %c0_56 = arith.constant 0 : index
    %c0_57 = arith.constant 0 : index
    %49 = vector.load %arg2[%c0_54, %c2_55, %c0_56, %c0_57] : memref<1x4x30x128xbf16, #tpu.memory_space<vmem>>, vector<1x1x20x128xbf16>
    %50 = vector.shape_cast %49 : vector<1x1x20x128xbf16> to vector<20x128xbf16>
    %c4 = arith.constant 4 : index
    %c0_58 = arith.constant 0 : index
    %c0_59 = arith.constant 0 : index
    %51 = vector.load %arg3[%c4, %c0_58, %c0_59] : memref<16x128x128xbf16, #tpu.memory_space<vmem>>, vector<1x128x128xbf16>
    %52 = vector.shape_cast %51 : vector<1x128x128xbf16> to vector<128x128xbf16>
    %cst_60 = arith.constant dense<0.000000e+00> : vector<20x128xf32>
    %53 = tpu.matmul %50, %52, %cst_60 {dimension_numbers = #tpu.dot_dimension_numbers<[1], [0], [0], [1], [0, 0, 1, 1], [], []>} : vector<20x128xbf16>, vector<128x128xbf16>, vector<20x128xf32> -> vector<20x128xf32>
    %54 = arith.addf %48, %53 : vector<20x128xf32>
    %c0_61 = arith.constant 0 : index
    %c2_62 = arith.constant 2 : index
    %c1_63 = arith.constant 1 : index
    %c0_64 = arith.constant 0 : index
    %55 = vector.load %arg2[%c0_61, %c2_62, %c1_63, %c0_64] : memref<1x4x30x128xbf16, #tpu.memory_space<vmem>>, vector<1x1x20x128xbf16>
    %56 = vector.shape_cast %55 : vector<1x1x20x128xbf16> to vector<20x128xbf16>
    %c6_65 = arith.constant 6 : index
    %c0_66 = arith.constant 0 : index
    %c0_67 = arith.constant 0 : index
    %57 = vector.load %arg3[%c6_65, %c0_66, %c0_67] : memref<16x128x128xbf16, #tpu.memory_space<vmem>>, vector<1x128x128xbf16>
    %58 = vector.shape_cast %57 : vector<1x128x128xbf16> to vector<128x128xbf16>
    %cst_68 = arith.constant dense<0.000000e+00> : vector<20x128xf32>
    %59 = tpu.matmul %56, %58, %cst_68 {dimension_numbers = #tpu.dot_dimension_numbers<[1], [0], [0], [1], [0, 0, 1, 1], [], []>} : vector<20x128xbf16>, vector<128x128xbf16>, vector<20x128xf32> -> vector<20x128xf32>
    %60 = arith.addf %54, %59 : vector<20x128xf32>
    %c0_69 = arith.constant 0 : index
    %c2_70 = arith.constant 2 : index
    %c5_71 = arith.constant 5 : index
    %c0_72 = arith.constant 0 : index
    %61 = vector.load %arg2[%c0_69, %c2_70, %c5_71, %c0_72] : memref<1x4x30x128xbf16, #tpu.memory_space<vmem>>, vector<1x1x20x128xbf16>
    %62 = vector.shape_cast %61 : vector<1x1x20x128xbf16> to vector<20x128xbf16>
    %c12 = arith.constant 12 : index
    %c0_73 = arith.constant 0 : index
    %c0_74 = arith.constant 0 : index
    %63 = vector.load %arg3[%c12, %c0_73, %c0_74] : memref<16x128x128xbf16, #tpu.memory_space<vmem>>, vector<1x128x128xbf16>
    %64 = vector.shape_cast %63 : vector<1x128x128xbf16> to vector<128x128xbf16>
    %cst_75 = arith.constant dense<0.000000e+00> : vector<20x128xf32>
    %65 = tpu.matmul %62, %64, %cst_75 {dimension_numbers = #tpu.dot_dimension_numbers<[1], [0], [0], [1], [0, 0, 1, 1], [], []>} : vector<20x128xbf16>, vector<128x128xbf16>, vector<20x128xf32> -> vector<20x128xf32>
    %66 = arith.addf %60, %65 : vector<20x128xf32>
    %c0_76 = arith.constant 0 : index
    %c2_77 = arith.constant 2 : index
    %c6_78 = arith.constant 6 : index
    %c0_79 = arith.constant 0 : index
    %67 = vector.load %arg2[%c0_76, %c2_77, %c6_78, %c0_79] : memref<1x4x30x128xbf16, #tpu.memory_space<vmem>>, vector<1x1x20x128xbf16>
    %68 = vector.shape_cast %67 : vector<1x1x20x128xbf16> to vector<20x128xbf16>
    %c14 = arith.constant 14 : index
    %c0_80 = arith.constant 0 : index
    %c0_81 = arith.constant 0 : index
    %69 = vector.load %arg3[%c14, %c0_80, %c0_81] : memref<16x128x128xbf16, #tpu.memory_space<vmem>>, vector<1x128x128xbf16>
    %70 = vector.shape_cast %69 : vector<1x128x128xbf16> to vector<128x128xbf16>
    %cst_82 = arith.constant dense<0.000000e+00> : vector<20x128xf32>
    %71 = tpu.matmul %68, %70, %cst_82 {dimension_numbers = #tpu.dot_dimension_numbers<[1], [0], [0], [1], [0, 0, 1, 1], [], []>} : vector<20x128xbf16>, vector<128x128xbf16>, vector<20x128xf32> -> vector<20x128xf32>
    %72 = arith.addf %66, %71 : vector<20x128xf32>
    %c0_83 = arith.constant 0 : index
    %c3_84 = arith.constant 3 : index
    %c0_85 = arith.constant 0 : index
    %c0_86 = arith.constant 0 : index
    %73 = vector.load %arg2[%c0_83, %c3_84, %c0_85, %c0_86] : memref<1x4x30x128xbf16, #tpu.memory_space<vmem>>, vector<1x1x20x128xbf16>
    %74 = vector.shape_cast %73 : vector<1x1x20x128xbf16> to vector<20x128xbf16>
    %c5_87 = arith.constant 5 : index
    %c0_88 = arith.constant 0 : index
    %c0_89 = arith.constant 0 : index
    %75 = vector.load %arg3[%c5_87, %c0_88, %c0_89] : memref<16x128x128xbf16, #tpu.memory_space<vmem>>, vector<1x128x128xbf16>
    %76 = vector.shape_cast %75 : vector<1x128x128xbf16> to vector<128x128xbf16>
    %cst_90 = arith.constant dense<0.000000e+00> : vector<20x128xf32>
    %77 = tpu.matmul %74, %76, %cst_90 {dimension_numbers = #tpu.dot_dimension_numbers<[1], [0], [0], [1], [0, 0, 1, 1], [], []>} : vector<20x128xbf16>, vector<128x128xbf16>, vector<20x128xf32> -> vector<20x128xf32>
    %78 = arith.addf %72, %77 : vector<20x128xf32>
    %c0_91 = arith.constant 0 : index
    %c3_92 = arith.constant 3 : index
    %c1_93 = arith.constant 1 : index
    %c0_94 = arith.constant 0 : index
    %79 = vector.load %arg2[%c0_91, %c3_92, %c1_93, %c0_94] : memref<1x4x30x128xbf16, #tpu.memory_space<vmem>>, vector<1x1x20x128xbf16>
    %80 = vector.shape_cast %79 : vector<1x1x20x128xbf16> to vector<20x128xbf16>
    %c7 = arith.constant 7 : index
    %c0_95 = arith.constant 0 : index
    %c0_96 = arith.constant 0 : index
    %81 = vector.load %arg3[%c7, %c0_95, %c0_96] : memref<16x128x128xbf16, #tpu.memory_space<vmem>>, vector<1x128x128xbf16>
    %82 = vector.shape_cast %81 : vector<1x128x128xbf16> to vector<128x128xbf16>
    %cst_97 = arith.constant dense<0.000000e+00> : vector<20x128xf32>
    %83 = tpu.matmul %80, %82, %cst_97 {dimension_numbers = #tpu.dot_dimension_numbers<[1], [0], [0], [1], [0, 0, 1, 1], [], []>} : vector<20x128xbf16>, vector<128x128xbf16>, vector<20x128xf32> -> vector<20x128xf32>
    %84 = arith.addf %78, %83 : vector<20x128xf32>
    %c0_98 = arith.constant 0 : index
    %c3_99 = arith.constant 3 : index
    %c5_100 = arith.constant 5 : index
    %c0_101 = arith.constant 0 : index
    %85 = vector.load %arg2[%c0_98, %c3_99, %c5_100, %c0_101] : memref<1x4x30x128xbf16, #tpu.memory_space<vmem>>, vector<1x1x20x128xbf16>
    %86 = vector.shape_cast %85 : vector<1x1x20x128xbf16> to vector<20x128xbf16>
    %c13 = arith.constant 13 : index
    %c0_102 = arith.constant 0 : index
    %c0_103 = arith.constant 0 : index
    %87 = vector.load %arg3[%c13, %c0_102, %c0_103] : memref<16x128x128xbf16, #tpu.memory_space<vmem>>, vector<1x128x128xbf16>
    %88 = vector.shape_cast %87 : vector<1x128x128xbf16> to vector<128x128xbf16>
    %cst_104 = arith.constant dense<0.000000e+00> : vector<20x128xf32>
    %89 = tpu.matmul %86, %88, %cst_104 {dimension_numbers = #tpu.dot_dimension_numbers<[1], [0], [0], [1], [0, 0, 1, 1], [], []>} : vector<20x128xbf16>, vector<128x128xbf16>, vector<20x128xf32> -> vector<20x128xf32>
    %90 = arith.addf %84, %89 : vector<20x128xf32>
    %c0_105 = arith.constant 0 : index
    %c3_106 = arith.constant 3 : index
    %c6_107 = arith.constant 6 : index
    %c0_108 = arith.constant 0 : index
    %91 = vector.load %arg2[%c0_105, %c3_106, %c6_107, %c0_108] : memref<1x4x30x128xbf16, #tpu.memory_space<vmem>>, vector<1x1x20x128xbf16>
    %92 = vector.shape_cast %91 : vector<1x1x20x128xbf16> to vector<20x128xbf16>
    %c15 = arith.constant 15 : index
    %c0_109 = arith.constant 0 : index
    %c0_110 = arith.constant 0 : index
    %93 = vector.load %arg3[%c15, %c0_109, %c0_110] : memref<16x128x128xbf16, #tpu.memory_space<vmem>>, vector<1x128x128xbf16>
    %94 = vector.shape_cast %93 : vector<1x128x128xbf16> to vector<128x128xbf16>
    %cst_111 = arith.constant dense<0.000000e+00> : vector<20x128xf32>
    %95 = tpu.matmul %92, %94, %cst_111 {dimension_numbers = #tpu.dot_dimension_numbers<[1], [0], [0], [1], [0, 0, 1, 1], [], []>} : vector<20x128xbf16>, vector<128x128xbf16>, vector<20x128xf32> -> vector<20x128xf32>
    %96 = arith.addf %90, %95 : vector<20x128xf32>
    %c0_112 = arith.constant 0 : index
    %c0_113 = arith.constant 0 : index
    %97 = vector.load %arg4[%c0_112, %c0_113] : memref<1x128xf32, #tpu.memory_space<vmem>>, vector<1x128xf32>
    %98 = vector.broadcast %97 : vector<1x128xf32> to vector<20x128xf32>
    %99 = arith.addf %96, %98 : vector<20x128xf32>
    %cst_114 = arith.constant 0.000000e+00 : f32
    %100 = vector.broadcast %cst_114 : f32 to vector<20x128xf32>
    %101 = arith.cmpf oge, %99, %100 : vector<20x128xf32>
    %cst_115 = arith.constant 0.00999999977 : f32
    %102 = vector.broadcast %cst_115 : f32 to vector<20x128xf32>
    %103 = arith.mulf %102, %99 : vector<20x128xf32>
    %104 = arith.select %101, %99, %103 : vector<20x128xi1>, vector<20x128xf32>
    %105 = arith.truncf %104 : vector<20x128xf32> to vector<20x128xbf16>
    %c0_116 = arith.constant 0 : index
    %c0_117 = arith.constant 0 : index
    %c0_118 = arith.constant 0 : index
    %106 = vector.load %arg5[%c0_116, %c0_117, %c0_118] : memref<1x20x128xbf16, #tpu.memory_space<vmem>>, vector<1x20x128xbf16>
    %107 = vector.shape_cast %106 : vector<1x20x128xbf16> to vector<20x128xbf16>
    %108 = vector.shape_cast %105 : vector<20x128xbf16> to vector<1x20x128xbf16>
    tpu.vector_store %arg5[%c0_116, %c0_117, %c0_118], %108 {strides = array<i32>} : memref<1x20x128xbf16, #tpu.memory_space<vmem>>, vector<1x20x128xbf16>,
    return
  }
  func.func @transform_0(%arg0: i32, %arg1: i32) -> (i32, i32, i32, i32) {
    %c0_i32 = arith.constant 0 : i32
    %c0_i32_0 = arith.constant 0 : i32
    %c0_i32_1 = arith.constant 0 : i32
    %c0_i32_2 = arith.constant 0 : i32
    return %arg1, %c0_i32, %c0_i32_0, %c0_i32_1 : i32, i32, i32, i32
  }
  func.func @transform_1(%arg0: i32, %arg1: i32) -> (i32, i32, i32) {
    %c0_i32 = arith.constant 0 : i32
    %c0_i32_0 = arith.constant 0 : i32
    %c0_i32_1 = arith.constant 0 : i32
    return %c0_i32, %c0_i32_0, %arg0 : i32, i32, i32
  }
  func.func @transform_2(%arg0: i32, %arg1: i32) -> (i32, i32) {
    %c0_i32 = arith.constant 0 : i32
    %c0_i32_0 = arith.constant 0 : i32
    return %c0_i32, %arg0 : i32, i32
  }
  func.func @transform_3(%arg0: i32, %arg1: i32) -> (i32, i32, i32) {
    %c0_i32 = arith.constant 0 : i32
    %c0_i32_0 = arith.constant 0 : i32
    return %arg1, %c0_i32, %arg0 : i32, i32, i32
  }
}

module attributes {stable_mosaic.version = 11 : i64} {
  func.func @_direct_conv_kernel(%arg0: i32, %arg1: i32, %arg2: memref<1x4x12x128xbf16, #tpu.memory_space<vmem>>, %arg3: memref<16x128x256xbf16, #tpu.memory_space<vmem>>, %arg4: memref<1x256xf32, #tpu.memory_space<vmem>>, %arg5: memref<1x6x256xbf16, #tpu.memory_space<vmem>>) attributes {dimension_semantics = [#tpu.dimension_semantics<parallel>, #tpu.dimension_semantics<parallel>], iteration_bounds = array<i64: 1, 2>, scalar_prefetch = 0 : i64, scratch_operands = 0 : i64, tpu.core_type = #tpu.core_type<tc>, window_params = [{transform_indices = @transform_0, window_bounds = array<i64: 1, 4, 12, 128>}, {transform_indices = @transform_1, window_bounds = array<i64: 16, 128, 256>}, {transform_indices = @transform_2, window_bounds = array<i64: 1, 256>}, {transform_indices = @transform_3, window_bounds = array<i64: 1, 6, 256>}]} {
    %cst = arith.constant 0.000000e+00 : f32
    %0 = vector.broadcast %cst : f32 to vector<6x256xf32>
    %c0 = arith.constant 0 : index
    %c0_0 = arith.constant 0 : index
    %c0_1 = arith.constant 0 : index
    %c0_2 = arith.constant 0 : index
    %1 = vector.load %arg2[%c0, %c0_0, %c0_1, %c0_2] : memref<1x4x12x128xbf16, #tpu.memory_space<vmem>>, vector<1x1x6x128xbf16>
    %2 = vector.shape_cast %1 : vector<1x1x6x128xbf16> to vector<6x128xbf16>
    %c0_3 = arith.constant 0 : index
    %c0_4 = arith.constant 0 : index
    %c0_5 = arith.constant 0 : index
    %3 = vector.load %arg3[%c0_3, %c0_4, %c0_5] : memref<16x128x256xbf16, #tpu.memory_space<vmem>>, vector<1x128x256xbf16>
    %4 = vector.shape_cast %3 : vector<1x128x256xbf16> to vector<128x256xbf16>
    %cst_6 = arith.constant dense<0.000000e+00> : vector<6x256xf32>
    %5 = tpu.matmul %2, %4, %cst_6 {dimension_numbers = #tpu.dot_dimension_numbers<[1], [0], [0], [1], [0, 0, 1, 1], [], []>} : vector<6x128xbf16>, vector<128x256xbf16>, vector<6x256xf32> -> vector<6x256xf32>
    %6 = arith.addf %0, %5 : vector<6x256xf32>
    %c0_7 = arith.constant 0 : index
    %c0_8 = arith.constant 0 : index
    %c1 = arith.constant 1 : index
    %c0_9 = arith.constant 0 : index
    %7 = vector.load %arg2[%c0_7, %c0_8, %c1, %c0_9] : memref<1x4x12x128xbf16, #tpu.memory_space<vmem>>, vector<1x1x6x128xbf16>
    %8 = vector.shape_cast %7 : vector<1x1x6x128xbf16> to vector<6x128xbf16>
    %c2 = arith.constant 2 : index
    %c0_10 = arith.constant 0 : index
    %c0_11 = arith.constant 0 : index
    %9 = vector.load %arg3[%c2, %c0_10, %c0_11] : memref<16x128x256xbf16, #tpu.memory_space<vmem>>, vector<1x128x256xbf16>
    %10 = vector.shape_cast %9 : vector<1x128x256xbf16> to vector<128x256xbf16>
    %cst_12 = arith.constant dense<0.000000e+00> : vector<6x256xf32>
    %11 = tpu.matmul %8, %10, %cst_12 {dimension_numbers = #tpu.dot_dimension_numbers<[1], [0], [0], [1], [0, 0, 1, 1], [], []>} : vector<6x128xbf16>, vector<128x256xbf16>, vector<6x256xf32> -> vector<6x256xf32>
    %12 = arith.addf %6, %11 : vector<6x256xf32>
    %c0_13 = arith.constant 0 : index
    %c0_14 = arith.constant 0 : index
    %c3 = arith.constant 3 : index
    %c0_15 = arith.constant 0 : index
    %13 = vector.load %arg2[%c0_13, %c0_14, %c3, %c0_15] : memref<1x4x12x128xbf16, #tpu.memory_space<vmem>>, vector<1x1x6x128xbf16>
    %14 = vector.shape_cast %13 : vector<1x1x6x128xbf16> to vector<6x128xbf16>
    %c8 = arith.constant 8 : index
    %c0_16 = arith.constant 0 : index
    %c0_17 = arith.constant 0 : index
    %15 = vector.load %arg3[%c8, %c0_16, %c0_17] : memref<16x128x256xbf16, #tpu.memory_space<vmem>>, vector<1x128x256xbf16>
    %16 = vector.shape_cast %15 : vector<1x128x256xbf16> to vector<128x256xbf16>
    %cst_18 = arith.constant dense<0.000000e+00> : vector<6x256xf32>
    %17 = tpu.matmul %14, %16, %cst_18 {dimension_numbers = #tpu.dot_dimension_numbers<[1], [0], [0], [1], [0, 0, 1, 1], [], []>} : vector<6x128xbf16>, vector<128x256xbf16>, vector<6x256xf32> -> vector<6x256xf32>
    %18 = arith.addf %12, %17 : vector<6x256xf32>
    %c0_19 = arith.constant 0 : index
    %c0_20 = arith.constant 0 : index
    %c4 = arith.constant 4 : index
    %c0_21 = arith.constant 0 : index
    %19 = vector.load %arg2[%c0_19, %c0_20, %c4, %c0_21] : memref<1x4x12x128xbf16, #tpu.memory_space<vmem>>, vector<1x1x6x128xbf16>
    %20 = vector.shape_cast %19 : vector<1x1x6x128xbf16> to vector<6x128xbf16>
    %c10 = arith.constant 10 : index
    %c0_22 = arith.constant 0 : index
    %c0_23 = arith.constant 0 : index
    %21 = vector.load %arg3[%c10, %c0_22, %c0_23] : memref<16x128x256xbf16, #tpu.memory_space<vmem>>, vector<1x128x256xbf16>
    %22 = vector.shape_cast %21 : vector<1x128x256xbf16> to vector<128x256xbf16>
    %cst_24 = arith.constant dense<0.000000e+00> : vector<6x256xf32>
    %23 = tpu.matmul %20, %22, %cst_24 {dimension_numbers = #tpu.dot_dimension_numbers<[1], [0], [0], [1], [0, 0, 1, 1], [], []>} : vector<6x128xbf16>, vector<128x256xbf16>, vector<6x256xf32> -> vector<6x256xf32>
    %24 = arith.addf %18, %23 : vector<6x256xf32>
    %c0_25 = arith.constant 0 : index
    %c1_26 = arith.constant 1 : index
    %c0_27 = arith.constant 0 : index
    %c0_28 = arith.constant 0 : index
    %25 = vector.load %arg2[%c0_25, %c1_26, %c0_27, %c0_28] : memref<1x4x12x128xbf16, #tpu.memory_space<vmem>>, vector<1x1x6x128xbf16>
    %26 = vector.shape_cast %25 : vector<1x1x6x128xbf16> to vector<6x128xbf16>
    %c1_29 = arith.constant 1 : index
    %c0_30 = arith.constant 0 : index
    %c0_31 = arith.constant 0 : index
    %27 = vector.load %arg3[%c1_29, %c0_30, %c0_31] : memref<16x128x256xbf16, #tpu.memory_space<vmem>>, vector<1x128x256xbf16>
    %28 = vector.shape_cast %27 : vector<1x128x256xbf16> to vector<128x256xbf16>
    %cst_32 = arith.constant dense<0.000000e+00> : vector<6x256xf32>
    %29 = tpu.matmul %26, %28, %cst_32 {dimension_numbers = #tpu.dot_dimension_numbers<[1], [0], [0], [1], [0, 0, 1, 1], [], []>} : vector<6x128xbf16>, vector<128x256xbf16>, vector<6x256xf32> -> vector<6x256xf32>
    %30 = arith.addf %24, %29 : vector<6x256xf32>
    %c0_33 = arith.constant 0 : index
    %c1_34 = arith.constant 1 : index
    %c1_35 = arith.constant 1 : index
    %c0_36 = arith.constant 0 : index
    %31 = vector.load %arg2[%c0_33, %c1_34, %c1_35, %c0_36] : memref<1x4x12x128xbf16, #tpu.memory_space<vmem>>, vector<1x1x6x128xbf16>
    %32 = vector.shape_cast %31 : vector<1x1x6x128xbf16> to vector<6x128xbf16>
    %c3_37 = arith.constant 3 : index
    %c0_38 = arith.constant 0 : index
    %c0_39 = arith.constant 0 : index
    %33 = vector.load %arg3[%c3_37, %c0_38, %c0_39] : memref<16x128x256xbf16, #tpu.memory_space<vmem>>, vector<1x128x256xbf16>
    %34 = vector.shape_cast %33 : vector<1x128x256xbf16> to vector<128x256xbf16>
    %cst_40 = arith.constant dense<0.000000e+00> : vector<6x256xf32>
    %35 = tpu.matmul %32, %34, %cst_40 {dimension_numbers = #tpu.dot_dimension_numbers<[1], [0], [0], [1], [0, 0, 1, 1], [], []>} : vector<6x128xbf16>, vector<128x256xbf16>, vector<6x256xf32> -> vector<6x256xf32>
    %36 = arith.addf %30, %35 : vector<6x256xf32>
    %c0_41 = arith.constant 0 : index
    %c1_42 = arith.constant 1 : index
    %c3_43 = arith.constant 3 : index
    %c0_44 = arith.constant 0 : index
    %37 = vector.load %arg2[%c0_41, %c1_42, %c3_43, %c0_44] : memref<1x4x12x128xbf16, #tpu.memory_space<vmem>>, vector<1x1x6x128xbf16>
    %38 = vector.shape_cast %37 : vector<1x1x6x128xbf16> to vector<6x128xbf16>
    %c9 = arith.constant 9 : index
    %c0_45 = arith.constant 0 : index
    %c0_46 = arith.constant 0 : index
    %39 = vector.load %arg3[%c9, %c0_45, %c0_46] : memref<16x128x256xbf16, #tpu.memory_space<vmem>>, vector<1x128x256xbf16>
    %40 = vector.shape_cast %39 : vector<1x128x256xbf16> to vector<128x256xbf16>
    %cst_47 = arith.constant dense<0.000000e+00> : vector<6x256xf32>
    %41 = tpu.matmul %38, %40, %cst_47 {dimension_numbers = #tpu.dot_dimension_numbers<[1], [0], [0], [1], [0, 0, 1, 1], [], []>} : vector<6x128xbf16>, vector<128x256xbf16>, vector<6x256xf32> -> vector<6x256xf32>
    %42 = arith.addf %36, %41 : vector<6x256xf32>
    %c0_48 = arith.constant 0 : index
    %c1_49 = arith.constant 1 : index
    %c4_50 = arith.constant 4 : index
    %c0_51 = arith.constant 0 : index
    %43 = vector.load %arg2[%c0_48, %c1_49, %c4_50, %c0_51] : memref<1x4x12x128xbf16, #tpu.memory_space<vmem>>, vector<1x1x6x128xbf16>
    %44 = vector.shape_cast %43 : vector<1x1x6x128xbf16> to vector<6x128xbf16>
    %c11 = arith.constant 11 : index
    %c0_52 = arith.constant 0 : index
    %c0_53 = arith.constant 0 : index
    %45 = vector.load %arg3[%c11, %c0_52, %c0_53] : memref<16x128x256xbf16, #tpu.memory_space<vmem>>, vector<1x128x256xbf16>
    %46 = vector.shape_cast %45 : vector<1x128x256xbf16> to vector<128x256xbf16>
    %cst_54 = arith.constant dense<0.000000e+00> : vector<6x256xf32>
    %47 = tpu.matmul %44, %46, %cst_54 {dimension_numbers = #tpu.dot_dimension_numbers<[1], [0], [0], [1], [0, 0, 1, 1], [], []>} : vector<6x128xbf16>, vector<128x256xbf16>, vector<6x256xf32> -> vector<6x256xf32>
    %48 = arith.addf %42, %47 : vector<6x256xf32>
    %c0_55 = arith.constant 0 : index
    %c2_56 = arith.constant 2 : index
    %c0_57 = arith.constant 0 : index
    %c0_58 = arith.constant 0 : index
    %49 = vector.load %arg2[%c0_55, %c2_56, %c0_57, %c0_58] : memref<1x4x12x128xbf16, #tpu.memory_space<vmem>>, vector<1x1x6x128xbf16>
    %50 = vector.shape_cast %49 : vector<1x1x6x128xbf16> to vector<6x128xbf16>
    %c4_59 = arith.constant 4 : index
    %c0_60 = arith.constant 0 : index
    %c0_61 = arith.constant 0 : index
    %51 = vector.load %arg3[%c4_59, %c0_60, %c0_61] : memref<16x128x256xbf16, #tpu.memory_space<vmem>>, vector<1x128x256xbf16>
    %52 = vector.shape_cast %51 : vector<1x128x256xbf16> to vector<128x256xbf16>
    %cst_62 = arith.constant dense<0.000000e+00> : vector<6x256xf32>
    %53 = tpu.matmul %50, %52, %cst_62 {dimension_numbers = #tpu.dot_dimension_numbers<[1], [0], [0], [1], [0, 0, 1, 1], [], []>} : vector<6x128xbf16>, vector<128x256xbf16>, vector<6x256xf32> -> vector<6x256xf32>
    %54 = arith.addf %48, %53 : vector<6x256xf32>
    %c0_63 = arith.constant 0 : index
    %c2_64 = arith.constant 2 : index
    %c1_65 = arith.constant 1 : index
    %c0_66 = arith.constant 0 : index
    %55 = vector.load %arg2[%c0_63, %c2_64, %c1_65, %c0_66] : memref<1x4x12x128xbf16, #tpu.memory_space<vmem>>, vector<1x1x6x128xbf16>
    %56 = vector.shape_cast %55 : vector<1x1x6x128xbf16> to vector<6x128xbf16>
    %c6 = arith.constant 6 : index
    %c0_67 = arith.constant 0 : index
    %c0_68 = arith.constant 0 : index
    %57 = vector.load %arg3[%c6, %c0_67, %c0_68] : memref<16x128x256xbf16, #tpu.memory_space<vmem>>, vector<1x128x256xbf16>
    %58 = vector.shape_cast %57 : vector<1x128x256xbf16> to vector<128x256xbf16>
    %cst_69 = arith.constant dense<0.000000e+00> : vector<6x256xf32>
    %59 = tpu.matmul %56, %58, %cst_69 {dimension_numbers = #tpu.dot_dimension_numbers<[1], [0], [0], [1], [0, 0, 1, 1], [], []>} : vector<6x128xbf16>, vector<128x256xbf16>, vector<6x256xf32> -> vector<6x256xf32>
    %60 = arith.addf %54, %59 : vector<6x256xf32>
    %c0_70 = arith.constant 0 : index
    %c2_71 = arith.constant 2 : index
    %c3_72 = arith.constant 3 : index
    %c0_73 = arith.constant 0 : index
    %61 = vector.load %arg2[%c0_70, %c2_71, %c3_72, %c0_73] : memref<1x4x12x128xbf16, #tpu.memory_space<vmem>>, vector<1x1x6x128xbf16>
    %62 = vector.shape_cast %61 : vector<1x1x6x128xbf16> to vector<6x128xbf16>
    %c12 = arith.constant 12 : index
    %c0_74 = arith.constant 0 : index
    %c0_75 = arith.constant 0 : index
    %63 = vector.load %arg3[%c12, %c0_74, %c0_75] : memref<16x128x256xbf16, #tpu.memory_space<vmem>>, vector<1x128x256xbf16>
    %64 = vector.shape_cast %63 : vector<1x128x256xbf16> to vector<128x256xbf16>
    %cst_76 = arith.constant dense<0.000000e+00> : vector<6x256xf32>
    %65 = tpu.matmul %62, %64, %cst_76 {dimension_numbers = #tpu.dot_dimension_numbers<[1], [0], [0], [1], [0, 0, 1, 1], [], []>} : vector<6x128xbf16>, vector<128x256xbf16>, vector<6x256xf32> -> vector<6x256xf32>
    %66 = arith.addf %60, %65 : vector<6x256xf32>
    %c0_77 = arith.constant 0 : index
    %c2_78 = arith.constant 2 : index
    %c4_79 = arith.constant 4 : index
    %c0_80 = arith.constant 0 : index
    %67 = vector.load %arg2[%c0_77, %c2_78, %c4_79, %c0_80] : memref<1x4x12x128xbf16, #tpu.memory_space<vmem>>, vector<1x1x6x128xbf16>
    %68 = vector.shape_cast %67 : vector<1x1x6x128xbf16> to vector<6x128xbf16>
    %c14 = arith.constant 14 : index
    %c0_81 = arith.constant 0 : index
    %c0_82 = arith.constant 0 : index
    %69 = vector.load %arg3[%c14, %c0_81, %c0_82] : memref<16x128x256xbf16, #tpu.memory_space<vmem>>, vector<1x128x256xbf16>
    %70 = vector.shape_cast %69 : vector<1x128x256xbf16> to vector<128x256xbf16>
    %cst_83 = arith.constant dense<0.000000e+00> : vector<6x256xf32>
    %71 = tpu.matmul %68, %70, %cst_83 {dimension_numbers = #tpu.dot_dimension_numbers<[1], [0], [0], [1], [0, 0, 1, 1], [], []>} : vector<6x128xbf16>, vector<128x256xbf16>, vector<6x256xf32> -> vector<6x256xf32>
    %72 = arith.addf %66, %71 : vector<6x256xf32>
    %c0_84 = arith.constant 0 : index
    %c3_85 = arith.constant 3 : index
    %c0_86 = arith.constant 0 : index
    %c0_87 = arith.constant 0 : index
    %73 = vector.load %arg2[%c0_84, %c3_85, %c0_86, %c0_87] : memref<1x4x12x128xbf16, #tpu.memory_space<vmem>>, vector<1x1x6x128xbf16>
    %74 = vector.shape_cast %73 : vector<1x1x6x128xbf16> to vector<6x128xbf16>
    %c5 = arith.constant 5 : index
    %c0_88 = arith.constant 0 : index
    %c0_89 = arith.constant 0 : index
    %75 = vector.load %arg3[%c5, %c0_88, %c0_89] : memref<16x128x256xbf16, #tpu.memory_space<vmem>>, vector<1x128x256xbf16>
    %76 = vector.shape_cast %75 : vector<1x128x256xbf16> to vector<128x256xbf16>
    %cst_90 = arith.constant dense<0.000000e+00> : vector<6x256xf32>
    %77 = tpu.matmul %74, %76, %cst_90 {dimension_numbers = #tpu.dot_dimension_numbers<[1], [0], [0], [1], [0, 0, 1, 1], [], []>} : vector<6x128xbf16>, vector<128x256xbf16>, vector<6x256xf32> -> vector<6x256xf32>
    %78 = arith.addf %72, %77 : vector<6x256xf32>
    %c0_91 = arith.constant 0 : index
    %c3_92 = arith.constant 3 : index
    %c1_93 = arith.constant 1 : index
    %c0_94 = arith.constant 0 : index
    %79 = vector.load %arg2[%c0_91, %c3_92, %c1_93, %c0_94] : memref<1x4x12x128xbf16, #tpu.memory_space<vmem>>, vector<1x1x6x128xbf16>
    %80 = vector.shape_cast %79 : vector<1x1x6x128xbf16> to vector<6x128xbf16>
    %c7 = arith.constant 7 : index
    %c0_95 = arith.constant 0 : index
    %c0_96 = arith.constant 0 : index
    %81 = vector.load %arg3[%c7, %c0_95, %c0_96] : memref<16x128x256xbf16, #tpu.memory_space<vmem>>, vector<1x128x256xbf16>
    %82 = vector.shape_cast %81 : vector<1x128x256xbf16> to vector<128x256xbf16>
    %cst_97 = arith.constant dense<0.000000e+00> : vector<6x256xf32>
    %83 = tpu.matmul %80, %82, %cst_97 {dimension_numbers = #tpu.dot_dimension_numbers<[1], [0], [0], [1], [0, 0, 1, 1], [], []>} : vector<6x128xbf16>, vector<128x256xbf16>, vector<6x256xf32> -> vector<6x256xf32>
    %84 = arith.addf %78, %83 : vector<6x256xf32>
    %c0_98 = arith.constant 0 : index
    %c3_99 = arith.constant 3 : index
    %c3_100 = arith.constant 3 : index
    %c0_101 = arith.constant 0 : index
    %85 = vector.load %arg2[%c0_98, %c3_99, %c3_100, %c0_101] : memref<1x4x12x128xbf16, #tpu.memory_space<vmem>>, vector<1x1x6x128xbf16>
    %86 = vector.shape_cast %85 : vector<1x1x6x128xbf16> to vector<6x128xbf16>
    %c13 = arith.constant 13 : index
    %c0_102 = arith.constant 0 : index
    %c0_103 = arith.constant 0 : index
    %87 = vector.load %arg3[%c13, %c0_102, %c0_103] : memref<16x128x256xbf16, #tpu.memory_space<vmem>>, vector<1x128x256xbf16>
    %88 = vector.shape_cast %87 : vector<1x128x256xbf16> to vector<128x256xbf16>
    %cst_104 = arith.constant dense<0.000000e+00> : vector<6x256xf32>
    %89 = tpu.matmul %86, %88, %cst_104 {dimension_numbers = #tpu.dot_dimension_numbers<[1], [0], [0], [1], [0, 0, 1, 1], [], []>} : vector<6x128xbf16>, vector<128x256xbf16>, vector<6x256xf32> -> vector<6x256xf32>
    %90 = arith.addf %84, %89 : vector<6x256xf32>
    %c0_105 = arith.constant 0 : index
    %c3_106 = arith.constant 3 : index
    %c4_107 = arith.constant 4 : index
    %c0_108 = arith.constant 0 : index
    %91 = vector.load %arg2[%c0_105, %c3_106, %c4_107, %c0_108] : memref<1x4x12x128xbf16, #tpu.memory_space<vmem>>, vector<1x1x6x128xbf16>
    %92 = vector.shape_cast %91 : vector<1x1x6x128xbf16> to vector<6x128xbf16>
    %c15 = arith.constant 15 : index
    %c0_109 = arith.constant 0 : index
    %c0_110 = arith.constant 0 : index
    %93 = vector.load %arg3[%c15, %c0_109, %c0_110] : memref<16x128x256xbf16, #tpu.memory_space<vmem>>, vector<1x128x256xbf16>
    %94 = vector.shape_cast %93 : vector<1x128x256xbf16> to vector<128x256xbf16>
    %cst_111 = arith.constant dense<0.000000e+00> : vector<6x256xf32>
    %95 = tpu.matmul %92, %94, %cst_111 {dimension_numbers = #tpu.dot_dimension_numbers<[1], [0], [0], [1], [0, 0, 1, 1], [], []>} : vector<6x128xbf16>, vector<128x256xbf16>, vector<6x256xf32> -> vector<6x256xf32>
    %96 = arith.addf %90, %95 : vector<6x256xf32>
    %c0_112 = arith.constant 0 : index
    %c0_113 = arith.constant 0 : index
    %97 = vector.load %arg4[%c0_112, %c0_113] : memref<1x256xf32, #tpu.memory_space<vmem>>, vector<1x256xf32>
    %98 = vector.broadcast %97 : vector<1x256xf32> to vector<6x256xf32>
    %99 = arith.addf %96, %98 : vector<6x256xf32>
    %cst_114 = arith.constant 0.000000e+00 : f32
    %100 = vector.broadcast %cst_114 : f32 to vector<6x256xf32>
    %101 = arith.cmpf oge, %99, %100 : vector<6x256xf32>
    %cst_115 = arith.constant 0.00999999977 : f32
    %102 = vector.broadcast %cst_115 : f32 to vector<6x256xf32>
    %103 = arith.mulf %102, %99 : vector<6x256xf32>
    %104 = arith.select %101, %99, %103 : vector<6x256xi1>, vector<6x256xf32>
    %105 = arith.truncf %104 : vector<6x256xf32> to vector<6x256xbf16>
    %c0_116 = arith.constant 0 : index
    %c0_117 = arith.constant 0 : index
    %c0_118 = arith.constant 0 : index
    %106 = vector.load %arg5[%c0_116, %c0_117, %c0_118] : memref<1x6x256xbf16, #tpu.memory_space<vmem>>, vector<1x6x256xbf16>
    %107 = vector.shape_cast %106 : vector<1x6x256xbf16> to vector<6x256xbf16>
    %108 = vector.shape_cast %105 : vector<6x256xbf16> to vector<1x6x256xbf16>
    tpu.vector_store %arg5[%c0_116, %c0_117, %c0_118], %108 {strides = array<i32>} : memref<1x6x256xbf16, #tpu.memory_space<vmem>>, vector<1x6x256xbf16>,
    return
  }
  func.func @transform_0(%arg0: i32, %arg1: i32) -> (i32, i32, i32, i32) {
    %c0_i32 = arith.constant 0 : i32
    %c0_i32_0 = arith.constant 0 : i32
    %c0_i32_1 = arith.constant 0 : i32
    %c0_i32_2 = arith.constant 0 : i32
    return %arg1, %c0_i32, %c0_i32_0, %c0_i32_1 : i32, i32, i32, i32
  }
  func.func @transform_1(%arg0: i32, %arg1: i32) -> (i32, i32, i32) {
    %c0_i32 = arith.constant 0 : i32
    %c0_i32_0 = arith.constant 0 : i32
    %c0_i32_1 = arith.constant 0 : i32
    return %c0_i32, %c0_i32_0, %arg0 : i32, i32, i32
  }
  func.func @transform_2(%arg0: i32, %arg1: i32) -> (i32, i32) {
    %c0_i32 = arith.constant 0 : i32
    %c0_i32_0 = arith.constant 0 : i32
    return %c0_i32, %arg0 : i32, i32
  }
  func.func @transform_3(%arg0: i32, %arg1: i32) -> (i32, i32, i32) {
    %c0_i32 = arith.constant 0 : i32
    %c0_i32_0 = arith.constant 0 : i32
    return %arg1, %c0_i32, %arg0 : i32, i32, i32
  }
}

module attributes {stable_mosaic.version = 11 : i64} {
  func.func @_direct_conv_kernel(%arg0: i32, %arg1: i32, %arg2: memref<1x1x2x1024xbf16, #tpu.memory_space<vmem>>, %arg3: memref<1x1024x128xbf16, #tpu.memory_space<vmem>>, %arg4: memref<1x128xf32, #tpu.memory_space<vmem>>, %arg5: memref<1x2x128xf32, #tpu.memory_space<vmem>>) attributes {dimension_semantics = [#tpu.dimension_semantics<parallel>, #tpu.dimension_semantics<parallel>], iteration_bounds = array<i64: 1, 1>, scalar_prefetch = 0 : i64, scratch_operands = 0 : i64, tpu.core_type = #tpu.core_type<tc>, window_params = [{transform_indices = @transform_0, window_bounds = array<i64: 1, 1, 2, 1024>}, {transform_indices = @transform_1, window_bounds = array<i64: 1, 1024, 128>}, {transform_indices = @transform_2, window_bounds = array<i64: 1, 128>}, {transform_indices = @transform_3, window_bounds = array<i64: 1, 2, 128>}]} {
    %cst = arith.constant 0.000000e+00 : f32
    %0 = vector.broadcast %cst : f32 to vector<2x128xf32>
    %c0 = arith.constant 0 : index
    %c0_0 = arith.constant 0 : index
    %c0_1 = arith.constant 0 : index
    %c0_2 = arith.constant 0 : index
    %1 = vector.load %arg2[%c0, %c0_0, %c0_1, %c0_2] : memref<1x1x2x1024xbf16, #tpu.memory_space<vmem>>, vector<1x1x2x1024xbf16>
    %2 = vector.shape_cast %1 : vector<1x1x2x1024xbf16> to vector<2x1024xbf16>
    %c0_3 = arith.constant 0 : index
    %c0_4 = arith.constant 0 : index
    %c0_5 = arith.constant 0 : index
    %3 = vector.load %arg3[%c0_3, %c0_4, %c0_5] : memref<1x1024x128xbf16, #tpu.memory_space<vmem>>, vector<1x1024x128xbf16>
    %4 = vector.shape_cast %3 : vector<1x1024x128xbf16> to vector<1024x128xbf16>
    %cst_6 = arith.constant dense<0.000000e+00> : vector<2x128xf32>
    %5 = tpu.matmul %2, %4, %cst_6 {dimension_numbers = #tpu.dot_dimension_numbers<[1], [0], [0], [1], [0, 0, 1, 1], [], []>} : vector<2x1024xbf16>, vector<1024x128xbf16>, vector<2x128xf32> -> vector<2x128xf32>
    %6 = arith.addf %0, %5 : vector<2x128xf32>
    %c0_7 = arith.constant 0 : index
    %c0_8 = arith.constant 0 : index
    %7 = vector.load %arg4[%c0_7, %c0_8] : memref<1x128xf32, #tpu.memory_space<vmem>>, vector<1x128xf32>
    %8 = vector.broadcast %7 : vector<1x128xf32> to vector<2x128xf32>
    %9 = arith.addf %6, %8 : vector<2x128xf32>
    %c0_9 = arith.constant 0 : index
    %c0_10 = arith.constant 0 : index
    %c0_11 = arith.constant 0 : index
    %10 = vector.load %arg5[%c0_9, %c0_10, %c0_11] : memref<1x2x128xf32, #tpu.memory_space<vmem>>, vector<1x2x128xf32>
    %11 = vector.shape_cast %10 : vector<1x2x128xf32> to vector<2x128xf32>
    %12 = vector.shape_cast %9 : vector<2x128xf32> to vector<1x2x128xf32>
    tpu.vector_store %arg5[%c0_9, %c0_10, %c0_11], %12 {strides = array<i32>} : memref<1x2x128xf32, #tpu.memory_space<vmem>>, vector<1x2x128xf32>,
    return
  }
  func.func @transform_0(%arg0: i32, %arg1: i32) -> (i32, i32, i32, i32) {
    %c0_i32 = arith.constant 0 : i32
    %c0_i32_0 = arith.constant 0 : i32
    %c0_i32_1 = arith.constant 0 : i32
    %c0_i32_2 = arith.constant 0 : i32
    return %arg1, %c0_i32, %c0_i32_0, %c0_i32_1 : i32, i32, i32, i32
  }
  func.func @transform_1(%arg0: i32, %arg1: i32) -> (i32, i32, i32) {
    %c0_i32 = arith.constant 0 : i32
    %c0_i32_0 = arith.constant 0 : i32
    %c0_i32_1 = arith.constant 0 : i32
    return %c0_i32, %c0_i32_0, %arg0 : i32, i32, i32
  }
  func.func @transform_2(%arg0: i32, %arg1: i32) -> (i32, i32) {
    %c0_i32 = arith.constant 0 : i32
    %c0_i32_0 = arith.constant 0 : i32
    return %c0_i32, %arg0 : i32, i32
  }
  func.func @transform_3(%arg0: i32, %arg1: i32) -> (i32, i32, i32) {
    %c0_i32 = arith.constant 0 : i32
    %c0_i32_0 = arith.constant 0 : i32
    return %arg1, %c0_i32, %arg0 : i32, i32, i32
  }
}

module attributes {stable_mosaic.version = 11 : i64} {
  func.func @_direct_conv_kernel(%arg0: i32, %arg1: i32, %arg2: memref<1x1x20x256xbf16, #tpu.memory_space<vmem>>, %arg3: memref<9x256x128xbf16, #tpu.memory_space<vmem>>, %arg4: memref<1x128xf32, #tpu.memory_space<vmem>>, %arg5: memref<1x8x128xf32, #tpu.memory_space<vmem>>) attributes {dimension_semantics = [#tpu.dimension_semantics<parallel>, #tpu.dimension_semantics<parallel>], iteration_bounds = array<i64: 1, 2>, scalar_prefetch = 0 : i64, scratch_operands = 0 : i64, tpu.core_type = #tpu.core_type<tc>, window_params = [{transform_indices = @transform_0, window_bounds = array<i64: 1, 1, 20, 256>}, {transform_indices = @transform_1, window_bounds = array<i64: 9, 256, 128>}, {transform_indices = @transform_2, window_bounds = array<i64: 1, 128>}, {transform_indices = @transform_3, window_bounds = array<i64: 1, 8, 128>}]} {
    %cst = arith.constant 0.000000e+00 : f32
    %0 = vector.broadcast %cst : f32 to vector<8x128xf32>
    %c0 = arith.constant 0 : index
    %c0_0 = arith.constant 0 : index
    %c0_1 = arith.constant 0 : index
    %c0_2 = arith.constant 0 : index
    %1 = vector.load %arg2[%c0, %c0_0, %c0_1, %c0_2] : memref<1x1x20x256xbf16, #tpu.memory_space<vmem>>, vector<1x1x8x256xbf16>
    %2 = vector.shape_cast %1 : vector<1x1x8x256xbf16> to vector<8x256xbf16>
    %c0_3 = arith.constant 0 : index
    %c0_4 = arith.constant 0 : index
    %c0_5 = arith.constant 0 : index
    %3 = vector.load %arg3[%c0_3, %c0_4, %c0_5] : memref<9x256x128xbf16, #tpu.memory_space<vmem>>, vector<1x256x128xbf16>
    %4 = vector.shape_cast %3 : vector<1x256x128xbf16> to vector<256x128xbf16>
    %cst_6 = arith.constant dense<0.000000e+00> : vector<8x128xf32>
    %5 = tpu.matmul %2, %4, %cst_6 {dimension_numbers = #tpu.dot_dimension_numbers<[1], [0], [0], [1], [0, 0, 1, 1], [], []>} : vector<8x256xbf16>, vector<256x128xbf16>, vector<8x128xf32> -> vector<8x128xf32>
    %6 = arith.addf %0, %5 : vector<8x128xf32>
    %c0_7 = arith.constant 0 : index
    %c0_8 = arith.constant 0 : index
    %c1 = arith.constant 1 : index
    %c0_9 = arith.constant 0 : index
    %7 = vector.load %arg2[%c0_7, %c0_8, %c1, %c0_9] : memref<1x1x20x256xbf16, #tpu.memory_space<vmem>>, vector<1x1x8x256xbf16>
    %8 = vector.shape_cast %7 : vector<1x1x8x256xbf16> to vector<8x256xbf16>
    %c1_10 = arith.constant 1 : index
    %c0_11 = arith.constant 0 : index
    %c0_12 = arith.constant 0 : index
    %9 = vector.load %arg3[%c1_10, %c0_11, %c0_12] : memref<9x256x128xbf16, #tpu.memory_space<vmem>>, vector<1x256x128xbf16>
    %10 = vector.shape_cast %9 : vector<1x256x128xbf16> to vector<256x128xbf16>
    %cst_13 = arith.constant dense<0.000000e+00> : vector<8x128xf32>
    %11 = tpu.matmul %8, %10, %cst_13 {dimension_numbers = #tpu.dot_dimension_numbers<[1], [0], [0], [1], [0, 0, 1, 1], [], []>} : vector<8x256xbf16>, vector<256x128xbf16>, vector<8x128xf32> -> vector<8x128xf32>
    %12 = arith.addf %6, %11 : vector<8x128xf32>
    %c0_14 = arith.constant 0 : index
    %c0_15 = arith.constant 0 : index
    %c2 = arith.constant 2 : index
    %c0_16 = arith.constant 0 : index
    %13 = vector.load %arg2[%c0_14, %c0_15, %c2, %c0_16] : memref<1x1x20x256xbf16, #tpu.memory_space<vmem>>, vector<1x1x8x256xbf16>
    %14 = vector.shape_cast %13 : vector<1x1x8x256xbf16> to vector<8x256xbf16>
    %c2_17 = arith.constant 2 : index
    %c0_18 = arith.constant 0 : index
    %c0_19 = arith.constant 0 : index
    %15 = vector.load %arg3[%c2_17, %c0_18, %c0_19] : memref<9x256x128xbf16, #tpu.memory_space<vmem>>, vector<1x256x128xbf16>
    %16 = vector.shape_cast %15 : vector<1x256x128xbf16> to vector<256x128xbf16>
    %cst_20 = arith.constant dense<0.000000e+00> : vector<8x128xf32>
    %17 = tpu.matmul %14, %16, %cst_20 {dimension_numbers = #tpu.dot_dimension_numbers<[1], [0], [0], [1], [0, 0, 1, 1], [], []>} : vector<8x256xbf16>, vector<256x128xbf16>, vector<8x128xf32> -> vector<8x128xf32>
    %18 = arith.addf %12, %17 : vector<8x128xf32>
    %c0_21 = arith.constant 0 : index
    %c0_22 = arith.constant 0 : index
    %c4 = arith.constant 4 : index
    %c0_23 = arith.constant 0 : index
    %19 = vector.load %arg2[%c0_21, %c0_22, %c4, %c0_23] : memref<1x1x20x256xbf16, #tpu.memory_space<vmem>>, vector<1x1x8x256xbf16>
    %20 = vector.shape_cast %19 : vector<1x1x8x256xbf16> to vector<8x256xbf16>
    %c3 = arith.constant 3 : index
    %c0_24 = arith.constant 0 : index
    %c0_25 = arith.constant 0 : index
    %21 = vector.load %arg3[%c3, %c0_24, %c0_25] : memref<9x256x128xbf16, #tpu.memory_space<vmem>>, vector<1x256x128xbf16>
    %22 = vector.shape_cast %21 : vector<1x256x128xbf16> to vector<256x128xbf16>
    %cst_26 = arith.constant dense<0.000000e+00> : vector<8x128xf32>
    %23 = tpu.matmul %20, %22, %cst_26 {dimension_numbers = #tpu.dot_dimension_numbers<[1], [0], [0], [1], [0, 0, 1, 1], [], []>} : vector<8x256xbf16>, vector<256x128xbf16>, vector<8x128xf32> -> vector<8x128xf32>
    %24 = arith.addf %18, %23 : vector<8x128xf32>
    %c0_27 = arith.constant 0 : index
    %c0_28 = arith.constant 0 : index
    %c5 = arith.constant 5 : index
    %c0_29 = arith.constant 0 : index
    %25 = vector.load %arg2[%c0_27, %c0_28, %c5, %c0_29] : memref<1x1x20x256xbf16, #tpu.memory_space<vmem>>, vector<1x1x8x256xbf16>
    %26 = vector.shape_cast %25 : vector<1x1x8x256xbf16> to vector<8x256xbf16>
    %c4_30 = arith.constant 4 : index
    %c0_31 = arith.constant 0 : index
    %c0_32 = arith.constant 0 : index
    %27 = vector.load %arg3[%c4_30, %c0_31, %c0_32] : memref<9x256x128xbf16, #tpu.memory_space<vmem>>, vector<1x256x128xbf16>
    %28 = vector.shape_cast %27 : vector<1x256x128xbf16> to vector<256x128xbf16>
    %cst_33 = arith.constant dense<0.000000e+00> : vector<8x128xf32>
    %29 = tpu.matmul %26, %28, %cst_33 {dimension_numbers = #tpu.dot_dimension_numbers<[1], [0], [0], [1], [0, 0, 1, 1], [], []>} : vector<8x256xbf16>, vector<256x128xbf16>, vector<8x128xf32> -> vector<8x128xf32>
    %30 = arith.addf %24, %29 : vector<8x128xf32>
    %c0_34 = arith.constant 0 : index
    %c0_35 = arith.constant 0 : index
    %c6 = arith.constant 6 : index
    %c0_36 = arith.constant 0 : index
    %31 = vector.load %arg2[%c0_34, %c0_35, %c6, %c0_36] : memref<1x1x20x256xbf16, #tpu.memory_space<vmem>>, vector<1x1x8x256xbf16>
    %32 = vector.shape_cast %31 : vector<1x1x8x256xbf16> to vector<8x256xbf16>
    %c5_37 = arith.constant 5 : index
    %c0_38 = arith.constant 0 : index
    %c0_39 = arith.constant 0 : index
    %33 = vector.load %arg3[%c5_37, %c0_38, %c0_39] : memref<9x256x128xbf16, #tpu.memory_space<vmem>>, vector<1x256x128xbf16>
    %34 = vector.shape_cast %33 : vector<1x256x128xbf16> to vector<256x128xbf16>
    %cst_40 = arith.constant dense<0.000000e+00> : vector<8x128xf32>
    %35 = tpu.matmul %32, %34, %cst_40 {dimension_numbers = #tpu.dot_dimension_numbers<[1], [0], [0], [1], [0, 0, 1, 1], [], []>} : vector<8x256xbf16>, vector<256x128xbf16>, vector<8x128xf32> -> vector<8x128xf32>
    %36 = arith.addf %30, %35 : vector<8x128xf32>
    %c0_41 = arith.constant 0 : index
    %c0_42 = arith.constant 0 : index
    %c8 = arith.constant 8 : index
    %c0_43 = arith.constant 0 : index
    %37 = vector.load %arg2[%c0_41, %c0_42, %c8, %c0_43] : memref<1x1x20x256xbf16, #tpu.memory_space<vmem>>, vector<1x1x8x256xbf16>
    %38 = vector.shape_cast %37 : vector<1x1x8x256xbf16> to vector<8x256xbf16>
    %c6_44 = arith.constant 6 : index
    %c0_45 = arith.constant 0 : index
    %c0_46 = arith.constant 0 : index
    %39 = vector.load %arg3[%c6_44, %c0_45, %c0_46] : memref<9x256x128xbf16, #tpu.memory_space<vmem>>, vector<1x256x128xbf16>
    %40 = vector.shape_cast %39 : vector<1x256x128xbf16> to vector<256x128xbf16>
    %cst_47 = arith.constant dense<0.000000e+00> : vector<8x128xf32>
    %41 = tpu.matmul %38, %40, %cst_47 {dimension_numbers = #tpu.dot_dimension_numbers<[1], [0], [0], [1], [0, 0, 1, 1], [], []>} : vector<8x256xbf16>, vector<256x128xbf16>, vector<8x128xf32> -> vector<8x128xf32>
    %42 = arith.addf %36, %41 : vector<8x128xf32>
    %c0_48 = arith.constant 0 : index
    %c0_49 = arith.constant 0 : index
    %c9 = arith.constant 9 : index
    %c0_50 = arith.constant 0 : index
    %43 = vector.load %arg2[%c0_48, %c0_49, %c9, %c0_50] : memref<1x1x20x256xbf16, #tpu.memory_space<vmem>>, vector<1x1x8x256xbf16>
    %44 = vector.shape_cast %43 : vector<1x1x8x256xbf16> to vector<8x256xbf16>
    %c7 = arith.constant 7 : index
    %c0_51 = arith.constant 0 : index
    %c0_52 = arith.constant 0 : index
    %45 = vector.load %arg3[%c7, %c0_51, %c0_52] : memref<9x256x128xbf16, #tpu.memory_space<vmem>>, vector<1x256x128xbf16>
    %46 = vector.shape_cast %45 : vector<1x256x128xbf16> to vector<256x128xbf16>
    %cst_53 = arith.constant dense<0.000000e+00> : vector<8x128xf32>
    %47 = tpu.matmul %44, %46, %cst_53 {dimension_numbers = #tpu.dot_dimension_numbers<[1], [0], [0], [1], [0, 0, 1, 1], [], []>} : vector<8x256xbf16>, vector<256x128xbf16>, vector<8x128xf32> -> vector<8x128xf32>
    %48 = arith.addf %42, %47 : vector<8x128xf32>
    %c0_54 = arith.constant 0 : index
    %c0_55 = arith.constant 0 : index
    %c10 = arith.constant 10 : index
    %c0_56 = arith.constant 0 : index
    %49 = vector.load %arg2[%c0_54, %c0_55, %c10, %c0_56] : memref<1x1x20x256xbf16, #tpu.memory_space<vmem>>, vector<1x1x8x256xbf16>
    %50 = vector.shape_cast %49 : vector<1x1x8x256xbf16> to vector<8x256xbf16>
    %c8_57 = arith.constant 8 : index
    %c0_58 = arith.constant 0 : index
    %c0_59 = arith.constant 0 : index
    %51 = vector.load %arg3[%c8_57, %c0_58, %c0_59] : memref<9x256x128xbf16, #tpu.memory_space<vmem>>, vector<1x256x128xbf16>
    %52 = vector.shape_cast %51 : vector<1x256x128xbf16> to vector<256x128xbf16>
    %cst_60 = arith.constant dense<0.000000e+00> : vector<8x128xf32>
    %53 = tpu.matmul %50, %52, %cst_60 {dimension_numbers = #tpu.dot_dimension_numbers<[1], [0], [0], [1], [0, 0, 1, 1], [], []>} : vector<8x256xbf16>, vector<256x128xbf16>, vector<8x128xf32> -> vector<8x128xf32>
    %54 = arith.addf %48, %53 : vector<8x128xf32>
    %c0_61 = arith.constant 0 : index
    %c0_62 = arith.constant 0 : index
    %55 = vector.load %arg4[%c0_61, %c0_62] : memref<1x128xf32, #tpu.memory_space<vmem>>, vector<1x128xf32>
    %56 = vector.broadcast %55 : vector<1x128xf32> to vector<8x128xf32>
    %57 = arith.addf %54, %56 : vector<8x128xf32>
    %c0_63 = arith.constant 0 : index
    %c0_64 = arith.constant 0 : index
    %c0_65 = arith.constant 0 : index
    %58 = vector.load %arg5[%c0_63, %c0_64, %c0_65] : memref<1x8x128xf32, #tpu.memory_space<vmem>>, vector<1x8x128xf32>
    %59 = vector.shape_cast %58 : vector<1x8x128xf32> to vector<8x128xf32>
    %60 = vector.shape_cast %57 : vector<8x128xf32> to vector<1x8x128xf32>
    tpu.vector_store %arg5[%c0_63, %c0_64, %c0_65], %60 {strides = array<i32>} : memref<1x8x128xf32, #tpu.memory_space<vmem>>, vector<1x8x128xf32>,
    return
  }
  func.func @transform_0(%arg0: i32, %arg1: i32) -> (i32, i32, i32, i32) {
    %c0_i32 = arith.constant 0 : i32
    %c0_i32_0 = arith.constant 0 : i32
    %c0_i32_1 = arith.constant 0 : i32
    %c0_i32_2 = arith.constant 0 : i32
    return %arg1, %c0_i32, %c0_i32_0, %c0_i32_1 : i32, i32, i32, i32
  }
  func.func @transform_1(%arg0: i32, %arg1: i32) -> (i32, i32, i32) {
    %c0_i32 = arith.constant 0 : i32
    %c0_i32_0 = arith.constant 0 : i32
    %c0_i32_1 = arith.constant 0 : i32
    return %c0_i32, %c0_i32_0, %arg0 : i32, i32, i32
  }
  func.func @transform_2(%arg0: i32, %arg1: i32) -> (i32, i32) {
    %c0_i32 = arith.constant 0 : i32
    %c0_i32_0 = arith.constant 0 : i32
    return %c0_i32, %arg0 : i32, i32
  }
  func.func @transform_3(%arg0: i32, %arg1: i32) -> (i32, i32, i32) {
    %c0_i32 = arith.constant 0 : i32
    %c0_i32_0 = arith.constant 0 : i32
    return %arg1, %c0_i32, %arg0 : i32, i32, i32
  }
}

</mosaic_0001>

<llo_original>
// kernel: discriminator_forward.9
$region0: #{discriminator_forward.9}
  #allocation0 [shape = 'u32[]', space=smem, size = 0x4, offset = 0x4, fixed_abs, tag = 'smem constant byte address 0x4 - core index']
  #allocation1 [shape = 'u32[72,128]{1,0:T(1,128)}', space=vmem, size = 0x9000, scoped, tag = 'internal scratch']
  %s0 = inlined_call_operand.vmem [shape: bf16[1,1,2,1024], index: 0, kind: input, shape index: {}]
  %s1 = inlined_call_operand.vmem [shape: bf16[1,1024,128], index: 1, kind: input, shape index: {}]
  %s2 = inlined_call_operand.vmem [shape: f32[1,128], index: 2, kind: input, shape index: {}]
  %s3 = inlined_call_operand.hbm [shape: f32[1,2,128], index: 3, kind: output, shape index: {}]
  %s4 = sld [smem:[#allocation0]]
  $region22: #{discriminator_forward.9} parent=0
    _
  %s6 = ssub.s32 1, %s4
  %s7 = scalar_select 0, %s6, %s4
  $region1: #{discriminator_forward.9} parent=0
    #allocation2 [shape = 'u8[1024]{0}', space=vmem, size = 0x400, scoped, tag = 'output window, operand 0, single buffered']
    #allocation3 [shape = 's32[1]{0}', space=sflag, size = 0x4, scoped, tag = 'scoped memory for discriminator_forward.9']
    %8 = vsyncpa [#allocation3], 0
    // Predicated region
    $region2: #{discriminator_forward.9} parent=1 // pred_check
      _
    $region3: #{discriminator_forward.9} parent=1 // pred_check_branch
      %10 = sbr.rel (0) target = $region5
    $region4: #{discriminator_forward.9} parent=1 // pred_region
      _
    $region5: #{discriminator_forward.9} parent=1 // pred_fallthru
      _
    // Predicated region
    $region6: #{discriminator_forward.9} parent=1 // pred_check
      _
    $region7: #{discriminator_forward.9} parent=1 // pred_check_branch
      %12 = sbr.rel (0) target = $region9
    $region8: #{discriminator_forward.9} parent=1 // pred_region
      _
    $region9: #{discriminator_forward.9} parent=1 // pred_fallthru
      _
    // Predicated region
    $region10: #{discriminator_forward.9} parent=1 // pred_check
      _
    $region11: #{discriminator_forward.9} parent=1 // pred_check_branch
      %14 = sbr.rel (0) target = $region13
    $region12: #{discriminator_forward.9} parent=1 // pred_region
      _
    $region13: #{discriminator_forward.9} parent=1 // pred_fallthru
      _
    %v15 = vld [vmem:[%s0] sm:$0xff]
    %v16 = vld [vmem:[%s1] sm:$0xf]
    %v17 = vld [vmem:[%s1 + $0x4] sm:$0xf]
    %v18 = vld [vmem:[%s1 + $0x8] sm:$0xf]
    %v19 = vld [vmem:[%s1 + $0xc] sm:$0xf]
    %v20 = vld [vmem:[%s1 + $0x10] sm:$0xf]
    %v21 = vld [vmem:[%s1 + $0x14] sm:$0xf]
    %v22 = vld [vmem:[%s1 + $0x18] sm:$0xf]
    %v23 = vld [vmem:[%s1 + $0x1c] sm:$0xf]
    %v24 = vld [vmem:[%s1 + $0x20] sm:$0xf]
    %v25 = vld [vmem:[%s1 + $0x24] sm:$0xf]
    %v26 = vld [vmem:[%s1 + $0x28] sm:$0xf]
    %v27 = vld [vmem:[%s1 + $0x2c] sm:$0xf]
    %v28 = vld [vmem:[%s1 + $0x30] sm:$0xf]
    %v29 = vld [vmem:[%s1 + $0x34] sm:$0xf]
    %v30 = vld [vmem:[%s1 + $0x38] sm:$0xf]
    %v31 = vld [vmem:[%s1 + $0x3c] sm:$0xf]
    %v32 = vld [vmem:[%s1 + $0x40] sm:$0xf]
    %v33 = vld [vmem:[%s1 + $0x44] sm:$0xf]
    %v34 = vld [vmem:[%s1 + $0x48] sm:$0xf]
    %v35 = vld [vmem:[%s1 + $0x4c] sm:$0xf]
    %v36 = vld [vmem:[%s1 + $0x50] sm:$0xf]
    %v37 = vld [vmem:[%s1 + $0x54] sm:$0xf]
    %v38 = vld [vmem:[%s1 + $0x58] sm:$0xf]
    %v39 = vld [vmem:[%s1 + $0x5c] sm:$0xf]
    %v40 = vld [vmem:[%s1 + $0x60] sm:$0xf]
    %v41 = vld [vmem:[%s1 + $0x64] sm:$0xf]
    %v42 = vld [vmem:[%s1 + $0x68] sm:$0xf]
    %v43 = vld [vmem:[%s1 + $0x6c] sm:$0xf]
    %v44 = vld [vmem:[%s1 + $0x70] sm:$0xf]
    %v45 = vld [vmem:[%s1 + $0x74] sm:$0xf]
    %v46 = vld [vmem:[%s1 + $0x78] sm:$0xf]
    %v47 = vld [vmem:[%s1 + $0x7c] sm:$0xf]
    %v48 = vld [vmem:[%s1 + $0x80] sm:$0xf]
    %v49 = vld [vmem:[%s1 + $0x84] sm:$0xf]
    %v50 = vld [vmem:[%s1 + $0x88] sm:$0xf]
    %v51 = vld [vmem:[%s1 + $0x8c] sm:$0xf]
    %v52 = vld [vmem:[%s1 + $0x90] sm:$0xf]
    %v53 = vld [vmem:[%s1 + $0x94] sm:$0xf]
    %v54 = vld [vmem:[%s1 + $0x98] sm:$0xf]
    %v55 = vld [vmem:[%s1 + $0x9c] sm:$0xf]
    %v56 = vld [vmem:[%s1 + $0xa0] sm:$0xf]
    %v57 = vld [vmem:[%s1 + $0xa4] sm:$0xf]
    %v58 = vld [vmem:[%s1 + $0xa8] sm:$0xf]
    %v59 = vld [vmem:[%s1 + $0xac] sm:$0xf]
    %v60 = vld [vmem:[%s1 + $0xb0] sm:$0xf]
    %v61 = vld [vmem:[%s1 + $0xb4] sm:$0xf]
    %v62 = vld [vmem:[%s1 + $0xb8] sm:$0xf]
    %v63 = vld [vmem:[%s1 + $0xbc] sm:$0xf]
    %v64 = vld [vmem:[%s1 + $0xc0] sm:$0xf]
    %v65 = vld [vmem:[%s1 + $0xc4] sm:$0xf]
    %v66 = vld [vmem:[%s1 + $0xc8] sm:$0xf]
    %v67 = vld [vmem:[%s1 + $0xcc] sm:$0xf]
    %v68 = vld [vmem:[%s1 + $0xd0] sm:$0xf]
    %v69 = vld [vmem:[%s1 + $0xd4] sm:$0xf]
    %v70 = vld [vmem:[%s1 + $0xd8] sm:$0xf]
    %v71 = vld [vmem:[%s1 + $0xdc] sm:$0xf]
    %v72 = vld [vmem:[%s1 + $0xe0] sm:$0xf]
    %v73 = vld [vmem:[%s1 + $0xe4] sm:$0xf]
    %v74 = vld [vmem:[%s1 + $0xe8] sm:$0xf]
    %v75 = vld [vmem:[%s1 + $0xec] sm:$0xf]
    %v76 = vld [vmem:[%s1 + $0xf0] sm:$0xf]
    %v77 = vld [vmem:[%s1 + $0xf4] sm:$0xf]
    %v78 = vld [vmem:[%s1 + $0xf8] sm:$0xf]
    %v79 = vld [vmem:[%s1 + $0xfc] sm:$0xf]
    %v80 = vld [vmem:[%s1 + $0x100] sm:$0xf]
    %v81 = vld [vmem:[%s1 + $0x104] sm:$0xf]
    %v82 = vld [vmem:[%s1 + $0x108] sm:$0xf]
    %v83 = vld [vmem:[%s1 + $0x10c] sm:$0xf]
    %v84 = vld [vmem:[%s1 + $0x110] sm:$0xf]
    %v85 = vld [vmem:[%s1 + $0x114] sm:$0xf]
    %v86 = vld [vmem:[%s1 + $0x118] sm:$0xf]
    %v87 = vld [vmem:[%s1 + $0x11c] sm:$0xf]
    %v88 = vld [vmem:[%s1 + $0x120] sm:$0xf]
    %v89 = vld [vmem:[%s1 + $0x124] sm:$0xf]
    %v90 = vld [vmem:[%s1 + $0x128] sm:$0xf]
    %v91 = vld [vmem:[%s1 + $0x12c] sm:$0xf]
    %v92 = vld [vmem:[%s1 + $0x130] sm:$0xf]
    %v93 = vld [vmem:[%s1 + $0x134] sm:$0xf]
    %v94 = vld [vmem:[%s1 + $0x138] sm:$0xf]
    %v95 = vld [vmem:[%s1 + $0x13c] sm:$0xf]
    %v96 = vld [vmem:[%s1 + $0x140] sm:$0xf]
    %v97 = vld [vmem:[%s1 + $0x144] sm:$0xf]
    %v98 = vld [vmem:[%s1 + $0x148] sm:$0xf]
    %v99 = vld [vmem:[%s1 + $0x14c] sm:$0xf]
    %v100 = vld [vmem:[%s1 + $0x150] sm:$0xf]
    %v101 = vld [vmem:[%s1 + $0x154] sm:$0xf]
    %v102 = vld [vmem:[%s1 + $0x158] sm:$0xf]
    %v103 = vld [vmem:[%s1 + $0x15c] sm:$0xf]
    %v104 = vld [vmem:[%s1 + $0x160] sm:$0xf]
    %v105 = vld [vmem:[%s1 + $0x164] sm:$0xf]
    %v106 = vld [vmem:[%s1 + $0x168] sm:$0xf]
    %v107 = vld [vmem:[%s1 + $0x16c] sm:$0xf]
    %v108 = vld [vmem:[%s1 + $0x170] sm:$0xf]
    %v109 = vld [vmem:[%s1 + $0x174] sm:$0xf]
    %v110 = vld [vmem:[%s1 + $0x178] sm:$0xf]
    %v111 = vld [vmem:[%s1 + $0x17c] sm:$0xf]
    %v112 = vld [vmem:[%s1 + $0x180] sm:$0xf]
    %v113 = vld [vmem:[%s1 + $0x184] sm:$0xf]
    %v114 = vld [vmem:[%s1 + $0x188] sm:$0xf]
    %v115 = vld [vmem:[%s1 + $0x18c] sm:$0xf]
    %v116 = vld [vmem:[%s1 + $0x190] sm:$0xf]
    %v117 = vld [vmem:[%s1 + $0x194] sm:$0xf]
    %v118 = vld [vmem:[%s1 + $0x198] sm:$0xf]
    %v119 = vld [vmem:[%s1 + $0x19c] sm:$0xf]
    %v120 = vld [vmem:[%s1 + $0x1a0] sm:$0xf]
    %v121 = vld [vmem:[%s1 + $0x1a4] sm:$0xf]
    %v122 = vld [vmem:[%s1 + $0x1a8] sm:$0xf]
    %v123 = vld [vmem:[%s1 + $0x1ac] sm:$0xf]
    %v124 = vld [vmem:[%s1 + $0x1b0] sm:$0xf]
    %v125 = vld [vmem:[%s1 + $0x1b4] sm:$0xf]
    %v126 = vld [vmem:[%s1 + $0x1b8] sm:$0xf]
    %v127 = vld [vmem:[%s1 + $0x1bc] sm:$0xf]
    %v128 = vld [vmem:[%s1 + $0x1c0] sm:$0xf]
    %v129 = vld [vmem:[%s1 + $0x1c4] sm:$0xf]
    %v130 = vld [vmem:[%s1 + $0x1c8] sm:$0xf]
    %v131 = vld [vmem:[%s1 + $0x1cc] sm:$0xf]
    %v132 = vld [vmem:[%s1 + $0x1d0] sm:$0xf]
    %v133 = vld [vmem:[%s1 + $0x1d4] sm:$0xf]
    %v134 = vld [vmem:[%s1 + $0x1d8] sm:$0xf]
    %v135 = vld [vmem:[%s1 + $0x1dc] sm:$0xf]
    %v136 = vld [vmem:[%s1 + $0x1e0] sm:$0xf]
    %v137 = vld [vmem:[%s1 + $0x1e4] sm:$0xf]
    %v138 = vld [vmem:[%s1 + $0x1e8] sm:$0xf]
    %v139 = vld [vmem:[%s1 + $0x1ec] sm:$0xf]
    %v140 = vld [vmem:[%s1 + $0x1f0] sm:$0xf]
    %v141 = vld [vmem:[%s1 + $0x1f4] sm:$0xf]
    %v142 = vld [vmem:[%s1 + $0x1f8] sm:$0xf]
    %v143 = vld [vmem:[%s1 + $0x1fc] sm:$0xf]
    %v144 = vld [vmem:[%s2] sm:$0x1]
    %v146 = vperm.slane %v144, 0
    %149 = vst [vmem:[#allocation1] ss:$9 sm:$0xff] %v15
    %v150 = vld [vmem:[#allocation1] sm:$0xff]
    %v151 = vld [vmem:[#allocation1 + $0x9] sm:$0xff]
    %v152 = vld [vmem:[#allocation1 + $0x12] sm:$0xff]
    %v153 = vld [vmem:[#allocation1 + $0x1b] sm:$0xff]
    %v154 = vld [vmem:[#allocation1 + $0x24] sm:$0xff]
    %v155 = vld [vmem:[#allocation1 + $0x2d] sm:$0xff]
    %v156 = vld [vmem:[#allocation1 + $0x36] sm:$0xff]
    %v157 = vld [vmem:[#allocation1 + $0x3f] sm:$0xff]
    %v294 = vunpack.c.l.b16 %v16
    %v295 = vunpack.c.l.b16 %v17
    %v296 = vunpack.c.l.b16 %v18
    %v297 = vunpack.c.l.b16 %v19
    %v298 = vunpack.c.l.b16 %v20
    %v299 = vunpack.c.l.b16 %v21
    %v300 = vunpack.c.l.b16 %v22
    %v301 = vunpack.c.l.b16 %v23
    %v302 = vunpack.c.l.b16 %v24
    %v303 = vunpack.c.l.b16 %v25
    %v304 = vunpack.c.l.b16 %v26
    %v305 = vunpack.c.l.b16 %v27
    %v306 = vunpack.c.l.b16 %v28
    %v307 = vunpack.c.l.b16 %v29
    %v308 = vunpack.c.l.b16 %v30
    %v309 = vunpack.c.l.b16 %v31
    %v310 = vunpack.c.l.b16 %v32
    %v311 = vunpack.c.l.b16 %v33
    %v312 = vunpack.c.l.b16 %v34
    %v313 = vunpack.c.l.b16 %v35
    %v314 = vunpack.c.l.b16 %v36
    %v315 = vunpack.c.l.b16 %v37
    %v316 = vunpack.c.l.b16 %v38
    %v317 = vunpack.c.l.b16 %v39
    %v318 = vunpack.c.l.b16 %v40
    %v319 = vunpack.c.l.b16 %v41
    %v320 = vunpack.c.l.b16 %v42
    %v321 = vunpack.c.l.b16 %v43
    %v322 = vunpack.c.l.b16 %v44
    %v323 = vunpack.c.l.b16 %v45
    %v324 = vunpack.c.l.b16 %v46
    %v325 = vunpack.c.l.b16 %v47
    %v326 = vunpack.c.l.b16 %v48
    %v327 = vunpack.c.l.b16 %v49
    %v328 = vunpack.c.l.b16 %v50
    %v329 = vunpack.c.l.b16 %v51
    %v330 = vunpack.c.l.b16 %v52
    %v331 = vunpack.c.l.b16 %v53
    %v332 = vunpack.c.l.b16 %v54
    %v333 = vunpack.c.l.b16 %v55
    %v334 = vunpack.c.l.b16 %v56
    %v335 = vunpack.c.l.b16 %v57
    %v336 = vunpack.c.l.b16 %v58
    %v337 = vunpack.c.l.b16 %v59
    %v338 = vunpack.c.l.b16 %v60
    %v339 = vunpack.c.l.b16 %v61
    %v340 = vunpack.c.l.b16 %v62
    %v341 = vunpack.c.l.b16 %v63
    %v342 = vunpack.c.l.b16 %v64
    %v343 = vunpack.c.l.b16 %v65
    %v344 = vunpack.c.l.b16 %v66
    %v345 = vunpack.c.l.b16 %v67
    %v346 = vunpack.c.l.b16 %v68
    %v347 = vunpack.c.l.b16 %v69
    %v348 = vunpack.c.l.b16 %v70
    %v349 = vunpack.c.l.b16 %v71
    %v350 = vunpack.c.l.b16 %v72
    %v351 = vunpack.c.l.b16 %v73
    %v352 = vunpack.c.l.b16 %v74
    %v353 = vunpack.c.l.b16 %v75
    %v354 = vunpack.c.l.b16 %v76
    %v355 = vunpack.c.l.b16 %v77
    %v356 = vunpack.c.l.b16 %v78
    %v357 = vunpack.c.l.b16 %v79
    %v358 = vunpack.c.l.b16 %v80
    %v359 = vunpack.c.l.b16 %v81
    %v360 = vunpack.c.l.b16 %v82
    %v361 = vunpack.c.l.b16 %v83
    %v362 = vunpack.c.l.b16 %v84
    %v363 = vunpack.c.l.b16 %v85
    %v364 = vunpack.c.l.b16 %v86
    %v365 = vunpack.c.l.b16 %v87
    %v366 = vunpack.c.l.b16 %v88
    %v367 = vunpack.c.l.b16 %v89
    %v368 = vunpack.c.l.b16 %v90
    %v369 = vunpack.c.l.b16 %v91
    %v370 = vunpack.c.l.b16 %v92
    %v371 = vunpack.c.l.b16 %v93
    %v372 = vunpack.c.l.b16 %v94
    %v373 = vunpack.c.l.b16 %v95
    %v374 = vunpack.c.l.b16 %v96
    %v375 = vunpack.c.l.b16 %v97
    %v376 = vunpack.c.l.b16 %v98
    %v377 = vunpack.c.l.b16 %v99
    %v378 = vunpack.c.l.b16 %v100
    %v379 = vunpack.c.l.b16 %v101
    %v380 = vunpack.c.l.b16 %v102
    %v381 = vunpack.c.l.b16 %v103
    %v382 = vunpack.c.l.b16 %v104
    %v383 = vunpack.c.l.b16 %v105
    %v384 = vunpack.c.l.b16 %v106
    %v385 = vunpack.c.l.b16 %v107
    %v386 = vunpack.c.l.b16 %v108
    %v387 = vunpack.c.l.b16 %v109
    %v388 = vunpack.c.l.b16 %v110
    %v389 = vunpack.c.l.b16 %v111
    %v390 = vunpack.c.l.b16 %v112
    %v391 = vunpack.c.l.b16 %v113
    %v392 = vunpack.c.l.b16 %v114
    %v393 = vunpack.c.l.b16 %v115
    %v394 = vunpack.c.l.b16 %v116
    %v395 = vunpack.c.l.b16 %v117
    %v396 = vunpack.c.l.b16 %v118
    %v397 = vunpack.c.l.b16 %v119
    %v398 = vunpack.c.l.b16 %v120
    %v399 = vunpack.c.l.b16 %v121
    %v400 = vunpack.c.l.b16 %v122
    %v401 = vunpack.c.l.b16 %v123
    %v402 = vunpack.c.l.b16 %v124
    %v403 = vunpack.c.l.b16 %v125
    %v404 = vunpack.c.l.b16 %v126
    %v405 = vunpack.c.l.b16 %v127
    %v406 = vunpack.c.l.b16 %v128
    %v407 = vunpack.c.l.b16 %v129
    %v408 = vunpack.c.l.b16 %v130
    %v409 = vunpack.c.l.b16 %v131
    %v410 = vunpack.c.l.b16 %v132
    %v411 = vunpack.c.l.b16 %v133
    %v412 = vunpack.c.l.b16 %v134
    %v413 = vunpack.c.l.b16 %v135
    %v414 = vunpack.c.l.b16 %v136
    %v415 = vunpack.c.l.b16 %v137
    %v416 = vunpack.c.l.b16 %v138
    %v417 = vunpack.c.l.b16 %v139
    %v418 = vunpack.c.l.b16 %v140
    %v419 = vunpack.c.l.b16 %v141
    %v420 = vunpack.c.l.b16 %v142
    %v421 = vunpack.c.l.b16 %v143
    %v422 = vpack.c.b16 %v295, %v294
    %v423 = vpack.c.b16 %v297, %v296
    %v424 = vpack.c.b16 %v299, %v298
    %v425 = vpack.c.b16 %v301, %v300
    %v426 = vpack.c.b16 %v303, %v302
    %v427 = vpack.c.b16 %v305, %v304
    %v428 = vpack.c.b16 %v307, %v306
    %v429 = vpack.c.b16 %v309, %v308
    %v430 = vpack.c.b16 %v311, %v310
    %v431 = vpack.c.b16 %v313, %v312
    %v432 = vpack.c.b16 %v315, %v314
    %v433 = vpack.c.b16 %v317, %v316
    %v434 = vpack.c.b16 %v319, %v318
    %v435 = vpack.c.b16 %v321, %v320
    %v436 = vpack.c.b16 %v323, %v322
    %v437 = vpack.c.b16 %v325, %v324
    %v438 = vpack.c.b16 %v327, %v326
    %v439 = vpack.c.b16 %v329, %v328
    %v440 = vpack.c.b16 %v331, %v330
    %v441 = vpack.c.b16 %v333, %v332
    %v442 = vpack.c.b16 %v335, %v334
    %v443 = vpack.c.b16 %v337, %v336
    %v444 = vpack.c.b16 %v339, %v338
    %v445 = vpack.c.b16 %v341, %v340
    %v446 = vpack.c.b16 %v343, %v342
    %v447 = vpack.c.b16 %v345, %v344
    %v448 = vpack.c.b16 %v347, %v346
    %v449 = vpack.c.b16 %v349, %v348
    %v450 = vpack.c.b16 %v351, %v350
    %v451 = vpack.c.b16 %v353, %v352
    %v452 = vpack.c.b16 %v355, %v354
    %v453 = vpack.c.b16 %v357, %v356
    %v454 = vpack.c.b16 %v359, %v358
    %v455 = vpack.c.b16 %v361, %v360
    %v456 = vpack.c.b16 %v363, %v362
    %v457 = vpack.c.b16 %v365, %v364
    %v458 = vpack.c.b16 %v367, %v366
    %v459 = vpack.c.b16 %v369, %v368
    %v460 = vpack.c.b16 %v371, %v370
    %v461 = vpack.c.b16 %v373, %v372
    %v462 = vpack.c.b16 %v375, %v374
    %v463 = vpack.c.b16 %v377, %v376
    %v464 = vpack.c.b16 %v379, %v378
    %v465 = vpack.c.b16 %v381, %v380
    %v466 = vpack.c.b16 %v383, %v382
    %v467 = vpack.c.b16 %v385, %v384
    %v468 = vpack.c.b16 %v387, %v386
    %v469 = vpack.c.b16 %v389, %v388
    %v470 = vpack.c.b16 %v391, %v390
    %v471 = vpack.c.b16 %v393, %v392
    %v472 = vpack.c.b16 %v395, %v394
    %v473 = vpack.c.b16 %v397, %v396
    %v474 = vpack.c.b16 %v399, %v398
    %v475 = vpack.c.b16 %v401, %v400
    %v476 = vpack.c.b16 %v403, %v402
    %v477 = vpack.c.b16 %v405, %v404
    %v478 = vpack.c.b16 %v407, %v406
    %v479 = vpack.c.b16 %v409, %v408
    %v480 = vpack.c.b16 %v411, %v410
    %v481 = vpack.c.b16 %v413, %v412
    %v482 = vpack.c.b16 %v415, %v414
    %v483 = vpack.c.b16 %v417, %v416
    %v484 = vpack.c.b16 %v419, %v418
    %v485 = vpack.c.b16 %v421, %v420
    %550 = vmatpush.bf16.msra.mxu0 %v429
    %551 = vmatpush.bf16.msra.mxu0 %v428
    %552 = vmatpush.bf16.msra.mxu0 %v427
    %553 = vmatpush.bf16.msra.mxu0 %v426
    %554 = vmatpush.bf16.msra.mxu0 %v425
    %555 = vmatpush.bf16.msra.mxu0 %v424
    %556 = vmatpush.bf16.msra.mxu0 %v423
    %557 = vmatpush.bf16.msra.mxu0 %v422
    %558 = vmatmul.bf16.gmra.mxu0 %v150
    %v559 = vpop.f32.mrf.mxu0
    %v560 = vadd.f32 %v146, %v559
    %v561 = vpop.f32.mrf.mxu0
    %562 = vdwg.mxu0
    %563 = vmatpush.bf16.msra.mxu0 %v437
    %564 = vmatpush.bf16.msra.mxu0 %v436
    %565 = vmatpush.bf16.msra.mxu0 %v435
    %566 = vmatpush.bf16.msra.mxu0 %v434
    %567 = vmatpush.bf16.msra.mxu0 %v433
    %568 = vmatpush.bf16.msra.mxu0 %v432
    %569 = vmatpush.bf16.msra.mxu0 %v431
    %570 = vmatpush.bf16.msra.mxu0 %v430
    %571 = vmatmul.bf16.gmra.mxu0 %v151
    %v572 = vpop.f32.mrf.mxu0
    %v573 = vadd.f32 %v560, %v572
    %v574 = vpop.f32.mrf.mxu0
    %575 = vdwg.mxu0
    %576 = vmatpush.bf16.msra.mxu0 %v445
    %577 = vmatpush.bf16.msra.mxu0 %v444
    %578 = vmatpush.bf16.msra.mxu0 %v443
    %579 = vmatpush.bf16.msra.mxu0 %v442
    %580 = vmatpush.bf16.msra.mxu0 %v441
    %581 = vmatpush.bf16.msra.mxu0 %v440
    %582 = vmatpush.bf16.msra.mxu0 %v439
    %583 = vmatpush.bf16.msra.mxu0 %v438
    %584 = vmatmul.bf16.gmra.mxu0 %v152
    %v585 = vpop.f32.mrf.mxu0
    %v586 = vadd.f32 %v573, %v585
    %v587 = vpop.f32.mrf.mxu0
    %588 = vdwg.mxu0
    %589 = vmatpush.bf16.msra.mxu0 %v453
    %590 = vmatpush.bf16.msra.mxu0 %v452
    %591 = vmatpush.bf16.msra.mxu0 %v451
    %592 = vmatpush.bf16.msra.mxu0 %v450
    %593 = vmatpush.bf16.msra.mxu0 %v449
    %594 = vmatpush.bf16.msra.mxu0 %v448
    %595 = vmatpush.bf16.msra.mxu0 %v447
    %596 = vmatpush.bf16.msra.mxu0 %v446
    %597 = vmatmul.bf16.gmra.mxu0 %v153
    %v598 = vpop.f32.mrf.mxu0
    %v599 = vadd.f32 %v586, %v598
    %v600 = vpop.f32.mrf.mxu0
    %601 = vdwg.mxu0
    %602 = vmatpush.bf16.msra.mxu0 %v461
    %603 = vmatpush.bf16.msra.mxu0 %v460
    %604 = vmatpush.bf16.msra.mxu0 %v459
    %605 = vmatpush.bf16.msra.mxu0 %v458
    %606 = vmatpush.bf16.msra.mxu0 %v457
    %607 = vmatpush.bf16.msra.mxu0 %v456
    %608 = vmatpush.bf16.msra.mxu0 %v455
    %609 = vmatpush.bf16.msra.mxu0 %v454
    %610 = vmatmul.bf16.gmra.mxu0 %v154
    %v611 = vpop.f32.mrf.mxu0
    %v612 = vadd.f32 %v599, %v611
    %v613 = vpop.f32.mrf.mxu0
    %614 = vdwg.mxu0
    %615 = vmatpush.bf16.msra.mxu0 %v469
    %616 = vmatpush.bf16.msra.mxu0 %v468
    %617 = vmatpush.bf16.msra.mxu0 %v467
    %618 = vmatpush.bf16.msra.mxu0 %v466
    %619 = vmatpush.bf16.msra.mxu0 %v465
    %620 = vmatpush.bf16.msra.mxu0 %v464
    %621 = vmatpush.bf16.msra.mxu0 %v463
    %622 = vmatpush.bf16.msra.mxu0 %v462
    %623 = vmatmul.bf16.gmra.mxu0 %v155
    %v624 = vpop.f32.mrf.mxu0
    %v625 = vadd.f32 %v612, %v624
    %v626 = vpop.f32.mrf.mxu0
    %627 = vdwg.mxu0
    %628 = vmatpush.bf16.msra.mxu0 %v477
    %629 = vmatpush.bf16.msra.mxu0 %v476
    %630 = vmatpush.bf16.msra.mxu0 %v475
    %631 = vmatpush.bf16.msra.mxu0 %v474
    %632 = vmatpush.bf16.msra.mxu0 %v473
    %633 = vmatpush.bf16.msra.mxu0 %v472
    %634 = vmatpush.bf16.msra.mxu0 %v471
    %635 = vmatpush.bf16.msra.mxu0 %v470
    %636 = vmatmul.bf16.gmra.mxu0 %v156
    %v637 = vpop.f32.mrf.mxu0
    %v638 = vadd.f32 %v625, %v637
    %v639 = vpop.f32.mrf.mxu0
    %640 = vdwg.mxu0
    %641 = vmatpush.bf16.msra.mxu0 %v485
    %642 = vmatpush.bf16.msra.mxu0 %v484
    %643 = vmatpush.bf16.msra.mxu0 %v483
    %644 = vmatpush.bf16.msra.mxu0 %v482
    %645 = vmatpush.bf16.msra.mxu0 %v481
    %646 = vmatpush.bf16.msra.mxu0 %v480
    %647 = vmatpush.bf16.msra.mxu0 %v479
    %648 = vmatpush.bf16.msra.mxu0 %v478
    %649 = vmatmul.bf16.gmra.mxu0 %v157
    %v650 = vpop.f32.mrf.mxu0
    %v651 = vadd.f32 %v638, %v650
    %v652 = vpop.f32.mrf.mxu0
    %653 = vdwg.mxu0
    %654 = vst [vmem:[#allocation2] sm:$0x3] %v651
    // Predicated region
    $region14: #{discriminator_forward.9} parent=1 // pred_check
      _
    $region15: #{discriminator_forward.9} parent=1 // pred_check_branch
      %656 = sbr.rel (0) target = $region17
    $region16: #{discriminator_forward.9} parent=1 // pred_region
      %658 = vsyncadd [#allocation3], 0
      %s660 = sshll.u32 [#allocation2], 4
      %s661 = int_to_ptr.vmem [resolvable:$true] %s660
      %s662 = sshll.u32 %s3, 4
      %s663 = int_to_ptr.hbm [resolvable:$true] %s662
      %665 = dma.vmem_to_hbm [thread:$0]  %s661, 32, %s663, [#allocation3]
    $region17: #{discriminator_forward.9} parent=1 // pred_fallthru
      _
    // Predicated region
    $region18: #{discriminator_forward.9} parent=1 // pred_check
      _
    $region19: #{discriminator_forward.9} parent=1 // pred_check_branch
      %667 = sbr.rel (0) target = $region21
    $region20: #{discriminator_forward.9} parent=1 // pred_region
      %669 = dma.done [#allocation3], 32
    $region21: #{discriminator_forward.9} parent=1 // pred_fallthru
      _
    %670 = vsyncpa [#allocation3], 1

// kernel: discriminator_forward.5
$region0: #{discriminator_forward.5}
  #allocation0 [shape = 'u32[]', space=smem, size = 0x4, offset = 0x4, fixed_abs, tag = 'smem constant byte address 0x4 - core index']
  #allocation1 [shape = 'u32[72,128]{1,0:T(1,128)}', space=vmem, size = 0x9000, scoped, tag = 'internal scratch']
  %s0 = inlined_call_operand.vmem [shape: bf16[2,4,90,4], index: 0, kind: input, shape index: {}]
  %s1 = inlined_call_operand.vmem [shape: bf16[16,4,128], index: 1, kind: input, shape index: {}]
  %s2 = inlined_call_operand.vmem [shape: f32[1,128], index: 2, kind: input, shape index: {}]
  %s3 = inlined_call_operand.vmem [shape: bf16[2,72,128], index: 3, kind: output, shape index: {}]
  %s4 = sld [smem:[#allocation0]]
  $region45: #{discriminator_forward.5} parent=0
    _
  %s6 = ssub.s32 1, %s4
  %s7 = scalar_select 0, %s6, %s4
  loop: start=0, step=1, limit=4
  $region2: #{discriminator_forward.5} parent=0 // loop_pre_header
    _
  $region3: #{discriminator_forward.5} parent=0 // loop_header
    %s9 = sphi 0, %s13
    %p10 = scmp.ge.s32.totalorder %s9, 4
    %s16 = sphi 0, %s28
    %s17 = sphi 0, %s24
    %s18 = sphi 0, %s16
    %s19 = sphi 0, %s17
    %s20 = sphi 0, %s18
    %s21 = sphi 0, %s19
    %s31 = sphi 0, %s33
    %s34 = sphi 0, %s31
    %s35 = sphi 0, %s34
    %s51 = sphi 0, %s35
    %s57 = sphi 0, %s59
    %s60 = sphi 0, %s57
    %s61 = sphi 0, %s60
    %s77 = sphi 0, %s61
    %s83 = sphi 0, %s85
    %s86 = sphi 0, %s83
    %s87 = sphi 0, %s86
    %s103 = sphi 0, %s87
    %s111 = sphi 0, %s113
    %s114 = sphi 0, %s111
    %s115 = sphi 0, %s114
    %s131 = sphi 0, %s115
  $region4: #{discriminator_forward.5} parent=0 // loop_header_branch
    %12 = sbr.rel (%p10) target = $region8
  $region5: #{discriminator_forward.5} parent=0 // loop_body
    %s14 = ssub.s32 %s9, 1
    %s15 = ssub.s32 %s9, 2
    %s22 = sadd.s32 1, %s17
    %p23 = scmp.ge.s32.totalorder %s22, 2
    %s24 = scalar_select %p23, 0, %s22
    %s25 = sadd.s32 1, %s16
    %s26 = scalar_select %p23, %s25, %s16
    %p27 = scmp.ge.s32.totalorder %s26, 1
    %s28 = scalar_select %p27, 0, %s26
    %s29 = ssub.s32 %s17, %s24
    %p30 = scmp.eq.s32.totalorder %s29, 0
    %s32 = sadd.s32 %s31, 1
    %s33 = scalar_select %p30, %s31, %s32
    %p36 = pneg %p30
    %p37 = scmp.eq.s32.totalorder %s9, 1
    %p38 = por %p36, %p37
    %p39 = scmp.ne.s32.totalorder %s31, %s34
    %p40 = scmp.eq.s32.totalorder %s9, 0
    %p41 = por %p39, %p40
    %p42 = scmp.ne.s32.totalorder %s31, %s34
    %p43 = scmp.eq.s32.totalorder %s14, 1
    %p44 = por %p42, %p43
    %p45 = scmp.ne.s32.totalorder %s34, %s35
    %p46 = scmp.eq.s32.totalorder %s14, 0
    %p47 = por %p45, %p46
    %p48 = scmp.ne.s32.totalorder %s34, %s35
    %p49 = scmp.eq.s32.totalorder %s15, 1
    %p50 = por %p48, %p49
    %p52 = scmp.ne.s32.totalorder %s35, %s51
    %p53 = scmp.eq.s32.totalorder %s15, 0
    %p54 = por %p52, %p53
    %s55 = ssub.s32 %s16, %s28
    %p56 = scmp.eq.s32.totalorder %s55, 0
    %s58 = sadd.s32 %s57, 1
    %s59 = scalar_select %p56, %s57, %s58
    %p62 = pneg %p56
    %p63 = scmp.eq.s32.totalorder %s9, 1
    %p64 = por %p62, %p63
    %p65 = scmp.ne.s32.totalorder %s57, %s60
    %p66 = scmp.eq.s32.totalorder %s9, 0
    %p67 = por %p65, %p66
    %p68 = scmp.ne.s32.totalorder %s57, %s60
    %p69 = scmp.eq.s32.totalorder %s14, 1
    %p70 = por %p68, %p69
    %p71 = scmp.ne.s32.totalorder %s60, %s61
    %p72 = scmp.eq.s32.totalorder %s14, 0
    %p73 = por %p71, %p72
    %p74 = scmp.ne.s32.totalorder %s60, %s61
    %p75 = scmp.eq.s32.totalorder %s15, 1
    %p76 = por %p74, %p75
    %p78 = scmp.ne.s32.totalorder %s61, %s77
    %p79 = scmp.eq.s32.totalorder %s15, 0
    %p80 = por %p78, %p79
    %s81 = ssub.s32 %s16, %s28
    %p82 = scmp.eq.s32.totalorder %s81, 0
    %s84 = sadd.s32 %s83, 1
    %s85 = scalar_select %p82, %s83, %s84
    %p88 = pneg %p82
    %p89 = scmp.eq.s32.totalorder %s9, 1
    %p90 = por %p88, %p89
    %p91 = scmp.ne.s32.totalorder %s83, %s86
    %p92 = scmp.eq.s32.totalorder %s9, 0
    %p93 = por %p91, %p92
    %p94 = scmp.ne.s32.totalorder %s83, %s86
    %p95 = scmp.eq.s32.totalorder %s14, 1
    %p96 = por %p94, %p95
    %p97 = scmp.ne.s32.totalorder %s86, %s87
    %p98 = scmp.eq.s32.totalorder %s14, 0
    %p99 = por %p97, %p98
    %p100 = scmp.ne.s32.totalorder %s86, %s87
    %p101 = scmp.eq.s32.totalorder %s15, 1
    %p102 = por %p100, %p101
    %p104 = scmp.ne.s32.totalorder %s87, %s103
    %p105 = scmp.eq.s32.totalorder %s15, 0
    %p106 = por %p104, %p105
    %s107 = ssub.s32 %s17, %s24
    %s108 = ssub.s32 %s16, %s28
    %s109 = sor.u32 %s107, %s108
    %p110 = scmp.eq.s32.totalorder %s109, 0
    %s112 = sadd.s32 %s111, 1
    %s113 = scalar_select %p110, %s111, %s112
    %p116 = pneg %p110
    %p117 = scmp.eq.s32.totalorder %s9, 1
    %p118 = por %p116, %p117
    %p119 = scmp.ne.s32.totalorder %s111, %s114
    %p120 = scmp.eq.s32.totalorder %s9, 0
    %p121 = por %p119, %p120
    %p122 = scmp.ne.s32.totalorder %s111, %s114
    %p123 = scmp.eq.s32.totalorder %s14, 1
    %p124 = por %p122, %p123
    %p125 = scmp.ne.s32.totalorder %s114, %s115
    %p126 = scmp.eq.s32.totalorder %s14, 0
    %p127 = por %p125, %p126
    %p128 = scmp.ne.s32.totalorder %s114, %s115
    %p129 = scmp.eq.s32.totalorder %s15, 1
    %p130 = por %p128, %p129
    %p132 = scmp.ne.s32.totalorder %s115, %s131
    %p133 = scmp.eq.s32.totalorder %s15, 0
    %p134 = por %p132, %p133
    %p135 = scmp.le.s32.totalorder 1, %s9
    %p136 = scmp.lt.s32.totalorder %s9, 3
    %p137 = pnand %p135, %p136
    %p138 = pneg %p137
    // Predicated region
    $region9: #{discriminator_forward.5} parent=5 // pred_check
      _
    $region10: #{discriminator_forward.5} parent=5 // pred_check_branch
      %140 = sbr.rel (%p137) target = $region12
    $region11: #{discriminator_forward.5} parent=5 // pred_region
      %s141 = ssub.s32 %s9, 1
      // Predicated region
      $region13: #{discriminator_forward.5} parent=11 // pred_check
        %p142 = pneg %p73
      $region14: #{discriminator_forward.5} parent=11 // pred_check_branch
        %144 = sbr.rel (%p142) target = $region16
      $region15: #{discriminator_forward.5} parent=11 // pred_region
        %p145 = scmp.lt.s32.totalorder %s18, 0
        %s146 = scalar_select %p145, %s18, 0
        %s147 = smul.addr %s146, 2
        %s148 = scalar_lea.vmem %s1, %s147
      $region16: #{discriminator_forward.5} parent=11 // pred_fallthru
        _
      // Predicated region
      $region17: #{discriminator_forward.5} parent=11 // pred_check
        %p149 = pneg %p99
      $region18: #{discriminator_forward.5} parent=11 // pred_check_branch
        %151 = sbr.rel (%p149) target = $region20
      $region19: #{discriminator_forward.5} parent=11 // pred_region
        %p152 = scmp.lt.s32.totalorder %s18, 0
        %s153 = scalar_select %p152, %s18, 0
        %s154 = scalar_lea.vmem %s2, %s153
      $region20: #{discriminator_forward.5} parent=11 // pred_fallthru
        _
    $region12: #{discriminator_forward.5} parent=5 // pred_fallthru
      _
    %p155 = scmp.lt.s32.totalorder %s9, 2
    // Predicated region
    $region21: #{discriminator_forward.5} parent=5 // pred_check
      %p156 = pneg %p155
    $region22: #{discriminator_forward.5} parent=5 // pred_check_branch
      %158 = sbr.rel (%p156) target = $region24
    $region23: #{discriminator_forward.5} parent=5 // pred_region
      // Predicated region
      $region25: #{discriminator_forward.5} parent=23 // pred_check
        %p159 = pneg %p41
      $region26: #{discriminator_forward.5} parent=23 // pred_check_branch
        %161 = sbr.rel (%p159) target = $region28
      $region27: #{discriminator_forward.5} parent=23 // pred_region
        %p162 = scmp.lt.s32.totalorder %s17, 1
        %s163 = scalar_select %p162, %s17, 1
        %s164 = smul.addr %s163, 48
        %s165 = smul.addr %s164, 4
        %s166 = scalar_lea.vmem %s0, %s165
      $region28: #{discriminator_forward.5} parent=23 // pred_fallthru
        _
    $region24: #{discriminator_forward.5} parent=5 // pred_fallthru
      _
    %p167 = scmp.le.s32.totalorder 1, %s9
    %p168 = scmp.lt.s32.totalorder %s9, 3
    %p169 = pnand %p167, %p168
    %p170 = pneg %p169
    // Predicated region
    $region29: #{discriminator_forward.5} parent=5 // pred_check
      _
    $region30: #{discriminator_forward.5} parent=5 // pred_check_branch
      %172 = sbr.rel (%p169) target = $region32
    $region31: #{discriminator_forward.5} parent=5 // pred_region
      %s173 = ssub.s32 %s9, 1
      %p174 = scmp.lt.s32.totalorder %s19, 1
      %s175 = scalar_select %p174, %s19, 1
      %s176 = smul.addr %s175, 48
      %s177 = smul.addr %s176, 4
      %s178 = scalar_lea.vmem %s0, %s177
      %p179 = pneg %p47
      %p180 = pneg %p44
      %p181 = scmp.lt.s32.totalorder %s18, 0
      %s182 = scalar_select %p181, %s18, 0
      %s183 = smul.addr %s182, 2
      %s184 = scalar_lea.vmem %s1, %s183
      %p185 = pneg %p73
      %p186 = pneg %p70
      %p187 = scmp.lt.s32.totalorder %s18, 0
      %s188 = scalar_select %p187, %s18, 0
      %s189 = scalar_lea.vmem %s2, %s188
      %p190 = pneg %p99
      %p191 = pneg %p96
      %p192 = pneg %p127
      %p193 = pneg %p124
      %p194 = scmp.lt.s32.totalorder %s19, 1
      %s195 = scalar_select %p194, %s19, 1
      %p196 = scmp.lt.s32.totalorder %s18, 0
      %s197 = scalar_select %p196, %s18, 0
      %s198 = smul.addr %s195, 9
      %s199 = sadd.s32 %s197, %s198
      %s200 = smul.addr %s199, 4
      %s201 = scalar_lea.vmem %s3, %s200
      %p202 = scmp.lt.s32.totalorder %s19, 1
      %s203 = scalar_select %p202, %s19, 1
      %s204 = smul.addr %s203, 48
      %s205 = smul.addr %s204, 4
      %s206 = scalar_lea.vmem %s0, %s205
      %p207 = scmp.lt.s32.totalorder %s18, 0
      %s208 = scalar_select %p207, %s18, 0
      %s209 = smul.addr %s208, 2
      %s210 = scalar_lea.vmem %s1, %s209
      %p211 = scmp.lt.s32.totalorder %s18, 0
      %s212 = scalar_select %p211, %s18, 0
      %s213 = scalar_lea.vmem %s2, %s212
      %p214 = scmp.lt.s32.totalorder %s19, 1
      %s215 = scalar_select %p214, %s19, 1
      %p216 = scmp.lt.s32.totalorder %s18, 0
      %s217 = scalar_select %p216, %s18, 0
      %s218 = smul.addr %s215, 9
      %s219 = sadd.s32 %s217, %s218
      %s220 = smul.addr %s219, 4
      %s221 = scalar_lea.vmem %s3, %s220
      %v223 = vld [vmem:[%s206] sm:$0xf]
      %v224 = vld [vmem:[%s206 + $0x4] sm:$0xf]
      %v225 = vld [vmem:[%s206 + $0x8] sm:$0xf]
      %v226 = vld [vmem:[%s206 + $0xc] sm:$0xf]
      %v227 = vld [vmem:[%s206 + $0x10] sm:$0xf]
      %v228 = vld [vmem:[%s206 + $0x14] sm:$0xf]
      %v229 = vld [vmem:[%s206 + $0x18] sm:$0xf]
      %v230 = vld [vmem:[%s206 + $0x1c] sm:$0xf]
      %v231 = vld [vmem:[%s206 + $0x20] sm:$0xf]
      %v232 = vld [vmem:[%s210] sm:$0x3]
      %v233 = vld [vmem:[%s206 + $0x24] sm:$0x1]
      %s234 = scalar_lea.vmem %s210, 4
      %v235 = vld [vmem:[%s234] sm:$0x3]
      %v246 = vunpack.c.l.b16 %v223
      %v247 = vunpack.c.l.b16 %v224
      %v248 = vunpack.c.l.b16 %v225
      %v249 = vunpack.c.l.b16 %v226
      %v250 = vunpack.c.l.b16 %v227
      %v251 = vunpack.c.l.b16 %v228
      %v252 = vunpack.c.l.b16 %v229
      %v253 = vunpack.c.l.b16 %v230
      %v254 = vunpack.c.l.b16 %v231
      %v255 = vunpack.c.l.b16 %v233
      %v256 = vpack.c.b16 %v247, %v246
      %v257 = vpack.c.b16 %v249, %v248
      %v258 = vpack.c.b16 %v251, %v250
      %v259 = vpack.c.b16 %v253, %v252
      %v260 = vpack.c.b16 %v255, %v254
      %vm261 = vsmask.f32 7424
      %v263 = vshrl.u32 %v256, 16
      %v265 = vshll.u32 %v256, 16
      %v267 = vrot.slane %v265, 1
      %v268 = vor.u32 %v263, %v267
      %v270 = vshll.u32 %v257, 16
      %v272 = vrot.slane %v270, 1
      %v273 = vsel %vm261, %v268, %v272
      %v274 = vshrl.u32 %v257, 16
      %v276 = vor.u32 %v274, %v272
      %v278 = vshll.u32 %v258, 16
      %v280 = vrot.slane %v278, 1
      %v281 = vsel %vm261, %v276, %v280
      %v282 = vshrl.u32 %v258, 16
      %v284 = vor.u32 %v282, %v280
      %v286 = vshll.u32 %v259, 16
      %v288 = vrot.slane %v286, 1
      %v289 = vsel %vm261, %v284, %v288
      %v290 = vshrl.u32 %v259, 16
      %v292 = vor.u32 %v290, %v288
      %v294 = vshll.u32 %v260, 16
      %v296 = vrot.slane %v294, 1
      %v297 = vsel %vm261, %v292, %v296
      %v298 = vshrl.u32 %v260, 16
      %v300 = vor.u32 %v298, %v296
      %vm301 = vcmask 31744
      %v303 = vsel %vm301, %v273, 0
      %v306 = vsel %vm301, %v281, 0
      %v309 = vsel %vm301, %v289, 0
      %v312 = vsel %vm301, %v297, 0
      %v315 = vsel %vm301, %v300, 0
      %vm317 = vcmask 1041408
      %v319 = vsel %vm317, %v235, 0
      %321 = vmatpush.bf16.msra.mxu0 0
      %322 = vmatpush.bf16.msra.mxu0 0
      %323 = vmatpush.bf16.msra.mxu0 0
      %324 = vmatpush.bf16.msra.mxu0 0
      %325 = vmatpush.bf16.msra.mxu0 0
      %326 = vmatpush.bf16.msra.mxu0 0
      %327 = vmatpush.bf16.msra.mxu0 0
      %328 = vmatpush.bf16.msra.mxu0 %v319
      %329 = vmatmul.bf16.gmra.mxu0 %v303
      %v330 = vpop.f32.mrf.mxu0
      %v331 = vadd.f32 0.0, %v330
      %v332 = vpop.f32.mrf.mxu0
      %v333 = vadd.f32 0.0, %v332
      %334 = vmatmul.bf16.gmra.mxu0 %v306
      %v335 = vpop.f32.mrf.mxu0
      %v336 = vadd.f32 0.0, %v335
      %v337 = vpop.f32.mrf.mxu0
      %v338 = vadd.f32 0.0, %v337
      %339 = vmatmul.bf16.gmra.mxu0 %v309
      %v340 = vpop.f32.mrf.mxu0
      %v341 = vadd.f32 0.0, %v340
      %v342 = vpop.f32.mrf.mxu0
      %v343 = vadd.f32 0.0, %v342
      %344 = vmatmul.bf16.gmra.mxu0 %v312
      %v345 = vpop.f32.mrf.mxu0
      %v346 = vadd.f32 0.0, %v345
      %v347 = vpop.f32.mrf.mxu0
      %v348 = vadd.f32 0.0, %v347
      %349 = vmatmul.bf16.gmra.mxu0 %v315
      %v350 = vpop.f32.mrf.mxu0
      %v351 = vadd.f32 0.0, %v350
      %v352 = vpop.f32.mrf.mxu0
      %353 = vdwg.mxu0
      %v354 = vpack.c.b16 %v254, %v254
      %v355 = vsel %vm301, %v256, 0
      %v357 = vsel %vm301, %v257, 0
      %v359 = vsel %vm301, %v258, 0
      %v361 = vsel %vm301, %v259, 0
      %v364 = vsel %vm301, %v354, 0
      %v367 = vsel %vm317, %v232, 0
      %369 = vmatpush.bf16.msra.mxu0 0
      %370 = vmatpush.bf16.msra.mxu0 0
      %371 = vmatpush.bf16.msra.mxu0 0
      %372 = vmatpush.bf16.msra.mxu0 0
      %373 = vmatpush.bf16.msra.mxu0 0
      %374 = vmatpush.bf16.msra.mxu0 0
      %375 = vmatpush.bf16.msra.mxu0 0
      %376 = vmatpush.bf16.msra.mxu0 %v367
      %377 = vmatmul.bf16.gmra.mxu0 %v355
      %v378 = vpop.f32.mrf.mxu0
      %v379 = vadd.f32 %v331, %v378
      %v380 = vpop.f32.mrf.mxu0
      %v381 = vadd.f32 %v333, %v380
      %382 = vmatmul.bf16.gmra.mxu0 %v357
      %v383 = vpop.f32.mrf.mxu0
      %v384 = vadd.f32 %v336, %v383
      %v385 = vpop.f32.mrf.mxu0
      %v386 = vadd.f32 %v338, %v385
      %387 = vmatmul.bf16.gmra.mxu0 %v359
      %v388 = vpop.f32.mrf.mxu0
      %v389 = vadd.f32 %v341, %v388
      %v390 = vpop.f32.mrf.mxu0
      %v391 = vadd.f32 %v343, %v390
      %392 = vmatmul.bf16.gmra.mxu0 %v361
      %v393 = vpop.f32.mrf.mxu0
      %v394 = vadd.f32 %v346, %v393
      %v395 = vpop.f32.mrf.mxu0
      %v396 = vadd.f32 %v348, %v395
      %397 = vmatmul.bf16.gmra.mxu0 %v364
      %v398 = vpop.f32.mrf.mxu0
      %v399 = vadd.f32 %v351, %v398
      %v400 = vpop.f32.mrf.mxu0
      %401 = vdwg.mxu0
      %v402 = vld [vmem:[%s206 + $0x4] sm:$0xf]
      %v403 = vld [vmem:[%s206 + $0x8] sm:$0xf]
      %v404 = vld [vmem:[%s206 + $0xc] sm:$0xf]
      %v405 = vld [vmem:[%s206 + $0x10] sm:$0xf]
      %v406 = vld [vmem:[%s206 + $0x14] sm:$0xf]
      %v407 = vld [vmem:[%s206 + $0x18] sm:$0xf]
      %v408 = vld [vmem:[%s206 + $0x1c] sm:$0xf]
      %v409 = vld [vmem:[%s206 + $0x20] sm:$0xf]
      %v410 = vld [vmem:[%s206 + $0x24] sm:$0xf]
      %v411 = vld [vmem:[%s206 + $0x28] sm:$0x1]
      %s412 = scalar_lea.vmem %s210, 16
      %v413 = vld [vmem:[%s412] sm:$0x3]
      %v424 = vunpack.c.l.b16 %v402
      %v425 = vunpack.c.l.b16 %v403
      %v426 = vunpack.c.l.b16 %v404
      %v427 = vunpack.c.l.b16 %v405
      %v428 = vunpack.c.l.b16 %v406
      %v429 = vunpack.c.l.b16 %v407
      %v430 = vunpack.c.l.b16 %v408
      %v431 = vunpack.c.l.b16 %v409
      %v432 = vunpack.c.l.b16 %v410
      %v433 = vunpack.c.l.b16 %v411
      %v434 = vpack.c.b16 %v425, %v424
      %v435 = vpack.c.b16 %v427, %v426
      %v436 = vpack.c.b16 %v429, %v428
      %v437 = vpack.c.b16 %v431, %v430
      %v438 = vpack.c.b16 %v433, %v432
      %v440 = vshrl.u32 %v434, 16
      %v442 = vshll.u32 %v434, 16
      %v444 = vrot.slane %v442, 1
      %v445 = vor.u32 %v440, %v444
      %v447 = vshll.u32 %v435, 16
      %v449 = vrot.slane %v447, 1
      %v450 = vsel %vm261, %v445, %v449
      %v451 = vshrl.u32 %v435, 16
      %v453 = vor.u32 %v451, %v449
      %v455 = vshll.u32 %v436, 16
      %v457 = vrot.slane %v455, 1
      %v458 = vsel %vm261, %v453, %v457
      %v459 = vshrl.u32 %v436, 16
      %v461 = vor.u32 %v459, %v457
      %v463 = vshll.u32 %v437, 16
      %v465 = vrot.slane %v463, 1
      %v466 = vsel %vm261, %v461, %v465
      %v467 = vshrl.u32 %v437, 16
      %v469 = vor.u32 %v467, %v465
      %v471 = vshll.u32 %v438, 16
      %v473 = vrot.slane %v471, 1
      %v474 = vsel %vm261, %v469, %v473
      %v475 = vshrl.u32 %v438, 16
      %v477 = vor.u32 %v475, %v473
      %v479 = vsel %vm301, %v450, 0
      %v482 = vsel %vm301, %v458, 0
      %v485 = vsel %vm301, %v466, 0
      %v488 = vsel %vm301, %v474, 0
      %v491 = vsel %vm301, %v477, 0
      %v494 = vsel %vm317, %v413, 0
      %496 = vmatpush.bf16.msra.mxu0 0
      %497 = vmatpush.bf16.msra.mxu0 0
      %498 = vmatpush.bf16.msra.mxu0 0
      %499 = vmatpush.bf16.msra.mxu0 0
      %500 = vmatpush.bf16.msra.mxu0 0
      %501 = vmatpush.bf16.msra.mxu0 0
      %502 = vmatpush.bf16.msra.mxu0 0
      %503 = vmatpush.bf16.msra.mxu0 %v494
      %504 = vmatmul.bf16.gmra.mxu0 %v479
      %v505 = vpop.f32.mrf.mxu0
      %v506 = vadd.f32 0.0, %v505
      %v507 = vpop.f32.mrf.mxu0
      %v508 = vadd.f32 0.0, %v507
      %509 = vmatmul.bf16.gmra.mxu0 %v482
      %v510 = vpop.f32.mrf.mxu0
      %v511 = vadd.f32 0.0, %v510
      %v512 = vpop.f32.mrf.mxu0
      %v513 = vadd.f32 0.0, %v512
      %514 = vmatmul.bf16.gmra.mxu0 %v485
      %v515 = vpop.f32.mrf.mxu0
      %v516 = vadd.f32 0.0, %v515
      %v517 = vpop.f32.mrf.mxu0
      %v518 = vadd.f32 0.0, %v517
      %519 = vmatmul.bf16.gmra.mxu0 %v488
      %v520 = vpop.f32.mrf.mxu0
      %v521 = vadd.f32 0.0, %v520
      %v522 = vpop.f32.mrf.mxu0
      %v523 = vadd.f32 0.0, %v522
      %524 = vmatmul.bf16.gmra.mxu0 %v491
      %v525 = vpop.f32.mrf.mxu0
      %v526 = vadd.f32 0.0, %v525
      %v527 = vpop.f32.mrf.mxu0
      %528 = vdwg.mxu0
      %v529 = vadd.f32 %v379, %v506
      %v530 = vadd.f32 %v381, %v508
      %v531 = vadd.f32 %v384, %v511
      %v532 = vadd.f32 %v386, %v513
      %v533 = vadd.f32 %v389, %v516
      %v534 = vadd.f32 %v391, %v518
      %v535 = vadd.f32 %v394, %v521
      %v536 = vadd.f32 %v396, %v523
      %v537 = vadd.f32 %v399, %v526
      %v538 = vld [vmem:[%s206 + $0x4] sm:$0xe]
      %s539 = scalar_lea.vmem %s210, 20
      %v540 = vld [vmem:[%s539] sm:$0x3]
      %v542 = vunpack.c.l.b16 %v538
      %v543 = vpack.c.b16 %v425, %v542
      %vm544 = vcmask 1046528
      %v545 = vrot.slane %v543, 1
      %v546 = vrot.slane %v435, 1
      %v547 = vsel %vm544, %v545, %v546
      %v548 = vrot.slane %v436, 1
      %v549 = vsel %vm544, %v546, %v548
      %v550 = vrot.slane %v437, 1
      %v551 = vsel %vm544, %v548, %v550
      %v552 = vrot.slane %v438, 1
      %v553 = vsel %vm544, %v550, %v552
      %v555 = vsel %vm301, %v547, 0
      %v558 = vsel %vm301, %v549, 0
      %v561 = vsel %vm301, %v551, 0
      %v564 = vsel %vm301, %v553, 0
      %v567 = vsel %vm301, %v552, 0
      %v570 = vsel %vm317, %v540, 0
      %572 = vmatpush.bf16.msra.mxu0 0
      %573 = vmatpush.bf16.msra.mxu0 0
      %574 = vmatpush.bf16.msra.mxu0 0
      %575 = vmatpush.bf16.msra.mxu0 0
      %576 = vmatpush.bf16.msra.mxu0 0
      %577 = vmatpush.bf16.msra.mxu0 0
      %578 = vmatpush.bf16.msra.mxu0 0
      %579 = vmatpush.bf16.msra.mxu0 %v570
      %580 = vmatmul.bf16.gmra.mxu0 %v555
      %v581 = vpop.f32.mrf.mxu0
      %v582 = vadd.f32 0.0, %v581
      %v583 = vpop.f32.mrf.mxu0
      %v584 = vadd.f32 0.0, %v583
      %585 = vmatmul.bf16.gmra.mxu0 %v558
      %v586 = vpop.f32.mrf.mxu0
      %v587 = vadd.f32 0.0, %v586
      %v588 = vpop.f32.mrf.mxu0
      %v589 = vadd.f32 0.0, %v588
      %590 = vmatmul.bf16.gmra.mxu0 %v561
      %v591 = vpop.f32.mrf.mxu0
      %v592 = vadd.f32 0.0, %v591
      %v593 = vpop.f32.mrf.mxu0
      %v594 = vadd.f32 0.0, %v593
      %595 = vmatmul.bf16.gmra.mxu0 %v564
      %v596 = vpop.f32.mrf.mxu0
      %v597 = vadd.f32 0.0, %v596
      %v598 = vpop.f32.mrf.mxu0
      %v599 = vadd.f32 0.0, %v598
      %600 = vmatmul.bf16.gmra.mxu0 %v567
      %v601 = vpop.f32.mrf.mxu0
      %v602 = vadd.f32 0.0, %v601
      %v603 = vpop.f32.mrf.mxu0
      %604 = vdwg.mxu0
      %v605 = vadd.f32 %v529, %v582
      %v606 = vadd.f32 %v530, %v584
      %v607 = vadd.f32 %v531, %v587
      %v608 = vadd.f32 %v532, %v589
      %v609 = vadd.f32 %v533, %v592
      %v610 = vadd.f32 %v534, %v594
      %v611 = vadd.f32 %v535, %v597
      %v612 = vadd.f32 %v536, %v599
      %v613 = vadd.f32 %v537, %v602
      %s614 = scalar_lea.vmem %s206, 48
      %v615 = vld [vmem:[%s614] sm:$0xf]
      %v616 = vld [vmem:[%s614 + $0x4] sm:$0xf]
      %v617 = vld [vmem:[%s614 + $0x8] sm:$0xf]
      %v618 = vld [vmem:[%s614 + $0xc] sm:$0xf]
      %v619 = vld [vmem:[%s614 + $0x10] sm:$0xf]
      %v620 = vld [vmem:[%s614 + $0x14] sm:$0xf]
      %v621 = vld [vmem:[%s614 + $0x18] sm:$0xf]
      %v622 = vld [vmem:[%s614 + $0x1c] sm:$0xf]
      %v623 = vld [vmem:[%s614 + $0x20] sm:$0xf]
      %s624 = scalar_lea.vmem %s210, 2
      %v625 = vld [vmem:[%s624] sm:$0x3]
      %v635 = vunpack.c.l.b16 %v615
      %v636 = vunpack.c.l.b16 %v616
      %v637 = vunpack.c.l.b16 %v617
      %v638 = vunpack.c.l.b16 %v618
      %v639 = vunpack.c.l.b16 %v619
      %v640 = vunpack.c.l.b16 %v620
      %v641 = vunpack.c.l.b16 %v621
      %v642 = vunpack.c.l.b16 %v622
      %v643 = vunpack.c.l.b16 %v623
      %v644 = vpack.c.b16 %v636, %v635
      %v645 = vpack.c.b16 %v638, %v637
      %v646 = vpack.c.b16 %v640, %v639
      %v647 = vpack.c.b16 %v642, %v641
      %v648 = vpack.c.b16 %v643, %v643
      %v650 = vsel %vm301, %v644, 0
      %v653 = vsel %vm301, %v645, 0
      %v656 = vsel %vm301, %v646, 0
      %v659 = vsel %vm301, %v647, 0
      %v662 = vsel %vm301, %v648, 0
      %v665 = vsel %vm317, %v625, 0
      %667 = vmatpush.bf16.msra.mxu0 0
      %668 = vmatpush.bf16.msra.mxu0 0
      %669 = vmatpush.bf16.msra.mxu0 0
      %670 = vmatpush.bf16.msra.mxu0 0
      %671 = vmatpush.bf16.msra.mxu0 0
      %672 = vmatpush.bf16.msra.mxu0 0
      %673 = vmatpush.bf16.msra.mxu0 0
      %674 = vmatpush.bf16.msra.mxu0 %v665
      %675 = vmatmul.bf16.gmra.mxu0 %v650
      %v676 = vpop.f32.mrf.mxu0
      %v677 = vadd.f32 0.0, %v676
      %v678 = vpop.f32.mrf.mxu0
      %v679 = vadd.f32 0.0, %v678
      %680 = vmatmul.bf16.gmra.mxu0 %v653
      %v681 = vpop.f32.mrf.mxu0
      %v682 = vadd.f32 0.0, %v681
      %v683 = vpop.f32.mrf.mxu0
      %v684 = vadd.f32 0.0, %v683
      %685 = vmatmul.bf16.gmra.mxu0 %v656
      %v686 = vpop.f32.mrf.mxu0
      %v687 = vadd.f32 0.0, %v686
      %v688 = vpop.f32.mrf.mxu0
      %v689 = vadd.f32 0.0, %v688
      %690 = vmatmul.bf16.gmra.mxu0 %v659
      %v691 = vpop.f32.mrf.mxu0
      %v692 = vadd.f32 0.0, %v691
      %v693 = vpop.f32.mrf.mxu0
      %v694 = vadd.f32 0.0, %v693
      %695 = vmatmul.bf16.gmra.mxu0 %v662
      %v696 = vpop.f32.mrf.mxu0
      %v697 = vadd.f32 0.0, %v696
      %v698 = vpop.f32.mrf.mxu0
      %699 = vdwg.mxu0
      %v700 = vadd.f32 %v605, %v677
      %v701 = vadd.f32 %v606, %v679
      %v702 = vadd.f32 %v607, %v682
      %v703 = vadd.f32 %v608, %v684
      %v704 = vadd.f32 %v609, %v687
      %v705 = vadd.f32 %v610, %v689
      %v706 = vadd.f32 %v611, %v692
      %v707 = vadd.f32 %v612, %v694
      %v708 = vadd.f32 %v613, %v697
      %v709 = vld [vmem:[%s614] sm:$0xf]
      %v710 = vld [vmem:[%s614 + $0x4] sm:$0xf]
      %v711 = vld [vmem:[%s614 + $0x8] sm:$0xf]
      %v712 = vld [vmem:[%s614 + $0xc] sm:$0xf]
      %v713 = vld [vmem:[%s614 + $0x10] sm:$0xf]
      %v714 = vld [vmem:[%s614 + $0x14] sm:$0xf]
      %v715 = vld [vmem:[%s614 + $0x18] sm:$0xf]
      %v716 = vld [vmem:[%s614 + $0x1c] sm:$0xf]
      %v717 = vld [vmem:[%s614 + $0x20] sm:$0xf]
      %v718 = vld [vmem:[%s614 + $0x24] sm:$0x1]
      %s719 = scalar_lea.vmem %s210, 6
      %v720 = vld [vmem:[%s719] sm:$0x3]
      %v731 = vunpack.c.l.b16 %v709
      %v732 = vunpack.c.l.b16 %v710
      %v733 = vunpack.c.l.b16 %v711
      %v734 = vunpack.c.l.b16 %v712
      %v735 = vunpack.c.l.b16 %v713
      %v736 = vunpack.c.l.b16 %v714
      %v737 = vunpack.c.l.b16 %v715
      %v738 = vunpack.c.l.b16 %v716
      %v739 = vunpack.c.l.b16 %v717
      %v740 = vunpack.c.l.b16 %v718
      %v741 = vpack.c.b16 %v732, %v731
      %v742 = vpack.c.b16 %v734, %v733
      %v743 = vpack.c.b16 %v736, %v735
      %v744 = vpack.c.b16 %v738, %v737
      %v745 = vpack.c.b16 %v740, %v739
      %v747 = vshrl.u32 %v741, 16
      %v749 = vshll.u32 %v741, 16
      %v751 = vrot.slane %v749, 1
      %v752 = vor.u32 %v747, %v751
      %v754 = vshll.u32 %v742, 16
      %v756 = vrot.slane %v754, 1
      %v757 = vsel %vm261, %v752, %v756
      %v758 = vshrl.u32 %v742, 16
      %v760 = vor.u32 %v758, %v756
      %v762 = vshll.u32 %v743, 16
      %v764 = vrot.slane %v762, 1
      %v765 = vsel %vm261, %v760, %v764
      %v766 = vshrl.u32 %v743, 16
      %v768 = vor.u32 %v766, %v764
      %v770 = vshll.u32 %v744, 16
      %v772 = vrot.slane %v770, 1
      %v773 = vsel %vm261, %v768, %v772
      %v774 = vshrl.u32 %v744, 16
      %v776 = vor.u32 %v774, %v772
      %v778 = vshll.u32 %v745, 16
      %v780 = vrot.slane %v778, 1
      %v781 = vsel %vm261, %v776, %v780
      %v782 = vshrl.u32 %v745, 16
      %v784 = vor.u32 %v782, %v780
      %v786 = vsel %vm301, %v757, 0
      %v789 = vsel %vm301, %v765, 0
      %v792 = vsel %vm301, %v773, 0
      %v795 = vsel %vm301, %v781, 0
      %v798 = vsel %vm301, %v784, 0
      %v801 = vsel %vm317, %v720, 0
      %803 = vmatpush.bf16.msra.mxu0 0
      %804 = vmatpush.bf16.msra.mxu0 0
      %805 = vmatpush.bf16.msra.mxu0 0
      %806 = vmatpush.bf16.msra.mxu0 0
      %807 = vmatpush.bf16.msra.mxu0 0
      %808 = vmatpush.bf16.msra.mxu0 0
      %809 = vmatpush.bf16.msra.mxu0 0
      %810 = vmatpush.bf16.msra.mxu0 %v801
      %811 = vmatmul.bf16.gmra.mxu0 %v786
      %v812 = vpop.f32.mrf.mxu0
      %v813 = vadd.f32 0.0, %v812
      %v814 = vpop.f32.mrf.mxu0
      %v815 = vadd.f32 0.0, %v814
      %816 = vmatmul.bf16.gmra.mxu0 %v789
      %v817 = vpop.f32.mrf.mxu0
      %v818 = vadd.f32 0.0, %v817
      %v819 = vpop.f32.mrf.mxu0
      %v820 = vadd.f32 0.0, %v819
      %821 = vmatmul.bf16.gmra.mxu0 %v792
      %v822 = vpop.f32.mrf.mxu0
      %v823 = vadd.f32 0.0, %v822
      %v824 = vpop.f32.mrf.mxu0
      %v825 = vadd.f32 0.0, %v824
      %826 = vmatmul.bf16.gmra.mxu0 %v795
      %v827 = vpop.f32.mrf.mxu0
      %v828 = vadd.f32 0.0, %v827
      %v829 = vpop.f32.mrf.mxu0
      %v830 = vadd.f32 0.0, %v829
      %831 = vmatmul.bf16.gmra.mxu0 %v798
      %v832 = vpop.f32.mrf.mxu0
      %v833 = vadd.f32 0.0, %v832
      %v834 = vpop.f32.mrf.mxu0
      %835 = vdwg.mxu0
      %v836 = vadd.f32 %v700, %v813
      %v837 = vadd.f32 %v701, %v815
      %v838 = vadd.f32 %v702, %v818
      %v839 = vadd.f32 %v703, %v820
      %v840 = vadd.f32 %v704, %v823
      %v841 = vadd.f32 %v705, %v825
      %v842 = vadd.f32 %v706, %v828
      %v843 = vadd.f32 %v707, %v830
      %v844 = vadd.f32 %v708, %v833
      %v845 = vld [vmem:[%s614 + $0x4] sm:$0xf]
      %v846 = vld [vmem:[%s614 + $0x8] sm:$0xf]
      %v847 = vld [vmem:[%s614 + $0xc] sm:$0xf]
      %v848 = vld [vmem:[%s614 + $0x10] sm:$0xf]
      %v849 = vld [vmem:[%s614 + $0x14] sm:$0xf]
      %v850 = vld [vmem:[%s614 + $0x18] sm:$0xf]
      %v851 = vld [vmem:[%s614 + $0x1c] sm:$0xf]
      %v852 = vld [vmem:[%s614 + $0x20] sm:$0xf]
      %v853 = vld [vmem:[%s614 + $0x24] sm:$0xf]
      %v854 = vld [vmem:[%s614 + $0x28] sm:$0x1]
      %s855 = scalar_lea.vmem %s210, 18
      %v856 = vld [vmem:[%s855] sm:$0x3]
      %v867 = vunpack.c.l.b16 %v845
      %v868 = vunpack.c.l.b16 %v846
      %v869 = vunpack.c.l.b16 %v847
      %v870 = vunpack.c.l.b16 %v848
      %v871 = vunpack.c.l.b16 %v849
      %v872 = vunpack.c.l.b16 %v850
      %v873 = vunpack.c.l.b16 %v851
      %v874 = vunpack.c.l.b16 %v852
      %v875 = vunpack.c.l.b16 %v853
      %v876 = vunpack.c.l.b16 %v854
      %v877 = vpack.c.b16 %v868, %v867
      %v878 = vpack.c.b16 %v870, %v869
      %v879 = vpack.c.b16 %v872, %v871
      %v880 = vpack.c.b16 %v874, %v873
      %v881 = vpack.c.b16 %v876, %v875
      %v883 = vshrl.u32 %v877, 16
      %v885 = vshll.u32 %v877, 16
      %v887 = vrot.slane %v885, 1
      %v888 = vor.u32 %v883, %v887
      %v890 = vshll.u32 %v878, 16
      %v892 = vrot.slane %v890, 1
      %v893 = vsel %vm261, %v888, %v892
      %v894 = vshrl.u32 %v878, 16
      %v896 = vor.u32 %v894, %v892
      %v898 = vshll.u32 %v879, 16
      %v900 = vrot.slane %v898, 1
      %v901 = vsel %vm261, %v896, %v900
      %v902 = vshrl.u32 %v879, 16
      %v904 = vor.u32 %v902, %v900
      %v906 = vshll.u32 %v880, 16
      %v908 = vrot.slane %v906, 1
      %v909 = vsel %vm261, %v904, %v908
      %v910 = vshrl.u32 %v880, 16
      %v912 = vor.u32 %v910, %v908
      %v914 = vshll.u32 %v881, 16
      %v916 = vrot.slane %v914, 1
      %v917 = vsel %vm261, %v912, %v916
      %v918 = vshrl.u32 %v881, 16
      %v920 = vor.u32 %v918, %v916
      %v922 = vsel %vm301, %v893, 0
      %v925 = vsel %vm301, %v901, 0
      %v928 = vsel %vm301, %v909, 0
      %v931 = vsel %vm301, %v917, 0
      %v934 = vsel %vm301, %v920, 0
      %v937 = vsel %vm317, %v856, 0
      %939 = vmatpush.bf16.msra.mxu0 0
      %940 = vmatpush.bf16.msra.mxu0 0
      %941 = vmatpush.bf16.msra.mxu0 0
      %942 = vmatpush.bf16.msra.mxu0 0
      %943 = vmatpush.bf16.msra.mxu0 0
      %944 = vmatpush.bf16.msra.mxu0 0
      %945 = vmatpush.bf16.msra.mxu0 0
      %946 = vmatpush.bf16.msra.mxu0 %v937
      %947 = vmatmul.bf16.gmra.mxu0 %v922
      %v948 = vpop.f32.mrf.mxu0
      %v949 = vadd.f32 0.0, %v948
      %v950 = vpop.f32.mrf.mxu0
      %v951 = vadd.f32 0.0, %v950
      %952 = vmatmul.bf16.gmra.mxu0 %v925
      %v953 = vpop.f32.mrf.mxu0
      %v954 = vadd.f32 0.0, %v953
      %v955 = vpop.f32.mrf.mxu0
      %v956 = vadd.f32 0.0, %v955
      %957 = vmatmul.bf16.gmra.mxu0 %v928
      %v958 = vpop.f32.mrf.mxu0
      %v959 = vadd.f32 0.0, %v958
      %v960 = vpop.f32.mrf.mxu0
      %v961 = vadd.f32 0.0, %v960
      %962 = vmatmul.bf16.gmra.mxu0 %v931
      %v963 = vpop.f32.mrf.mxu0
      %v964 = vadd.f32 0.0, %v963
      %v965 = vpop.f32.mrf.mxu0
      %v966 = vadd.f32 0.0, %v965
      %967 = vmatmul.bf16.gmra.mxu0 %v934
      %v968 = vpop.f32.mrf.mxu0
      %v969 = vadd.f32 0.0, %v968
      %v970 = vpop.f32.mrf.mxu0
      %971 = vdwg.mxu0
      %v972 = vadd.f32 %v836, %v949
      %v973 = vadd.f32 %v837, %v951
      %v974 = vadd.f32 %v838, %v954
      %v975 = vadd.f32 %v839, %v956
      %v976 = vadd.f32 %v840, %v959
      %v977 = vadd.f32 %v841, %v961
      %v978 = vadd.f32 %v842, %v964
      %v979 = vadd.f32 %v843, %v966
      %v980 = vadd.f32 %v844, %v969
      %v981 = vld [vmem:[%s614 + $0x4] sm:$0xe]
      %s982 = scalar_lea.vmem %s210, 22
      %v983 = vld [vmem:[%s982] sm:$0x3]
      %v985 = vunpack.c.l.b16 %v981
      %v986 = vpack.c.b16 %v868, %v985
      %v987 = vrot.slane %v986, 1
      %v988 = vrot.slane %v878, 1
      %v989 = vsel %vm544, %v987, %v988
      %v990 = vrot.slane %v879, 1
      %v991 = vsel %vm544, %v988, %v990
      %v992 = vrot.slane %v880, 1
      %v993 = vsel %vm544, %v990, %v992
      %v994 = vrot.slane %v881, 1
      %v995 = vsel %vm544, %v992, %v994
      %v997 = vsel %vm301, %v989, 0
      %v1000 = vsel %vm301, %v991, 0
      %v1003 = vsel %vm301, %v993, 0
      %v1006 = vsel %vm301, %v995, 0
      %v1009 = vsel %vm301, %v994, 0
      %v1012 = vsel %vm317, %v983, 0
      %1014 = vmatpush.bf16.msra.mxu0 0
      %1015 = vmatpush.bf16.msra.mxu0 0
      %1016 = vmatpush.bf16.msra.mxu0 0
      %1017 = vmatpush.bf16.msra.mxu0 0
      %1018 = vmatpush.bf16.msra.mxu0 0
      %1019 = vmatpush.bf16.msra.mxu0 0
      %1020 = vmatpush.bf16.msra.mxu0 0
      %1021 = vmatpush.bf16.msra.mxu0 %v1012
      %1022 = vmatmul.bf16.gmra.mxu0 %v997
      %v1023 = vpop.f32.mrf.mxu0
      %v1024 = vadd.f32 0.0, %v1023
      %v1025 = vpop.f32.mrf.mxu0
      %v1026 = vadd.f32 0.0, %v1025
      %1027 = vmatmul.bf16.gmra.mxu0 %v1000
      %v1028 = vpop.f32.mrf.mxu0
      %v1029 = vadd.f32 0.0, %v1028
      %v1030 = vpop.f32.mrf.mxu0
      %v1031 = vadd.f32 0.0, %v1030
      %1032 = vmatmul.bf16.gmra.mxu0 %v1003
      %v1033 = vpop.f32.mrf.mxu0
      %v1034 = vadd.f32 0.0, %v1033
      %v1035 = vpop.f32.mrf.mxu0
      %v1036 = vadd.f32 0.0, %v1035
      %1037 = vmatmul.bf16.gmra.mxu0 %v1006
      %v1038 = vpop.f32.mrf.mxu0
      %v1039 = vadd.f32 0.0, %v1038
      %v1040 = vpop.f32.mrf.mxu0
      %v1041 = vadd.f32 0.0, %v1040
      %1042 = vmatmul.bf16.gmra.mxu0 %v1009
      %v1043 = vpop.f32.mrf.mxu0
      %v1044 = vadd.f32 0.0, %v1043
      %v1045 = vpop.f32.mrf.mxu0
      %1046 = vdwg.mxu0
      %v1047 = vadd.f32 %v972, %v1024
      %v1048 = vadd.f32 %v973, %v1026
      %v1049 = vadd.f32 %v974, %v1029
      %v1050 = vadd.f32 %v975, %v1031
      %v1051 = vadd.f32 %v976, %v1034
      %v1052 = vadd.f32 %v977, %v1036
      %v1053 = vadd.f32 %v978, %v1039
      %v1054 = vadd.f32 %v979, %v1041
      %v1055 = vadd.f32 %v980, %v1044
      %s1056 = scalar_lea.vmem %s206, 96
      %v1057 = vld [vmem:[%s1056] sm:$0xf]
      %v1058 = vld [vmem:[%s1056 + $0x4] sm:$0xf]
      %v1059 = vld [vmem:[%s1056 + $0x8] sm:$0xf]
      %v1060 = vld [vmem:[%s1056 + $0xc] sm:$0xf]
      %v1061 = vld [vmem:[%s1056 + $0x10] sm:$0xf]
      %v1062 = vld [vmem:[%s1056 + $0x14] sm:$0xf]
      %v1063 = vld [vmem:[%s1056 + $0x18] sm:$0xf]
      %v1064 = vld [vmem:[%s1056 + $0x1c] sm:$0xf]
      %v1065 = vld [vmem:[%s1056 + $0x20] sm:$0xf]
      %s1066 = scalar_lea.vmem %s210, 8
      %v1067 = vld [vmem:[%s1066] sm:$0x3]
      %v1077 = vunpack.c.l.b16 %v1057
      %v1078 = vunpack.c.l.b16 %v1058
      %v1079 = vunpack.c.l.b16 %v1059
      %v1080 = vunpack.c.l.b16 %v1060
      %v1081 = vunpack.c.l.b16 %v1061
      %v1082 = vunpack.c.l.b16 %v1062
      %v1083 = vunpack.c.l.b16 %v1063
      %v1084 = vunpack.c.l.b16 %v1064
      %v1085 = vunpack.c.l.b16 %v1065
      %v1086 = vpack.c.b16 %v1078, %v1077
      %v1087 = vpack.c.b16 %v1080, %v1079
      %v1088 = vpack.c.b16 %v1082, %v1081
      %v1089 = vpack.c.b16 %v1084, %v1083
      %v1090 = vpack.c.b16 %v1085, %v1085
      %v1092 = vsel %vm301, %v1086, 0
      %v1095 = vsel %vm301, %v1087, 0
      %v1098 = vsel %vm301, %v1088, 0
      %v1101 = vsel %vm301, %v1089, 0
      %v1104 = vsel %vm301, %v1090, 0
      %v1107 = vsel %vm317, %v1067, 0
      %1109 = vmatpush.bf16.msra.mxu0 0
      %1110 = vmatpush.bf16.msra.mxu0 0
      %1111 = vmatpush.bf16.msra.mxu0 0
      %1112 = vmatpush.bf16.msra.mxu0 0
      %1113 = vmatpush.bf16.msra.mxu0 0
      %1114 = vmatpush.bf16.msra.mxu0 0
      %1115 = vmatpush.bf16.msra.mxu0 0
      %1116 = vmatpush.bf16.msra.mxu0 %v1107
      %1117 = vmatmul.bf16.gmra.mxu0 %v1092
      %v1118 = vpop.f32.mrf.mxu0
      %v1119 = vadd.f32 0.0, %v1118
      %v1120 = vpop.f32.mrf.mxu0
      %v1121 = vadd.f32 0.0, %v1120
      %1122 = vmatmul.bf16.gmra.mxu0 %v1095
      %v1123 = vpop.f32.mrf.mxu0
      %v1124 = vadd.f32 0.0, %v1123
      %v1125 = vpop.f32.mrf.mxu0
      %v1126 = vadd.f32 0.0, %v1125
      %1127 = vmatmul.bf16.gmra.mxu0 %v1098
      %v1128 = vpop.f32.mrf.mxu0
      %v1129 = vadd.f32 0.0, %v1128
      %v1130 = vpop.f32.mrf.mxu0
      %v1131 = vadd.f32 0.0, %v1130
      %1132 = vmatmul.bf16.gmra.mxu0 %v1101
      %v1133 = vpop.f32.mrf.mxu0
      %v1134 = vadd.f32 0.0, %v1133
      %v1135 = vpop.f32.mrf.mxu0
      %v1136 = vadd.f32 0.0, %v1135
      %1137 = vmatmul.bf16.gmra.mxu0 %v1104
      %v1138 = vpop.f32.mrf.mxu0
      %v1139 = vadd.f32 0.0, %v1138
      %v1140 = vpop.f32.mrf.mxu0
      %1141 = vdwg.mxu0
      %v1142 = vadd.f32 %v1047, %v1119
      %v1143 = vadd.f32 %v1048, %v1121
      %v1144 = vadd.f32 %v1049, %v1124
      %v1145 = vadd.f32 %v1050, %v1126
      %v1146 = vadd.f32 %v1051, %v1129
      %v1147 = vadd.f32 %v1052, %v1131
      %v1148 = vadd.f32 %v1053, %v1134
      %v1149 = vadd.f32 %v1054, %v1136
      %v1150 = vadd.f32 %v1055, %v1139
      %v1151 = vld [vmem:[%s1056] sm:$0xf]
      %v1152 = vld [vmem:[%s1056 + $0x4] sm:$0xf]
      %v1153 = vld [vmem:[%s1056 + $0x8] sm:$0xf]
      %v1154 = vld [vmem:[%s1056 + $0xc] sm:$0xf]
      %v1155 = vld [vmem:[%s1056 + $0x10] sm:$0xf]
      %v1156 = vld [vmem:[%s1056 + $0x14] sm:$0xf]
      %v1157 = vld [vmem:[%s1056 + $0x18] sm:$0xf]
      %v1158 = vld [vmem:[%s1056 + $0x1c] sm:$0xf]
      %v1159 = vld [vmem:[%s1056 + $0x20] sm:$0xf]
      %v1160 = vld [vmem:[%s1056 + $0x24] sm:$0x1]
      %s1161 = scalar_lea.vmem %s210, 12
      %v1162 = vld [vmem:[%s1161] sm:$0x3]
      %v1173 = vunpack.c.l.b16 %v1151
      %v1174 = vunpack.c.l.b16 %v1152
      %v1175 = vunpack.c.l.b16 %v1153
      %v1176 = vunpack.c.l.b16 %v1154
      %v1177 = vunpack.c.l.b16 %v1155
      %v1178 = vunpack.c.l.b16 %v1156
      %v1179 = vunpack.c.l.b16 %v1157
      %v1180 = vunpack.c.l.b16 %v1158
      %v1181 = vunpack.c.l.b16 %v1159
      %v1182 = vunpack.c.l.b16 %v1160
      %v1183 = vpack.c.b16 %v1174, %v1173
      %v1184 = vpack.c.b16 %v1176, %v1175
      %v1185 = vpack.c.b16 %v1178, %v1177
      %v1186 = vpack.c.b16 %v1180, %v1179
      %v1187 = vpack.c.b16 %v1182, %v1181
      %v1189 = vshrl.u32 %v1183, 16
      %v1191 = vshll.u32 %v1183, 16
      %v1193 = vrot.slane %v1191, 1
      %v1194 = vor.u32 %v1189, %v1193
      %v1196 = vshll.u32 %v1184, 16
      %v1198 = vrot.slane %v1196, 1
      %v1199 = vsel %vm261, %v1194, %v1198
      %v1200 = vshrl.u32 %v1184, 16
      %v1202 = vor.u32 %v1200, %v1198
      %v1204 = vshll.u32 %v1185, 16
      %v1206 = vrot.slane %v1204, 1
      %v1207 = vsel %vm261, %v1202, %v1206
      %v1208 = vshrl.u32 %v1185, 16
      %v1210 = vor.u32 %v1208, %v1206
      %v1212 = vshll.u32 %v1186, 16
      %v1214 = vrot.slane %v1212, 1
      %v1215 = vsel %vm261, %v1210, %v1214
      %v1216 = vshrl.u32 %v1186, 16
      %v1218 = vor.u32 %v1216, %v1214
      %v1220 = vshll.u32 %v1187, 16
      %v1222 = vrot.slane %v1220, 1
      %v1223 = vsel %vm261, %v1218, %v1222
      %v1224 = vshrl.u32 %v1187, 16
      %v1226 = vor.u32 %v1224, %v1222
      %v1228 = vsel %vm301, %v1199, 0
      %v1231 = vsel %vm301, %v1207, 0
      %v1234 = vsel %vm301, %v1215, 0
      %v1237 = vsel %vm301, %v1223, 0
      %v1240 = vsel %vm301, %v1226, 0
      %v1243 = vsel %vm317, %v1162, 0
      %1245 = vmatpush.bf16.msra.mxu0 0
      %1246 = vmatpush.bf16.msra.mxu0 0
      %1247 = vmatpush.bf16.msra.mxu0 0
      %1248 = vmatpush.bf16.msra.mxu0 0
      %1249 = vmatpush.bf16.msra.mxu0 0
      %1250 = vmatpush.bf16.msra.mxu0 0
      %1251 = vmatpush.bf16.msra.mxu0 0
      %1252 = vmatpush.bf16.msra.mxu0 %v1243
      %1253 = vmatmul.bf16.gmra.mxu0 %v1228
      %v1254 = vpop.f32.mrf.mxu0
      %v1255 = vadd.f32 0.0, %v1254
      %v1256 = vpop.f32.mrf.mxu0
      %v1257 = vadd.f32 0.0, %v1256
      %1258 = vmatmul.bf16.gmra.mxu0 %v1231
      %v1259 = vpop.f32.mrf.mxu0
      %v1260 = vadd.f32 0.0, %v1259
      %v1261 = vpop.f32.mrf.mxu0
      %v1262 = vadd.f32 0.0, %v1261
      %1263 = vmatmul.bf16.gmra.mxu0 %v1234
      %v1264 = vpop.f32.mrf.mxu0
      %v1265 = vadd.f32 0.0, %v1264
      %v1266 = vpop.f32.mrf.mxu0
      %v1267 = vadd.f32 0.0, %v1266
      %1268 = vmatmul.bf16.gmra.mxu0 %v1237
      %v1269 = vpop.f32.mrf.mxu0
      %v1270 = vadd.f32 0.0, %v1269
      %v1271 = vpop.f32.mrf.mxu0
      %v1272 = vadd.f32 0.0, %v1271
      %1273 = vmatmul.bf16.gmra.mxu0 %v1240
      %v1274 = vpop.f32.mrf.mxu0
      %v1275 = vadd.f32 0.0, %v1274
      %v1276 = vpop.f32.mrf.mxu0
      %1277 = vdwg.mxu0
      %v1278 = vadd.f32 %v1142, %v1255
      %v1279 = vadd.f32 %v1143, %v1257
      %v1280 = vadd.f32 %v1144, %v1260
      %v1281 = vadd.f32 %v1145, %v1262
      %v1282 = vadd.f32 %v1146, %v1265
      %v1283 = vadd.f32 %v1147, %v1267
      %v1284 = vadd.f32 %v1148, %v1270
      %v1285 = vadd.f32 %v1149, %v1272
      %v1286 = vadd.f32 %v1150, %v1275
      %v1287 = vld [vmem:[%s1056 + $0x4] sm:$0xf]
      %v1288 = vld [vmem:[%s1056 + $0x8] sm:$0xf]
      %v1289 = vld [vmem:[%s1056 + $0xc] sm:$0xf]
      %v1290 = vld [vmem:[%s1056 + $0x10] sm:$0xf]
      %v1291 = vld [vmem:[%s1056 + $0x14] sm:$0xf]
      %v1292 = vld [vmem:[%s1056 + $0x18] sm:$0xf]
      %v1293 = vld [vmem:[%s1056 + $0x1c] sm:$0xf]
      %v1294 = vld [vmem:[%s1056 + $0x20] sm:$0xf]
      %v1295 = vld [vmem:[%s1056 + $0x24] sm:$0xf]
      %v1296 = vld [vmem:[%s1056 + $0x28] sm:$0x1]
      %s1297 = scalar_lea.vmem %s210, 24
      %v1298 = vld [vmem:[%s1297] sm:$0x3]
      %v1309 = vunpack.c.l.b16 %v1287
      %v1310 = vunpack.c.l.b16 %v1288
      %v1311 = vunpack.c.l.b16 %v1289
      %v1312 = vunpack.c.l.b16 %v1290
      %v1313 = vunpack.c.l.b16 %v1291
      %v1314 = vunpack.c.l.b16 %v1292
      %v1315 = vunpack.c.l.b16 %v1293
      %v1316 = vunpack.c.l.b16 %v1294
      %v1317 = vunpack.c.l.b16 %v1295
      %v1318 = vunpack.c.l.b16 %v1296
      %v1319 = vpack.c.b16 %v1310, %v1309
      %v1320 = vpack.c.b16 %v1312, %v1311
      %v1321 = vpack.c.b16 %v1314, %v1313
      %v1322 = vpack.c.b16 %v1316, %v1315
      %v1323 = vpack.c.b16 %v1318, %v1317
      %v1325 = vshrl.u32 %v1319, 16
      %v1327 = vshll.u32 %v1319, 16
      %v1329 = vrot.slane %v1327, 1
      %v1330 = vor.u32 %v1325, %v1329
      %v1332 = vshll.u32 %v1320, 16
      %v1334 = vrot.slane %v1332, 1
      %v1335 = vsel %vm261, %v1330, %v1334
      %v1336 = vshrl.u32 %v1320, 16
      %v1338 = vor.u32 %v1336, %v1334
      %v1340 = vshll.u32 %v1321, 16
      %v1342 = vrot.slane %v1340, 1
      %v1343 = vsel %vm261, %v1338, %v1342
      %v1344 = vshrl.u32 %v1321, 16
      %v1346 = vor.u32 %v1344, %v1342
      %v1348 = vshll.u32 %v1322, 16
      %v1350 = vrot.slane %v1348, 1
      %v1351 = vsel %vm261, %v1346, %v1350
      %v1352 = vshrl.u32 %v1322, 16
      %v1354 = vor.u32 %v1352, %v1350
      %v1356 = vshll.u32 %v1323, 16
      %v1358 = vrot.slane %v1356, 1
      %v1359 = vsel %vm261, %v1354, %v1358
      %v1360 = vshrl.u32 %v1323, 16
      %v1362 = vor.u32 %v1360, %v1358
      %v1364 = vsel %vm301, %v1335, 0
      %v1367 = vsel %vm301, %v1343, 0
      %v1370 = vsel %vm301, %v1351, 0
      %v1373 = vsel %vm301, %v1359, 0
      %v1376 = vsel %vm301, %v1362, 0
      %v1379 = vsel %vm317, %v1298, 0
      %1381 = vmatpush.bf16.msra.mxu0 0
      %1382 = vmatpush.bf16.msra.mxu0 0
      %1383 = vmatpush.bf16.msra.mxu0 0
      %1384 = vmatpush.bf16.msra.mxu0 0
      %1385 = vmatpush.bf16.msra.mxu0 0
      %1386 = vmatpush.bf16.msra.mxu0 0
      %1387 = vmatpush.bf16.msra.mxu0 0
      %1388 = vmatpush.bf16.msra.mxu0 %v1379
      %1389 = vmatmul.bf16.gmra.mxu0 %v1364
      %v1390 = vpop.f32.mrf.mxu0
      %v1391 = vadd.f32 0.0, %v1390
      %v1392 = vpop.f32.mrf.mxu0
      %v1393 = vadd.f32 0.0, %v1392
      %1394 = vmatmul.bf16.gmra.mxu0 %v1367
      %v1395 = vpop.f32.mrf.mxu0
      %v1396 = vadd.f32 0.0, %v1395
      %v1397 = vpop.f32.mrf.mxu0
      %v1398 = vadd.f32 0.0, %v1397
      %1399 = vmatmul.bf16.gmra.mxu0 %v1370
      %v1400 = vpop.f32.mrf.mxu0
      %v1401 = vadd.f32 0.0, %v1400
      %v1402 = vpop.f32.mrf.mxu0
      %v1403 = vadd.f32 0.0, %v1402
      %1404 = vmatmul.bf16.gmra.mxu0 %v1373
      %v1405 = vpop.f32.mrf.mxu0
      %v1406 = vadd.f32 0.0, %v1405
      %v1407 = vpop.f32.mrf.mxu0
      %v1408 = vadd.f32 0.0, %v1407
      %1409 = vmatmul.bf16.gmra.mxu0 %v1376
      %v1410 = vpop.f32.mrf.mxu0
      %v1411 = vadd.f32 0.0, %v1410
      %v1412 = vpop.f32.mrf.mxu0
      %1413 = vdwg.mxu0
      %v1414 = vadd.f32 %v1278, %v1391
      %v1415 = vadd.f32 %v1279, %v1393
      %v1416 = vadd.f32 %v1280, %v1396
      %v1417 = vadd.f32 %v1281, %v1398
      %v1418 = vadd.f32 %v1282, %v1401
      %v1419 = vadd.f32 %v1283, %v1403
      %v1420 = vadd.f32 %v1284, %v1406
      %v1421 = vadd.f32 %v1285, %v1408
      %v1422 = vadd.f32 %v1286, %v1411
      %v1423 = vld [vmem:[%s1056 + $0x4] sm:$0xe]
      %s1424 = scalar_lea.vmem %s210, 28
      %v1425 = vld [vmem:[%s1424] sm:$0x3]
      %v1427 = vunpack.c.l.b16 %v1423
      %v1428 = vpack.c.b16 %v1310, %v1427
      %v1429 = vrot.slane %v1428, 1
      %v1430 = vrot.slane %v1320, 1
      %v1431 = vsel %vm544, %v1429, %v1430
      %v1432 = vrot.slane %v1321, 1
      %v1433 = vsel %vm544, %v1430, %v1432
      %v1434 = vrot.slane %v1322, 1
      %v1435 = vsel %vm544, %v1432, %v1434
      %v1436 = vrot.slane %v1323, 1
      %v1437 = vsel %vm544, %v1434, %v1436
      %v1439 = vsel %vm301, %v1431, 0
      %v1442 = vsel %vm301, %v1433, 0
      %v1445 = vsel %vm301, %v1435, 0
      %v1448 = vsel %vm301, %v1437, 0
      %v1451 = vsel %vm301, %v1436, 0
      %v1454 = vsel %vm317, %v1425, 0
      %1456 = vmatpush.bf16.msra.mxu0 0
      %1457 = vmatpush.bf16.msra.mxu0 0
      %1458 = vmatpush.bf16.msra.mxu0 0
      %1459 = vmatpush.bf16.msra.mxu0 0
      %1460 = vmatpush.bf16.msra.mxu0 0
      %1461 = vmatpush.bf16.msra.mxu0 0
      %1462 = vmatpush.bf16.msra.mxu0 0
      %1463 = vmatpush.bf16.msra.mxu0 %v1454
      %1464 = vmatmul.bf16.gmra.mxu0 %v1439
      %v1465 = vpop.f32.mrf.mxu0
      %v1466 = vadd.f32 0.0, %v1465
      %v1467 = vpop.f32.mrf.mxu0
      %v1468 = vadd.f32 0.0, %v1467
      %1469 = vmatmul.bf16.gmra.mxu0 %v1442
      %v1470 = vpop.f32.mrf.mxu0
      %v1471 = vadd.f32 0.0, %v1470
      %v1472 = vpop.f32.mrf.mxu0
      %v1473 = vadd.f32 0.0, %v1472
      %1474 = vmatmul.bf16.gmra.mxu0 %v1445
      %v1475 = vpop.f32.mrf.mxu0
      %v1476 = vadd.f32 0.0, %v1475
      %v1477 = vpop.f32.mrf.mxu0
      %v1478 = vadd.f32 0.0, %v1477
      %1479 = vmatmul.bf16.gmra.mxu0 %v1448
      %v1480 = vpop.f32.mrf.mxu0
      %v1481 = vadd.f32 0.0, %v1480
      %v1482 = vpop.f32.mrf.mxu0
      %v1483 = vadd.f32 0.0, %v1482
      %1484 = vmatmul.bf16.gmra.mxu0 %v1451
      %v1485 = vpop.f32.mrf.mxu0
      %v1486 = vadd.f32 0.0, %v1485
      %v1487 = vpop.f32.mrf.mxu0
      %1488 = vdwg.mxu0
      %v1489 = vadd.f32 %v1414, %v1466
      %v1490 = vadd.f32 %v1415, %v1468
      %v1491 = vadd.f32 %v1416, %v1471
      %v1492 = vadd.f32 %v1417, %v1473
      %v1493 = vadd.f32 %v1418, %v1476
      %v1494 = vadd.f32 %v1419, %v1478
      %v1495 = vadd.f32 %v1420, %v1481
      %v1496 = vadd.f32 %v1421, %v1483
      %v1497 = vadd.f32 %v1422, %v1486
      %s1498 = scalar_lea.vmem %s206, 144
      %v1499 = vld [vmem:[%s1498] sm:$0xf]
      %v1500 = vld [vmem:[%s1498 + $0x4] sm:$0xf]
      %v1501 = vld [vmem:[%s1498 + $0x8] sm:$0xf]
      %v1502 = vld [vmem:[%s1498 + $0xc] sm:$0xf]
      %v1503 = vld [vmem:[%s1498 + $0x10] sm:$0xf]
      %v1504 = vld [vmem:[%s1498 + $0x14] sm:$0xf]
      %v1505 = vld [vmem:[%s1498 + $0x18] sm:$0xf]
      %v1506 = vld [vmem:[%s1498 + $0x1c] sm:$0xf]
      %v1507 = vld [vmem:[%s1498 + $0x20] sm:$0xf]
      %s1508 = scalar_lea.vmem %s210, 10
      %v1509 = vld [vmem:[%s1508] sm:$0x3]
      %v1519 = vunpack.c.l.b16 %v1499
      %v1520 = vunpack.c.l.b16 %v1500
      %v1521 = vunpack.c.l.b16 %v1501
      %v1522 = vunpack.c.l.b16 %v1502
      %v1523 = vunpack.c.l.b16 %v1503
      %v1524 = vunpack.c.l.b16 %v1504
      %v1525 = vunpack.c.l.b16 %v1505
      %v1526 = vunpack.c.l.b16 %v1506
      %v1527 = vunpack.c.l.b16 %v1507
      %v1528 = vpack.c.b16 %v1520, %v1519
      %v1529 = vpack.c.b16 %v1522, %v1521
      %v1530 = vpack.c.b16 %v1524, %v1523
      %v1531 = vpack.c.b16 %v1526, %v1525
      %v1532 = vpack.c.b16 %v1527, %v1527
      %v1534 = vsel %vm301, %v1528, 0
      %v1537 = vsel %vm301, %v1529, 0
      %v1540 = vsel %vm301, %v1530, 0
      %v1543 = vsel %vm301, %v1531, 0
      %v1546 = vsel %vm301, %v1532, 0
      %v1549 = vsel %vm317, %v1509, 0
      %1551 = vmatpush.bf16.msra.mxu0 0
      %1552 = vmatpush.bf16.msra.mxu0 0
      %1553 = vmatpush.bf16.msra.mxu0 0
      %1554 = vmatpush.bf16.msra.mxu0 0
      %1555 = vmatpush.bf16.msra.mxu0 0
      %1556 = vmatpush.bf16.msra.mxu0 0
      %1557 = vmatpush.bf16.msra.mxu0 0
      %1558 = vmatpush.bf16.msra.mxu0 %v1549
      %1559 = vmatmul.bf16.gmra.mxu0 %v1534
      %v1560 = vpop.f32.mrf.mxu0
      %v1561 = vadd.f32 0.0, %v1560
      %v1562 = vpop.f32.mrf.mxu0
      %v1563 = vadd.f32 0.0, %v1562
      %1564 = vmatmul.bf16.gmra.mxu0 %v1537
      %v1565 = vpop.f32.mrf.mxu0
      %v1566 = vadd.f32 0.0, %v1565
      %v1567 = vpop.f32.mrf.mxu0
      %v1568 = vadd.f32 0.0, %v1567
      %1569 = vmatmul.bf16.gmra.mxu0 %v1540
      %v1570 = vpop.f32.mrf.mxu0
      %v1571 = vadd.f32 0.0, %v1570
      %v1572 = vpop.f32.mrf.mxu0
      %v1573 = vadd.f32 0.0, %v1572
      %1574 = vmatmul.bf16.gmra.mxu0 %v1543
      %v1575 = vpop.f32.mrf.mxu0
      %v1576 = vadd.f32 0.0, %v1575
      %v1577 = vpop.f32.mrf.mxu0
      %v1578 = vadd.f32 0.0, %v1577
      %1579 = vmatmul.bf16.gmra.mxu0 %v1546
      %v1580 = vpop.f32.mrf.mxu0
      %v1581 = vadd.f32 0.0, %v1580
      %v1582 = vpop.f32.mrf.mxu0
      %1583 = vdwg.mxu0
      %v1584 = vadd.f32 %v1489, %v1561
      %v1585 = vadd.f32 %v1490, %v1563
      %v1586 = vadd.f32 %v1491, %v1566
      %v1587 = vadd.f32 %v1492, %v1568
      %v1588 = vadd.f32 %v1493, %v1571
      %v1589 = vadd.f32 %v1494, %v1573
      %v1590 = vadd.f32 %v1495, %v1576
      %v1591 = vadd.f32 %v1496, %v1578
      %v1592 = vadd.f32 %v1497, %v1581
      %v1593 = vld [vmem:[%s1498] sm:$0xf]
      %v1594 = vld [vmem:[%s1498 + $0x4] sm:$0xf]
      %v1595 = vld [vmem:[%s1498 + $0x8] sm:$0xf]
      %v1596 = vld [vmem:[%s1498 + $0xc] sm:$0xf]
      %v1597 = vld [vmem:[%s1498 + $0x10] sm:$0xf]
      %v1598 = vld [vmem:[%s1498 + $0x14] sm:$0xf]
      %v1599 = vld [vmem:[%s1498 + $0x18] sm:$0xf]
      %v1600 = vld [vmem:[%s1498 + $0x1c] sm:$0xf]
      %v1601 = vld [vmem:[%s1498 + $0x20] sm:$0xf]
      %v1602 = vld [vmem:[%s1498 + $0x24] sm:$0x1]
      %s1603 = scalar_lea.vmem %s210, 14
      %v1604 = vld [vmem:[%s1603] sm:$0x3]
      %v1615 = vunpack.c.l.b16 %v1593
      %v1616 = vunpack.c.l.b16 %v1594
      %v1617 = vunpack.c.l.b16 %v1595
      %v1618 = vunpack.c.l.b16 %v1596
      %v1619 = vunpack.c.l.b16 %v1597
      %v1620 = vunpack.c.l.b16 %v1598
      %v1621 = vunpack.c.l.b16 %v1599
      %v1622 = vunpack.c.l.b16 %v1600
      %v1623 = vunpack.c.l.b16 %v1601
      %v1624 = vunpack.c.l.b16 %v1602
      %v1625 = vpack.c.b16 %v1616, %v1615
      %v1626 = vpack.c.b16 %v1618, %v1617
      %v1627 = vpack.c.b16 %v1620, %v1619
      %v1628 = vpack.c.b16 %v1622, %v1621
      %v1629 = vpack.c.b16 %v1624, %v1623
      %v1631 = vshrl.u32 %v1625, 16
      %v1633 = vshll.u32 %v1625, 16
      %v1635 = vrot.slane %v1633, 1
      %v1636 = vor.u32 %v1631, %v1635
      %v1638 = vshll.u32 %v1626, 16
      %v1640 = vrot.slane %v1638, 1
      %v1641 = vsel %vm261, %v1636, %v1640
      %v1642 = vshrl.u32 %v1626, 16
      %v1644 = vor.u32 %v1642, %v1640
      %v1646 = vshll.u32 %v1627, 16
      %v1648 = vrot.slane %v1646, 1
      %v1649 = vsel %vm261, %v1644, %v1648
      %v1650 = vshrl.u32 %v1627, 16
      %v1652 = vor.u32 %v1650, %v1648
      %v1654 = vshll.u32 %v1628, 16
      %v1656 = vrot.slane %v1654, 1
      %v1657 = vsel %vm261, %v1652, %v1656
      %v1658 = vshrl.u32 %v1628, 16
      %v1660 = vor.u32 %v1658, %v1656
      %v1662 = vshll.u32 %v1629, 16
      %v1664 = vrot.slane %v1662, 1
      %v1665 = vsel %vm261, %v1660, %v1664
      %v1666 = vshrl.u32 %v1629, 16
      %v1668 = vor.u32 %v1666, %v1664
      %v1670 = vsel %vm301, %v1641, 0
      %v1673 = vsel %vm301, %v1649, 0
      %v1676 = vsel %vm301, %v1657, 0
      %v1679 = vsel %vm301, %v1665, 0
      %v1682 = vsel %vm301, %v1668, 0
      %v1685 = vsel %vm317, %v1604, 0
      %1687 = vmatpush.bf16.msra.mxu0 0
      %1688 = vmatpush.bf16.msra.mxu0 0
      %1689 = vmatpush.bf16.msra.mxu0 0
      %1690 = vmatpush.bf16.msra.mxu0 0
      %1691 = vmatpush.bf16.msra.mxu0 0
      %1692 = vmatpush.bf16.msra.mxu0 0
      %1693 = vmatpush.bf16.msra.mxu0 0
      %1694 = vmatpush.bf16.msra.mxu0 %v1685
      %1695 = vmatmul.bf16.gmra.mxu0 %v1670
      %v1696 = vpop.f32.mrf.mxu0
      %v1697 = vadd.f32 0.0, %v1696
      %v1698 = vpop.f32.mrf.mxu0
      %v1699 = vadd.f32 0.0, %v1698
      %1700 = vmatmul.bf16.gmra.mxu0 %v1673
      %v1701 = vpop.f32.mrf.mxu0
      %v1702 = vadd.f32 0.0, %v1701
      %v1703 = vpop.f32.mrf.mxu0
      %v1704 = vadd.f32 0.0, %v1703
      %1705 = vmatmul.bf16.gmra.mxu0 %v1676
      %v1706 = vpop.f32.mrf.mxu0
      %v1707 = vadd.f32 0.0, %v1706
      %v1708 = vpop.f32.mrf.mxu0
      %v1709 = vadd.f32 0.0, %v1708
      %1710 = vmatmul.bf16.gmra.mxu0 %v1679
      %v1711 = vpop.f32.mrf.mxu0
      %v1712 = vadd.f32 0.0, %v1711
      %v1713 = vpop.f32.mrf.mxu0
      %v1714 = vadd.f32 0.0, %v1713
      %1715 = vmatmul.bf16.gmra.mxu0 %v1682
      %v1716 = vpop.f32.mrf.mxu0
      %v1717 = vadd.f32 0.0, %v1716
      %v1718 = vpop.f32.mrf.mxu0
      %1719 = vdwg.mxu0
      %v1720 = vadd.f32 %v1584, %v1697
      %v1721 = vadd.f32 %v1585, %v1699
      %v1722 = vadd.f32 %v1586, %v1702
      %v1723 = vadd.f32 %v1587, %v1704
      %v1724 = vadd.f32 %v1588, %v1707
      %v1725 = vadd.f32 %v1589, %v1709
      %v1726 = vadd.f32 %v1590, %v1712
      %v1727 = vadd.f32 %v1591, %v1714
      %v1728 = vadd.f32 %v1592, %v1717
      %v1729 = vld [vmem:[%s1498 + $0x4] sm:$0xf]
      %v1730 = vld [vmem:[%s1498 + $0x8] sm:$0xf]
      %v1731 = vld [vmem:[%s1498 + $0xc] sm:$0xf]
      %v1732 = vld [vmem:[%s1498 + $0x10] sm:$0xf]
      %v1733 = vld [vmem:[%s1498 + $0x14] sm:$0xf]
      %v1734 = vld [vmem:[%s1498 + $0x18] sm:$0xf]
      %v1735 = vld [vmem:[%s1498 + $0x1c] sm:$0xf]
      %v1736 = vld [vmem:[%s1498 + $0x20] sm:$0xf]
      %v1737 = vld [vmem:[%s1498 + $0x24] sm:$0xf]
      %v1738 = vld [vmem:[%s1498 + $0x28] sm:$0x1]
      %s1739 = scalar_lea.vmem %s210, 26
      %v1740 = vld [vmem:[%s1739] sm:$0x3]
      %v1751 = vunpack.c.l.b16 %v1729
      %v1752 = vunpack.c.l.b16 %v1730
      %v1753 = vunpack.c.l.b16 %v1731
      %v1754 = vunpack.c.l.b16 %v1732
      %v1755 = vunpack.c.l.b16 %v1733
      %v1756 = vunpack.c.l.b16 %v1734
      %v1757 = vunpack.c.l.b16 %v1735
      %v1758 = vunpack.c.l.b16 %v1736
      %v1759 = vunpack.c.l.b16 %v1737
      %v1760 = vunpack.c.l.b16 %v1738
      %v1761 = vpack.c.b16 %v1752, %v1751
      %v1762 = vpack.c.b16 %v1754, %v1753
      %v1763 = vpack.c.b16 %v1756, %v1755
      %v1764 = vpack.c.b16 %v1758, %v1757
      %v1765 = vpack.c.b16 %v1760, %v1759
      %v1767 = vshrl.u32 %v1761, 16
      %v1769 = vshll.u32 %v1761, 16
      %v1771 = vrot.slane %v1769, 1
      %v1772 = vor.u32 %v1767, %v1771
      %v1774 = vshll.u32 %v1762, 16
      %v1776 = vrot.slane %v1774, 1
      %v1777 = vsel %vm261, %v1772, %v1776
      %v1778 = vshrl.u32 %v1762, 16
      %v1780 = vor.u32 %v1778, %v1776
      %v1782 = vshll.u32 %v1763, 16
      %v1784 = vrot.slane %v1782, 1
      %v1785 = vsel %vm261, %v1780, %v1784
      %v1786 = vshrl.u32 %v1763, 16
      %v1788 = vor.u32 %v1786, %v1784
      %v1790 = vshll.u32 %v1764, 16
      %v1792 = vrot.slane %v1790, 1
      %v1793 = vsel %vm261, %v1788, %v1792
      %v1794 = vshrl.u32 %v1764, 16
      %v1796 = vor.u32 %v1794, %v1792
      %v1798 = vshll.u32 %v1765, 16
      %v1800 = vrot.slane %v1798, 1
      %v1801 = vsel %vm261, %v1796, %v1800
      %v1802 = vshrl.u32 %v1765, 16
      %v1804 = vor.u32 %v1802, %v1800
      %v1806 = vsel %vm301, %v1777, 0
      %v1809 = vsel %vm301, %v1785, 0
      %v1812 = vsel %vm301, %v1793, 0
      %v1815 = vsel %vm301, %v1801, 0
      %v1818 = vsel %vm301, %v1804, 0
      %v1821 = vsel %vm317, %v1740, 0
      %1823 = vmatpush.bf16.msra.mxu0 0
      %1824 = vmatpush.bf16.msra.mxu0 0
      %1825 = vmatpush.bf16.msra.mxu0 0
      %1826 = vmatpush.bf16.msra.mxu0 0
      %1827 = vmatpush.bf16.msra.mxu0 0
      %1828 = vmatpush.bf16.msra.mxu0 0
      %1829 = vmatpush.bf16.msra.mxu0 0
      %1830 = vmatpush.bf16.msra.mxu0 %v1821
      %1831 = vmatmul.bf16.gmra.mxu0 %v1806
      %v1832 = vpop.f32.mrf.mxu0
      %v1833 = vadd.f32 0.0, %v1832
      %v1834 = vpop.f32.mrf.mxu0
      %v1835 = vadd.f32 0.0, %v1834
      %1836 = vmatmul.bf16.gmra.mxu0 %v1809
      %v1837 = vpop.f32.mrf.mxu0
      %v1838 = vadd.f32 0.0, %v1837
      %v1839 = vpop.f32.mrf.mxu0
      %v1840 = vadd.f32 0.0, %v1839
      %1841 = vmatmul.bf16.gmra.mxu0 %v1812
      %v1842 = vpop.f32.mrf.mxu0
      %v1843 = vadd.f32 0.0, %v1842
      %v1844 = vpop.f32.mrf.mxu0
      %v1845 = vadd.f32 0.0, %v1844
      %1846 = vmatmul.bf16.gmra.mxu0 %v1815
      %v1847 = vpop.f32.mrf.mxu0
      %v1848 = vadd.f32 0.0, %v1847
      %v1849 = vpop.f32.mrf.mxu0
      %v1850 = vadd.f32 0.0, %v1849
      %1851 = vmatmul.bf16.gmra.mxu0 %v1818
      %v1852 = vpop.f32.mrf.mxu0
      %v1853 = vadd.f32 0.0, %v1852
      %v1854 = vpop.f32.mrf.mxu0
      %1855 = vdwg.mxu0
      %v1856 = vadd.f32 %v1720, %v1833
      %v1857 = vadd.f32 %v1721, %v1835
      %v1858 = vadd.f32 %v1722, %v1838
      %v1859 = vadd.f32 %v1723, %v1840
      %v1860 = vadd.f32 %v1724, %v1843
      %v1861 = vadd.f32 %v1725, %v1845
      %v1862 = vadd.f32 %v1726, %v1848
      %v1863 = vadd.f32 %v1727, %v1850
      %v1864 = vadd.f32 %v1728, %v1853
      %v1865 = vld [vmem:[%s1498 + $0x4] sm:$0xe]
      %s1866 = scalar_lea.vmem %s210, 30
      %v1867 = vld [vmem:[%s1866] sm:$0x3]
      %v1869 = vunpack.c.l.b16 %v1865
      %v1870 = vpack.c.b16 %v1752, %v1869
      %v1871 = vrot.slane %v1870, 1
      %v1872 = vrot.slane %v1762, 1
      %v1873 = vsel %vm544, %v1871, %v1872
      %v1874 = vrot.slane %v1763, 1
      %v1875 = vsel %vm544, %v1872, %v1874
      %v1876 = vrot.slane %v1764, 1
      %v1877 = vsel %vm544, %v1874, %v1876
      %v1878 = vrot.slane %v1765, 1
      %v1879 = vsel %vm544, %v1876, %v1878
      %v1881 = vsel %vm301, %v1873, 0
      %v1884 = vsel %vm301, %v1875, 0
      %v1887 = vsel %vm301, %v1877, 0
      %v1890 = vsel %vm301, %v1879, 0
      %v1893 = vsel %vm301, %v1878, 0
      %v1896 = vsel %vm317, %v1867, 0
      %1898 = vmatpush.bf16.msra.mxu0 0
      %1899 = vmatpush.bf16.msra.mxu0 0
      %1900 = vmatpush.bf16.msra.mxu0 0
      %1901 = vmatpush.bf16.msra.mxu0 0
      %1902 = vmatpush.bf16.msra.mxu0 0
      %1903 = vmatpush.bf16.msra.mxu0 0
      %1904 = vmatpush.bf16.msra.mxu0 0
      %1905 = vmatpush.bf16.msra.mxu0 %v1896
      %1906 = vmatmul.bf16.gmra.mxu0 %v1881
      %v1907 = vpop.f32.mrf.mxu0
      %v1908 = vadd.f32 0.0, %v1907
      %v1909 = vpop.f32.mrf.mxu0
      %v1910 = vadd.f32 0.0, %v1909
      %1911 = vmatmul.bf16.gmra.mxu0 %v1884
      %v1912 = vpop.f32.mrf.mxu0
      %v1913 = vadd.f32 0.0, %v1912
      %v1914 = vpop.f32.mrf.mxu0
      %v1915 = vadd.f32 0.0, %v1914
      %1916 = vmatmul.bf16.gmra.mxu0 %v1887
      %v1917 = vpop.f32.mrf.mxu0
      %v1918 = vadd.f32 0.0, %v1917
      %v1919 = vpop.f32.mrf.mxu0
      %v1920 = vadd.f32 0.0, %v1919
      %1921 = vmatmul.bf16.gmra.mxu0 %v1890
      %v1922 = vpop.f32.mrf.mxu0
      %v1923 = vadd.f32 0.0, %v1922
      %v1924 = vpop.f32.mrf.mxu0
      %v1925 = vadd.f32 0.0, %v1924
      %1926 = vmatmul.bf16.gmra.mxu0 %v1893
      %v1927 = vpop.f32.mrf.mxu0
      %v1928 = vadd.f32 0.0, %v1927
      %v1929 = vpop.f32.mrf.mxu0
      %1930 = vdwg.mxu0
      %v1931 = vadd.f32 %v1856, %v1908
      %v1932 = vadd.f32 %v1857, %v1910
      %v1933 = vadd.f32 %v1858, %v1913
      %v1934 = vadd.f32 %v1859, %v1915
      %v1935 = vadd.f32 %v1860, %v1918
      %v1936 = vadd.f32 %v1861, %v1920
      %v1937 = vadd.f32 %v1862, %v1923
      %v1938 = vadd.f32 %v1863, %v1925
      %v1939 = vadd.f32 %v1864, %v1928
      %v1940 = vld [vmem:[%s213] sm:$0x1]
      %v1942 = vperm.slane %v1940, 0
      %v1944 = vadd.f32 %v1931, %v1942
      %v1945 = vadd.f32 %v1932, %v1942
      %v1946 = vadd.f32 %v1933, %v1942
      %v1947 = vadd.f32 %v1934, %v1942
      %v1948 = vadd.f32 %v1935, %v1942
      %v1949 = vadd.f32 %v1936, %v1942
      %v1950 = vadd.f32 %v1937, %v1942
      %v1951 = vadd.f32 %v1938, %v1942
      %v1952 = vadd.f32 %v1939, %v1942
      %vm1953 = vcmp.ge.f32.partialorder %v1944, 0.0
      %vm1954 = vcmp.ge.f32.partialorder %v1945, 0.0
      %vm1955 = vcmp.ge.f32.partialorder %v1946, 0.0
      %vm1956 = vcmp.ge.f32.partialorder %v1947, 0.0
      %vm1957 = vcmp.ge.f32.partialorder %v1948, 0.0
      %vm1958 = vcmp.ge.f32.partialorder %v1949, 0.0
      %vm1959 = vcmp.ge.f32.partialorder %v1950, 0.0
      %vm1960 = vcmp.ge.f32.partialorder %v1951, 0.0
      %vm1961 = vcmp.ge.f32.partialorder %v1952, 0.0
      %v1962 = vmul.f32 %v1944, 0.01
      %v1963 = vmul.f32 %v1945, 0.01
      %v1964 = vmul.f32 %v1946, 0.01
      %v1965 = vmul.f32 %v1947, 0.01
      %v1966 = vmul.f32 %v1948, 0.01
      %v1967 = vmul.f32 %v1949, 0.01
      %v1968 = vmul.f32 %v1950, 0.01
      %v1969 = vmul.f32 %v1951, 0.01
      %v1970 = vmul.f32 %v1952, 0.01
      %v1971 = vsel %vm1953, %v1944, %v1962
      %v1972 = vsel %vm1954, %v1945, %v1963
      %v1973 = vsel %vm1955, %v1946, %v1964
      %v1974 = vsel %vm1956, %v1947, %v1965
      %v1975 = vsel %vm1957, %v1948, %v1966
      %v1976 = vsel %vm1958, %v1949, %v1967
      %v1977 = vsel %vm1959, %v1950, %v1968
      %v1978 = vsel %vm1960, %v1951, %v1969
      %v1979 = vsel %vm1961, %v1952, %v1970
      %v1980 = vpack.c.bf16 %v1971, %v1971
      %v1981 = vpack.c.bf16 %v1972, %v1972
      %v1982 = vpack.c.bf16 %v1973, %v1973
      %v1983 = vpack.c.bf16 %v1974, %v1974
      %v1984 = vpack.c.bf16 %v1975, %v1975
      %v1985 = vpack.c.bf16 %v1976, %v1976
      %v1986 = vpack.c.bf16 %v1977, %v1977
      %v1987 = vpack.c.bf16 %v1978, %v1978
      %v1988 = vpack.c.bf16 %v1979, %v1979
      %1989 = vst [vmem:[%s221] sm:$0xf] %v1980
      %1990 = vst [vmem:[%s221 + $0x4] sm:$0xf] %v1981
      %1991 = vst [vmem:[%s221 + $0x8] sm:$0xf] %v1982
      %1992 = vst [vmem:[%s221 + $0xc] sm:$0xf] %v1983
      %1993 = vst [vmem:[%s221 + $0x10] sm:$0xf] %v1984
      %1994 = vst [vmem:[%s221 + $0x14] sm:$0xf] %v1985
      %1995 = vst [vmem:[%s221 + $0x18] sm:$0xf] %v1986
      %1996 = vst [vmem:[%s221 + $0x1c] sm:$0xf] %v1987
      %1997 = vst [vmem:[%s221 + $0x20] sm:$0xf] %v1988
      %p1998 = scmp.lt.s32.totalorder %s19, 1
      %s1999 = scalar_select %p1998, %s19, 1
      %p2000 = scmp.lt.s32.totalorder %s18, 0
      %s2001 = scalar_select %p2000, %s18, 0
      %s2002 = smul.addr %s1999, 9
      %s2003 = sadd.s32 %s2001, %s2002
      %s2004 = smul.addr %s2003, 4
      %s2005 = scalar_lea.vmem %s3, %s2004
      // Predicated region
      $region33: #{discriminator_forward.5} parent=31 // pred_check
        %p2006 = pneg %p124
      $region34: #{discriminator_forward.5} parent=31 // pred_check_branch
        %2008 = sbr.rel (%p2006) target = $region36
      $region35: #{discriminator_forward.5} parent=31 // pred_region
        _
      $region36: #{discriminator_forward.5} parent=31 // pred_fallthru
        _
    $region32: #{discriminator_forward.5} parent=5 // pred_fallthru
      _
    %p2009 = scmp.le.s32.totalorder 2, %s9
    // Predicated region
    $region37: #{discriminator_forward.5} parent=5 // pred_check
      %p2010 = pneg %p2009
    $region38: #{discriminator_forward.5} parent=5 // pred_check_branch
      %2012 = sbr.rel (%p2010) target = $region40
    $region39: #{discriminator_forward.5} parent=5 // pred_region
      %s2013 = ssub.s32 %s9, 2
      // Predicated region
      $region41: #{discriminator_forward.5} parent=39 // pred_check
        %p2014 = pneg %p130
      $region42: #{discriminator_forward.5} parent=39 // pred_check_branch
        %2016 = sbr.rel (%p2014) target = $region44
      $region43: #{discriminator_forward.5} parent=39 // pred_region
        %p2017 = scmp.lt.s32.totalorder %s21, 1
        %s2018 = scalar_select %p2017, %s21, 1
        %p2019 = scmp.lt.s32.totalorder %s20, 0
        %s2020 = scalar_select %p2019, %s20, 0
        %s2021 = smul.addr %s2018, 9
        %s2022 = sadd.s32 %s2020, %s2021
        %s2023 = smul.addr %s2022, 4
        %s2024 = scalar_lea.vmem %s3, %s2023
      $region44: #{discriminator_forward.5} parent=39 // pred_fallthru
        _
    $region40: #{discriminator_forward.5} parent=5 // pred_fallthru
      _
  $region6: #{discriminator_forward.5} parent=0 // loop_footer
    %s13 = sadd.s32 1, %s9
  $region7: #{discriminator_forward.5} parent=0 // loop_footer_branch
    %8 = sbr.rel target = $region3
  $region8: #{discriminator_forward.5} parent=0 // loop_exit
    _

// kernel: discriminator_forward.6
$region0: #{discriminator_forward.6}
  #allocation0 [shape = 'u32[]', space=smem, size = 0x4, offset = 0x4, fixed_abs, tag = 'smem constant byte address 0x4 - core index']
  #allocation1 [shape = 'u32[72,128]{1,0:T(1,128)}', space=vmem, size = 0x9000, scoped, tag = 'internal scratch']
  %s0 = inlined_call_operand.vmem [shape: bf16[2,4,30,128], index: 0, kind: input, shape index: {}]
  %s1 = inlined_call_operand.hbm [shape: bf16[16,128,128], index: 1, kind: input, shape index: {}]
  %s2 = inlined_call_operand.vmem [shape: f32[1,128], index: 2, kind: input, shape index: {}]
  %s3 = inlined_call_operand.vmem [shape: bf16[2,20,128], index: 3, kind: output, shape index: {}]
  %s4 = sld [smem:[#allocation0]]
  $region49: #{discriminator_forward.6} parent=0
    _
  %s6 = ssub.s32 1, %s4
  %s7 = scalar_select 0, %s6, %s4
  $region1: #{discriminator_forward.6} parent=0
    #allocation2 [shape = 'u8[524288]{0}', space=vmem, size = 0x80000, scoped, tag = 'input window, operand 1, single buffered']
    #allocation3 [shape = 's32[2]{0}', space=sflag, size = 0x8, scoped, tag = 'scoped memory for discriminator_forward.6']
    %8 = vsyncpa [#allocation3], 0
    loop: start=0, step=1, limit=4
    $region2: #{discriminator_forward.6} parent=1 // loop_pre_header
      _
    $region3: #{discriminator_forward.6} parent=1 // loop_header
      %s10 = sphi 0, %s14
      %p11 = scmp.ge.s32.totalorder %s10, 4
      %s17 = sphi 0, %s29
      %s18 = sphi 0, %s25
      %s19 = sphi 0, %s17
      %s20 = sphi 0, %s18
      %s21 = sphi 0, %s19
      %s22 = sphi 0, %s20
      %s32 = sphi 0, %s34
      %s35 = sphi 0, %s32
      %s36 = sphi 0, %s35
      %s52 = sphi 0, %s36
      %s58 = sphi 0, %s60
      %s61 = sphi 0, %s58
      %s62 = sphi 0, %s61
      %s78 = sphi 0, %s62
      %s84 = sphi 0, %s86
      %s87 = sphi 0, %s84
      %s88 = sphi 0, %s87
      %s104 = sphi 0, %s88
      %s112 = sphi 0, %s114
      %s115 = sphi 0, %s112
      %s116 = sphi 0, %s115
      %s132 = sphi 0, %s116
    $region4: #{discriminator_forward.6} parent=1 // loop_header_branch
      %13 = sbr.rel (%p11) target = $region8
    $region5: #{discriminator_forward.6} parent=1 // loop_body
      %s15 = ssub.s32 %s10, 1
      %s16 = ssub.s32 %s10, 2
      %s23 = sadd.s32 1, %s18
      %p24 = scmp.ge.s32.totalorder %s23, 2
      %s25 = scalar_select %p24, 0, %s23
      %s26 = sadd.s32 1, %s17
      %s27 = scalar_select %p24, %s26, %s17
      %p28 = scmp.ge.s32.totalorder %s27, 1
      %s29 = scalar_select %p28, 0, %s27
      %s30 = ssub.s32 %s18, %s25
      %p31 = scmp.eq.s32.totalorder %s30, 0
      %s33 = sadd.s32 %s32, 1
      %s34 = scalar_select %p31, %s32, %s33
      %p37 = pneg %p31
      %p38 = scmp.eq.s32.totalorder %s10, 1
      %p39 = por %p37, %p38
      %p40 = scmp.ne.s32.totalorder %s32, %s35
      %p41 = scmp.eq.s32.totalorder %s10, 0
      %p42 = por %p40, %p41
      %p43 = scmp.ne.s32.totalorder %s32, %s35
      %p44 = scmp.eq.s32.totalorder %s15, 1
      %p45 = por %p43, %p44
      %p46 = scmp.ne.s32.totalorder %s35, %s36
      %p47 = scmp.eq.s32.totalorder %s15, 0
      %p48 = por %p46, %p47
      %p49 = scmp.ne.s32.totalorder %s35, %s36
      %p50 = scmp.eq.s32.totalorder %s16, 1
      %p51 = por %p49, %p50
      %p53 = scmp.ne.s32.totalorder %s36, %s52
      %p54 = scmp.eq.s32.totalorder %s16, 0
      %p55 = por %p53, %p54
      %s56 = ssub.s32 %s17, %s29
      %p57 = scmp.eq.s32.totalorder %s56, 0
      %s59 = sadd.s32 %s58, 1
      %s60 = scalar_select %p57, %s58, %s59
      %p63 = pneg %p57
      %p64 = scmp.eq.s32.totalorder %s10, 1
      %p65 = por %p63, %p64
      %p66 = scmp.ne.s32.totalorder %s58, %s61
      %p67 = scmp.eq.s32.totalorder %s10, 0
      %p68 = por %p66, %p67
      %p69 = scmp.ne.s32.totalorder %s58, %s61
      %p70 = scmp.eq.s32.totalorder %s15, 1
      %p71 = por %p69, %p70
      %p72 = scmp.ne.s32.totalorder %s61, %s62
      %p73 = scmp.eq.s32.totalorder %s15, 0
      %p74 = por %p72, %p73
      %p75 = scmp.ne.s32.totalorder %s61, %s62
      %p76 = scmp.eq.s32.totalorder %s16, 1
      %p77 = por %p75, %p76
      %p79 = scmp.ne.s32.totalorder %s62, %s78
      %p80 = scmp.eq.s32.totalorder %s16, 0
      %p81 = por %p79, %p80
      %s82 = ssub.s32 %s17, %s29
      %p83 = scmp.eq.s32.totalorder %s82, 0
      %s85 = sadd.s32 %s84, 1
      %s86 = scalar_select %p83, %s84, %s85
      %p89 = pneg %p83
      %p90 = scmp.eq.s32.totalorder %s10, 1
      %p91 = por %p89, %p90
      %p92 = scmp.ne.s32.totalorder %s84, %s87
      %p93 = scmp.eq.s32.totalorder %s10, 0
      %p94 = por %p92, %p93
      %p95 = scmp.ne.s32.totalorder %s84, %s87
      %p96 = scmp.eq.s32.totalorder %s15, 1
      %p97 = por %p95, %p96
      %p98 = scmp.ne.s32.totalorder %s87, %s88
      %p99 = scmp.eq.s32.totalorder %s15, 0
      %p100 = por %p98, %p99
      %p101 = scmp.ne.s32.totalorder %s87, %s88
      %p102 = scmp.eq.s32.totalorder %s16, 1
      %p103 = por %p101, %p102
      %p105 = scmp.ne.s32.totalorder %s88, %s104
      %p106 = scmp.eq.s32.totalorder %s16, 0
      %p107 = por %p105, %p106
      %s108 = ssub.s32 %s18, %s25
      %s109 = ssub.s32 %s17, %s29
      %s110 = sor.u32 %s108, %s109
      %p111 = scmp.eq.s32.totalorder %s110, 0
      %s113 = sadd.s32 %s112, 1
      %s114 = scalar_select %p111, %s112, %s113
      %p117 = pneg %p111
      %p118 = scmp.eq.s32.totalorder %s10, 1
      %p119 = por %p117, %p118
      %p120 = scmp.ne.s32.totalorder %s112, %s115
      %p121 = scmp.eq.s32.totalorder %s10, 0
      %p122 = por %p120, %p121
      %p123 = scmp.ne.s32.totalorder %s112, %s115
      %p124 = scmp.eq.s32.totalorder %s15, 1
      %p125 = por %p123, %p124
      %p126 = scmp.ne.s32.totalorder %s115, %s116
      %p127 = scmp.eq.s32.totalorder %s15, 0
      %p128 = por %p126, %p127
      %p129 = scmp.ne.s32.totalorder %s115, %s116
      %p130 = scmp.eq.s32.totalorder %s16, 1
      %p131 = por %p129, %p130
      %p133 = scmp.ne.s32.totalorder %s116, %s132
      %p134 = scmp.eq.s32.totalorder %s16, 0
      %p135 = por %p133, %p134
      %p136 = scmp.le.s32.totalorder 1, %s10
      %p137 = scmp.lt.s32.totalorder %s10, 3
      %p138 = pnand %p136, %p137
      %p139 = pneg %p138
      // Predicated region
      $region9: #{discriminator_forward.6} parent=5 // pred_check
        _
      $region10: #{discriminator_forward.6} parent=5 // pred_check_branch
        %141 = sbr.rel (%p138) target = $region12
      $region11: #{discriminator_forward.6} parent=5 // pred_region
        %s142 = ssub.s32 %s10, 1
        // Predicated region
        $region13: #{discriminator_forward.6} parent=11 // pred_check
          %p143 = pneg %p74
        $region14: #{discriminator_forward.6} parent=11 // pred_check_branch
          %145 = sbr.rel (%p143) target = $region16
        $region15: #{discriminator_forward.6} parent=11 // pred_region
          %147 = vsyncadd [#allocation3], 0
          %s148 = smul.addr %s19, 4
          %s149 = scalar_lea.hbm %s1, %s148
          %s150 = sshll.u32 %s149, 4
          %s151 = int_to_ptr.hbm [resolvable:$true] %s150
          %s152 = sshll.u32 [#allocation2], 4
          %s153 = int_to_ptr.vmem [resolvable:$true] %s152
          %158 = dma.hbm_to_vmem [thread:$0]  %s151, 16384, %s153, [#allocation3], 64, 64, 4
        $region16: #{discriminator_forward.6} parent=11 // pred_fallthru
          _
        // Predicated region
        $region17: #{discriminator_forward.6} parent=11 // pred_check
          %p159 = pneg %p100
        $region18: #{discriminator_forward.6} parent=11 // pred_check_branch
          %161 = sbr.rel (%p159) target = $region20
        $region19: #{discriminator_forward.6} parent=11 // pred_region
          %p162 = scmp.lt.s32.totalorder %s19, 0
          %s163 = scalar_select %p162, %s19, 0
          %s164 = scalar_lea.vmem %s2, %s163
        $region20: #{discriminator_forward.6} parent=11 // pred_fallthru
          _
      $region12: #{discriminator_forward.6} parent=5 // pred_fallthru
        _
      %p165 = scmp.lt.s32.totalorder %s10, 2
      // Predicated region
      $region21: #{discriminator_forward.6} parent=5 // pred_check
        %p166 = pneg %p165
      $region22: #{discriminator_forward.6} parent=5 // pred_check_branch
        %168 = sbr.rel (%p166) target = $region24
      $region23: #{discriminator_forward.6} parent=5 // pred_region
        // Predicated region
        $region25: #{discriminator_forward.6} parent=23 // pred_check
          %p169 = pneg %p42
        $region26: #{discriminator_forward.6} parent=23 // pred_check_branch
          %171 = sbr.rel (%p169) target = $region28
        $region27: #{discriminator_forward.6} parent=23 // pred_region
          %p172 = scmp.lt.s32.totalorder %s18, 1
          %s173 = scalar_select %p172, %s18, 1
          %s174 = smul.addr %s173, 16
          %s175 = smul.addr %s174, 4
          %s176 = scalar_lea.vmem %s0, %s175
        $region28: #{discriminator_forward.6} parent=23 // pred_fallthru
          _
      $region24: #{discriminator_forward.6} parent=5 // pred_fallthru
        _
      %p177 = scmp.le.s32.totalorder 1, %s10
      %p178 = scmp.lt.s32.totalorder %s10, 3
      %p179 = pnand %p177, %p178
      %p180 = pneg %p179
      // Predicated region
      $region29: #{discriminator_forward.6} parent=5 // pred_check
        _
      $region30: #{discriminator_forward.6} parent=5 // pred_check_branch
        %182 = sbr.rel (%p179) target = $region32
      $region31: #{discriminator_forward.6} parent=5 // pred_region
        %s183 = ssub.s32 %s10, 1
        // Predicated region
        $region33: #{discriminator_forward.6} parent=31 // pred_check
          %p184 = pneg %p74
        $region34: #{discriminator_forward.6} parent=31 // pred_check_branch
          %186 = sbr.rel (%p184) target = $region36
        $region35: #{discriminator_forward.6} parent=31 // pred_region
          %188 = dma.done [#allocation3], 16384
        $region36: #{discriminator_forward.6} parent=31 // pred_fallthru
          _
        %p189 = scmp.lt.s32.totalorder %s20, 1
        %s190 = scalar_select %p189, %s20, 1
        %s191 = smul.addr %s190, 16
        %s192 = smul.addr %s191, 4
        %s193 = scalar_lea.vmem %s0, %s192
        %p194 = pneg %p48
        %p195 = pneg %p45
        %p196 = pneg %p74
        %p197 = pneg %p71
        %p198 = scmp.lt.s32.totalorder %s19, 0
        %s199 = scalar_select %p198, %s19, 0
        %s200 = scalar_lea.vmem %s2, %s199
        %p201 = pneg %p100
        %p202 = pneg %p97
        %p203 = pneg %p128
        %p204 = pneg %p125
        %p205 = scmp.lt.s32.totalorder %s20, 1
        %s206 = scalar_select %p205, %s20, 1
        %p207 = scmp.lt.s32.totalorder %s19, 0
        %s208 = scalar_select %p207, %s19, 0
        %s209 = smul.addr %s206, 3
        %s210 = sadd.s32 %s208, %s209
        %s211 = smul.addr %s210, 4
        %s212 = scalar_lea.vmem %s3, %s211
        %p213 = scmp.lt.s32.totalorder %s20, 1
        %s214 = scalar_select %p213, %s20, 1
        %s215 = smul.addr %s214, 16
        %s216 = smul.addr %s215, 4
        %s217 = scalar_lea.vmem %s0, %s216
        %p218 = scmp.lt.s32.totalorder %s19, 0
        %s219 = scalar_select %p218, %s19, 0
        %s220 = scalar_lea.vmem %s2, %s219
        %p221 = scmp.lt.s32.totalorder %s20, 1
        %s222 = scalar_select %p221, %s20, 1
        %p223 = scmp.lt.s32.totalorder %s19, 0
        %s224 = scalar_select %p223, %s19, 0
        %s225 = smul.addr %s222, 3
        %s226 = sadd.s32 %s224, %s225
        %s227 = smul.addr %s226, 4
        %s228 = scalar_lea.vmem %s3, %s227
        %v229 = vld [vmem:[%s217] sm:$0xf]
        %v230 = vld [vmem:[%s217 + $0x4] sm:$0xf]
        %v231 = vld [vmem:[%s217 + $0x8] sm:$0x3]
        %v232 = vld [vmem:[#allocation2] sm:$0xf]
        %v233 = vld [vmem:[#allocation2 + $0x4] sm:$0xf]
        %v234 = vld [vmem:[#allocation2 + $0x8] sm:$0xf]
        %v235 = vld [vmem:[#allocation2 + $0xc] sm:$0xf]
        %v236 = vld [vmem:[#allocation2 + $0x10] sm:$0xf]
        %v237 = vld [vmem:[#allocation2 + $0x14] sm:$0xf]
        %v238 = vld [vmem:[#allocation2 + $0x18] sm:$0xf]
        %v239 = vld [vmem:[#allocation2 + $0x1c] sm:$0xf]
        %v240 = vld [vmem:[#allocation2 + $0x20] sm:$0xf]
        %v241 = vld [vmem:[#allocation2 + $0x24] sm:$0xf]
        %v242 = vld [vmem:[#allocation2 + $0x28] sm:$0xf]
        %v243 = vld [vmem:[#allocation2 + $0x2c] sm:$0xf]
        %v244 = vld [vmem:[#allocation2 + $0x30] sm:$0xf]
        %v245 = vld [vmem:[#allocation2 + $0x34] sm:$0xf]
        %v246 = vld [vmem:[#allocation2 + $0x38] sm:$0xf]
        %v247 = vld [vmem:[#allocation2 + $0x3c] sm:$0xf]
        %v248 = vld [vmem:[%s217 + $0x8] sm:$0x7]
        %s249 = scalar_lea.vmem [#allocation2], 128
        %v250 = vld [vmem:[%s249] sm:$0xf]
        %v251 = vld [vmem:[%s249 + $0x4] sm:$0xf]
        %v252 = vld [vmem:[%s249 + $0x8] sm:$0xf]
        %v253 = vld [vmem:[%s249 + $0xc] sm:$0xf]
        %v254 = vld [vmem:[%s249 + $0x10] sm:$0xf]
        %v255 = vld [vmem:[%s249 + $0x14] sm:$0xf]
        %v256 = vld [vmem:[%s249 + $0x18] sm:$0xf]
        %v257 = vld [vmem:[%s249 + $0x1c] sm:$0xf]
        %v258 = vld [vmem:[%s249 + $0x20] sm:$0xf]
        %v259 = vld [vmem:[%s249 + $0x24] sm:$0xf]
        %v260 = vld [vmem:[%s249 + $0x28] sm:$0xf]
        %v261 = vld [vmem:[%s249 + $0x2c] sm:$0xf]
        %v262 = vld [vmem:[%s249 + $0x30] sm:$0xf]
        %v263 = vld [vmem:[%s249 + $0x34] sm:$0xf]
        %v264 = vld [vmem:[%s249 + $0x38] sm:$0xf]
        %v265 = vld [vmem:[%s249 + $0x3c] sm:$0xf]
        %v269 = vunpack.c.l.b16 %v229
        %v270 = vunpack.c.l.b16 %v230
        %v271 = vunpack.c.l.b16 %v248
        %v272 = vpack.c.b16 %v270, %v269
        %v273 = vpack.c.b16 %v271, %v271
        %vm274 = vsmask.f32 7424
        %v276 = vshrl.u32 %v272, 16
        %v278 = vshll.u32 %v272, 16
        %v280 = vrot.slane %v278, 1
        %v281 = vor.u32 %v276, %v280
        %v283 = vshll.u32 %v273, 16
        %v285 = vrot.slane %v283, 1
        %v286 = vsel %vm274, %v281, %v285
        %v287 = vshrl.u32 %v273, 16
        %v289 = vor.u32 %v287, %v285
        %v308 = vunpack.c.l.b16 %v250
        %v309 = vunpack.c.l.b16 %v251
        %v310 = vunpack.c.l.b16 %v252
        %v311 = vunpack.c.l.b16 %v253
        %v312 = vunpack.c.l.b16 %v254
        %v313 = vunpack.c.l.b16 %v255
        %v314 = vunpack.c.l.b16 %v256
        %v315 = vunpack.c.l.b16 %v257
        %v316 = vunpack.c.l.b16 %v258
        %v317 = vunpack.c.l.b16 %v259
        %v318 = vunpack.c.l.b16 %v260
        %v319 = vunpack.c.l.b16 %v261
        %v320 = vunpack.c.l.b16 %v262
        %v321 = vunpack.c.l.b16 %v263
        %v322 = vunpack.c.l.b16 %v264
        %v323 = vunpack.c.l.b16 %v265
        %v324 = vpack.c.b16 %v309, %v308
        %v325 = vpack.c.b16 %v311, %v310
        %v326 = vpack.c.b16 %v313, %v312
        %v327 = vpack.c.b16 %v315, %v314
        %v328 = vpack.c.b16 %v317, %v316
        %v329 = vpack.c.b16 %v319, %v318
        %v330 = vpack.c.b16 %v321, %v320
        %v331 = vpack.c.b16 %v323, %v322
        %340 = vmatpush.bf16.msra.mxu0 %v331
        %341 = vmatpush.bf16.msra.mxu0 %v330
        %342 = vmatpush.bf16.msra.mxu0 %v329
        %343 = vmatpush.bf16.msra.mxu0 %v328
        %344 = vmatpush.bf16.msra.mxu0 %v327
        %345 = vmatpush.bf16.msra.mxu0 %v326
        %346 = vmatpush.bf16.msra.mxu0 %v325
        %347 = vmatpush.bf16.msra.mxu0 %v324
        %348 = vmatmul.bf16.gmra.mxu0 %v286
        %v349 = vpop.f32.mrf.mxu0
        %v350 = vadd.f32 0.0, %v349
        %v351 = vpop.f32.mrf.mxu0
        %v352 = vadd.f32 0.0, %v351
        %353 = vmatmul.bf16.gmra.mxu0 %v289
        %v354 = vpop.f32.mrf.mxu0
        %v355 = vadd.f32 0.0, %v354
        %v356 = vpop.f32.mrf.mxu0
        %357 = vdwg.mxu0
        %v359 = vunpack.c.l.b16 %v231
        %v360 = vpack.c.b16 %v359, %v359
        %v379 = vunpack.c.l.b16 %v232
        %v380 = vunpack.c.l.b16 %v233
        %v381 = vunpack.c.l.b16 %v234
        %v382 = vunpack.c.l.b16 %v235
        %v383 = vunpack.c.l.b16 %v236
        %v384 = vunpack.c.l.b16 %v237
        %v385 = vunpack.c.l.b16 %v238
        %v386 = vunpack.c.l.b16 %v239
        %v387 = vunpack.c.l.b16 %v240
        %v388 = vunpack.c.l.b16 %v241
        %v389 = vunpack.c.l.b16 %v242
        %v390 = vunpack.c.l.b16 %v243
        %v391 = vunpack.c.l.b16 %v244
        %v392 = vunpack.c.l.b16 %v245
        %v393 = vunpack.c.l.b16 %v246
        %v394 = vunpack.c.l.b16 %v247
        %v395 = vpack.c.b16 %v380, %v379
        %v396 = vpack.c.b16 %v382, %v381
        %v397 = vpack.c.b16 %v384, %v383
        %v398 = vpack.c.b16 %v386, %v385
        %v399 = vpack.c.b16 %v388, %v387
        %v400 = vpack.c.b16 %v390, %v389
        %v401 = vpack.c.b16 %v392, %v391
        %v402 = vpack.c.b16 %v394, %v393
        %411 = vmatpush.bf16.msra.mxu0 %v402
        %412 = vmatpush.bf16.msra.mxu0 %v401
        %413 = vmatpush.bf16.msra.mxu0 %v400
        %414 = vmatpush.bf16.msra.mxu0 %v399
        %415 = vmatpush.bf16.msra.mxu0 %v398
        %416 = vmatpush.bf16.msra.mxu0 %v397
        %417 = vmatpush.bf16.msra.mxu0 %v396
        %418 = vmatpush.bf16.msra.mxu0 %v395
        %419 = vmatmul.bf16.gmra.mxu0 %v272
        %v420 = vpop.f32.mrf.mxu0
        %v421 = vadd.f32 %v350, %v420
        %v422 = vpop.f32.mrf.mxu0
        %v423 = vadd.f32 %v352, %v422
        %424 = vmatmul.bf16.gmra.mxu0 %v360
        %v425 = vpop.f32.mrf.mxu0
        %v426 = vadd.f32 %v355, %v425
        %v427 = vpop.f32.mrf.mxu0
        %428 = vdwg.mxu0
        %v429 = vld [vmem:[%s217] sm:$0xc]
        %v430 = vld [vmem:[%s217 + $0x4] sm:$0xf]
        %v431 = vld [vmem:[%s217 + $0x8] sm:$0xf]
        %v432 = vld [vmem:[%s217 + $0xc] sm:$0x1]
        %s433 = scalar_lea.vmem [#allocation2], 512
        %v434 = vld [vmem:[%s433] sm:$0xf]
        %v435 = vld [vmem:[%s433 + $0x4] sm:$0xf]
        %v436 = vld [vmem:[%s433 + $0x8] sm:$0xf]
        %v437 = vld [vmem:[%s433 + $0xc] sm:$0xf]
        %v438 = vld [vmem:[%s433 + $0x10] sm:$0xf]
        %v439 = vld [vmem:[%s433 + $0x14] sm:$0xf]
        %v440 = vld [vmem:[%s433 + $0x18] sm:$0xf]
        %v441 = vld [vmem:[%s433 + $0x1c] sm:$0xf]
        %v442 = vld [vmem:[%s433 + $0x20] sm:$0xf]
        %v443 = vld [vmem:[%s433 + $0x24] sm:$0xf]
        %v444 = vld [vmem:[%s433 + $0x28] sm:$0xf]
        %v445 = vld [vmem:[%s433 + $0x2c] sm:$0xf]
        %v446 = vld [vmem:[%s433 + $0x30] sm:$0xf]
        %v447 = vld [vmem:[%s433 + $0x34] sm:$0xf]
        %v448 = vld [vmem:[%s433 + $0x38] sm:$0xf]
        %v449 = vld [vmem:[%s433 + $0x3c] sm:$0xf]
        %v454 = vunpack.c.l.b16 %v429
        %v455 = vunpack.c.l.b16 %v430
        %v456 = vunpack.c.l.b16 %v431
        %v457 = vunpack.c.l.b16 %v432
        %v458 = vpack.c.b16 %v455, %v454
        %v459 = vpack.c.b16 %v457, %v456
        %vm460 = vsmask.f32 5376
        %v462 = vshrl.u32 %v458, 16
        %v464 = vrot.slane %v462, 2
        %v465 = vshll.u32 %v458, 16
        %v467 = vrot.slane %v465, 3
        %v468 = vor.u32 %v464, %v467
        %v470 = vshrl.u32 %v459, 16
        %v472 = vrot.slane %v470, 2
        %v473 = vshll.u32 %v459, 16
        %v475 = vrot.slane %v473, 3
        %v476 = vor.u32 %v472, %v475
        %v477 = vsel %vm460, %v468, %v476
        %v496 = vunpack.c.l.b16 %v434
        %v497 = vunpack.c.l.b16 %v435
        %v498 = vunpack.c.l.b16 %v436
        %v499 = vunpack.c.l.b16 %v437
        %v500 = vunpack.c.l.b16 %v438
        %v501 = vunpack.c.l.b16 %v439
        %v502 = vunpack.c.l.b16 %v440
        %v503 = vunpack.c.l.b16 %v441
        %v504 = vunpack.c.l.b16 %v442
        %v505 = vunpack.c.l.b16 %v443
        %v506 = vunpack.c.l.b16 %v444
        %v507 = vunpack.c.l.b16 %v445
        %v508 = vunpack.c.l.b16 %v446
        %v509 = vunpack.c.l.b16 %v447
        %v510 = vunpack.c.l.b16 %v448
        %v511 = vunpack.c.l.b16 %v449
        %v512 = vpack.c.b16 %v497, %v496
        %v513 = vpack.c.b16 %v499, %v498
        %v514 = vpack.c.b16 %v501, %v500
        %v515 = vpack.c.b16 %v503, %v502
        %v516 = vpack.c.b16 %v505, %v504
        %v517 = vpack.c.b16 %v507, %v506
        %v518 = vpack.c.b16 %v509, %v508
        %v519 = vpack.c.b16 %v511, %v510
        %528 = vmatpush.bf16.msra.mxu0 %v519
        %529 = vmatpush.bf16.msra.mxu0 %v518
        %530 = vmatpush.bf16.msra.mxu0 %v517
        %531 = vmatpush.bf16.msra.mxu0 %v516
        %532 = vmatpush.bf16.msra.mxu0 %v515
        %533 = vmatpush.bf16.msra.mxu0 %v514
        %534 = vmatpush.bf16.msra.mxu0 %v513
        %535 = vmatpush.bf16.msra.mxu0 %v512
        %536 = vmatmul.bf16.gmra.mxu0 %v477
        %v537 = vpop.f32.mrf.mxu0
        %v538 = vadd.f32 0.0, %v537
        %v539 = vpop.f32.mrf.mxu0
        %v540 = vadd.f32 0.0, %v539
        %541 = vmatmul.bf16.gmra.mxu0 %v476
        %v542 = vpop.f32.mrf.mxu0
        %v543 = vadd.f32 0.0, %v542
        %v544 = vpop.f32.mrf.mxu0
        %545 = vdwg.mxu0
        %v546 = vadd.f32 %v421, %v538
        %v547 = vadd.f32 %v423, %v540
        %v548 = vadd.f32 %v426, %v543
        %v549 = vld [vmem:[%s217] sm:$0x8]
        %s550 = scalar_lea.vmem [#allocation2], 640
        %v551 = vld [vmem:[%s550] sm:$0xf]
        %v552 = vld [vmem:[%s550 + $0x4] sm:$0xf]
        %v553 = vld [vmem:[%s550 + $0x8] sm:$0xf]
        %v554 = vld [vmem:[%s550 + $0xc] sm:$0xf]
        %v555 = vld [vmem:[%s550 + $0x10] sm:$0xf]
        %v556 = vld [vmem:[%s550 + $0x14] sm:$0xf]
        %v557 = vld [vmem:[%s550 + $0x18] sm:$0xf]
        %v558 = vld [vmem:[%s550 + $0x1c] sm:$0xf]
        %v559 = vld [vmem:[%s550 + $0x20] sm:$0xf]
        %v560 = vld [vmem:[%s550 + $0x24] sm:$0xf]
        %v561 = vld [vmem:[%s550 + $0x28] sm:$0xf]
        %v562 = vld [vmem:[%s550 + $0x2c] sm:$0xf]
        %v563 = vld [vmem:[%s550 + $0x30] sm:$0xf]
        %v564 = vld [vmem:[%s550 + $0x34] sm:$0xf]
        %v565 = vld [vmem:[%s550 + $0x38] sm:$0xf]
        %v566 = vld [vmem:[%s550 + $0x3c] sm:$0xf]
        %v568 = vunpack.c.l.b16 %v549
        %v569 = vpack.c.b16 %v455, %v568
        %vm570 = vcmask 1044480
        %v571 = vrot.slane %v569, 3
        %v572 = vrot.slane %v459, 3
        %v573 = vsel %vm570, %v571, %v572
        %v592 = vunpack.c.l.b16 %v551
        %v593 = vunpack.c.l.b16 %v552
        %v594 = vunpack.c.l.b16 %v553
        %v595 = vunpack.c.l.b16 %v554
        %v596 = vunpack.c.l.b16 %v555
        %v597 = vunpack.c.l.b16 %v556
        %v598 = vunpack.c.l.b16 %v557
        %v599 = vunpack.c.l.b16 %v558
        %v600 = vunpack.c.l.b16 %v559
        %v601 = vunpack.c.l.b16 %v560
        %v602 = vunpack.c.l.b16 %v561
        %v603 = vunpack.c.l.b16 %v562
        %v604 = vunpack.c.l.b16 %v563
        %v605 = vunpack.c.l.b16 %v564
        %v606 = vunpack.c.l.b16 %v565
        %v607 = vunpack.c.l.b16 %v566
        %v608 = vpack.c.b16 %v593, %v592
        %v609 = vpack.c.b16 %v595, %v594
        %v610 = vpack.c.b16 %v597, %v596
        %v611 = vpack.c.b16 %v599, %v598
        %v612 = vpack.c.b16 %v601, %v600
        %v613 = vpack.c.b16 %v603, %v602
        %v614 = vpack.c.b16 %v605, %v604
        %v615 = vpack.c.b16 %v607, %v606
        %624 = vmatpush.bf16.msra.mxu0 %v615
        %625 = vmatpush.bf16.msra.mxu0 %v614
        %626 = vmatpush.bf16.msra.mxu0 %v613
        %627 = vmatpush.bf16.msra.mxu0 %v612
        %628 = vmatpush.bf16.msra.mxu0 %v611
        %629 = vmatpush.bf16.msra.mxu0 %v610
        %630 = vmatpush.bf16.msra.mxu0 %v609
        %631 = vmatpush.bf16.msra.mxu0 %v608
        %632 = vmatmul.bf16.gmra.mxu0 %v573
        %v633 = vpop.f32.mrf.mxu0
        %v634 = vadd.f32 0.0, %v633
        %v635 = vpop.f32.mrf.mxu0
        %v636 = vadd.f32 0.0, %v635
        %637 = vmatmul.bf16.gmra.mxu0 %v572
        %v638 = vpop.f32.mrf.mxu0
        %v639 = vadd.f32 0.0, %v638
        %v640 = vpop.f32.mrf.mxu0
        %641 = vdwg.mxu0
        %v642 = vadd.f32 %v546, %v634
        %v643 = vadd.f32 %v547, %v636
        %v644 = vadd.f32 %v548, %v639
        %s645 = scalar_lea.vmem %s217, 16
        %v646 = vld [vmem:[%s645] sm:$0xf]
        %v647 = vld [vmem:[%s645 + $0x4] sm:$0xf]
        %v648 = vld [vmem:[%s645 + $0x8] sm:$0x3]
        %s649 = scalar_lea.vmem [#allocation2], 64
        %v650 = vld [vmem:[%s649] sm:$0xf]
        %v651 = vld [vmem:[%s649 + $0x4] sm:$0xf]
        %v652 = vld [vmem:[%s649 + $0x8] sm:$0xf]
        %v653 = vld [vmem:[%s649 + $0xc] sm:$0xf]
        %v654 = vld [vmem:[%s649 + $0x10] sm:$0xf]
        %v655 = vld [vmem:[%s649 + $0x14] sm:$0xf]
        %v656 = vld [vmem:[%s649 + $0x18] sm:$0xf]
        %v657 = vld [vmem:[%s649 + $0x1c] sm:$0xf]
        %v658 = vld [vmem:[%s649 + $0x20] sm:$0xf]
        %v659 = vld [vmem:[%s649 + $0x24] sm:$0xf]
        %v660 = vld [vmem:[%s649 + $0x28] sm:$0xf]
        %v661 = vld [vmem:[%s649 + $0x2c] sm:$0xf]
        %v662 = vld [vmem:[%s649 + $0x30] sm:$0xf]
        %v663 = vld [vmem:[%s649 + $0x34] sm:$0xf]
        %v664 = vld [vmem:[%s649 + $0x38] sm:$0xf]
        %v665 = vld [vmem:[%s649 + $0x3c] sm:$0xf]
        %v669 = vunpack.c.l.b16 %v646
        %v670 = vunpack.c.l.b16 %v647
        %v671 = vunpack.c.l.b16 %v648
        %v672 = vpack.c.b16 %v670, %v669
        %v673 = vpack.c.b16 %v671, %v671
        %v692 = vunpack.c.l.b16 %v650
        %v693 = vunpack.c.l.b16 %v651
        %v694 = vunpack.c.l.b16 %v652
        %v695 = vunpack.c.l.b16 %v653
        %v696 = vunpack.c.l.b16 %v654
        %v697 = vunpack.c.l.b16 %v655
        %v698 = vunpack.c.l.b16 %v656
        %v699 = vunpack.c.l.b16 %v657
        %v700 = vunpack.c.l.b16 %v658
        %v701 = vunpack.c.l.b16 %v659
        %v702 = vunpack.c.l.b16 %v660
        %v703 = vunpack.c.l.b16 %v661
        %v704 = vunpack.c.l.b16 %v662
        %v705 = vunpack.c.l.b16 %v663
        %v706 = vunpack.c.l.b16 %v664
        %v707 = vunpack.c.l.b16 %v665
        %v708 = vpack.c.b16 %v693, %v692
        %v709 = vpack.c.b16 %v695, %v694
        %v710 = vpack.c.b16 %v697, %v696
        %v711 = vpack.c.b16 %v699, %v698
        %v712 = vpack.c.b16 %v701, %v700
        %v713 = vpack.c.b16 %v703, %v702
        %v714 = vpack.c.b16 %v705, %v704
        %v715 = vpack.c.b16 %v707, %v706
        %724 = vmatpush.bf16.msra.mxu0 %v715
        %725 = vmatpush.bf16.msra.mxu0 %v714
        %726 = vmatpush.bf16.msra.mxu0 %v713
        %727 = vmatpush.bf16.msra.mxu0 %v712
        %728 = vmatpush.bf16.msra.mxu0 %v711
        %729 = vmatpush.bf16.msra.mxu0 %v710
        %730 = vmatpush.bf16.msra.mxu0 %v709
        %731 = vmatpush.bf16.msra.mxu0 %v708
        %732 = vmatmul.bf16.gmra.mxu0 %v672
        %v733 = vpop.f32.mrf.mxu0
        %v734 = vadd.f32 0.0, %v733
        %v735 = vpop.f32.mrf.mxu0
        %v736 = vadd.f32 0.0, %v735
        %737 = vmatmul.bf16.gmra.mxu0 %v673
        %v738 = vpop.f32.mrf.mxu0
        %v739 = vadd.f32 0.0, %v738
        %v740 = vpop.f32.mrf.mxu0
        %741 = vdwg.mxu0
        %v742 = vadd.f32 %v642, %v734
        %v743 = vadd.f32 %v643, %v736
        %v744 = vadd.f32 %v644, %v739
        %v745 = vld [vmem:[%s645 + $0x8] sm:$0x7]
        %s746 = scalar_lea.vmem [#allocation2], 192
        %v747 = vld [vmem:[%s746] sm:$0xf]
        %v748 = vld [vmem:[%s746 + $0x4] sm:$0xf]
        %v749 = vld [vmem:[%s746 + $0x8] sm:$0xf]
        %v750 = vld [vmem:[%s746 + $0xc] sm:$0xf]
        %v751 = vld [vmem:[%s746 + $0x10] sm:$0xf]
        %v752 = vld [vmem:[%s746 + $0x14] sm:$0xf]
        %v753 = vld [vmem:[%s746 + $0x18] sm:$0xf]
        %v754 = vld [vmem:[%s746 + $0x1c] sm:$0xf]
        %v755 = vld [vmem:[%s746 + $0x20] sm:$0xf]
        %v756 = vld [vmem:[%s746 + $0x24] sm:$0xf]
        %v757 = vld [vmem:[%s746 + $0x28] sm:$0xf]
        %v758 = vld [vmem:[%s746 + $0x2c] sm:$0xf]
        %v759 = vld [vmem:[%s746 + $0x30] sm:$0xf]
        %v760 = vld [vmem:[%s746 + $0x34] sm:$0xf]
        %v761 = vld [vmem:[%s746 + $0x38] sm:$0xf]
        %v762 = vld [vmem:[%s746 + $0x3c] sm:$0xf]
        %v764 = vunpack.c.l.b16 %v745
        %v765 = vpack.c.b16 %v764, %v764
        %v767 = vshrl.u32 %v672, 16
        %v769 = vshll.u32 %v672, 16
        %v771 = vrot.slane %v769, 1
        %v772 = vor.u32 %v767, %v771
        %v774 = vshll.u32 %v765, 16
        %v776 = vrot.slane %v774, 1
        %v777 = vsel %vm274, %v772, %v776
        %v778 = vshrl.u32 %v765, 16
        %v780 = vor.u32 %v778, %v776
        %v799 = vunpack.c.l.b16 %v747
        %v800 = vunpack.c.l.b16 %v748
        %v801 = vunpack.c.l.b16 %v749
        %v802 = vunpack.c.l.b16 %v750
        %v803 = vunpack.c.l.b16 %v751
        %v804 = vunpack.c.l.b16 %v752
        %v805 = vunpack.c.l.b16 %v753
        %v806 = vunpack.c.l.b16 %v754
        %v807 = vunpack.c.l.b16 %v755
        %v808 = vunpack.c.l.b16 %v756
        %v809 = vunpack.c.l.b16 %v757
        %v810 = vunpack.c.l.b16 %v758
        %v811 = vunpack.c.l.b16 %v759
        %v812 = vunpack.c.l.b16 %v760
        %v813 = vunpack.c.l.b16 %v761
        %v814 = vunpack.c.l.b16 %v762
        %v815 = vpack.c.b16 %v800, %v799
        %v816 = vpack.c.b16 %v802, %v801
        %v817 = vpack.c.b16 %v804, %v803
        %v818 = vpack.c.b16 %v806, %v805
        %v819 = vpack.c.b16 %v808, %v807
        %v820 = vpack.c.b16 %v810, %v809
        %v821 = vpack.c.b16 %v812, %v811
        %v822 = vpack.c.b16 %v814, %v813
        %831 = vmatpush.bf16.msra.mxu0 %v822
        %832 = vmatpush.bf16.msra.mxu0 %v821
        %833 = vmatpush.bf16.msra.mxu0 %v820
        %834 = vmatpush.bf16.msra.mxu0 %v819
        %835 = vmatpush.bf16.msra.mxu0 %v818
        %836 = vmatpush.bf16.msra.mxu0 %v817
        %837 = vmatpush.bf16.msra.mxu0 %v816
        %838 = vmatpush.bf16.msra.mxu0 %v815
        %839 = vmatmul.bf16.gmra.mxu0 %v777
        %v840 = vpop.f32.mrf.mxu0
        %v841 = vadd.f32 0.0, %v840
        %v842 = vpop.f32.mrf.mxu0
        %v843 = vadd.f32 0.0, %v842
        %844 = vmatmul.bf16.gmra.mxu0 %v780
        %v845 = vpop.f32.mrf.mxu0
        %v846 = vadd.f32 0.0, %v845
        %v847 = vpop.f32.mrf.mxu0
        %848 = vdwg.mxu0
        %v849 = vadd.f32 %v742, %v841
        %v850 = vadd.f32 %v743, %v843
        %v851 = vadd.f32 %v744, %v846
        %v852 = vld [vmem:[%s645] sm:$0xc]
        %v853 = vld [vmem:[%s645 + $0x4] sm:$0xf]
        %v854 = vld [vmem:[%s645 + $0x8] sm:$0xf]
        %v855 = vld [vmem:[%s645 + $0xc] sm:$0x1]
        %s856 = scalar_lea.vmem [#allocation2], 576
        %v857 = vld [vmem:[%s856] sm:$0xf]
        %v858 = vld [vmem:[%s856 + $0x4] sm:$0xf]
        %v859 = vld [vmem:[%s856 + $0x8] sm:$0xf]
        %v860 = vld [vmem:[%s856 + $0xc] sm:$0xf]
        %v861 = vld [vmem:[%s856 + $0x10] sm:$0xf]
        %v862 = vld [vmem:[%s856 + $0x14] sm:$0xf]
        %v863 = vld [vmem:[%s856 + $0x18] sm:$0xf]
        %v864 = vld [vmem:[%s856 + $0x1c] sm:$0xf]
        %v865 = vld [vmem:[%s856 + $0x20] sm:$0xf]
        %v866 = vld [vmem:[%s856 + $0x24] sm:$0xf]
        %v867 = vld [vmem:[%s856 + $0x28] sm:$0xf]
        %v868 = vld [vmem:[%s856 + $0x2c] sm:$0xf]
        %v869 = vld [vmem:[%s856 + $0x30] sm:$0xf]
        %v870 = vld [vmem:[%s856 + $0x34] sm:$0xf]
        %v871 = vld [vmem:[%s856 + $0x38] sm:$0xf]
        %v872 = vld [vmem:[%s856 + $0x3c] sm:$0xf]
        %v877 = vunpack.c.l.b16 %v852
        %v878 = vunpack.c.l.b16 %v853
        %v879 = vunpack.c.l.b16 %v854
        %v880 = vunpack.c.l.b16 %v855
        %v881 = vpack.c.b16 %v878, %v877
        %v882 = vpack.c.b16 %v880, %v879
        %v884 = vshrl.u32 %v881, 16
        %v886 = vrot.slane %v884, 2
        %v887 = vshll.u32 %v881, 16
        %v889 = vrot.slane %v887, 3
        %v890 = vor.u32 %v886, %v889
        %v892 = vshrl.u32 %v882, 16
        %v894 = vrot.slane %v892, 2
        %v895 = vshll.u32 %v882, 16
        %v897 = vrot.slane %v895, 3
        %v898 = vor.u32 %v894, %v897
        %v899 = vsel %vm460, %v890, %v898
        %v918 = vunpack.c.l.b16 %v857
        %v919 = vunpack.c.l.b16 %v858
        %v920 = vunpack.c.l.b16 %v859
        %v921 = vunpack.c.l.b16 %v860
        %v922 = vunpack.c.l.b16 %v861
        %v923 = vunpack.c.l.b16 %v862
        %v924 = vunpack.c.l.b16 %v863
        %v925 = vunpack.c.l.b16 %v864
        %v926 = vunpack.c.l.b16 %v865
        %v927 = vunpack.c.l.b16 %v866
        %v928 = vunpack.c.l.b16 %v867
        %v929 = vunpack.c.l.b16 %v868
        %v930 = vunpack.c.l.b16 %v869
        %v931 = vunpack.c.l.b16 %v870
        %v932 = vunpack.c.l.b16 %v871
        %v933 = vunpack.c.l.b16 %v872
        %v934 = vpack.c.b16 %v919, %v918
        %v935 = vpack.c.b16 %v921, %v920
        %v936 = vpack.c.b16 %v923, %v922
        %v937 = vpack.c.b16 %v925, %v924
        %v938 = vpack.c.b16 %v927, %v926
        %v939 = vpack.c.b16 %v929, %v928
        %v940 = vpack.c.b16 %v931, %v930
        %v941 = vpack.c.b16 %v933, %v932
        %950 = vmatpush.bf16.msra.mxu0 %v941
        %951 = vmatpush.bf16.msra.mxu0 %v940
        %952 = vmatpush.bf16.msra.mxu0 %v939
        %953 = vmatpush.bf16.msra.mxu0 %v938
        %954 = vmatpush.bf16.msra.mxu0 %v937
        %955 = vmatpush.bf16.msra.mxu0 %v936
        %956 = vmatpush.bf16.msra.mxu0 %v935
        %957 = vmatpush.bf16.msra.mxu0 %v934
        %958 = vmatmul.bf16.gmra.mxu0 %v899
        %v959 = vpop.f32.mrf.mxu0
        %v960 = vadd.f32 0.0, %v959
        %v961 = vpop.f32.mrf.mxu0
        %v962 = vadd.f32 0.0, %v961
        %963 = vmatmul.bf16.gmra.mxu0 %v898
        %v964 = vpop.f32.mrf.mxu0
        %v965 = vadd.f32 0.0, %v964
        %v966 = vpop.f32.mrf.mxu0
        %967 = vdwg.mxu0
        %v968 = vadd.f32 %v849, %v960
        %v969 = vadd.f32 %v850, %v962
        %v970 = vadd.f32 %v851, %v965
        %v971 = vld [vmem:[%s645] sm:$0x8]
        %s972 = scalar_lea.vmem [#allocation2], 704
        %v973 = vld [vmem:[%s972] sm:$0xf]
        %v974 = vld [vmem:[%s972 + $0x4] sm:$0xf]
        %v975 = vld [vmem:[%s972 + $0x8] sm:$0xf]
        %v976 = vld [vmem:[%s972 + $0xc] sm:$0xf]
        %v977 = vld [vmem:[%s972 + $0x10] sm:$0xf]
        %v978 = vld [vmem:[%s972 + $0x14] sm:$0xf]
        %v979 = vld [vmem:[%s972 + $0x18] sm:$0xf]
        %v980 = vld [vmem:[%s972 + $0x1c] sm:$0xf]
        %v981 = vld [vmem:[%s972 + $0x20] sm:$0xf]
        %v982 = vld [vmem:[%s972 + $0x24] sm:$0xf]
        %v983 = vld [vmem:[%s972 + $0x28] sm:$0xf]
        %v984 = vld [vmem:[%s972 + $0x2c] sm:$0xf]
        %v985 = vld [vmem:[%s972 + $0x30] sm:$0xf]
        %v986 = vld [vmem:[%s972 + $0x34] sm:$0xf]
        %v987 = vld [vmem:[%s972 + $0x38] sm:$0xf]
        %v988 = vld [vmem:[%s972 + $0x3c] sm:$0xf]
        %v990 = vunpack.c.l.b16 %v971
        %v991 = vpack.c.b16 %v878, %v990
        %v992 = vrot.slane %v991, 3
        %v993 = vrot.slane %v882, 3
        %v994 = vsel %vm570, %v992, %v993
        %v1013 = vunpack.c.l.b16 %v973
        %v1014 = vunpack.c.l.b16 %v974
        %v1015 = vunpack.c.l.b16 %v975
        %v1016 = vunpack.c.l.b16 %v976
        %v1017 = vunpack.c.l.b16 %v977
        %v1018 = vunpack.c.l.b16 %v978
        %v1019 = vunpack.c.l.b16 %v979
        %v1020 = vunpack.c.l.b16 %v980
        %v1021 = vunpack.c.l.b16 %v981
        %v1022 = vunpack.c.l.b16 %v982
        %v1023 = vunpack.c.l.b16 %v983
        %v1024 = vunpack.c.l.b16 %v984
        %v1025 = vunpack.c.l.b16 %v985
        %v1026 = vunpack.c.l.b16 %v986
        %v1027 = vunpack.c.l.b16 %v987
        %v1028 = vunpack.c.l.b16 %v988
        %v1029 = vpack.c.b16 %v1014, %v1013
        %v1030 = vpack.c.b16 %v1016, %v1015
        %v1031 = vpack.c.b16 %v1018, %v1017
        %v1032 = vpack.c.b16 %v1020, %v1019
        %v1033 = vpack.c.b16 %v1022, %v1021
        %v1034 = vpack.c.b16 %v1024, %v1023
        %v1035 = vpack.c.b16 %v1026, %v1025
        %v1036 = vpack.c.b16 %v1028, %v1027
        %1045 = vmatpush.bf16.msra.mxu0 %v1036
        %1046 = vmatpush.bf16.msra.mxu0 %v1035
        %1047 = vmatpush.bf16.msra.mxu0 %v1034
        %1048 = vmatpush.bf16.msra.mxu0 %v1033
        %1049 = vmatpush.bf16.msra.mxu0 %v1032
        %1050 = vmatpush.bf16.msra.mxu0 %v1031
        %1051 = vmatpush.bf16.msra.mxu0 %v1030
        %1052 = vmatpush.bf16.msra.mxu0 %v1029
        %1053 = vmatmul.bf16.gmra.mxu0 %v994
        %v1054 = vpop.f32.mrf.mxu0
        %v1055 = vadd.f32 0.0, %v1054
        %v1056 = vpop.f32.mrf.mxu0
        %v1057 = vadd.f32 0.0, %v1056
        %1058 = vmatmul.bf16.gmra.mxu0 %v993
        %v1059 = vpop.f32.mrf.mxu0
        %v1060 = vadd.f32 0.0, %v1059
        %v1061 = vpop.f32.mrf.mxu0
        %1062 = vdwg.mxu0
        %v1063 = vadd.f32 %v968, %v1055
        %v1064 = vadd.f32 %v969, %v1057
        %v1065 = vadd.f32 %v970, %v1060
        %s1066 = scalar_lea.vmem %s217, 32
        %v1067 = vld [vmem:[%s1066] sm:$0xf]
        %v1068 = vld [vmem:[%s1066 + $0x4] sm:$0xf]
        %v1069 = vld [vmem:[%s1066 + $0x8] sm:$0x3]
        %s1070 = scalar_lea.vmem [#allocation2], 256
        %v1071 = vld [vmem:[%s1070] sm:$0xf]
        %v1072 = vld [vmem:[%s1070 + $0x4] sm:$0xf]
        %v1073 = vld [vmem:[%s1070 + $0x8] sm:$0xf]
        %v1074 = vld [vmem:[%s1070 + $0xc] sm:$0xf]
        %v1075 = vld [vmem:[%s1070 + $0x10] sm:$0xf]
        %v1076 = vld [vmem:[%s1070 + $0x14] sm:$0xf]
        %v1077 = vld [vmem:[%s1070 + $0x18] sm:$0xf]
        %v1078 = vld [vmem:[%s1070 + $0x1c] sm:$0xf]
        %v1079 = vld [vmem:[%s1070 + $0x20] sm:$0xf]
        %v1080 = vld [vmem:[%s1070 + $0x24] sm:$0xf]
        %v1081 = vld [vmem:[%s1070 + $0x28] sm:$0xf]
        %v1082 = vld [vmem:[%s1070 + $0x2c] sm:$0xf]
        %v1083 = vld [vmem:[%s1070 + $0x30] sm:$0xf]
        %v1084 = vld [vmem:[%s1070 + $0x34] sm:$0xf]
        %v1085 = vld [vmem:[%s1070 + $0x38] sm:$0xf]
        %v1086 = vld [vmem:[%s1070 + $0x3c] sm:$0xf]
        %v1090 = vunpack.c.l.b16 %v1067
        %v1091 = vunpack.c.l.b16 %v1068
        %v1092 = vunpack.c.l.b16 %v1069
        %v1093 = vpack.c.b16 %v1091, %v1090
        %v1094 = vpack.c.b16 %v1092, %v1092
        %v1113 = vunpack.c.l.b16 %v1071
        %v1114 = vunpack.c.l.b16 %v1072
        %v1115 = vunpack.c.l.b16 %v1073
        %v1116 = vunpack.c.l.b16 %v1074
        %v1117 = vunpack.c.l.b16 %v1075
        %v1118 = vunpack.c.l.b16 %v1076
        %v1119 = vunpack.c.l.b16 %v1077
        %v1120 = vunpack.c.l.b16 %v1078
        %v1121 = vunpack.c.l.b16 %v1079
        %v1122 = vunpack.c.l.b16 %v1080
        %v1123 = vunpack.c.l.b16 %v1081
        %v1124 = vunpack.c.l.b16 %v1082
        %v1125 = vunpack.c.l.b16 %v1083
        %v1126 = vunpack.c.l.b16 %v1084
        %v1127 = vunpack.c.l.b16 %v1085
        %v1128 = vunpack.c.l.b16 %v1086
        %v1129 = vpack.c.b16 %v1114, %v1113
        %v1130 = vpack.c.b16 %v1116, %v1115
        %v1131 = vpack.c.b16 %v1118, %v1117
        %v1132 = vpack.c.b16 %v1120, %v1119
        %v1133 = vpack.c.b16 %v1122, %v1121
        %v1134 = vpack.c.b16 %v1124, %v1123
        %v1135 = vpack.c.b16 %v1126, %v1125
        %v1136 = vpack.c.b16 %v1128, %v1127
        %1145 = vmatpush.bf16.msra.mxu0 %v1136
        %1146 = vmatpush.bf16.msra.mxu0 %v1135
        %1147 = vmatpush.bf16.msra.mxu0 %v1134
        %1148 = vmatpush.bf16.msra.mxu0 %v1133
        %1149 = vmatpush.bf16.msra.mxu0 %v1132
        %1150 = vmatpush.bf16.msra.mxu0 %v1131
        %1151 = vmatpush.bf16.msra.mxu0 %v1130
        %1152 = vmatpush.bf16.msra.mxu0 %v1129
        %1153 = vmatmul.bf16.gmra.mxu0 %v1093
        %v1154 = vpop.f32.mrf.mxu0
        %v1155 = vadd.f32 0.0, %v1154
        %v1156 = vpop.f32.mrf.mxu0
        %v1157 = vadd.f32 0.0, %v1156
        %1158 = vmatmul.bf16.gmra.mxu0 %v1094
        %v1159 = vpop.f32.mrf.mxu0
        %v1160 = vadd.f32 0.0, %v1159
        %v1161 = vpop.f32.mrf.mxu0
        %1162 = vdwg.mxu0
        %v1163 = vadd.f32 %v1063, %v1155
        %v1164 = vadd.f32 %v1064, %v1157
        %v1165 = vadd.f32 %v1065, %v1160
        %v1166 = vld [vmem:[%s1066 + $0x8] sm:$0x7]
        %s1167 = scalar_lea.vmem [#allocation2], 384
        %v1168 = vld [vmem:[%s1167] sm:$0xf]
        %v1169 = vld [vmem:[%s1167 + $0x4] sm:$0xf]
        %v1170 = vld [vmem:[%s1167 + $0x8] sm:$0xf]
        %v1171 = vld [vmem:[%s1167 + $0xc] sm:$0xf]
        %v1172 = vld [vmem:[%s1167 + $0x10] sm:$0xf]
        %v1173 = vld [vmem:[%s1167 + $0x14] sm:$0xf]
        %v1174 = vld [vmem:[%s1167 + $0x18] sm:$0xf]
        %v1175 = vld [vmem:[%s1167 + $0x1c] sm:$0xf]
        %v1176 = vld [vmem:[%s1167 + $0x20] sm:$0xf]
        %v1177 = vld [vmem:[%s1167 + $0x24] sm:$0xf]
        %v1178 = vld [vmem:[%s1167 + $0x28] sm:$0xf]
        %v1179 = vld [vmem:[%s1167 + $0x2c] sm:$0xf]
        %v1180 = vld [vmem:[%s1167 + $0x30] sm:$0xf]
        %v1181 = vld [vmem:[%s1167 + $0x34] sm:$0xf]
        %v1182 = vld [vmem:[%s1167 + $0x38] sm:$0xf]
        %v1183 = vld [vmem:[%s1167 + $0x3c] sm:$0xf]
        %v1185 = vunpack.c.l.b16 %v1166
        %v1186 = vpack.c.b16 %v1185, %v1185
        %v1188 = vshrl.u32 %v1093, 16
        %v1190 = vshll.u32 %v1093, 16
        %v1192 = vrot.slane %v1190, 1
        %v1193 = vor.u32 %v1188, %v1192
        %v1195 = vshll.u32 %v1186, 16
        %v1197 = vrot.slane %v1195, 1
        %v1198 = vsel %vm274, %v1193, %v1197
        %v1199 = vshrl.u32 %v1186, 16
        %v1201 = vor.u32 %v1199, %v1197
        %v1220 = vunpack.c.l.b16 %v1168
        %v1221 = vunpack.c.l.b16 %v1169
        %v1222 = vunpack.c.l.b16 %v1170
        %v1223 = vunpack.c.l.b16 %v1171
        %v1224 = vunpack.c.l.b16 %v1172
        %v1225 = vunpack.c.l.b16 %v1173
        %v1226 = vunpack.c.l.b16 %v1174
        %v1227 = vunpack.c.l.b16 %v1175
        %v1228 = vunpack.c.l.b16 %v1176
        %v1229 = vunpack.c.l.b16 %v1177
        %v1230 = vunpack.c.l.b16 %v1178
        %v1231 = vunpack.c.l.b16 %v1179
        %v1232 = vunpack.c.l.b16 %v1180
        %v1233 = vunpack.c.l.b16 %v1181
        %v1234 = vunpack.c.l.b16 %v1182
        %v1235 = vunpack.c.l.b16 %v1183
        %v1236 = vpack.c.b16 %v1221, %v1220
        %v1237 = vpack.c.b16 %v1223, %v1222
        %v1238 = vpack.c.b16 %v1225, %v1224
        %v1239 = vpack.c.b16 %v1227, %v1226
        %v1240 = vpack.c.b16 %v1229, %v1228
        %v1241 = vpack.c.b16 %v1231, %v1230
        %v1242 = vpack.c.b16 %v1233, %v1232
        %v1243 = vpack.c.b16 %v1235, %v1234
        %1252 = vmatpush.bf16.msra.mxu0 %v1243
        %1253 = vmatpush.bf16.msra.mxu0 %v1242
        %1254 = vmatpush.bf16.msra.mxu0 %v1241
        %1255 = vmatpush.bf16.msra.mxu0 %v1240
        %1256 = vmatpush.bf16.msra.mxu0 %v1239
        %1257 = vmatpush.bf16.msra.mxu0 %v1238
        %1258 = vmatpush.bf16.msra.mxu0 %v1237
        %1259 = vmatpush.bf16.msra.mxu0 %v1236
        %1260 = vmatmul.bf16.gmra.mxu0 %v1198
        %v1261 = vpop.f32.mrf.mxu0
        %v1262 = vadd.f32 0.0, %v1261
        %v1263 = vpop.f32.mrf.mxu0
        %v1264 = vadd.f32 0.0, %v1263
        %1265 = vmatmul.bf16.gmra.mxu0 %v1201
        %v1266 = vpop.f32.mrf.mxu0
        %v1267 = vadd.f32 0.0, %v1266
        %v1268 = vpop.f32.mrf.mxu0
        %1269 = vdwg.mxu0
        %v1270 = vadd.f32 %v1163, %v1262
        %v1271 = vadd.f32 %v1164, %v1264
        %v1272 = vadd.f32 %v1165, %v1267
        %v1273 = vld [vmem:[%s1066] sm:$0xc]
        %v1274 = vld [vmem:[%s1066 + $0x4] sm:$0xf]
        %v1275 = vld [vmem:[%s1066 + $0x8] sm:$0xf]
        %v1276 = vld [vmem:[%s1066 + $0xc] sm:$0x1]
        %s1277 = scalar_lea.vmem [#allocation2], 768
        %v1278 = vld [vmem:[%s1277] sm:$0xf]
        %v1279 = vld [vmem:[%s1277 + $0x4] sm:$0xf]
        %v1280 = vld [vmem:[%s1277 + $0x8] sm:$0xf]
        %v1281 = vld [vmem:[%s1277 + $0xc] sm:$0xf]
        %v1282 = vld [vmem:[%s1277 + $0x10] sm:$0xf]
        %v1283 = vld [vmem:[%s1277 + $0x14] sm:$0xf]
        %v1284 = vld [vmem:[%s1277 + $0x18] sm:$0xf]
        %v1285 = vld [vmem:[%s1277 + $0x1c] sm:$0xf]
        %v1286 = vld [vmem:[%s1277 + $0x20] sm:$0xf]
        %v1287 = vld [vmem:[%s1277 + $0x24] sm:$0xf]
        %v1288 = vld [vmem:[%s1277 + $0x28] sm:$0xf]
        %v1289 = vld [vmem:[%s1277 + $0x2c] sm:$0xf]
        %v1290 = vld [vmem:[%s1277 + $0x30] sm:$0xf]
        %v1291 = vld [vmem:[%s1277 + $0x34] sm:$0xf]
        %v1292 = vld [vmem:[%s1277 + $0x38] sm:$0xf]
        %v1293 = vld [vmem:[%s1277 + $0x3c] sm:$0xf]
        %v1298 = vunpack.c.l.b16 %v1273
        %v1299 = vunpack.c.l.b16 %v1274
        %v1300 = vunpack.c.l.b16 %v1275
        %v1301 = vunpack.c.l.b16 %v1276
        %v1302 = vpack.c.b16 %v1299, %v1298
        %v1303 = vpack.c.b16 %v1301, %v1300
        %v1305 = vshrl.u32 %v1302, 16
        %v1307 = vrot.slane %v1305, 2
        %v1308 = vshll.u32 %v1302, 16
        %v1310 = vrot.slane %v1308, 3
        %v1311 = vor.u32 %v1307, %v1310
        %v1313 = vshrl.u32 %v1303, 16
        %v1315 = vrot.slane %v1313, 2
        %v1316 = vshll.u32 %v1303, 16
        %v1318 = vrot.slane %v1316, 3
        %v1319 = vor.u32 %v1315, %v1318
        %v1320 = vsel %vm460, %v1311, %v1319
        %v1339 = vunpack.c.l.b16 %v1278
        %v1340 = vunpack.c.l.b16 %v1279
        %v1341 = vunpack.c.l.b16 %v1280
        %v1342 = vunpack.c.l.b16 %v1281
        %v1343 = vunpack.c.l.b16 %v1282
        %v1344 = vunpack.c.l.b16 %v1283
        %v1345 = vunpack.c.l.b16 %v1284
        %v1346 = vunpack.c.l.b16 %v1285
        %v1347 = vunpack.c.l.b16 %v1286
        %v1348 = vunpack.c.l.b16 %v1287
        %v1349 = vunpack.c.l.b16 %v1288
        %v1350 = vunpack.c.l.b16 %v1289
        %v1351 = vunpack.c.l.b16 %v1290
        %v1352 = vunpack.c.l.b16 %v1291
        %v1353 = vunpack.c.l.b16 %v1292
        %v1354 = vunpack.c.l.b16 %v1293
        %v1355 = vpack.c.b16 %v1340, %v1339
        %v1356 = vpack.c.b16 %v1342, %v1341
        %v1357 = vpack.c.b16 %v1344, %v1343
        %v1358 = vpack.c.b16 %v1346, %v1345
        %v1359 = vpack.c.b16 %v1348, %v1347
        %v1360 = vpack.c.b16 %v1350, %v1349
        %v1361 = vpack.c.b16 %v1352, %v1351
        %v1362 = vpack.c.b16 %v1354, %v1353
        %1371 = vmatpush.bf16.msra.mxu0 %v1362
        %1372 = vmatpush.bf16.msra.mxu0 %v1361
        %1373 = vmatpush.bf16.msra.mxu0 %v1360
        %1374 = vmatpush.bf16.msra.mxu0 %v1359
        %1375 = vmatpush.bf16.msra.mxu0 %v1358
        %1376 = vmatpush.bf16.msra.mxu0 %v1357
        %1377 = vmatpush.bf16.msra.mxu0 %v1356
        %1378 = vmatpush.bf16.msra.mxu0 %v1355
        %1379 = vmatmul.bf16.gmra.mxu0 %v1320
        %v1380 = vpop.f32.mrf.mxu0
        %v1381 = vadd.f32 0.0, %v1380
        %v1382 = vpop.f32.mrf.mxu0
        %v1383 = vadd.f32 0.0, %v1382
        %1384 = vmatmul.bf16.gmra.mxu0 %v1319
        %v1385 = vpop.f32.mrf.mxu0
        %v1386 = vadd.f32 0.0, %v1385
        %v1387 = vpop.f32.mrf.mxu0
        %1388 = vdwg.mxu0
        %v1389 = vadd.f32 %v1270, %v1381
        %v1390 = vadd.f32 %v1271, %v1383
        %v1391 = vadd.f32 %v1272, %v1386
        %v1392 = vld [vmem:[%s1066] sm:$0x8]
        %s1393 = scalar_lea.vmem [#allocation2], 896
        %v1394 = vld [vmem:[%s1393] sm:$0xf]
        %v1395 = vld [vmem:[%s1393 + $0x4] sm:$0xf]
        %v1396 = vld [vmem:[%s1393 + $0x8] sm:$0xf]
        %v1397 = vld [vmem:[%s1393 + $0xc] sm:$0xf]
        %v1398 = vld [vmem:[%s1393 + $0x10] sm:$0xf]
        %v1399 = vld [vmem:[%s1393 + $0x14] sm:$0xf]
        %v1400 = vld [vmem:[%s1393 + $0x18] sm:$0xf]
        %v1401 = vld [vmem:[%s1393 + $0x1c] sm:$0xf]
        %v1402 = vld [vmem:[%s1393 + $0x20] sm:$0xf]
        %v1403 = vld [vmem:[%s1393 + $0x24] sm:$0xf]
        %v1404 = vld [vmem:[%s1393 + $0x28] sm:$0xf]
        %v1405 = vld [vmem:[%s1393 + $0x2c] sm:$0xf]
        %v1406 = vld [vmem:[%s1393 + $0x30] sm:$0xf]
        %v1407 = vld [vmem:[%s1393 + $0x34] sm:$0xf]
        %v1408 = vld [vmem:[%s1393 + $0x38] sm:$0xf]
        %v1409 = vld [vmem:[%s1393 + $0x3c] sm:$0xf]
        %v1411 = vunpack.c.l.b16 %v1392
        %v1412 = vpack.c.b16 %v1299, %v1411
        %v1413 = vrot.slane %v1412, 3
        %v1414 = vrot.slane %v1303, 3
        %v1415 = vsel %vm570, %v1413, %v1414
        %v1434 = vunpack.c.l.b16 %v1394
        %v1435 = vunpack.c.l.b16 %v1395
        %v1436 = vunpack.c.l.b16 %v1396
        %v1437 = vunpack.c.l.b16 %v1397
        %v1438 = vunpack.c.l.b16 %v1398
        %v1439 = vunpack.c.l.b16 %v1399
        %v1440 = vunpack.c.l.b16 %v1400
        %v1441 = vunpack.c.l.b16 %v1401
        %v1442 = vunpack.c.l.b16 %v1402
        %v1443 = vunpack.c.l.b16 %v1403
        %v1444 = vunpack.c.l.b16 %v1404
        %v1445 = vunpack.c.l.b16 %v1405
        %v1446 = vunpack.c.l.b16 %v1406
        %v1447 = vunpack.c.l.b16 %v1407
        %v1448 = vunpack.c.l.b16 %v1408
        %v1449 = vunpack.c.l.b16 %v1409
        %v1450 = vpack.c.b16 %v1435, %v1434
        %v1451 = vpack.c.b16 %v1437, %v1436
        %v1452 = vpack.c.b16 %v1439, %v1438
        %v1453 = vpack.c.b16 %v1441, %v1440
        %v1454 = vpack.c.b16 %v1443, %v1442
        %v1455 = vpack.c.b16 %v1445, %v1444
        %v1456 = vpack.c.b16 %v1447, %v1446
        %v1457 = vpack.c.b16 %v1449, %v1448
        %1466 = vmatpush.bf16.msra.mxu0 %v1457
        %1467 = vmatpush.bf16.msra.mxu0 %v1456
        %1468 = vmatpush.bf16.msra.mxu0 %v1455
        %1469 = vmatpush.bf16.msra.mxu0 %v1454
        %1470 = vmatpush.bf16.msra.mxu0 %v1453
        %1471 = vmatpush.bf16.msra.mxu0 %v1452
        %1472 = vmatpush.bf16.msra.mxu0 %v1451
        %1473 = vmatpush.bf16.msra.mxu0 %v1450
        %1474 = vmatmul.bf16.gmra.mxu0 %v1415
        %v1475 = vpop.f32.mrf.mxu0
        %v1476 = vadd.f32 0.0, %v1475
        %v1477 = vpop.f32.mrf.mxu0
        %v1478 = vadd.f32 0.0, %v1477
        %1479 = vmatmul.bf16.gmra.mxu0 %v1414
        %v1480 = vpop.f32.mrf.mxu0
        %v1481 = vadd.f32 0.0, %v1480
        %v1482 = vpop.f32.mrf.mxu0
        %1483 = vdwg.mxu0
        %v1484 = vadd.f32 %v1389, %v1476
        %v1485 = vadd.f32 %v1390, %v1478
        %v1486 = vadd.f32 %v1391, %v1481
        %s1487 = scalar_lea.vmem %s217, 48
        %v1488 = vld [vmem:[%s1487] sm:$0xf]
        %v1489 = vld [vmem:[%s1487 + $0x4] sm:$0xf]
        %v1490 = vld [vmem:[%s1487 + $0x8] sm:$0x3]
        %s1491 = scalar_lea.vmem [#allocation2], 320
        %v1492 = vld [vmem:[%s1491] sm:$0xf]
        %v1493 = vld [vmem:[%s1491 + $0x4] sm:$0xf]
        %v1494 = vld [vmem:[%s1491 + $0x8] sm:$0xf]
        %v1495 = vld [vmem:[%s1491 + $0xc] sm:$0xf]
        %v1496 = vld [vmem:[%s1491 + $0x10] sm:$0xf]
        %v1497 = vld [vmem:[%s1491 + $0x14] sm:$0xf]
        %v1498 = vld [vmem:[%s1491 + $0x18] sm:$0xf]
        %v1499 = vld [vmem:[%s1491 + $0x1c] sm:$0xf]
        %v1500 = vld [vmem:[%s1491 + $0x20] sm:$0xf]
        %v1501 = vld [vmem:[%s1491 + $0x24] sm:$0xf]
        %v1502 = vld [vmem:[%s1491 + $0x28] sm:$0xf]
        %v1503 = vld [vmem:[%s1491 + $0x2c] sm:$0xf]
        %v1504 = vld [vmem:[%s1491 + $0x30] sm:$0xf]
        %v1505 = vld [vmem:[%s1491 + $0x34] sm:$0xf]
        %v1506 = vld [vmem:[%s1491 + $0x38] sm:$0xf]
        %v1507 = vld [vmem:[%s1491 + $0x3c] sm:$0xf]
        %v1511 = vunpack.c.l.b16 %v1488
        %v1512 = vunpack.c.l.b16 %v1489
        %v1513 = vunpack.c.l.b16 %v1490
        %v1514 = vpack.c.b16 %v1512, %v1511
        %v1515 = vpack.c.b16 %v1513, %v1513
        %v1534 = vunpack.c.l.b16 %v1492
        %v1535 = vunpack.c.l.b16 %v1493
        %v1536 = vunpack.c.l.b16 %v1494
        %v1537 = vunpack.c.l.b16 %v1495
        %v1538 = vunpack.c.l.b16 %v1496
        %v1539 = vunpack.c.l.b16 %v1497
        %v1540 = vunpack.c.l.b16 %v1498
        %v1541 = vunpack.c.l.b16 %v1499
        %v1542 = vunpack.c.l.b16 %v1500
        %v1543 = vunpack.c.l.b16 %v1501
        %v1544 = vunpack.c.l.b16 %v1502
        %v1545 = vunpack.c.l.b16 %v1503
        %v1546 = vunpack.c.l.b16 %v1504
        %v1547 = vunpack.c.l.b16 %v1505
        %v1548 = vunpack.c.l.b16 %v1506
        %v1549 = vunpack.c.l.b16 %v1507
        %v1550 = vpack.c.b16 %v1535, %v1534
        %v1551 = vpack.c.b16 %v1537, %v1536
        %v1552 = vpack.c.b16 %v1539, %v1538
        %v1553 = vpack.c.b16 %v1541, %v1540
        %v1554 = vpack.c.b16 %v1543, %v1542
        %v1555 = vpack.c.b16 %v1545, %v1544
        %v1556 = vpack.c.b16 %v1547, %v1546
        %v1557 = vpack.c.b16 %v1549, %v1548
        %1566 = vmatpush.bf16.msra.mxu0 %v1557
        %1567 = vmatpush.bf16.msra.mxu0 %v1556
        %1568 = vmatpush.bf16.msra.mxu0 %v1555
        %1569 = vmatpush.bf16.msra.mxu0 %v1554
        %1570 = vmatpush.bf16.msra.mxu0 %v1553
        %1571 = vmatpush.bf16.msra.mxu0 %v1552
        %1572 = vmatpush.bf16.msra.mxu0 %v1551
        %1573 = vmatpush.bf16.msra.mxu0 %v1550
        %1574 = vmatmul.bf16.gmra.mxu0 %v1514
        %v1575 = vpop.f32.mrf.mxu0
        %v1576 = vadd.f32 0.0, %v1575
        %v1577 = vpop.f32.mrf.mxu0
        %v1578 = vadd.f32 0.0, %v1577
        %1579 = vmatmul.bf16.gmra.mxu0 %v1515
        %v1580 = vpop.f32.mrf.mxu0
        %v1581 = vadd.f32 0.0, %v1580
        %v1582 = vpop.f32.mrf.mxu0
        %1583 = vdwg.mxu0
        %v1584 = vadd.f32 %v1484, %v1576
        %v1585 = vadd.f32 %v1485, %v1578
        %v1586 = vadd.f32 %v1486, %v1581
        %v1587 = vld [vmem:[%s1487 + $0x8] sm:$0x7]
        %s1588 = scalar_lea.vmem [#allocation2], 448
        %v1589 = vld [vmem:[%s1588] sm:$0xf]
        %v1590 = vld [vmem:[%s1588 + $0x4] sm:$0xf]
        %v1591 = vld [vmem:[%s1588 + $0x8] sm:$0xf]
        %v1592 = vld [vmem:[%s1588 + $0xc] sm:$0xf]
        %v1593 = vld [vmem:[%s1588 + $0x10] sm:$0xf]
        %v1594 = vld [vmem:[%s1588 + $0x14] sm:$0xf]
        %v1595 = vld [vmem:[%s1588 + $0x18] sm:$0xf]
        %v1596 = vld [vmem:[%s1588 + $0x1c] sm:$0xf]
        %v1597 = vld [vmem:[%s1588 + $0x20] sm:$0xf]
        %v1598 = vld [vmem:[%s1588 + $0x24] sm:$0xf]
        %v1599 = vld [vmem:[%s1588 + $0x28] sm:$0xf]
        %v1600 = vld [vmem:[%s1588 + $0x2c] sm:$0xf]
        %v1601 = vld [vmem:[%s1588 + $0x30] sm:$0xf]
        %v1602 = vld [vmem:[%s1588 + $0x34] sm:$0xf]
        %v1603 = vld [vmem:[%s1588 + $0x38] sm:$0xf]
        %v1604 = vld [vmem:[%s1588 + $0x3c] sm:$0xf]
        %v1606 = vunpack.c.l.b16 %v1587
        %v1607 = vpack.c.b16 %v1606, %v1606
        %v1609 = vshrl.u32 %v1514, 16
        %v1611 = vshll.u32 %v1514, 16
        %v1613 = vrot.slane %v1611, 1
        %v1614 = vor.u32 %v1609, %v1613
        %v1616 = vshll.u32 %v1607, 16
        %v1618 = vrot.slane %v1616, 1
        %v1619 = vsel %vm274, %v1614, %v1618
        %v1620 = vshrl.u32 %v1607, 16
        %v1622 = vor.u32 %v1620, %v1618
        %v1641 = vunpack.c.l.b16 %v1589
        %v1642 = vunpack.c.l.b16 %v1590
        %v1643 = vunpack.c.l.b16 %v1591
        %v1644 = vunpack.c.l.b16 %v1592
        %v1645 = vunpack.c.l.b16 %v1593
        %v1646 = vunpack.c.l.b16 %v1594
        %v1647 = vunpack.c.l.b16 %v1595
        %v1648 = vunpack.c.l.b16 %v1596
        %v1649 = vunpack.c.l.b16 %v1597
        %v1650 = vunpack.c.l.b16 %v1598
        %v1651 = vunpack.c.l.b16 %v1599
        %v1652 = vunpack.c.l.b16 %v1600
        %v1653 = vunpack.c.l.b16 %v1601
        %v1654 = vunpack.c.l.b16 %v1602
        %v1655 = vunpack.c.l.b16 %v1603
        %v1656 = vunpack.c.l.b16 %v1604
        %v1657 = vpack.c.b16 %v1642, %v1641
        %v1658 = vpack.c.b16 %v1644, %v1643
        %v1659 = vpack.c.b16 %v1646, %v1645
        %v1660 = vpack.c.b16 %v1648, %v1647
        %v1661 = vpack.c.b16 %v1650, %v1649
        %v1662 = vpack.c.b16 %v1652, %v1651
        %v1663 = vpack.c.b16 %v1654, %v1653
        %v1664 = vpack.c.b16 %v1656, %v1655
        %1673 = vmatpush.bf16.msra.mxu0 %v1664
        %1674 = vmatpush.bf16.msra.mxu0 %v1663
        %1675 = vmatpush.bf16.msra.mxu0 %v1662
        %1676 = vmatpush.bf16.msra.mxu0 %v1661
        %1677 = vmatpush.bf16.msra.mxu0 %v1660
        %1678 = vmatpush.bf16.msra.mxu0 %v1659
        %1679 = vmatpush.bf16.msra.mxu0 %v1658
        %1680 = vmatpush.bf16.msra.mxu0 %v1657
        %1681 = vmatmul.bf16.gmra.mxu0 %v1619
        %v1682 = vpop.f32.mrf.mxu0
        %v1683 = vadd.f32 0.0, %v1682
        %v1684 = vpop.f32.mrf.mxu0
        %v1685 = vadd.f32 0.0, %v1684
        %1686 = vmatmul.bf16.gmra.mxu0 %v1622
        %v1687 = vpop.f32.mrf.mxu0
        %v1688 = vadd.f32 0.0, %v1687
        %v1689 = vpop.f32.mrf.mxu0
        %1690 = vdwg.mxu0
        %v1691 = vadd.f32 %v1584, %v1683
        %v1692 = vadd.f32 %v1585, %v1685
        %v1693 = vadd.f32 %v1586, %v1688
        %v1694 = vld [vmem:[%s1487] sm:$0xc]
        %v1695 = vld [vmem:[%s1487 + $0x4] sm:$0xf]
        %v1696 = vld [vmem:[%s1487 + $0x8] sm:$0xf]
        %v1697 = vld [vmem:[%s1487 + $0xc] sm:$0x1]
        %s1698 = scalar_lea.vmem [#allocation2], 832
        %v1699 = vld [vmem:[%s1698] sm:$0xf]
        %v1700 = vld [vmem:[%s1698 + $0x4] sm:$0xf]
        %v1701 = vld [vmem:[%s1698 + $0x8] sm:$0xf]
        %v1702 = vld [vmem:[%s1698 + $0xc] sm:$0xf]
        %v1703 = vld [vmem:[%s1698 + $0x10] sm:$0xf]
        %v1704 = vld [vmem:[%s1698 + $0x14] sm:$0xf]
        %v1705 = vld [vmem:[%s1698 + $0x18] sm:$0xf]
        %v1706 = vld [vmem:[%s1698 + $0x1c] sm:$0xf]
        %v1707 = vld [vmem:[%s1698 + $0x20] sm:$0xf]
        %v1708 = vld [vmem:[%s1698 + $0x24] sm:$0xf]
        %v1709 = vld [vmem:[%s1698 + $0x28] sm:$0xf]
        %v1710 = vld [vmem:[%s1698 + $0x2c] sm:$0xf]
        %v1711 = vld [vmem:[%s1698 + $0x30] sm:$0xf]
        %v1712 = vld [vmem:[%s1698 + $0x34] sm:$0xf]
        %v1713 = vld [vmem:[%s1698 + $0x38] sm:$0xf]
        %v1714 = vld [vmem:[%s1698 + $0x3c] sm:$0xf]
        %v1719 = vunpack.c.l.b16 %v1694
        %v1720 = vunpack.c.l.b16 %v1695
        %v1721 = vunpack.c.l.b16 %v1696
        %v1722 = vunpack.c.l.b16 %v1697
        %v1723 = vpack.c.b16 %v1720, %v1719
        %v1724 = vpack.c.b16 %v1722, %v1721
        %v1726 = vshrl.u32 %v1723, 16
        %v1728 = vrot.slane %v1726, 2
        %v1729 = vshll.u32 %v1723, 16
        %v1731 = vrot.slane %v1729, 3
        %v1732 = vor.u32 %v1728, %v1731
        %v1734 = vshrl.u32 %v1724, 16
        %v1736 = vrot.slane %v1734, 2
        %v1737 = vshll.u32 %v1724, 16
        %v1739 = vrot.slane %v1737, 3
        %v1740 = vor.u32 %v1736, %v1739
        %v1741 = vsel %vm460, %v1732, %v1740
        %v1760 = vunpack.c.l.b16 %v1699
        %v1761 = vunpack.c.l.b16 %v1700
        %v1762 = vunpack.c.l.b16 %v1701
        %v1763 = vunpack.c.l.b16 %v1702
        %v1764 = vunpack.c.l.b16 %v1703
        %v1765 = vunpack.c.l.b16 %v1704
        %v1766 = vunpack.c.l.b16 %v1705
        %v1767 = vunpack.c.l.b16 %v1706
        %v1768 = vunpack.c.l.b16 %v1707
        %v1769 = vunpack.c.l.b16 %v1708
        %v1770 = vunpack.c.l.b16 %v1709
        %v1771 = vunpack.c.l.b16 %v1710
        %v1772 = vunpack.c.l.b16 %v1711
        %v1773 = vunpack.c.l.b16 %v1712
        %v1774 = vunpack.c.l.b16 %v1713
        %v1775 = vunpack.c.l.b16 %v1714
        %v1776 = vpack.c.b16 %v1761, %v1760
        %v1777 = vpack.c.b16 %v1763, %v1762
        %v1778 = vpack.c.b16 %v1765, %v1764
        %v1779 = vpack.c.b16 %v1767, %v1766
        %v1780 = vpack.c.b16 %v1769, %v1768
        %v1781 = vpack.c.b16 %v1771, %v1770
        %v1782 = vpack.c.b16 %v1773, %v1772
        %v1783 = vpack.c.b16 %v1775, %v1774
        %1792 = vmatpush.bf16.msra.mxu0 %v1783
        %1793 = vmatpush.bf16.msra.mxu0 %v1782
        %1794 = vmatpush.bf16.msra.mxu0 %v1781
        %1795 = vmatpush.bf16.msra.mxu0 %v1780
        %1796 = vmatpush.bf16.msra.mxu0 %v1779
        %1797 = vmatpush.bf16.msra.mxu0 %v1778
        %1798 = vmatpush.bf16.msra.mxu0 %v1777
        %1799 = vmatpush.bf16.msra.mxu0 %v1776
        %1800 = vmatmul.bf16.gmra.mxu0 %v1741
        %v1801 = vpop.f32.mrf.mxu0
        %v1802 = vadd.f32 0.0, %v1801
        %v1803 = vpop.f32.mrf.mxu0
        %v1804 = vadd.f32 0.0, %v1803
        %1805 = vmatmul.bf16.gmra.mxu0 %v1740
        %v1806 = vpop.f32.mrf.mxu0
        %v1807 = vadd.f32 0.0, %v1806
        %v1808 = vpop.f32.mrf.mxu0
        %1809 = vdwg.mxu0
        %v1810 = vadd.f32 %v1691, %v1802
        %v1811 = vadd.f32 %v1692, %v1804
        %v1812 = vadd.f32 %v1693, %v1807
        %v1813 = vld [vmem:[%s1487] sm:$0x8]
        %s1814 = scalar_lea.vmem [#allocation2], 960
        %v1815 = vld [vmem:[%s1814] sm:$0xf]
        %v1816 = vld [vmem:[%s1814 + $0x4] sm:$0xf]
        %v1817 = vld [vmem:[%s1814 + $0x8] sm:$0xf]
        %v1818 = vld [vmem:[%s1814 + $0xc] sm:$0xf]
        %v1819 = vld [vmem:[%s1814 + $0x10] sm:$0xf]
        %v1820 = vld [vmem:[%s1814 + $0x14] sm:$0xf]
        %v1821 = vld [vmem:[%s1814 + $0x18] sm:$0xf]
        %v1822 = vld [vmem:[%s1814 + $0x1c] sm:$0xf]
        %v1823 = vld [vmem:[%s1814 + $0x20] sm:$0xf]
        %v1824 = vld [vmem:[%s1814 + $0x24] sm:$0xf]
        %v1825 = vld [vmem:[%s1814 + $0x28] sm:$0xf]
        %v1826 = vld [vmem:[%s1814 + $0x2c] sm:$0xf]
        %v1827 = vld [vmem:[%s1814 + $0x30] sm:$0xf]
        %v1828 = vld [vmem:[%s1814 + $0x34] sm:$0xf]
        %v1829 = vld [vmem:[%s1814 + $0x38] sm:$0xf]
        %v1830 = vld [vmem:[%s1814 + $0x3c] sm:$0xf]
        %v1832 = vunpack.c.l.b16 %v1813
        %v1833 = vpack.c.b16 %v1720, %v1832
        %v1834 = vrot.slane %v1833, 3
        %v1835 = vrot.slane %v1724, 3
        %v1836 = vsel %vm570, %v1834, %v1835
        %v1855 = vunpack.c.l.b16 %v1815
        %v1856 = vunpack.c.l.b16 %v1816
        %v1857 = vunpack.c.l.b16 %v1817
        %v1858 = vunpack.c.l.b16 %v1818
        %v1859 = vunpack.c.l.b16 %v1819
        %v1860 = vunpack.c.l.b16 %v1820
        %v1861 = vunpack.c.l.b16 %v1821
        %v1862 = vunpack.c.l.b16 %v1822
        %v1863 = vunpack.c.l.b16 %v1823
        %v1864 = vunpack.c.l.b16 %v1824
        %v1865 = vunpack.c.l.b16 %v1825
        %v1866 = vunpack.c.l.b16 %v1826
        %v1867 = vunpack.c.l.b16 %v1827
        %v1868 = vunpack.c.l.b16 %v1828
        %v1869 = vunpack.c.l.b16 %v1829
        %v1870 = vunpack.c.l.b16 %v1830
        %v1871 = vpack.c.b16 %v1856, %v1855
        %v1872 = vpack.c.b16 %v1858, %v1857
        %v1873 = vpack.c.b16 %v1860, %v1859
        %v1874 = vpack.c.b16 %v1862, %v1861
        %v1875 = vpack.c.b16 %v1864, %v1863
        %v1876 = vpack.c.b16 %v1866, %v1865
        %v1877 = vpack.c.b16 %v1868, %v1867
        %v1878 = vpack.c.b16 %v1870, %v1869
        %1887 = vmatpush.bf16.msra.mxu0 %v1878
        %1888 = vmatpush.bf16.msra.mxu0 %v1877
        %1889 = vmatpush.bf16.msra.mxu0 %v1876
        %1890 = vmatpush.bf16.msra.mxu0 %v1875
        %1891 = vmatpush.bf16.msra.mxu0 %v1874
        %1892 = vmatpush.bf16.msra.mxu0 %v1873
        %1893 = vmatpush.bf16.msra.mxu0 %v1872
        %1894 = vmatpush.bf16.msra.mxu0 %v1871
        %1895 = vmatmul.bf16.gmra.mxu0 %v1836
        %v1896 = vpop.f32.mrf.mxu0
        %v1897 = vadd.f32 0.0, %v1896
        %v1898 = vpop.f32.mrf.mxu0
        %v1899 = vadd.f32 0.0, %v1898
        %1900 = vmatmul.bf16.gmra.mxu0 %v1835
        %v1901 = vpop.f32.mrf.mxu0
        %v1902 = vadd.f32 0.0, %v1901
        %v1903 = vpop.f32.mrf.mxu0
        %1904 = vdwg.mxu0
        %v1905 = vadd.f32 %v1810, %v1897
        %v1906 = vadd.f32 %v1811, %v1899
        %v1907 = vadd.f32 %v1812, %v1902
        %v1908 = vld [vmem:[%s220] sm:$0x1]
        %v1910 = vperm.slane %v1908, 0
        %v1912 = vadd.f32 %v1905, %v1910
        %v1913 = vadd.f32 %v1906, %v1910
        %v1914 = vadd.f32 %v1907, %v1910
        %vm1915 = vcmp.ge.f32.partialorder %v1912, 0.0
        %vm1916 = vcmp.ge.f32.partialorder %v1913, 0.0
        %vm1917 = vcmp.ge.f32.partialorder %v1914, 0.0
        %v1918 = vmul.f32 %v1912, 0.01
        %v1919 = vmul.f32 %v1913, 0.01
        %v1920 = vmul.f32 %v1914, 0.01
        %v1921 = vsel %vm1915, %v1912, %v1918
        %v1922 = vsel %vm1916, %v1913, %v1919
        %v1923 = vsel %vm1917, %v1914, %v1920
        %v1924 = vpack.c.bf16 %v1921, %v1921
        %v1925 = vpack.c.bf16 %v1922, %v1922
        %v1926 = vpack.c.bf16 %v1923, %v1923
        %1927 = vst [vmem:[%s228] sm:$0xf] %v1924
        %1928 = vst [vmem:[%s228 + $0x4] sm:$0xf] %v1925
        %1929 = vst [vmem:[%s228 + $0x8] sm:$0x3] %v1926
        %p1930 = scmp.lt.s32.totalorder %s20, 1
        %s1931 = scalar_select %p1930, %s20, 1
        %p1932 = scmp.lt.s32.totalorder %s19, 0
        %s1933 = scalar_select %p1932, %s19, 0
        %s1934 = smul.addr %s1931, 3
        %s1935 = sadd.s32 %s1933, %s1934
        %s1936 = smul.addr %s1935, 4
        %s1937 = scalar_lea.vmem %s3, %s1936
        // Predicated region
        $region37: #{discriminator_forward.6} parent=31 // pred_check
          %p1938 = pneg %p125
        $region38: #{discriminator_forward.6} parent=31 // pred_check_branch
          %1940 = sbr.rel (%p1938) target = $region40
        $region39: #{discriminator_forward.6} parent=31 // pred_region
          _
        $region40: #{discriminator_forward.6} parent=31 // pred_fallthru
          _
      $region32: #{discriminator_forward.6} parent=5 // pred_fallthru
        _
      %p1941 = scmp.le.s32.totalorder 2, %s10
      // Predicated region
      $region41: #{discriminator_forward.6} parent=5 // pred_check
        %p1942 = pneg %p1941
      $region42: #{discriminator_forward.6} parent=5 // pred_check_branch
        %1944 = sbr.rel (%p1942) target = $region44
      $region43: #{discriminator_forward.6} parent=5 // pred_region
        %s1945 = ssub.s32 %s10, 2
        // Predicated region
        $region45: #{discriminator_forward.6} parent=43 // pred_check
          %p1946 = pneg %p131
        $region46: #{discriminator_forward.6} parent=43 // pred_check_branch
          %1948 = sbr.rel (%p1946) target = $region48
        $region47: #{discriminator_forward.6} parent=43 // pred_region
          %p1949 = scmp.lt.s32.totalorder %s22, 1
          %s1950 = scalar_select %p1949, %s22, 1
          %p1951 = scmp.lt.s32.totalorder %s21, 0
          %s1952 = scalar_select %p1951, %s21, 0
          %s1953 = smul.addr %s1950, 3
          %s1954 = sadd.s32 %s1952, %s1953
          %s1955 = smul.addr %s1954, 4
          %s1956 = scalar_lea.vmem %s3, %s1955
        $region48: #{discriminator_forward.6} parent=43 // pred_fallthru
          _
      $region44: #{discriminator_forward.6} parent=5 // pred_fallthru
        _
    $region6: #{discriminator_forward.6} parent=1 // loop_footer
      %s14 = sadd.s32 1, %s10
    $region7: #{discriminator_forward.6} parent=1 // loop_footer_branch
      %9 = sbr.rel target = $region3
    $region8: #{discriminator_forward.6} parent=1 // loop_exit
      _
    %1957 = vsyncpa [#allocation3], 1
    %s1958 = scalar_lea.sflag [#allocation3], 1
    %1959 = vsyncpa %s1958, 1

// kernel: discriminator_forward.7
$region0: #{discriminator_forward.7}
  #allocation0 [shape = 'u32[]', space=smem, size = 0x4, offset = 0x4, fixed_abs, tag = 'smem constant byte address 0x4 - core index']
  #allocation1 [shape = 'u32[72,128]{1,0:T(1,128)}', space=vmem, size = 0x9000, scoped, tag = 'internal scratch']
  %s0 = inlined_call_operand.vmem [shape: bf16[2,4,12,128], index: 0, kind: input, shape index: {}]
  %s1 = inlined_call_operand.vmem [shape: bf16[16,128,256], index: 1, kind: input, shape index: {}]
  %s2 = inlined_call_operand.vmem [shape: f32[1,256], index: 2, kind: input, shape index: {}]
  %s3 = inlined_call_operand.vmem [shape: bf16[2,6,256], index: 3, kind: output, shape index: {}]
  %s4 = sld [smem:[#allocation0]]
  $region45: #{discriminator_forward.7} parent=0
    _
  %s6 = ssub.s32 1, %s4
  %s7 = scalar_select 0, %s6, %s4
  loop: start=0, step=1, limit=4
  $region2: #{discriminator_forward.7} parent=0 // loop_pre_header
    _
  $region3: #{discriminator_forward.7} parent=0 // loop_header
    %s9 = sphi 0, %s13
    %p10 = scmp.ge.s32.totalorder %s9, 4
    %s16 = sphi 0, %s28
    %s17 = sphi 0, %s24
    %s18 = sphi 0, %s16
    %s19 = sphi 0, %s17
    %s20 = sphi 0, %s18
    %s21 = sphi 0, %s19
    %s31 = sphi 0, %s33
    %s34 = sphi 0, %s31
    %s35 = sphi 0, %s34
    %s51 = sphi 0, %s35
    %s57 = sphi 0, %s59
    %s60 = sphi 0, %s57
    %s61 = sphi 0, %s60
    %s77 = sphi 0, %s61
    %s83 = sphi 0, %s85
    %s86 = sphi 0, %s83
    %s87 = sphi 0, %s86
    %s103 = sphi 0, %s87
    %s111 = sphi 0, %s113
    %s114 = sphi 0, %s111
    %s115 = sphi 0, %s114
    %s131 = sphi 0, %s115
  $region4: #{discriminator_forward.7} parent=0 // loop_header_branch
    %12 = sbr.rel (%p10) target = $region8
  $region5: #{discriminator_forward.7} parent=0 // loop_body
    %s14 = ssub.s32 %s9, 1
    %s15 = ssub.s32 %s9, 2
    %s22 = sadd.s32 1, %s17
    %p23 = scmp.ge.s32.totalorder %s22, 2
    %s24 = scalar_select %p23, 0, %s22
    %s25 = sadd.s32 1, %s16
    %s26 = scalar_select %p23, %s25, %s16
    %p27 = scmp.ge.s32.totalorder %s26, 1
    %s28 = scalar_select %p27, 0, %s26
    %s29 = ssub.s32 %s17, %s24
    %p30 = scmp.eq.s32.totalorder %s29, 0
    %s32 = sadd.s32 %s31, 1
    %s33 = scalar_select %p30, %s31, %s32
    %p36 = pneg %p30
    %p37 = scmp.eq.s32.totalorder %s9, 1
    %p38 = por %p36, %p37
    %p39 = scmp.ne.s32.totalorder %s31, %s34
    %p40 = scmp.eq.s32.totalorder %s9, 0
    %p41 = por %p39, %p40
    %p42 = scmp.ne.s32.totalorder %s31, %s34
    %p43 = scmp.eq.s32.totalorder %s14, 1
    %p44 = por %p42, %p43
    %p45 = scmp.ne.s32.totalorder %s34, %s35
    %p46 = scmp.eq.s32.totalorder %s14, 0
    %p47 = por %p45, %p46
    %p48 = scmp.ne.s32.totalorder %s34, %s35
    %p49 = scmp.eq.s32.totalorder %s15, 1
    %p50 = por %p48, %p49
    %p52 = scmp.ne.s32.totalorder %s35, %s51
    %p53 = scmp.eq.s32.totalorder %s15, 0
    %p54 = por %p52, %p53
    %s55 = ssub.s32 %s16, %s28
    %p56 = scmp.eq.s32.totalorder %s55, 0
    %s58 = sadd.s32 %s57, 1
    %s59 = scalar_select %p56, %s57, %s58
    %p62 = pneg %p56
    %p63 = scmp.eq.s32.totalorder %s9, 1
    %p64 = por %p62, %p63
    %p65 = scmp.ne.s32.totalorder %s57, %s60
    %p66 = scmp.eq.s32.totalorder %s9, 0
    %p67 = por %p65, %p66
    %p68 = scmp.ne.s32.totalorder %s57, %s60
    %p69 = scmp.eq.s32.totalorder %s14, 1
    %p70 = por %p68, %p69
    %p71 = scmp.ne.s32.totalorder %s60, %s61
    %p72 = scmp.eq.s32.totalorder %s14, 0
    %p73 = por %p71, %p72
    %p74 = scmp.ne.s32.totalorder %s60, %s61
    %p75 = scmp.eq.s32.totalorder %s15, 1
    %p76 = por %p74, %p75
    %p78 = scmp.ne.s32.totalorder %s61, %s77
    %p79 = scmp.eq.s32.totalorder %s15, 0
    %p80 = por %p78, %p79
    %s81 = ssub.s32 %s16, %s28
    %p82 = scmp.eq.s32.totalorder %s81, 0
    %s84 = sadd.s32 %s83, 1
    %s85 = scalar_select %p82, %s83, %s84
    %p88 = pneg %p82
    %p89 = scmp.eq.s32.totalorder %s9, 1
    %p90 = por %p88, %p89
    %p91 = scmp.ne.s32.totalorder %s83, %s86
    %p92 = scmp.eq.s32.totalorder %s9, 0
    %p93 = por %p91, %p92
    %p94 = scmp.ne.s32.totalorder %s83, %s86
    %p95 = scmp.eq.s32.totalorder %s14, 1
    %p96 = por %p94, %p95
    %p97 = scmp.ne.s32.totalorder %s86, %s87
    %p98 = scmp.eq.s32.totalorder %s14, 0
    %p99 = por %p97, %p98
    %p100 = scmp.ne.s32.totalorder %s86, %s87
    %p101 = scmp.eq.s32.totalorder %s15, 1
    %p102 = por %p100, %p101
    %p104 = scmp.ne.s32.totalorder %s87, %s103
    %p105 = scmp.eq.s32.totalorder %s15, 0
    %p106 = por %p104, %p105
    %s107 = ssub.s32 %s17, %s24
    %s108 = ssub.s32 %s16, %s28
    %s109 = sor.u32 %s107, %s108
    %p110 = scmp.eq.s32.totalorder %s109, 0
    %s112 = sadd.s32 %s111, 1
    %s113 = scalar_select %p110, %s111, %s112
    %p116 = pneg %p110
    %p117 = scmp.eq.s32.totalorder %s9, 1
    %p118 = por %p116, %p117
    %p119 = scmp.ne.s32.totalorder %s111, %s114
    %p120 = scmp.eq.s32.totalorder %s9, 0
    %p121 = por %p119, %p120
    %p122 = scmp.ne.s32.totalorder %s111, %s114
    %p123 = scmp.eq.s32.totalorder %s14, 1
    %p124 = por %p122, %p123
    %p125 = scmp.ne.s32.totalorder %s114, %s115
    %p126 = scmp.eq.s32.totalorder %s14, 0
    %p127 = por %p125, %p126
    %p128 = scmp.ne.s32.totalorder %s114, %s115
    %p129 = scmp.eq.s32.totalorder %s15, 1
    %p130 = por %p128, %p129
    %p132 = scmp.ne.s32.totalorder %s115, %s131
    %p133 = scmp.eq.s32.totalorder %s15, 0
    %p134 = por %p132, %p133
    %p135 = scmp.le.s32.totalorder 1, %s9
    %p136 = scmp.lt.s32.totalorder %s9, 3
    %p137 = pnand %p135, %p136
    %p138 = pneg %p137
    // Predicated region
    $region9: #{discriminator_forward.7} parent=5 // pred_check
      _
    $region10: #{discriminator_forward.7} parent=5 // pred_check_branch
      %140 = sbr.rel (%p137) target = $region12
    $region11: #{discriminator_forward.7} parent=5 // pred_region
      %s141 = ssub.s32 %s9, 1
      // Predicated region
      $region13: #{discriminator_forward.7} parent=11 // pred_check
        %p142 = pneg %p73
      $region14: #{discriminator_forward.7} parent=11 // pred_check_branch
        %144 = sbr.rel (%p142) target = $region16
      $region15: #{discriminator_forward.7} parent=11 // pred_region
        %s145 = smul.u32 2, %s18
        %p146 = scmp.lt.s32.totalorder %s145, 1
        %s147 = scalar_select %p146, %s145, 1
        %s148 = smul.addr %s147, 4
        %s149 = scalar_lea.vmem %s1, %s148
        %s150 = smul.u32 2, %s18
      $region16: #{discriminator_forward.7} parent=11 // pred_fallthru
        _
      // Predicated region
      $region17: #{discriminator_forward.7} parent=11 // pred_check
        %p151 = pneg %p99
      $region18: #{discriminator_forward.7} parent=11 // pred_check_branch
        %153 = sbr.rel (%p151) target = $region20
      $region19: #{discriminator_forward.7} parent=11 // pred_region
        %s154 = smul.u32 2, %s18
        %p155 = scmp.lt.s32.totalorder %s154, 1
        %s156 = scalar_select %p155, %s154, 1
        %s157 = scalar_lea.vmem %s2, %s156
        %s158 = smul.u32 2, %s18
      $region20: #{discriminator_forward.7} parent=11 // pred_fallthru
        _
    $region12: #{discriminator_forward.7} parent=5 // pred_fallthru
      _
    %p159 = scmp.lt.s32.totalorder %s9, 2
    // Predicated region
    $region21: #{discriminator_forward.7} parent=5 // pred_check
      %p160 = pneg %p159
    $region22: #{discriminator_forward.7} parent=5 // pred_check_branch
      %162 = sbr.rel (%p160) target = $region24
    $region23: #{discriminator_forward.7} parent=5 // pred_region
      // Predicated region
      $region25: #{discriminator_forward.7} parent=23 // pred_check
        %p163 = pneg %p41
      $region26: #{discriminator_forward.7} parent=23 // pred_check_branch
        %165 = sbr.rel (%p163) target = $region28
      $region27: #{discriminator_forward.7} parent=23 // pred_region
        %p166 = scmp.lt.s32.totalorder %s17, 1
        %s167 = scalar_select %p166, %s17, 1
        %s168 = smul.addr %s167, 8
        %s169 = smul.addr %s168, 4
        %s170 = scalar_lea.vmem %s0, %s169
      $region28: #{discriminator_forward.7} parent=23 // pred_fallthru
        _
    $region24: #{discriminator_forward.7} parent=5 // pred_fallthru
      _
    %p171 = scmp.le.s32.totalorder 1, %s9
    %p172 = scmp.lt.s32.totalorder %s9, 3
    %p173 = pnand %p171, %p172
    %p174 = pneg %p173
    // Predicated region
    $region29: #{discriminator_forward.7} parent=5 // pred_check
      _
    $region30: #{discriminator_forward.7} parent=5 // pred_check_branch
      %176 = sbr.rel (%p173) target = $region32
    $region31: #{discriminator_forward.7} parent=5 // pred_region
      %s177 = ssub.s32 %s9, 1
      %p178 = scmp.lt.s32.totalorder %s19, 1
      %s179 = scalar_select %p178, %s19, 1
      %s180 = smul.addr %s179, 8
      %s181 = smul.addr %s180, 4
      %s182 = scalar_lea.vmem %s0, %s181
      %p183 = pneg %p47
      %p184 = pneg %p44
      %s185 = smul.u32 2, %s18
      %p186 = scmp.lt.s32.totalorder %s185, 1
      %s187 = scalar_select %p186, %s185, 1
      %s188 = smul.addr %s187, 4
      %s189 = scalar_lea.vmem %s1, %s188
      %p190 = pneg %p73
      %p191 = pneg %p70
      %s192 = smul.u32 2, %s18
      %p193 = scmp.lt.s32.totalorder %s192, 1
      %s194 = scalar_select %p193, %s192, 1
      %s195 = scalar_lea.vmem %s2, %s194
      %p196 = pneg %p99
      %p197 = pneg %p96
      %p198 = pneg %p127
      %p199 = pneg %p124
      %s200 = smul.u32 2, %s18
      %p201 = scmp.lt.s32.totalorder %s19, 1
      %s202 = scalar_select %p201, %s19, 1
      %p203 = scmp.lt.s32.totalorder %s200, 1
      %s204 = scalar_select %p203, %s200, 1
      %s205 = smul.addr %s202, 2
      %s206 = sadd.s32 %s204, %s205
      %s207 = smul.addr %s206, 4
      %s208 = scalar_lea.vmem %s3, %s207
      %p209 = scmp.lt.s32.totalorder %s19, 1
      %s210 = scalar_select %p209, %s19, 1
      %s211 = smul.addr %s210, 8
      %s212 = smul.addr %s211, 4
      %s213 = scalar_lea.vmem %s0, %s212
      %s214 = smul.u32 2, %s18
      %p215 = scmp.lt.s32.totalorder %s214, 1
      %s216 = scalar_select %p215, %s214, 1
      %s217 = smul.addr %s216, 4
      %s218 = scalar_lea.vmem %s1, %s217
      %s219 = smul.u32 2, %s18
      %s220 = smul.u32 2, %s18
      %p221 = scmp.lt.s32.totalorder %s220, 1
      %s222 = scalar_select %p221, %s220, 1
      %s223 = scalar_lea.vmem %s2, %s222
      %s224 = smul.u32 2, %s18
      %s225 = smul.u32 2, %s18
      %p226 = scmp.lt.s32.totalorder %s19, 1
      %s227 = scalar_select %p226, %s19, 1
      %p228 = scmp.lt.s32.totalorder %s225, 1
      %s229 = scalar_select %p228, %s225, 1
      %s230 = smul.addr %s227, 2
      %s231 = sadd.s32 %s229, %s230
      %s232 = smul.addr %s231, 4
      %s233 = scalar_lea.vmem %s3, %s232
      %s234 = smul.u32 2, %s18
      %v235 = vld [vmem:[%s213] sm:$0x7]
      %v236 = vld [vmem:[%s218] sm:$0xff]
      %v237 = vld [vmem:[%s218 + $0x8] sm:$0xff]
      %v238 = vld [vmem:[%s218 + $0x10] sm:$0xff]
      %v239 = vld [vmem:[%s218 + $0x18] sm:$0xff]
      %v240 = vld [vmem:[%s218 + $0x20] sm:$0xff]
      %v241 = vld [vmem:[%s218 + $0x28] sm:$0xff]
      %v242 = vld [vmem:[%s218 + $0x30] sm:$0xff]
      %v243 = vld [vmem:[%s218 + $0x38] sm:$0xff]
      %v244 = vld [vmem:[%s218 + $0x40] sm:$0xff]
      %v245 = vld [vmem:[%s218 + $0x48] sm:$0xff]
      %v246 = vld [vmem:[%s218 + $0x50] sm:$0xff]
      %v247 = vld [vmem:[%s218 + $0x58] sm:$0xff]
      %v248 = vld [vmem:[%s218 + $0x60] sm:$0xff]
      %v249 = vld [vmem:[%s218 + $0x68] sm:$0xff]
      %v250 = vld [vmem:[%s218 + $0x70] sm:$0xff]
      %v251 = vld [vmem:[%s218 + $0x78] sm:$0xff]
      %v252 = vld [vmem:[%s213] sm:$0xf]
      %s253 = scalar_lea.vmem %s218, 256
      %v254 = vld [vmem:[%s253] sm:$0xff]
      %v255 = vld [vmem:[%s253 + $0x8] sm:$0xff]
      %v256 = vld [vmem:[%s253 + $0x10] sm:$0xff]
      %v257 = vld [vmem:[%s253 + $0x18] sm:$0xff]
      %v258 = vld [vmem:[%s253 + $0x20] sm:$0xff]
      %v259 = vld [vmem:[%s253 + $0x28] sm:$0xff]
      %v260 = vld [vmem:[%s253 + $0x30] sm:$0xff]
      %v261 = vld [vmem:[%s253 + $0x38] sm:$0xff]
      %v262 = vld [vmem:[%s253 + $0x40] sm:$0xff]
      %v263 = vld [vmem:[%s253 + $0x48] sm:$0xff]
      %v264 = vld [vmem:[%s253 + $0x50] sm:$0xff]
      %v265 = vld [vmem:[%s253 + $0x58] sm:$0xff]
      %v266 = vld [vmem:[%s253 + $0x60] sm:$0xff]
      %v267 = vld [vmem:[%s253 + $0x68] sm:$0xff]
      %v268 = vld [vmem:[%s253 + $0x70] sm:$0xff]
      %v269 = vld [vmem:[%s253 + $0x78] sm:$0xff]
      %v271 = vunpack.c.l.b16 %v252
      %v272 = vpack.c.b16 %v271, %v271
      %v274 = vshrl.u32 %v272, 16
      %v276 = vshll.u32 %v272, 16
      %v278 = vrot.slane %v276, 1
      %v279 = vor.u32 %v274, %v278
      %v297 = vunpack.c.l.b16 %v254
      %v298 = vunpack.c.h.b16 %v254
      %v299 = vunpack.c.l.b16 %v255
      %v300 = vunpack.c.h.b16 %v255
      %v301 = vunpack.c.l.b16 %v256
      %v302 = vunpack.c.h.b16 %v256
      %v303 = vunpack.c.l.b16 %v257
      %v304 = vunpack.c.h.b16 %v257
      %v305 = vunpack.c.l.b16 %v258
      %v306 = vunpack.c.h.b16 %v258
      %v307 = vunpack.c.l.b16 %v259
      %v308 = vunpack.c.h.b16 %v259
      %v309 = vunpack.c.l.b16 %v260
      %v310 = vunpack.c.h.b16 %v260
      %v311 = vunpack.c.l.b16 %v261
      %v312 = vunpack.c.h.b16 %v261
      %v313 = vunpack.c.l.b16 %v262
      %v314 = vunpack.c.h.b16 %v262
      %v315 = vunpack.c.l.b16 %v263
      %v316 = vunpack.c.h.b16 %v263
      %v317 = vunpack.c.l.b16 %v264
      %v318 = vunpack.c.h.b16 %v264
      %v319 = vunpack.c.l.b16 %v265
      %v320 = vunpack.c.h.b16 %v265
      %v321 = vunpack.c.l.b16 %v266
      %v322 = vunpack.c.h.b16 %v266
      %v323 = vunpack.c.l.b16 %v267
      %v324 = vunpack.c.h.b16 %v267
      %v325 = vunpack.c.l.b16 %v268
      %v326 = vunpack.c.h.b16 %v268
      %v327 = vunpack.c.l.b16 %v269
      %v328 = vunpack.c.h.b16 %v269
      %v329 = vpack.c.b16 %v299, %v297
      %v330 = vpack.c.b16 %v300, %v298
      %v331 = vpack.c.b16 %v303, %v301
      %v332 = vpack.c.b16 %v304, %v302
      %v333 = vpack.c.b16 %v307, %v305
      %v334 = vpack.c.b16 %v308, %v306
      %v335 = vpack.c.b16 %v311, %v309
      %v336 = vpack.c.b16 %v312, %v310
      %v337 = vpack.c.b16 %v315, %v313
      %v338 = vpack.c.b16 %v316, %v314
      %v339 = vpack.c.b16 %v319, %v317
      %v340 = vpack.c.b16 %v320, %v318
      %v341 = vpack.c.b16 %v323, %v321
      %v342 = vpack.c.b16 %v324, %v322
      %v343 = vpack.c.b16 %v327, %v325
      %v344 = vpack.c.b16 %v328, %v326
      %361 = vmatpush.bf16.msra.mxu0 %v343
      %362 = vmatpush.bf16.msra.mxu0 %v341
      %363 = vmatpush.bf16.msra.mxu0 %v339
      %364 = vmatpush.bf16.msra.mxu0 %v337
      %365 = vmatpush.bf16.msra.mxu0 %v335
      %366 = vmatpush.bf16.msra.mxu0 %v333
      %367 = vmatpush.bf16.msra.mxu0 %v331
      %368 = vmatpush.bf16.msra.mxu0 %v329
      %369 = vmatmul.bf16.gmra.mxu0 %v279
      %v370 = vpop.f32.mrf.mxu0
      %v371 = vadd.f32 0.0, %v370
      %v372 = vpop.f32.mrf.mxu0
      %373 = vdwg.mxu0
      %374 = vmatpush.bf16.msra.mxu0 %v344
      %375 = vmatpush.bf16.msra.mxu0 %v342
      %376 = vmatpush.bf16.msra.mxu0 %v340
      %377 = vmatpush.bf16.msra.mxu0 %v338
      %378 = vmatpush.bf16.msra.mxu0 %v336
      %379 = vmatpush.bf16.msra.mxu0 %v334
      %380 = vmatpush.bf16.msra.mxu0 %v332
      %381 = vmatpush.bf16.msra.mxu0 %v330
      %382 = vmatmul.bf16.gmra.mxu0 %v279
      %v383 = vpop.f32.mrf.mxu0
      %v384 = vadd.f32 0.0, %v383
      %v385 = vpop.f32.mrf.mxu0
      %386 = vdwg.mxu0
      %v403 = vunpack.c.l.b16 %v236
      %v404 = vunpack.c.h.b16 %v236
      %v405 = vunpack.c.l.b16 %v237
      %v406 = vunpack.c.h.b16 %v237
      %v407 = vunpack.c.l.b16 %v238
      %v408 = vunpack.c.h.b16 %v238
      %v409 = vunpack.c.l.b16 %v239
      %v410 = vunpack.c.h.b16 %v239
      %v411 = vunpack.c.l.b16 %v240
      %v412 = vunpack.c.h.b16 %v240
      %v413 = vunpack.c.l.b16 %v241
      %v414 = vunpack.c.h.b16 %v241
      %v415 = vunpack.c.l.b16 %v242
      %v416 = vunpack.c.h.b16 %v242
      %v417 = vunpack.c.l.b16 %v243
      %v418 = vunpack.c.h.b16 %v243
      %v419 = vunpack.c.l.b16 %v244
      %v420 = vunpack.c.h.b16 %v244
      %v421 = vunpack.c.l.b16 %v245
      %v422 = vunpack.c.h.b16 %v245
      %v423 = vunpack.c.l.b16 %v246
      %v424 = vunpack.c.h.b16 %v246
      %v425 = vunpack.c.l.b16 %v247
      %v426 = vunpack.c.h.b16 %v247
      %v427 = vunpack.c.l.b16 %v248
      %v428 = vunpack.c.h.b16 %v248
      %v429 = vunpack.c.l.b16 %v249
      %v430 = vunpack.c.h.b16 %v249
      %v431 = vunpack.c.l.b16 %v250
      %v432 = vunpack.c.h.b16 %v250
      %v433 = vunpack.c.l.b16 %v251
      %v434 = vunpack.c.h.b16 %v251
      %v435 = vpack.c.b16 %v405, %v403
      %v436 = vpack.c.b16 %v406, %v404
      %v437 = vpack.c.b16 %v409, %v407
      %v438 = vpack.c.b16 %v410, %v408
      %v439 = vpack.c.b16 %v413, %v411
      %v440 = vpack.c.b16 %v414, %v412
      %v441 = vpack.c.b16 %v417, %v415
      %v442 = vpack.c.b16 %v418, %v416
      %v443 = vpack.c.b16 %v421, %v419
      %v444 = vpack.c.b16 %v422, %v420
      %v445 = vpack.c.b16 %v425, %v423
      %v446 = vpack.c.b16 %v426, %v424
      %v447 = vpack.c.b16 %v429, %v427
      %v448 = vpack.c.b16 %v430, %v428
      %v449 = vpack.c.b16 %v433, %v431
      %v450 = vpack.c.b16 %v434, %v432
      %467 = vmatpush.bf16.msra.mxu0 %v449
      %468 = vmatpush.bf16.msra.mxu0 %v447
      %469 = vmatpush.bf16.msra.mxu0 %v445
      %470 = vmatpush.bf16.msra.mxu0 %v443
      %471 = vmatpush.bf16.msra.mxu0 %v441
      %472 = vmatpush.bf16.msra.mxu0 %v439
      %473 = vmatpush.bf16.msra.mxu0 %v437
      %474 = vmatpush.bf16.msra.mxu0 %v435
      %475 = vmatmul.bf16.gmra.mxu0 %v235
      %v476 = vpop.f32.mrf.mxu0
      %v477 = vadd.f32 %v371, %v476
      %v478 = vpop.f32.mrf.mxu0
      %479 = vdwg.mxu0
      %480 = vmatpush.bf16.msra.mxu0 %v450
      %481 = vmatpush.bf16.msra.mxu0 %v448
      %482 = vmatpush.bf16.msra.mxu0 %v446
      %483 = vmatpush.bf16.msra.mxu0 %v444
      %484 = vmatpush.bf16.msra.mxu0 %v442
      %485 = vmatpush.bf16.msra.mxu0 %v440
      %486 = vmatpush.bf16.msra.mxu0 %v438
      %487 = vmatpush.bf16.msra.mxu0 %v436
      %488 = vmatmul.bf16.gmra.mxu0 %v235
      %v489 = vpop.f32.mrf.mxu0
      %v490 = vadd.f32 %v384, %v489
      %v491 = vpop.f32.mrf.mxu0
      %492 = vdwg.mxu0
      %v493 = vld [vmem:[%s213] sm:$0xe]
      %v494 = vld [vmem:[%s213 + $0x4] sm:$0x1]
      %s495 = scalar_lea.vmem %s218, 1024
      %v496 = vld [vmem:[%s495] sm:$0xff]
      %v497 = vld [vmem:[%s495 + $0x8] sm:$0xff]
      %v498 = vld [vmem:[%s495 + $0x10] sm:$0xff]
      %v499 = vld [vmem:[%s495 + $0x18] sm:$0xff]
      %v500 = vld [vmem:[%s495 + $0x20] sm:$0xff]
      %v501 = vld [vmem:[%s495 + $0x28] sm:$0xff]
      %v502 = vld [vmem:[%s495 + $0x30] sm:$0xff]
      %v503 = vld [vmem:[%s495 + $0x38] sm:$0xff]
      %v504 = vld [vmem:[%s495 + $0x40] sm:$0xff]
      %v505 = vld [vmem:[%s495 + $0x48] sm:$0xff]
      %v506 = vld [vmem:[%s495 + $0x50] sm:$0xff]
      %v507 = vld [vmem:[%s495 + $0x58] sm:$0xff]
      %v508 = vld [vmem:[%s495 + $0x60] sm:$0xff]
      %v509 = vld [vmem:[%s495 + $0x68] sm:$0xff]
      %v510 = vld [vmem:[%s495 + $0x70] sm:$0xff]
      %v511 = vld [vmem:[%s495 + $0x78] sm:$0xff]
      %v514 = vunpack.c.l.b16 %v493
      %v515 = vunpack.c.l.b16 %v494
      %v516 = vpack.c.b16 %v515, %v514
      %v518 = vshrl.u32 %v516, 16
      %v520 = vrot.slane %v518, 1
      %v521 = vshll.u32 %v516, 16
      %v523 = vrot.slane %v521, 2
      %v524 = vor.u32 %v520, %v523
      %v542 = vunpack.c.l.b16 %v496
      %v543 = vunpack.c.h.b16 %v496
      %v544 = vunpack.c.l.b16 %v497
      %v545 = vunpack.c.h.b16 %v497
      %v546 = vunpack.c.l.b16 %v498
      %v547 = vunpack.c.h.b16 %v498
      %v548 = vunpack.c.l.b16 %v499
      %v549 = vunpack.c.h.b16 %v499
      %v550 = vunpack.c.l.b16 %v500
      %v551 = vunpack.c.h.b16 %v500
      %v552 = vunpack.c.l.b16 %v501
      %v553 = vunpack.c.h.b16 %v501
      %v554 = vunpack.c.l.b16 %v502
      %v555 = vunpack.c.h.b16 %v502
      %v556 = vunpack.c.l.b16 %v503
      %v557 = vunpack.c.h.b16 %v503
      %v558 = vunpack.c.l.b16 %v504
      %v559 = vunpack.c.h.b16 %v504
      %v560 = vunpack.c.l.b16 %v505
      %v561 = vunpack.c.h.b16 %v505
      %v562 = vunpack.c.l.b16 %v506
      %v563 = vunpack.c.h.b16 %v506
      %v564 = vunpack.c.l.b16 %v507
      %v565 = vunpack.c.h.b16 %v507
      %v566 = vunpack.c.l.b16 %v508
      %v567 = vunpack.c.h.b16 %v508
      %v568 = vunpack.c.l.b16 %v509
      %v569 = vunpack.c.h.b16 %v509
      %v570 = vunpack.c.l.b16 %v510
      %v571 = vunpack.c.h.b16 %v510
      %v572 = vunpack.c.l.b16 %v511
      %v573 = vunpack.c.h.b16 %v511
      %v574 = vpack.c.b16 %v544, %v542
      %v575 = vpack.c.b16 %v545, %v543
      %v576 = vpack.c.b16 %v548, %v546
      %v577 = vpack.c.b16 %v549, %v547
      %v578 = vpack.c.b16 %v552, %v550
      %v579 = vpack.c.b16 %v553, %v551
      %v580 = vpack.c.b16 %v556, %v554
      %v581 = vpack.c.b16 %v557, %v555
      %v582 = vpack.c.b16 %v560, %v558
      %v583 = vpack.c.b16 %v561, %v559
      %v584 = vpack.c.b16 %v564, %v562
      %v585 = vpack.c.b16 %v565, %v563
      %v586 = vpack.c.b16 %v568, %v566
      %v587 = vpack.c.b16 %v569, %v567
      %v588 = vpack.c.b16 %v572, %v570
      %v589 = vpack.c.b16 %v573, %v571
      %606 = vmatpush.bf16.msra.mxu0 %v588
      %607 = vmatpush.bf16.msra.mxu0 %v586
      %608 = vmatpush.bf16.msra.mxu0 %v584
      %609 = vmatpush.bf16.msra.mxu0 %v582
      %610 = vmatpush.bf16.msra.mxu0 %v580
      %611 = vmatpush.bf16.msra.mxu0 %v578
      %612 = vmatpush.bf16.msra.mxu0 %v576
      %613 = vmatpush.bf16.msra.mxu0 %v574
      %614 = vmatmul.bf16.gmra.mxu0 %v524
      %v615 = vpop.f32.mrf.mxu0
      %v616 = vadd.f32 0.0, %v615
      %v617 = vpop.f32.mrf.mxu0
      %618 = vdwg.mxu0
      %619 = vmatpush.bf16.msra.mxu0 %v589
      %620 = vmatpush.bf16.msra.mxu0 %v587
      %621 = vmatpush.bf16.msra.mxu0 %v585
      %622 = vmatpush.bf16.msra.mxu0 %v583
      %623 = vmatpush.bf16.msra.mxu0 %v581
      %624 = vmatpush.bf16.msra.mxu0 %v579
      %625 = vmatpush.bf16.msra.mxu0 %v577
      %626 = vmatpush.bf16.msra.mxu0 %v575
      %627 = vmatmul.bf16.gmra.mxu0 %v524
      %v628 = vpop.f32.mrf.mxu0
      %v629 = vadd.f32 0.0, %v628
      %v630 = vpop.f32.mrf.mxu0
      %631 = vdwg.mxu0
      %v632 = vadd.f32 %v477, %v616
      %v633 = vadd.f32 %v490, %v629
      %v634 = vld [vmem:[%s213] sm:$0xc]
      %s635 = scalar_lea.vmem %s218, 1280
      %v636 = vld [vmem:[%s635] sm:$0xff]
      %v637 = vld [vmem:[%s635 + $0x8] sm:$0xff]
      %v638 = vld [vmem:[%s635 + $0x10] sm:$0xff]
      %v639 = vld [vmem:[%s635 + $0x18] sm:$0xff]
      %v640 = vld [vmem:[%s635 + $0x20] sm:$0xff]
      %v641 = vld [vmem:[%s635 + $0x28] sm:$0xff]
      %v642 = vld [vmem:[%s635 + $0x30] sm:$0xff]
      %v643 = vld [vmem:[%s635 + $0x38] sm:$0xff]
      %v644 = vld [vmem:[%s635 + $0x40] sm:$0xff]
      %v645 = vld [vmem:[%s635 + $0x48] sm:$0xff]
      %v646 = vld [vmem:[%s635 + $0x50] sm:$0xff]
      %v647 = vld [vmem:[%s635 + $0x58] sm:$0xff]
      %v648 = vld [vmem:[%s635 + $0x60] sm:$0xff]
      %v649 = vld [vmem:[%s635 + $0x68] sm:$0xff]
      %v650 = vld [vmem:[%s635 + $0x70] sm:$0xff]
      %v651 = vld [vmem:[%s635 + $0x78] sm:$0xff]
      %v653 = vunpack.c.l.b16 %v634
      %v654 = vpack.c.b16 %v515, %v653
      %v655 = vrot.slane %v654, 2
      %v673 = vunpack.c.l.b16 %v636
      %v674 = vunpack.c.h.b16 %v636
      %v675 = vunpack.c.l.b16 %v637
      %v676 = vunpack.c.h.b16 %v637
      %v677 = vunpack.c.l.b16 %v638
      %v678 = vunpack.c.h.b16 %v638
      %v679 = vunpack.c.l.b16 %v639
      %v680 = vunpack.c.h.b16 %v639
      %v681 = vunpack.c.l.b16 %v640
      %v682 = vunpack.c.h.b16 %v640
      %v683 = vunpack.c.l.b16 %v641
      %v684 = vunpack.c.h.b16 %v641
      %v685 = vunpack.c.l.b16 %v642
      %v686 = vunpack.c.h.b16 %v642
      %v687 = vunpack.c.l.b16 %v643
      %v688 = vunpack.c.h.b16 %v643
      %v689 = vunpack.c.l.b16 %v644
      %v690 = vunpack.c.h.b16 %v644
      %v691 = vunpack.c.l.b16 %v645
      %v692 = vunpack.c.h.b16 %v645
      %v693 = vunpack.c.l.b16 %v646
      %v694 = vunpack.c.h.b16 %v646
      %v695 = vunpack.c.l.b16 %v647
      %v696 = vunpack.c.h.b16 %v647
      %v697 = vunpack.c.l.b16 %v648
      %v698 = vunpack.c.h.b16 %v648
      %v699 = vunpack.c.l.b16 %v649
      %v700 = vunpack.c.h.b16 %v649
      %v701 = vunpack.c.l.b16 %v650
      %v702 = vunpack.c.h.b16 %v650
      %v703 = vunpack.c.l.b16 %v651
      %v704 = vunpack.c.h.b16 %v651
      %v705 = vpack.c.b16 %v675, %v673
      %v706 = vpack.c.b16 %v676, %v674
      %v707 = vpack.c.b16 %v679, %v677
      %v708 = vpack.c.b16 %v680, %v678
      %v709 = vpack.c.b16 %v683, %v681
      %v710 = vpack.c.b16 %v684, %v682
      %v711 = vpack.c.b16 %v687, %v685
      %v712 = vpack.c.b16 %v688, %v686
      %v713 = vpack.c.b16 %v691, %v689
      %v714 = vpack.c.b16 %v692, %v690
      %v715 = vpack.c.b16 %v695, %v693
      %v716 = vpack.c.b16 %v696, %v694
      %v717 = vpack.c.b16 %v699, %v697
      %v718 = vpack.c.b16 %v700, %v698
      %v719 = vpack.c.b16 %v703, %v701
      %v720 = vpack.c.b16 %v704, %v702
      %737 = vmatpush.bf16.msra.mxu0 %v719
      %738 = vmatpush.bf16.msra.mxu0 %v717
      %739 = vmatpush.bf16.msra.mxu0 %v715
      %740 = vmatpush.bf16.msra.mxu0 %v713
      %741 = vmatpush.bf16.msra.mxu0 %v711
      %742 = vmatpush.bf16.msra.mxu0 %v709
      %743 = vmatpush.bf16.msra.mxu0 %v707
      %744 = vmatpush.bf16.msra.mxu0 %v705
      %745 = vmatmul.bf16.gmra.mxu0 %v655
      %v746 = vpop.f32.mrf.mxu0
      %v747 = vadd.f32 0.0, %v746
      %v748 = vpop.f32.mrf.mxu0
      %749 = vdwg.mxu0
      %750 = vmatpush.bf16.msra.mxu0 %v720
      %751 = vmatpush.bf16.msra.mxu0 %v718
      %752 = vmatpush.bf16.msra.mxu0 %v716
      %753 = vmatpush.bf16.msra.mxu0 %v714
      %754 = vmatpush.bf16.msra.mxu0 %v712
      %755 = vmatpush.bf16.msra.mxu0 %v710
      %756 = vmatpush.bf16.msra.mxu0 %v708
      %757 = vmatpush.bf16.msra.mxu0 %v706
      %758 = vmatmul.bf16.gmra.mxu0 %v655
      %v759 = vpop.f32.mrf.mxu0
      %v760 = vadd.f32 0.0, %v759
      %v761 = vpop.f32.mrf.mxu0
      %762 = vdwg.mxu0
      %v763 = vadd.f32 %v632, %v747
      %v764 = vadd.f32 %v633, %v760
      %s765 = scalar_lea.vmem %s213, 8
      %v766 = vld [vmem:[%s765] sm:$0x7]
      %s767 = scalar_lea.vmem %s218, 128
      %v768 = vld [vmem:[%s767] sm:$0xff]
      %v769 = vld [vmem:[%s767 + $0x8] sm:$0xff]
      %v770 = vld [vmem:[%s767 + $0x10] sm:$0xff]
      %v771 = vld [vmem:[%s767 + $0x18] sm:$0xff]
      %v772 = vld [vmem:[%s767 + $0x20] sm:$0xff]
      %v773 = vld [vmem:[%s767 + $0x28] sm:$0xff]
      %v774 = vld [vmem:[%s767 + $0x30] sm:$0xff]
      %v775 = vld [vmem:[%s767 + $0x38] sm:$0xff]
      %v776 = vld [vmem:[%s767 + $0x40] sm:$0xff]
      %v777 = vld [vmem:[%s767 + $0x48] sm:$0xff]
      %v778 = vld [vmem:[%s767 + $0x50] sm:$0xff]
      %v779 = vld [vmem:[%s767 + $0x58] sm:$0xff]
      %v780 = vld [vmem:[%s767 + $0x60] sm:$0xff]
      %v781 = vld [vmem:[%s767 + $0x68] sm:$0xff]
      %v782 = vld [vmem:[%s767 + $0x70] sm:$0xff]
      %v783 = vld [vmem:[%s767 + $0x78] sm:$0xff]
      %v800 = vunpack.c.l.b16 %v768
      %v801 = vunpack.c.h.b16 %v768
      %v802 = vunpack.c.l.b16 %v769
      %v803 = vunpack.c.h.b16 %v769
      %v804 = vunpack.c.l.b16 %v770
      %v805 = vunpack.c.h.b16 %v770
      %v806 = vunpack.c.l.b16 %v771
      %v807 = vunpack.c.h.b16 %v771
      %v808 = vunpack.c.l.b16 %v772
      %v809 = vunpack.c.h.b16 %v772
      %v810 = vunpack.c.l.b16 %v773
      %v811 = vunpack.c.h.b16 %v773
      %v812 = vunpack.c.l.b16 %v774
      %v813 = vunpack.c.h.b16 %v774
      %v814 = vunpack.c.l.b16 %v775
      %v815 = vunpack.c.h.b16 %v775
      %v816 = vunpack.c.l.b16 %v776
      %v817 = vunpack.c.h.b16 %v776
      %v818 = vunpack.c.l.b16 %v777
      %v819 = vunpack.c.h.b16 %v777
      %v820 = vunpack.c.l.b16 %v778
      %v821 = vunpack.c.h.b16 %v778
      %v822 = vunpack.c.l.b16 %v779
      %v823 = vunpack.c.h.b16 %v779
      %v824 = vunpack.c.l.b16 %v780
      %v825 = vunpack.c.h.b16 %v780
      %v826 = vunpack.c.l.b16 %v781
      %v827 = vunpack.c.h.b16 %v781
      %v828 = vunpack.c.l.b16 %v782
      %v829 = vunpack.c.h.b16 %v782
      %v830 = vunpack.c.l.b16 %v783
      %v831 = vunpack.c.h.b16 %v783
      %v832 = vpack.c.b16 %v802, %v800
      %v833 = vpack.c.b16 %v803, %v801
      %v834 = vpack.c.b16 %v806, %v804
      %v835 = vpack.c.b16 %v807, %v805
      %v836 = vpack.c.b16 %v810, %v808
      %v837 = vpack.c.b16 %v811, %v809
      %v838 = vpack.c.b16 %v814, %v812
      %v839 = vpack.c.b16 %v815, %v813
      %v840 = vpack.c.b16 %v818, %v816
      %v841 = vpack.c.b16 %v819, %v817
      %v842 = vpack.c.b16 %v822, %v820
      %v843 = vpack.c.b16 %v823, %v821
      %v844 = vpack.c.b16 %v826, %v824
      %v845 = vpack.c.b16 %v827, %v825
      %v846 = vpack.c.b16 %v830, %v828
      %v847 = vpack.c.b16 %v831, %v829
      %864 = vmatpush.bf16.msra.mxu0 %v846
      %865 = vmatpush.bf16.msra.mxu0 %v844
      %866 = vmatpush.bf16.msra.mxu0 %v842
      %867 = vmatpush.bf16.msra.mxu0 %v840
      %868 = vmatpush.bf16.msra.mxu0 %v838
      %869 = vmatpush.bf16.msra.mxu0 %v836
      %870 = vmatpush.bf16.msra.mxu0 %v834
      %871 = vmatpush.bf16.msra.mxu0 %v832
      %872 = vmatmul.bf16.gmra.mxu0 %v766
      %v873 = vpop.f32.mrf.mxu0
      %v874 = vadd.f32 0.0, %v873
      %v875 = vpop.f32.mrf.mxu0
      %876 = vdwg.mxu0
      %877 = vmatpush.bf16.msra.mxu0 %v847
      %878 = vmatpush.bf16.msra.mxu0 %v845
      %879 = vmatpush.bf16.msra.mxu0 %v843
      %880 = vmatpush.bf16.msra.mxu0 %v841
      %881 = vmatpush.bf16.msra.mxu0 %v839
      %882 = vmatpush.bf16.msra.mxu0 %v837
      %883 = vmatpush.bf16.msra.mxu0 %v835
      %884 = vmatpush.bf16.msra.mxu0 %v833
      %885 = vmatmul.bf16.gmra.mxu0 %v766
      %v886 = vpop.f32.mrf.mxu0
      %v887 = vadd.f32 0.0, %v886
      %v888 = vpop.f32.mrf.mxu0
      %889 = vdwg.mxu0
      %v890 = vadd.f32 %v763, %v874
      %v891 = vadd.f32 %v764, %v887
      %v892 = vld [vmem:[%s765] sm:$0xf]
      %s893 = scalar_lea.vmem %s218, 384
      %v894 = vld [vmem:[%s893] sm:$0xff]
      %v895 = vld [vmem:[%s893 + $0x8] sm:$0xff]
      %v896 = vld [vmem:[%s893 + $0x10] sm:$0xff]
      %v897 = vld [vmem:[%s893 + $0x18] sm:$0xff]
      %v898 = vld [vmem:[%s893 + $0x20] sm:$0xff]
      %v899 = vld [vmem:[%s893 + $0x28] sm:$0xff]
      %v900 = vld [vmem:[%s893 + $0x30] sm:$0xff]
      %v901 = vld [vmem:[%s893 + $0x38] sm:$0xff]
      %v902 = vld [vmem:[%s893 + $0x40] sm:$0xff]
      %v903 = vld [vmem:[%s893 + $0x48] sm:$0xff]
      %v904 = vld [vmem:[%s893 + $0x50] sm:$0xff]
      %v905 = vld [vmem:[%s893 + $0x58] sm:$0xff]
      %v906 = vld [vmem:[%s893 + $0x60] sm:$0xff]
      %v907 = vld [vmem:[%s893 + $0x68] sm:$0xff]
      %v908 = vld [vmem:[%s893 + $0x70] sm:$0xff]
      %v909 = vld [vmem:[%s893 + $0x78] sm:$0xff]
      %v911 = vunpack.c.l.b16 %v892
      %v912 = vpack.c.b16 %v911, %v911
      %v914 = vshrl.u32 %v912, 16
      %v916 = vshll.u32 %v912, 16
      %v918 = vrot.slane %v916, 1
      %v919 = vor.u32 %v914, %v918
      %v937 = vunpack.c.l.b16 %v894
      %v938 = vunpack.c.h.b16 %v894
      %v939 = vunpack.c.l.b16 %v895
      %v940 = vunpack.c.h.b16 %v895
      %v941 = vunpack.c.l.b16 %v896
      %v942 = vunpack.c.h.b16 %v896
      %v943 = vunpack.c.l.b16 %v897
      %v944 = vunpack.c.h.b16 %v897
      %v945 = vunpack.c.l.b16 %v898
      %v946 = vunpack.c.h.b16 %v898
      %v947 = vunpack.c.l.b16 %v899
      %v948 = vunpack.c.h.b16 %v899
      %v949 = vunpack.c.l.b16 %v900
      %v950 = vunpack.c.h.b16 %v900
      %v951 = vunpack.c.l.b16 %v901
      %v952 = vunpack.c.h.b16 %v901
      %v953 = vunpack.c.l.b16 %v902
      %v954 = vunpack.c.h.b16 %v902
      %v955 = vunpack.c.l.b16 %v903
      %v956 = vunpack.c.h.b16 %v903
      %v957 = vunpack.c.l.b16 %v904
      %v958 = vunpack.c.h.b16 %v904
      %v959 = vunpack.c.l.b16 %v905
      %v960 = vunpack.c.h.b16 %v905
      %v961 = vunpack.c.l.b16 %v906
      %v962 = vunpack.c.h.b16 %v906
      %v963 = vunpack.c.l.b16 %v907
      %v964 = vunpack.c.h.b16 %v907
      %v965 = vunpack.c.l.b16 %v908
      %v966 = vunpack.c.h.b16 %v908
      %v967 = vunpack.c.l.b16 %v909
      %v968 = vunpack.c.h.b16 %v909
      %v969 = vpack.c.b16 %v939, %v937
      %v970 = vpack.c.b16 %v940, %v938
      %v971 = vpack.c.b16 %v943, %v941
      %v972 = vpack.c.b16 %v944, %v942
      %v973 = vpack.c.b16 %v947, %v945
      %v974 = vpack.c.b16 %v948, %v946
      %v975 = vpack.c.b16 %v951, %v949
      %v976 = vpack.c.b16 %v952, %v950
      %v977 = vpack.c.b16 %v955, %v953
      %v978 = vpack.c.b16 %v956, %v954
      %v979 = vpack.c.b16 %v959, %v957
      %v980 = vpack.c.b16 %v960, %v958
      %v981 = vpack.c.b16 %v963, %v961
      %v982 = vpack.c.b16 %v964, %v962
      %v983 = vpack.c.b16 %v967, %v965
      %v984 = vpack.c.b16 %v968, %v966
      %1001 = vmatpush.bf16.msra.mxu0 %v983
      %1002 = vmatpush.bf16.msra.mxu0 %v981
      %1003 = vmatpush.bf16.msra.mxu0 %v979
      %1004 = vmatpush.bf16.msra.mxu0 %v977
      %1005 = vmatpush.bf16.msra.mxu0 %v975
      %1006 = vmatpush.bf16.msra.mxu0 %v973
      %1007 = vmatpush.bf16.msra.mxu0 %v971
      %1008 = vmatpush.bf16.msra.mxu0 %v969
      %1009 = vmatmul.bf16.gmra.mxu0 %v919
      %v1010 = vpop.f32.mrf.mxu0
      %v1011 = vadd.f32 0.0, %v1010
      %v1012 = vpop.f32.mrf.mxu0
      %1013 = vdwg.mxu0
      %1014 = vmatpush.bf16.msra.mxu0 %v984
      %1015 = vmatpush.bf16.msra.mxu0 %v982
      %1016 = vmatpush.bf16.msra.mxu0 %v980
      %1017 = vmatpush.bf16.msra.mxu0 %v978
      %1018 = vmatpush.bf16.msra.mxu0 %v976
      %1019 = vmatpush.bf16.msra.mxu0 %v974
      %1020 = vmatpush.bf16.msra.mxu0 %v972
      %1021 = vmatpush.bf16.msra.mxu0 %v970
      %1022 = vmatmul.bf16.gmra.mxu0 %v919
      %v1023 = vpop.f32.mrf.mxu0
      %v1024 = vadd.f32 0.0, %v1023
      %v1025 = vpop.f32.mrf.mxu0
      %1026 = vdwg.mxu0
      %v1027 = vadd.f32 %v890, %v1011
      %v1028 = vadd.f32 %v891, %v1024
      %v1029 = vld [vmem:[%s765] sm:$0xe]
      %v1030 = vld [vmem:[%s765 + $0x4] sm:$0x1]
      %s1031 = scalar_lea.vmem %s218, 1152
      %v1032 = vld [vmem:[%s1031] sm:$0xff]
      %v1033 = vld [vmem:[%s1031 + $0x8] sm:$0xff]
      %v1034 = vld [vmem:[%s1031 + $0x10] sm:$0xff]
      %v1035 = vld [vmem:[%s1031 + $0x18] sm:$0xff]
      %v1036 = vld [vmem:[%s1031 + $0x20] sm:$0xff]
      %v1037 = vld [vmem:[%s1031 + $0x28] sm:$0xff]
      %v1038 = vld [vmem:[%s1031 + $0x30] sm:$0xff]
      %v1039 = vld [vmem:[%s1031 + $0x38] sm:$0xff]
      %v1040 = vld [vmem:[%s1031 + $0x40] sm:$0xff]
      %v1041 = vld [vmem:[%s1031 + $0x48] sm:$0xff]
      %v1042 = vld [vmem:[%s1031 + $0x50] sm:$0xff]
      %v1043 = vld [vmem:[%s1031 + $0x58] sm:$0xff]
      %v1044 = vld [vmem:[%s1031 + $0x60] sm:$0xff]
      %v1045 = vld [vmem:[%s1031 + $0x68] sm:$0xff]
      %v1046 = vld [vmem:[%s1031 + $0x70] sm:$0xff]
      %v1047 = vld [vmem:[%s1031 + $0x78] sm:$0xff]
      %v1050 = vunpack.c.l.b16 %v1029
      %v1051 = vunpack.c.l.b16 %v1030
      %v1052 = vpack.c.b16 %v1051, %v1050
      %v1054 = vshrl.u32 %v1052, 16
      %v1056 = vrot.slane %v1054, 1
      %v1057 = vshll.u32 %v1052, 16
      %v1059 = vrot.slane %v1057, 2
      %v1060 = vor.u32 %v1056, %v1059
      %v1078 = vunpack.c.l.b16 %v1032
      %v1079 = vunpack.c.h.b16 %v1032
      %v1080 = vunpack.c.l.b16 %v1033
      %v1081 = vunpack.c.h.b16 %v1033
      %v1082 = vunpack.c.l.b16 %v1034
      %v1083 = vunpack.c.h.b16 %v1034
      %v1084 = vunpack.c.l.b16 %v1035
      %v1085 = vunpack.c.h.b16 %v1035
      %v1086 = vunpack.c.l.b16 %v1036
      %v1087 = vunpack.c.h.b16 %v1036
      %v1088 = vunpack.c.l.b16 %v1037
      %v1089 = vunpack.c.h.b16 %v1037
      %v1090 = vunpack.c.l.b16 %v1038
      %v1091 = vunpack.c.h.b16 %v1038
      %v1092 = vunpack.c.l.b16 %v1039
      %v1093 = vunpack.c.h.b16 %v1039
      %v1094 = vunpack.c.l.b16 %v1040
      %v1095 = vunpack.c.h.b16 %v1040
      %v1096 = vunpack.c.l.b16 %v1041
      %v1097 = vunpack.c.h.b16 %v1041
      %v1098 = vunpack.c.l.b16 %v1042
      %v1099 = vunpack.c.h.b16 %v1042
      %v1100 = vunpack.c.l.b16 %v1043
      %v1101 = vunpack.c.h.b16 %v1043
      %v1102 = vunpack.c.l.b16 %v1044
      %v1103 = vunpack.c.h.b16 %v1044
      %v1104 = vunpack.c.l.b16 %v1045
      %v1105 = vunpack.c.h.b16 %v1045
      %v1106 = vunpack.c.l.b16 %v1046
      %v1107 = vunpack.c.h.b16 %v1046
      %v1108 = vunpack.c.l.b16 %v1047
      %v1109 = vunpack.c.h.b16 %v1047
      %v1110 = vpack.c.b16 %v1080, %v1078
      %v1111 = vpack.c.b16 %v1081, %v1079
      %v1112 = vpack.c.b16 %v1084, %v1082
      %v1113 = vpack.c.b16 %v1085, %v1083
      %v1114 = vpack.c.b16 %v1088, %v1086
      %v1115 = vpack.c.b16 %v1089, %v1087
      %v1116 = vpack.c.b16 %v1092, %v1090
      %v1117 = vpack.c.b16 %v1093, %v1091
      %v1118 = vpack.c.b16 %v1096, %v1094
      %v1119 = vpack.c.b16 %v1097, %v1095
      %v1120 = vpack.c.b16 %v1100, %v1098
      %v1121 = vpack.c.b16 %v1101, %v1099
      %v1122 = vpack.c.b16 %v1104, %v1102
      %v1123 = vpack.c.b16 %v1105, %v1103
      %v1124 = vpack.c.b16 %v1108, %v1106
      %v1125 = vpack.c.b16 %v1109, %v1107
      %1142 = vmatpush.bf16.msra.mxu0 %v1124
      %1143 = vmatpush.bf16.msra.mxu0 %v1122
      %1144 = vmatpush.bf16.msra.mxu0 %v1120
      %1145 = vmatpush.bf16.msra.mxu0 %v1118
      %1146 = vmatpush.bf16.msra.mxu0 %v1116
      %1147 = vmatpush.bf16.msra.mxu0 %v1114
      %1148 = vmatpush.bf16.msra.mxu0 %v1112
      %1149 = vmatpush.bf16.msra.mxu0 %v1110
      %1150 = vmatmul.bf16.gmra.mxu0 %v1060
      %v1151 = vpop.f32.mrf.mxu0
      %v1152 = vadd.f32 0.0, %v1151
      %v1153 = vpop.f32.mrf.mxu0
      %1154 = vdwg.mxu0
      %1155 = vmatpush.bf16.msra.mxu0 %v1125
      %1156 = vmatpush.bf16.msra.mxu0 %v1123
      %1157 = vmatpush.bf16.msra.mxu0 %v1121
      %1158 = vmatpush.bf16.msra.mxu0 %v1119
      %1159 = vmatpush.bf16.msra.mxu0 %v1117
      %1160 = vmatpush.bf16.msra.mxu0 %v1115
      %1161 = vmatpush.bf16.msra.mxu0 %v1113
      %1162 = vmatpush.bf16.msra.mxu0 %v1111
      %1163 = vmatmul.bf16.gmra.mxu0 %v1060
      %v1164 = vpop.f32.mrf.mxu0
      %v1165 = vadd.f32 0.0, %v1164
      %v1166 = vpop.f32.mrf.mxu0
      %1167 = vdwg.mxu0
      %v1168 = vadd.f32 %v1027, %v1152
      %v1169 = vadd.f32 %v1028, %v1165
      %v1170 = vld [vmem:[%s765] sm:$0xc]
      %s1171 = scalar_lea.vmem %s218, 1408
      %v1172 = vld [vmem:[%s1171] sm:$0xff]
      %v1173 = vld [vmem:[%s1171 + $0x8] sm:$0xff]
      %v1174 = vld [vmem:[%s1171 + $0x10] sm:$0xff]
      %v1175 = vld [vmem:[%s1171 + $0x18] sm:$0xff]
      %v1176 = vld [vmem:[%s1171 + $0x20] sm:$0xff]
      %v1177 = vld [vmem:[%s1171 + $0x28] sm:$0xff]
      %v1178 = vld [vmem:[%s1171 + $0x30] sm:$0xff]
      %v1179 = vld [vmem:[%s1171 + $0x38] sm:$0xff]
      %v1180 = vld [vmem:[%s1171 + $0x40] sm:$0xff]
      %v1181 = vld [vmem:[%s1171 + $0x48] sm:$0xff]
      %v1182 = vld [vmem:[%s1171 + $0x50] sm:$0xff]
      %v1183 = vld [vmem:[%s1171 + $0x58] sm:$0xff]
      %v1184 = vld [vmem:[%s1171 + $0x60] sm:$0xff]
      %v1185 = vld [vmem:[%s1171 + $0x68] sm:$0xff]
      %v1186 = vld [vmem:[%s1171 + $0x70] sm:$0xff]
      %v1187 = vld [vmem:[%s1171 + $0x78] sm:$0xff]
      %v1189 = vunpack.c.l.b16 %v1170
      %v1190 = vpack.c.b16 %v1051, %v1189
      %v1191 = vrot.slane %v1190, 2
      %v1209 = vunpack.c.l.b16 %v1172
      %v1210 = vunpack.c.h.b16 %v1172
      %v1211 = vunpack.c.l.b16 %v1173
      %v1212 = vunpack.c.h.b16 %v1173
      %v1213 = vunpack.c.l.b16 %v1174
      %v1214 = vunpack.c.h.b16 %v1174
      %v1215 = vunpack.c.l.b16 %v1175
      %v1216 = vunpack.c.h.b16 %v1175
      %v1217 = vunpack.c.l.b16 %v1176
      %v1218 = vunpack.c.h.b16 %v1176
      %v1219 = vunpack.c.l.b16 %v1177
      %v1220 = vunpack.c.h.b16 %v1177
      %v1221 = vunpack.c.l.b16 %v1178
      %v1222 = vunpack.c.h.b16 %v1178
      %v1223 = vunpack.c.l.b16 %v1179
      %v1224 = vunpack.c.h.b16 %v1179
      %v1225 = vunpack.c.l.b16 %v1180
      %v1226 = vunpack.c.h.b16 %v1180
      %v1227 = vunpack.c.l.b16 %v1181
      %v1228 = vunpack.c.h.b16 %v1181
      %v1229 = vunpack.c.l.b16 %v1182
      %v1230 = vunpack.c.h.b16 %v1182
      %v1231 = vunpack.c.l.b16 %v1183
      %v1232 = vunpack.c.h.b16 %v1183
      %v1233 = vunpack.c.l.b16 %v1184
      %v1234 = vunpack.c.h.b16 %v1184
      %v1235 = vunpack.c.l.b16 %v1185
      %v1236 = vunpack.c.h.b16 %v1185
      %v1237 = vunpack.c.l.b16 %v1186
      %v1238 = vunpack.c.h.b16 %v1186
      %v1239 = vunpack.c.l.b16 %v1187
      %v1240 = vunpack.c.h.b16 %v1187
      %v1241 = vpack.c.b16 %v1211, %v1209
      %v1242 = vpack.c.b16 %v1212, %v1210
      %v1243 = vpack.c.b16 %v1215, %v1213
      %v1244 = vpack.c.b16 %v1216, %v1214
      %v1245 = vpack.c.b16 %v1219, %v1217
      %v1246 = vpack.c.b16 %v1220, %v1218
      %v1247 = vpack.c.b16 %v1223, %v1221
      %v1248 = vpack.c.b16 %v1224, %v1222
      %v1249 = vpack.c.b16 %v1227, %v1225
      %v1250 = vpack.c.b16 %v1228, %v1226
      %v1251 = vpack.c.b16 %v1231, %v1229
      %v1252 = vpack.c.b16 %v1232, %v1230
      %v1253 = vpack.c.b16 %v1235, %v1233
      %v1254 = vpack.c.b16 %v1236, %v1234
      %v1255 = vpack.c.b16 %v1239, %v1237
      %v1256 = vpack.c.b16 %v1240, %v1238
      %1273 = vmatpush.bf16.msra.mxu0 %v1255
      %1274 = vmatpush.bf16.msra.mxu0 %v1253
      %1275 = vmatpush.bf16.msra.mxu0 %v1251
      %1276 = vmatpush.bf16.msra.mxu0 %v1249
      %1277 = vmatpush.bf16.msra.mxu0 %v1247
      %1278 = vmatpush.bf16.msra.mxu0 %v1245
      %1279 = vmatpush.bf16.msra.mxu0 %v1243
      %1280 = vmatpush.bf16.msra.mxu0 %v1241
      %1281 = vmatmul.bf16.gmra.mxu0 %v1191
      %v1282 = vpop.f32.mrf.mxu0
      %v1283 = vadd.f32 0.0, %v1282
      %v1284 = vpop.f32.mrf.mxu0
      %1285 = vdwg.mxu0
      %1286 = vmatpush.bf16.msra.mxu0 %v1256
      %1287 = vmatpush.bf16.msra.mxu0 %v1254
      %1288 = vmatpush.bf16.msra.mxu0 %v1252
      %1289 = vmatpush.bf16.msra.mxu0 %v1250
      %1290 = vmatpush.bf16.msra.mxu0 %v1248
      %1291 = vmatpush.bf16.msra.mxu0 %v1246
      %1292 = vmatpush.bf16.msra.mxu0 %v1244
      %1293 = vmatpush.bf16.msra.mxu0 %v1242
      %1294 = vmatmul.bf16.gmra.mxu0 %v1191
      %v1295 = vpop.f32.mrf.mxu0
      %v1296 = vadd.f32 0.0, %v1295
      %v1297 = vpop.f32.mrf.mxu0
      %1298 = vdwg.mxu0
      %v1299 = vadd.f32 %v1168, %v1283
      %v1300 = vadd.f32 %v1169, %v1296
      %s1301 = scalar_lea.vmem %s213, 16
      %v1302 = vld [vmem:[%s1301] sm:$0x7]
      %s1303 = scalar_lea.vmem %s218, 512
      %v1304 = vld [vmem:[%s1303] sm:$0xff]
      %v1305 = vld [vmem:[%s1303 + $0x8] sm:$0xff]
      %v1306 = vld [vmem:[%s1303 + $0x10] sm:$0xff]
      %v1307 = vld [vmem:[%s1303 + $0x18] sm:$0xff]
      %v1308 = vld [vmem:[%s1303 + $0x20] sm:$0xff]
      %v1309 = vld [vmem:[%s1303 + $0x28] sm:$0xff]
      %v1310 = vld [vmem:[%s1303 + $0x30] sm:$0xff]
      %v1311 = vld [vmem:[%s1303 + $0x38] sm:$0xff]
      %v1312 = vld [vmem:[%s1303 + $0x40] sm:$0xff]
      %v1313 = vld [vmem:[%s1303 + $0x48] sm:$0xff]
      %v1314 = vld [vmem:[%s1303 + $0x50] sm:$0xff]
      %v1315 = vld [vmem:[%s1303 + $0x58] sm:$0xff]
      %v1316 = vld [vmem:[%s1303 + $0x60] sm:$0xff]
      %v1317 = vld [vmem:[%s1303 + $0x68] sm:$0xff]
      %v1318 = vld [vmem:[%s1303 + $0x70] sm:$0xff]
      %v1319 = vld [vmem:[%s1303 + $0x78] sm:$0xff]
      %v1336 = vunpack.c.l.b16 %v1304
      %v1337 = vunpack.c.h.b16 %v1304
      %v1338 = vunpack.c.l.b16 %v1305
      %v1339 = vunpack.c.h.b16 %v1305
      %v1340 = vunpack.c.l.b16 %v1306
      %v1341 = vunpack.c.h.b16 %v1306
      %v1342 = vunpack.c.l.b16 %v1307
      %v1343 = vunpack.c.h.b16 %v1307
      %v1344 = vunpack.c.l.b16 %v1308
      %v1345 = vunpack.c.h.b16 %v1308
      %v1346 = vunpack.c.l.b16 %v1309
      %v1347 = vunpack.c.h.b16 %v1309
      %v1348 = vunpack.c.l.b16 %v1310
      %v1349 = vunpack.c.h.b16 %v1310
      %v1350 = vunpack.c.l.b16 %v1311
      %v1351 = vunpack.c.h.b16 %v1311
      %v1352 = vunpack.c.l.b16 %v1312
      %v1353 = vunpack.c.h.b16 %v1312
      %v1354 = vunpack.c.l.b16 %v1313
      %v1355 = vunpack.c.h.b16 %v1313
      %v1356 = vunpack.c.l.b16 %v1314
      %v1357 = vunpack.c.h.b16 %v1314
      %v1358 = vunpack.c.l.b16 %v1315
      %v1359 = vunpack.c.h.b16 %v1315
      %v1360 = vunpack.c.l.b16 %v1316
      %v1361 = vunpack.c.h.b16 %v1316
      %v1362 = vunpack.c.l.b16 %v1317
      %v1363 = vunpack.c.h.b16 %v1317
      %v1364 = vunpack.c.l.b16 %v1318
      %v1365 = vunpack.c.h.b16 %v1318
      %v1366 = vunpack.c.l.b16 %v1319
      %v1367 = vunpack.c.h.b16 %v1319
      %v1368 = vpack.c.b16 %v1338, %v1336
      %v1369 = vpack.c.b16 %v1339, %v1337
      %v1370 = vpack.c.b16 %v1342, %v1340
      %v1371 = vpack.c.b16 %v1343, %v1341
      %v1372 = vpack.c.b16 %v1346, %v1344
      %v1373 = vpack.c.b16 %v1347, %v1345
      %v1374 = vpack.c.b16 %v1350, %v1348
      %v1375 = vpack.c.b16 %v1351, %v1349
      %v1376 = vpack.c.b16 %v1354, %v1352
      %v1377 = vpack.c.b16 %v1355, %v1353
      %v1378 = vpack.c.b16 %v1358, %v1356
      %v1379 = vpack.c.b16 %v1359, %v1357
      %v1380 = vpack.c.b16 %v1362, %v1360
      %v1381 = vpack.c.b16 %v1363, %v1361
      %v1382 = vpack.c.b16 %v1366, %v1364
      %v1383 = vpack.c.b16 %v1367, %v1365
      %1400 = vmatpush.bf16.msra.mxu0 %v1382
      %1401 = vmatpush.bf16.msra.mxu0 %v1380
      %1402 = vmatpush.bf16.msra.mxu0 %v1378
      %1403 = vmatpush.bf16.msra.mxu0 %v1376
      %1404 = vmatpush.bf16.msra.mxu0 %v1374
      %1405 = vmatpush.bf16.msra.mxu0 %v1372
      %1406 = vmatpush.bf16.msra.mxu0 %v1370
      %1407 = vmatpush.bf16.msra.mxu0 %v1368
      %1408 = vmatmul.bf16.gmra.mxu0 %v1302
      %v1409 = vpop.f32.mrf.mxu0
      %v1410 = vadd.f32 0.0, %v1409
      %v1411 = vpop.f32.mrf.mxu0
      %1412 = vdwg.mxu0
      %1413 = vmatpush.bf16.msra.mxu0 %v1383
      %1414 = vmatpush.bf16.msra.mxu0 %v1381
      %1415 = vmatpush.bf16.msra.mxu0 %v1379
      %1416 = vmatpush.bf16.msra.mxu0 %v1377
      %1417 = vmatpush.bf16.msra.mxu0 %v1375
      %1418 = vmatpush.bf16.msra.mxu0 %v1373
      %1419 = vmatpush.bf16.msra.mxu0 %v1371
      %1420 = vmatpush.bf16.msra.mxu0 %v1369
      %1421 = vmatmul.bf16.gmra.mxu0 %v1302
      %v1422 = vpop.f32.mrf.mxu0
      %v1423 = vadd.f32 0.0, %v1422
      %v1424 = vpop.f32.mrf.mxu0
      %1425 = vdwg.mxu0
      %v1426 = vadd.f32 %v1299, %v1410
      %v1427 = vadd.f32 %v1300, %v1423
      %v1428 = vld [vmem:[%s1301] sm:$0xf]
      %s1429 = scalar_lea.vmem %s218, 768
      %v1430 = vld [vmem:[%s1429] sm:$0xff]
      %v1431 = vld [vmem:[%s1429 + $0x8] sm:$0xff]
      %v1432 = vld [vmem:[%s1429 + $0x10] sm:$0xff]
      %v1433 = vld [vmem:[%s1429 + $0x18] sm:$0xff]
      %v1434 = vld [vmem:[%s1429 + $0x20] sm:$0xff]
      %v1435 = vld [vmem:[%s1429 + $0x28] sm:$0xff]
      %v1436 = vld [vmem:[%s1429 + $0x30] sm:$0xff]
      %v1437 = vld [vmem:[%s1429 + $0x38] sm:$0xff]
      %v1438 = vld [vmem:[%s1429 + $0x40] sm:$0xff]
      %v1439 = vld [vmem:[%s1429 + $0x48] sm:$0xff]
      %v1440 = vld [vmem:[%s1429 + $0x50] sm:$0xff]
      %v1441 = vld [vmem:[%s1429 + $0x58] sm:$0xff]
      %v1442 = vld [vmem:[%s1429 + $0x60] sm:$0xff]
      %v1443 = vld [vmem:[%s1429 + $0x68] sm:$0xff]
      %v1444 = vld [vmem:[%s1429 + $0x70] sm:$0xff]
      %v1445 = vld [vmem:[%s1429 + $0x78] sm:$0xff]
      %v1447 = vunpack.c.l.b16 %v1428
      %v1448 = vpack.c.b16 %v1447, %v1447
      %v1450 = vshrl.u32 %v1448, 16
      %v1452 = vshll.u32 %v1448, 16
      %v1454 = vrot.slane %v1452, 1
      %v1455 = vor.u32 %v1450, %v1454
      %v1473 = vunpack.c.l.b16 %v1430
      %v1474 = vunpack.c.h.b16 %v1430
      %v1475 = vunpack.c.l.b16 %v1431
      %v1476 = vunpack.c.h.b16 %v1431
      %v1477 = vunpack.c.l.b16 %v1432
      %v1478 = vunpack.c.h.b16 %v1432
      %v1479 = vunpack.c.l.b16 %v1433
      %v1480 = vunpack.c.h.b16 %v1433
      %v1481 = vunpack.c.l.b16 %v1434
      %v1482 = vunpack.c.h.b16 %v1434
      %v1483 = vunpack.c.l.b16 %v1435
      %v1484 = vunpack.c.h.b16 %v1435
      %v1485 = vunpack.c.l.b16 %v1436
      %v1486 = vunpack.c.h.b16 %v1436
      %v1487 = vunpack.c.l.b16 %v1437
      %v1488 = vunpack.c.h.b16 %v1437
      %v1489 = vunpack.c.l.b16 %v1438
      %v1490 = vunpack.c.h.b16 %v1438
      %v1491 = vunpack.c.l.b16 %v1439
      %v1492 = vunpack.c.h.b16 %v1439
      %v1493 = vunpack.c.l.b16 %v1440
      %v1494 = vunpack.c.h.b16 %v1440
      %v1495 = vunpack.c.l.b16 %v1441
      %v1496 = vunpack.c.h.b16 %v1441
      %v1497 = vunpack.c.l.b16 %v1442
      %v1498 = vunpack.c.h.b16 %v1442
      %v1499 = vunpack.c.l.b16 %v1443
      %v1500 = vunpack.c.h.b16 %v1443
      %v1501 = vunpack.c.l.b16 %v1444
      %v1502 = vunpack.c.h.b16 %v1444
      %v1503 = vunpack.c.l.b16 %v1445
      %v1504 = vunpack.c.h.b16 %v1445
      %v1505 = vpack.c.b16 %v1475, %v1473
      %v1506 = vpack.c.b16 %v1476, %v1474
      %v1507 = vpack.c.b16 %v1479, %v1477
      %v1508 = vpack.c.b16 %v1480, %v1478
      %v1509 = vpack.c.b16 %v1483, %v1481
      %v1510 = vpack.c.b16 %v1484, %v1482
      %v1511 = vpack.c.b16 %v1487, %v1485
      %v1512 = vpack.c.b16 %v1488, %v1486
      %v1513 = vpack.c.b16 %v1491, %v1489
      %v1514 = vpack.c.b16 %v1492, %v1490
      %v1515 = vpack.c.b16 %v1495, %v1493
      %v1516 = vpack.c.b16 %v1496, %v1494
      %v1517 = vpack.c.b16 %v1499, %v1497
      %v1518 = vpack.c.b16 %v1500, %v1498
      %v1519 = vpack.c.b16 %v1503, %v1501
      %v1520 = vpack.c.b16 %v1504, %v1502
      %1537 = vmatpush.bf16.msra.mxu0 %v1519
      %1538 = vmatpush.bf16.msra.mxu0 %v1517
      %1539 = vmatpush.bf16.msra.mxu0 %v1515
      %1540 = vmatpush.bf16.msra.mxu0 %v1513
      %1541 = vmatpush.bf16.msra.mxu0 %v1511
      %1542 = vmatpush.bf16.msra.mxu0 %v1509
      %1543 = vmatpush.bf16.msra.mxu0 %v1507
      %1544 = vmatpush.bf16.msra.mxu0 %v1505
      %1545 = vmatmul.bf16.gmra.mxu0 %v1455
      %v1546 = vpop.f32.mrf.mxu0
      %v1547 = vadd.f32 0.0, %v1546
      %v1548 = vpop.f32.mrf.mxu0
      %1549 = vdwg.mxu0
      %1550 = vmatpush.bf16.msra.mxu0 %v1520
      %1551 = vmatpush.bf16.msra.mxu0 %v1518
      %1552 = vmatpush.bf16.msra.mxu0 %v1516
      %1553 = vmatpush.bf16.msra.mxu0 %v1514
      %1554 = vmatpush.bf16.msra.mxu0 %v1512
      %1555 = vmatpush.bf16.msra.mxu0 %v1510
      %1556 = vmatpush.bf16.msra.mxu0 %v1508
      %1557 = vmatpush.bf16.msra.mxu0 %v1506
      %1558 = vmatmul.bf16.gmra.mxu0 %v1455
      %v1559 = vpop.f32.mrf.mxu0
      %v1560 = vadd.f32 0.0, %v1559
      %v1561 = vpop.f32.mrf.mxu0
      %1562 = vdwg.mxu0
      %v1563 = vadd.f32 %v1426, %v1547
      %v1564 = vadd.f32 %v1427, %v1560
      %v1565 = vld [vmem:[%s1301] sm:$0xe]
      %v1566 = vld [vmem:[%s1301 + $0x4] sm:$0x1]
      %s1567 = scalar_lea.vmem %s218, 1536
      %v1568 = vld [vmem:[%s1567] sm:$0xff]
      %v1569 = vld [vmem:[%s1567 + $0x8] sm:$0xff]
      %v1570 = vld [vmem:[%s1567 + $0x10] sm:$0xff]
      %v1571 = vld [vmem:[%s1567 + $0x18] sm:$0xff]
      %v1572 = vld [vmem:[%s1567 + $0x20] sm:$0xff]
      %v1573 = vld [vmem:[%s1567 + $0x28] sm:$0xff]
      %v1574 = vld [vmem:[%s1567 + $0x30] sm:$0xff]
      %v1575 = vld [vmem:[%s1567 + $0x38] sm:$0xff]
      %v1576 = vld [vmem:[%s1567 + $0x40] sm:$0xff]
      %v1577 = vld [vmem:[%s1567 + $0x48] sm:$0xff]
      %v1578 = vld [vmem:[%s1567 + $0x50] sm:$0xff]
      %v1579 = vld [vmem:[%s1567 + $0x58] sm:$0xff]
      %v1580 = vld [vmem:[%s1567 + $0x60] sm:$0xff]
      %v1581 = vld [vmem:[%s1567 + $0x68] sm:$0xff]
      %v1582 = vld [vmem:[%s1567 + $0x70] sm:$0xff]
      %v1583 = vld [vmem:[%s1567 + $0x78] sm:$0xff]
      %v1586 = vunpack.c.l.b16 %v1565
      %v1587 = vunpack.c.l.b16 %v1566
      %v1588 = vpack.c.b16 %v1587, %v1586
      %v1590 = vshrl.u32 %v1588, 16
      %v1592 = vrot.slane %v1590, 1
      %v1593 = vshll.u32 %v1588, 16
      %v1595 = vrot.slane %v1593, 2
      %v1596 = vor.u32 %v1592, %v1595
      %v1614 = vunpack.c.l.b16 %v1568
      %v1615 = vunpack.c.h.b16 %v1568
      %v1616 = vunpack.c.l.b16 %v1569
      %v1617 = vunpack.c.h.b16 %v1569
      %v1618 = vunpack.c.l.b16 %v1570
      %v1619 = vunpack.c.h.b16 %v1570
      %v1620 = vunpack.c.l.b16 %v1571
      %v1621 = vunpack.c.h.b16 %v1571
      %v1622 = vunpack.c.l.b16 %v1572
      %v1623 = vunpack.c.h.b16 %v1572
      %v1624 = vunpack.c.l.b16 %v1573
      %v1625 = vunpack.c.h.b16 %v1573
      %v1626 = vunpack.c.l.b16 %v1574
      %v1627 = vunpack.c.h.b16 %v1574
      %v1628 = vunpack.c.l.b16 %v1575
      %v1629 = vunpack.c.h.b16 %v1575
      %v1630 = vunpack.c.l.b16 %v1576
      %v1631 = vunpack.c.h.b16 %v1576
      %v1632 = vunpack.c.l.b16 %v1577
      %v1633 = vunpack.c.h.b16 %v1577
      %v1634 = vunpack.c.l.b16 %v1578
      %v1635 = vunpack.c.h.b16 %v1578
      %v1636 = vunpack.c.l.b16 %v1579
      %v1637 = vunpack.c.h.b16 %v1579
      %v1638 = vunpack.c.l.b16 %v1580
      %v1639 = vunpack.c.h.b16 %v1580
      %v1640 = vunpack.c.l.b16 %v1581
      %v1641 = vunpack.c.h.b16 %v1581
      %v1642 = vunpack.c.l.b16 %v1582
      %v1643 = vunpack.c.h.b16 %v1582
      %v1644 = vunpack.c.l.b16 %v1583
      %v1645 = vunpack.c.h.b16 %v1583
      %v1646 = vpack.c.b16 %v1616, %v1614
      %v1647 = vpack.c.b16 %v1617, %v1615
      %v1648 = vpack.c.b16 %v1620, %v1618
      %v1649 = vpack.c.b16 %v1621, %v1619
      %v1650 = vpack.c.b16 %v1624, %v1622
      %v1651 = vpack.c.b16 %v1625, %v1623
      %v1652 = vpack.c.b16 %v1628, %v1626
      %v1653 = vpack.c.b16 %v1629, %v1627
      %v1654 = vpack.c.b16 %v1632, %v1630
      %v1655 = vpack.c.b16 %v1633, %v1631
      %v1656 = vpack.c.b16 %v1636, %v1634
      %v1657 = vpack.c.b16 %v1637, %v1635
      %v1658 = vpack.c.b16 %v1640, %v1638
      %v1659 = vpack.c.b16 %v1641, %v1639
      %v1660 = vpack.c.b16 %v1644, %v1642
      %v1661 = vpack.c.b16 %v1645, %v1643
      %1678 = vmatpush.bf16.msra.mxu0 %v1660
      %1679 = vmatpush.bf16.msra.mxu0 %v1658
      %1680 = vmatpush.bf16.msra.mxu0 %v1656
      %1681 = vmatpush.bf16.msra.mxu0 %v1654
      %1682 = vmatpush.bf16.msra.mxu0 %v1652
      %1683 = vmatpush.bf16.msra.mxu0 %v1650
      %1684 = vmatpush.bf16.msra.mxu0 %v1648
      %1685 = vmatpush.bf16.msra.mxu0 %v1646
      %1686 = vmatmul.bf16.gmra.mxu0 %v1596
      %v1687 = vpop.f32.mrf.mxu0
      %v1688 = vadd.f32 0.0, %v1687
      %v1689 = vpop.f32.mrf.mxu0
      %1690 = vdwg.mxu0
      %1691 = vmatpush.bf16.msra.mxu0 %v1661
      %1692 = vmatpush.bf16.msra.mxu0 %v1659
      %1693 = vmatpush.bf16.msra.mxu0 %v1657
      %1694 = vmatpush.bf16.msra.mxu0 %v1655
      %1695 = vmatpush.bf16.msra.mxu0 %v1653
      %1696 = vmatpush.bf16.msra.mxu0 %v1651
      %1697 = vmatpush.bf16.msra.mxu0 %v1649
      %1698 = vmatpush.bf16.msra.mxu0 %v1647
      %1699 = vmatmul.bf16.gmra.mxu0 %v1596
      %v1700 = vpop.f32.mrf.mxu0
      %v1701 = vadd.f32 0.0, %v1700
      %v1702 = vpop.f32.mrf.mxu0
      %1703 = vdwg.mxu0
      %v1704 = vadd.f32 %v1563, %v1688
      %v1705 = vadd.f32 %v1564, %v1701
      %v1706 = vld [vmem:[%s1301] sm:$0xc]
      %s1707 = scalar_lea.vmem %s218, 1792
      %v1708 = vld [vmem:[%s1707] sm:$0xff]
      %v1709 = vld [vmem:[%s1707 + $0x8] sm:$0xff]
      %v1710 = vld [vmem:[%s1707 + $0x10] sm:$0xff]
      %v1711 = vld [vmem:[%s1707 + $0x18] sm:$0xff]
      %v1712 = vld [vmem:[%s1707 + $0x20] sm:$0xff]
      %v1713 = vld [vmem:[%s1707 + $0x28] sm:$0xff]
      %v1714 = vld [vmem:[%s1707 + $0x30] sm:$0xff]
      %v1715 = vld [vmem:[%s1707 + $0x38] sm:$0xff]
      %v1716 = vld [vmem:[%s1707 + $0x40] sm:$0xff]
      %v1717 = vld [vmem:[%s1707 + $0x48] sm:$0xff]
      %v1718 = vld [vmem:[%s1707 + $0x50] sm:$0xff]
      %v1719 = vld [vmem:[%s1707 + $0x58] sm:$0xff]
      %v1720 = vld [vmem:[%s1707 + $0x60] sm:$0xff]
      %v1721 = vld [vmem:[%s1707 + $0x68] sm:$0xff]
      %v1722 = vld [vmem:[%s1707 + $0x70] sm:$0xff]
      %v1723 = vld [vmem:[%s1707 + $0x78] sm:$0xff]
      %v1725 = vunpack.c.l.b16 %v1706
      %v1726 = vpack.c.b16 %v1587, %v1725
      %v1727 = vrot.slane %v1726, 2
      %v1745 = vunpack.c.l.b16 %v1708
      %v1746 = vunpack.c.h.b16 %v1708
      %v1747 = vunpack.c.l.b16 %v1709
      %v1748 = vunpack.c.h.b16 %v1709
      %v1749 = vunpack.c.l.b16 %v1710
      %v1750 = vunpack.c.h.b16 %v1710
      %v1751 = vunpack.c.l.b16 %v1711
      %v1752 = vunpack.c.h.b16 %v1711
      %v1753 = vunpack.c.l.b16 %v1712
      %v1754 = vunpack.c.h.b16 %v1712
      %v1755 = vunpack.c.l.b16 %v1713
      %v1756 = vunpack.c.h.b16 %v1713
      %v1757 = vunpack.c.l.b16 %v1714
      %v1758 = vunpack.c.h.b16 %v1714
      %v1759 = vunpack.c.l.b16 %v1715
      %v1760 = vunpack.c.h.b16 %v1715
      %v1761 = vunpack.c.l.b16 %v1716
      %v1762 = vunpack.c.h.b16 %v1716
      %v1763 = vunpack.c.l.b16 %v1717
      %v1764 = vunpack.c.h.b16 %v1717
      %v1765 = vunpack.c.l.b16 %v1718
      %v1766 = vunpack.c.h.b16 %v1718
      %v1767 = vunpack.c.l.b16 %v1719
      %v1768 = vunpack.c.h.b16 %v1719
      %v1769 = vunpack.c.l.b16 %v1720
      %v1770 = vunpack.c.h.b16 %v1720
      %v1771 = vunpack.c.l.b16 %v1721
      %v1772 = vunpack.c.h.b16 %v1721
      %v1773 = vunpack.c.l.b16 %v1722
      %v1774 = vunpack.c.h.b16 %v1722
      %v1775 = vunpack.c.l.b16 %v1723
      %v1776 = vunpack.c.h.b16 %v1723
      %v1777 = vpack.c.b16 %v1747, %v1745
      %v1778 = vpack.c.b16 %v1748, %v1746
      %v1779 = vpack.c.b16 %v1751, %v1749
      %v1780 = vpack.c.b16 %v1752, %v1750
      %v1781 = vpack.c.b16 %v1755, %v1753
      %v1782 = vpack.c.b16 %v1756, %v1754
      %v1783 = vpack.c.b16 %v1759, %v1757
      %v1784 = vpack.c.b16 %v1760, %v1758
      %v1785 = vpack.c.b16 %v1763, %v1761
      %v1786 = vpack.c.b16 %v1764, %v1762
      %v1787 = vpack.c.b16 %v1767, %v1765
      %v1788 = vpack.c.b16 %v1768, %v1766
      %v1789 = vpack.c.b16 %v1771, %v1769
      %v1790 = vpack.c.b16 %v1772, %v1770
      %v1791 = vpack.c.b16 %v1775, %v1773
      %v1792 = vpack.c.b16 %v1776, %v1774
      %1809 = vmatpush.bf16.msra.mxu0 %v1791
      %1810 = vmatpush.bf16.msra.mxu0 %v1789
      %1811 = vmatpush.bf16.msra.mxu0 %v1787
      %1812 = vmatpush.bf16.msra.mxu0 %v1785
      %1813 = vmatpush.bf16.msra.mxu0 %v1783
      %1814 = vmatpush.bf16.msra.mxu0 %v1781
      %1815 = vmatpush.bf16.msra.mxu0 %v1779
      %1816 = vmatpush.bf16.msra.mxu0 %v1777
      %1817 = vmatmul.bf16.gmra.mxu0 %v1727
      %v1818 = vpop.f32.mrf.mxu0
      %v1819 = vadd.f32 0.0, %v1818
      %v1820 = vpop.f32.mrf.mxu0
      %1821 = vdwg.mxu0
      %1822 = vmatpush.bf16.msra.mxu0 %v1792
      %1823 = vmatpush.bf16.msra.mxu0 %v1790
      %1824 = vmatpush.bf16.msra.mxu0 %v1788
      %1825 = vmatpush.bf16.msra.mxu0 %v1786
      %1826 = vmatpush.bf16.msra.mxu0 %v1784
      %1827 = vmatpush.bf16.msra.mxu0 %v1782
      %1828 = vmatpush.bf16.msra.mxu0 %v1780
      %1829 = vmatpush.bf16.msra.mxu0 %v1778
      %1830 = vmatmul.bf16.gmra.mxu0 %v1727
      %v1831 = vpop.f32.mrf.mxu0
      %v1832 = vadd.f32 0.0, %v1831
      %v1833 = vpop.f32.mrf.mxu0
      %1834 = vdwg.mxu0
      %v1835 = vadd.f32 %v1704, %v1819
      %v1836 = vadd.f32 %v1705, %v1832
      %s1837 = scalar_lea.vmem %s213, 24
      %v1838 = vld [vmem:[%s1837] sm:$0x7]
      %s1839 = scalar_lea.vmem %s218, 640
      %v1840 = vld [vmem:[%s1839] sm:$0xff]
      %v1841 = vld [vmem:[%s1839 + $0x8] sm:$0xff]
      %v1842 = vld [vmem:[%s1839 + $0x10] sm:$0xff]
      %v1843 = vld [vmem:[%s1839 + $0x18] sm:$0xff]
      %v1844 = vld [vmem:[%s1839 + $0x20] sm:$0xff]
      %v1845 = vld [vmem:[%s1839 + $0x28] sm:$0xff]
      %v1846 = vld [vmem:[%s1839 + $0x30] sm:$0xff]
      %v1847 = vld [vmem:[%s1839 + $0x38] sm:$0xff]
      %v1848 = vld [vmem:[%s1839 + $0x40] sm:$0xff]
      %v1849 = vld [vmem:[%s1839 + $0x48] sm:$0xff]
      %v1850 = vld [vmem:[%s1839 + $0x50] sm:$0xff]
      %v1851 = vld [vmem:[%s1839 + $0x58] sm:$0xff]
      %v1852 = vld [vmem:[%s1839 + $0x60] sm:$0xff]
      %v1853 = vld [vmem:[%s1839 + $0x68] sm:$0xff]
      %v1854 = vld [vmem:[%s1839 + $0x70] sm:$0xff]
      %v1855 = vld [vmem:[%s1839 + $0x78] sm:$0xff]
      %v1872 = vunpack.c.l.b16 %v1840
      %v1873 = vunpack.c.h.b16 %v1840
      %v1874 = vunpack.c.l.b16 %v1841
      %v1875 = vunpack.c.h.b16 %v1841
      %v1876 = vunpack.c.l.b16 %v1842
      %v1877 = vunpack.c.h.b16 %v1842
      %v1878 = vunpack.c.l.b16 %v1843
      %v1879 = vunpack.c.h.b16 %v1843
      %v1880 = vunpack.c.l.b16 %v1844
      %v1881 = vunpack.c.h.b16 %v1844
      %v1882 = vunpack.c.l.b16 %v1845
      %v1883 = vunpack.c.h.b16 %v1845
      %v1884 = vunpack.c.l.b16 %v1846
      %v1885 = vunpack.c.h.b16 %v1846
      %v1886 = vunpack.c.l.b16 %v1847
      %v1887 = vunpack.c.h.b16 %v1847
      %v1888 = vunpack.c.l.b16 %v1848
      %v1889 = vunpack.c.h.b16 %v1848
      %v1890 = vunpack.c.l.b16 %v1849
      %v1891 = vunpack.c.h.b16 %v1849
      %v1892 = vunpack.c.l.b16 %v1850
      %v1893 = vunpack.c.h.b16 %v1850
      %v1894 = vunpack.c.l.b16 %v1851
      %v1895 = vunpack.c.h.b16 %v1851
      %v1896 = vunpack.c.l.b16 %v1852
      %v1897 = vunpack.c.h.b16 %v1852
      %v1898 = vunpack.c.l.b16 %v1853
      %v1899 = vunpack.c.h.b16 %v1853
      %v1900 = vunpack.c.l.b16 %v1854
      %v1901 = vunpack.c.h.b16 %v1854
      %v1902 = vunpack.c.l.b16 %v1855
      %v1903 = vunpack.c.h.b16 %v1855
      %v1904 = vpack.c.b16 %v1874, %v1872
      %v1905 = vpack.c.b16 %v1875, %v1873
      %v1906 = vpack.c.b16 %v1878, %v1876
      %v1907 = vpack.c.b16 %v1879, %v1877
      %v1908 = vpack.c.b16 %v1882, %v1880
      %v1909 = vpack.c.b16 %v1883, %v1881
      %v1910 = vpack.c.b16 %v1886, %v1884
      %v1911 = vpack.c.b16 %v1887, %v1885
      %v1912 = vpack.c.b16 %v1890, %v1888
      %v1913 = vpack.c.b16 %v1891, %v1889
      %v1914 = vpack.c.b16 %v1894, %v1892
      %v1915 = vpack.c.b16 %v1895, %v1893
      %v1916 = vpack.c.b16 %v1898, %v1896
      %v1917 = vpack.c.b16 %v1899, %v1897
      %v1918 = vpack.c.b16 %v1902, %v1900
      %v1919 = vpack.c.b16 %v1903, %v1901
      %1936 = vmatpush.bf16.msra.mxu0 %v1918
      %1937 = vmatpush.bf16.msra.mxu0 %v1916
      %1938 = vmatpush.bf16.msra.mxu0 %v1914
      %1939 = vmatpush.bf16.msra.mxu0 %v1912
      %1940 = vmatpush.bf16.msra.mxu0 %v1910
      %1941 = vmatpush.bf16.msra.mxu0 %v1908
      %1942 = vmatpush.bf16.msra.mxu0 %v1906
      %1943 = vmatpush.bf16.msra.mxu0 %v1904
      %1944 = vmatmul.bf16.gmra.mxu0 %v1838
      %v1945 = vpop.f32.mrf.mxu0
      %v1946 = vadd.f32 0.0, %v1945
      %v1947 = vpop.f32.mrf.mxu0
      %1948 = vdwg.mxu0
      %1949 = vmatpush.bf16.msra.mxu0 %v1919
      %1950 = vmatpush.bf16.msra.mxu0 %v1917
      %1951 = vmatpush.bf16.msra.mxu0 %v1915
      %1952 = vmatpush.bf16.msra.mxu0 %v1913
      %1953 = vmatpush.bf16.msra.mxu0 %v1911
      %1954 = vmatpush.bf16.msra.mxu0 %v1909
      %1955 = vmatpush.bf16.msra.mxu0 %v1907
      %1956 = vmatpush.bf16.msra.mxu0 %v1905
      %1957 = vmatmul.bf16.gmra.mxu0 %v1838
      %v1958 = vpop.f32.mrf.mxu0
      %v1959 = vadd.f32 0.0, %v1958
      %v1960 = vpop.f32.mrf.mxu0
      %1961 = vdwg.mxu0
      %v1962 = vadd.f32 %v1835, %v1946
      %v1963 = vadd.f32 %v1836, %v1959
      %v1964 = vld [vmem:[%s1837] sm:$0xf]
      %s1965 = scalar_lea.vmem %s218, 896
      %v1966 = vld [vmem:[%s1965] sm:$0xff]
      %v1967 = vld [vmem:[%s1965 + $0x8] sm:$0xff]
      %v1968 = vld [vmem:[%s1965 + $0x10] sm:$0xff]
      %v1969 = vld [vmem:[%s1965 + $0x18] sm:$0xff]
      %v1970 = vld [vmem:[%s1965 + $0x20] sm:$0xff]
      %v1971 = vld [vmem:[%s1965 + $0x28] sm:$0xff]
      %v1972 = vld [vmem:[%s1965 + $0x30] sm:$0xff]
      %v1973 = vld [vmem:[%s1965 + $0x38] sm:$0xff]
      %v1974 = vld [vmem:[%s1965 + $0x40] sm:$0xff]
      %v1975 = vld [vmem:[%s1965 + $0x48] sm:$0xff]
      %v1976 = vld [vmem:[%s1965 + $0x50] sm:$0xff]
      %v1977 = vld [vmem:[%s1965 + $0x58] sm:$0xff]
      %v1978 = vld [vmem:[%s1965 + $0x60] sm:$0xff]
      %v1979 = vld [vmem:[%s1965 + $0x68] sm:$0xff]
      %v1980 = vld [vmem:[%s1965 + $0x70] sm:$0xff]
      %v1981 = vld [vmem:[%s1965 + $0x78] sm:$0xff]
      %v1983 = vunpack.c.l.b16 %v1964
      %v1984 = vpack.c.b16 %v1983, %v1983
      %v1986 = vshrl.u32 %v1984, 16
      %v1988 = vshll.u32 %v1984, 16
      %v1990 = vrot.slane %v1988, 1
      %v1991 = vor.u32 %v1986, %v1990
      %v2009 = vunpack.c.l.b16 %v1966
      %v2010 = vunpack.c.h.b16 %v1966
      %v2011 = vunpack.c.l.b16 %v1967
      %v2012 = vunpack.c.h.b16 %v1967
      %v2013 = vunpack.c.l.b16 %v1968
      %v2014 = vunpack.c.h.b16 %v1968
      %v2015 = vunpack.c.l.b16 %v1969
      %v2016 = vunpack.c.h.b16 %v1969
      %v2017 = vunpack.c.l.b16 %v1970
      %v2018 = vunpack.c.h.b16 %v1970
      %v2019 = vunpack.c.l.b16 %v1971
      %v2020 = vunpack.c.h.b16 %v1971
      %v2021 = vunpack.c.l.b16 %v1972
      %v2022 = vunpack.c.h.b16 %v1972
      %v2023 = vunpack.c.l.b16 %v1973
      %v2024 = vunpack.c.h.b16 %v1973
      %v2025 = vunpack.c.l.b16 %v1974
      %v2026 = vunpack.c.h.b16 %v1974
      %v2027 = vunpack.c.l.b16 %v1975
      %v2028 = vunpack.c.h.b16 %v1975
      %v2029 = vunpack.c.l.b16 %v1976
      %v2030 = vunpack.c.h.b16 %v1976
      %v2031 = vunpack.c.l.b16 %v1977
      %v2032 = vunpack.c.h.b16 %v1977
      %v2033 = vunpack.c.l.b16 %v1978
      %v2034 = vunpack.c.h.b16 %v1978
      %v2035 = vunpack.c.l.b16 %v1979
      %v2036 = vunpack.c.h.b16 %v1979
      %v2037 = vunpack.c.l.b16 %v1980
      %v2038 = vunpack.c.h.b16 %v1980
      %v2039 = vunpack.c.l.b16 %v1981
      %v2040 = vunpack.c.h.b16 %v1981
      %v2041 = vpack.c.b16 %v2011, %v2009
      %v2042 = vpack.c.b16 %v2012, %v2010
      %v2043 = vpack.c.b16 %v2015, %v2013
      %v2044 = vpack.c.b16 %v2016, %v2014
      %v2045 = vpack.c.b16 %v2019, %v2017
      %v2046 = vpack.c.b16 %v2020, %v2018
      %v2047 = vpack.c.b16 %v2023, %v2021
      %v2048 = vpack.c.b16 %v2024, %v2022
      %v2049 = vpack.c.b16 %v2027, %v2025
      %v2050 = vpack.c.b16 %v2028, %v2026
      %v2051 = vpack.c.b16 %v2031, %v2029
      %v2052 = vpack.c.b16 %v2032, %v2030
      %v2053 = vpack.c.b16 %v2035, %v2033
      %v2054 = vpack.c.b16 %v2036, %v2034
      %v2055 = vpack.c.b16 %v2039, %v2037
      %v2056 = vpack.c.b16 %v2040, %v2038
      %2073 = vmatpush.bf16.msra.mxu0 %v2055
      %2074 = vmatpush.bf16.msra.mxu0 %v2053
      %2075 = vmatpush.bf16.msra.mxu0 %v2051
      %2076 = vmatpush.bf16.msra.mxu0 %v2049
      %2077 = vmatpush.bf16.msra.mxu0 %v2047
      %2078 = vmatpush.bf16.msra.mxu0 %v2045
      %2079 = vmatpush.bf16.msra.mxu0 %v2043
      %2080 = vmatpush.bf16.msra.mxu0 %v2041
      %2081 = vmatmul.bf16.gmra.mxu0 %v1991
      %v2082 = vpop.f32.mrf.mxu0
      %v2083 = vadd.f32 0.0, %v2082
      %v2084 = vpop.f32.mrf.mxu0
      %2085 = vdwg.mxu0
      %2086 = vmatpush.bf16.msra.mxu0 %v2056
      %2087 = vmatpush.bf16.msra.mxu0 %v2054
      %2088 = vmatpush.bf16.msra.mxu0 %v2052
      %2089 = vmatpush.bf16.msra.mxu0 %v2050
      %2090 = vmatpush.bf16.msra.mxu0 %v2048
      %2091 = vmatpush.bf16.msra.mxu0 %v2046
      %2092 = vmatpush.bf16.msra.mxu0 %v2044
      %2093 = vmatpush.bf16.msra.mxu0 %v2042
      %2094 = vmatmul.bf16.gmra.mxu0 %v1991
      %v2095 = vpop.f32.mrf.mxu0
      %v2096 = vadd.f32 0.0, %v2095
      %v2097 = vpop.f32.mrf.mxu0
      %2098 = vdwg.mxu0
      %v2099 = vadd.f32 %v1962, %v2083
      %v2100 = vadd.f32 %v1963, %v2096
      %v2101 = vld [vmem:[%s1837] sm:$0xe]
      %v2102 = vld [vmem:[%s1837 + $0x4] sm:$0x1]
      %s2103 = scalar_lea.vmem %s218, 1664
      %v2104 = vld [vmem:[%s2103] sm:$0xff]
      %v2105 = vld [vmem:[%s2103 + $0x8] sm:$0xff]
      %v2106 = vld [vmem:[%s2103 + $0x10] sm:$0xff]
      %v2107 = vld [vmem:[%s2103 + $0x18] sm:$0xff]
      %v2108 = vld [vmem:[%s2103 + $0x20] sm:$0xff]
      %v2109 = vld [vmem:[%s2103 + $0x28] sm:$0xff]
      %v2110 = vld [vmem:[%s2103 + $0x30] sm:$0xff]
      %v2111 = vld [vmem:[%s2103 + $0x38] sm:$0xff]
      %v2112 = vld [vmem:[%s2103 + $0x40] sm:$0xff]
      %v2113 = vld [vmem:[%s2103 + $0x48] sm:$0xff]
      %v2114 = vld [vmem:[%s2103 + $0x50] sm:$0xff]
      %v2115 = vld [vmem:[%s2103 + $0x58] sm:$0xff]
      %v2116 = vld [vmem:[%s2103 + $0x60] sm:$0xff]
      %v2117 = vld [vmem:[%s2103 + $0x68] sm:$0xff]
      %v2118 = vld [vmem:[%s2103 + $0x70] sm:$0xff]
      %v2119 = vld [vmem:[%s2103 + $0x78] sm:$0xff]
      %v2122 = vunpack.c.l.b16 %v2101
      %v2123 = vunpack.c.l.b16 %v2102
      %v2124 = vpack.c.b16 %v2123, %v2122
      %v2126 = vshrl.u32 %v2124, 16
      %v2128 = vrot.slane %v2126, 1
      %v2129 = vshll.u32 %v2124, 16
      %v2131 = vrot.slane %v2129, 2
      %v2132 = vor.u32 %v2128, %v2131
      %v2150 = vunpack.c.l.b16 %v2104
      %v2151 = vunpack.c.h.b16 %v2104
      %v2152 = vunpack.c.l.b16 %v2105
      %v2153 = vunpack.c.h.b16 %v2105
      %v2154 = vunpack.c.l.b16 %v2106
      %v2155 = vunpack.c.h.b16 %v2106
      %v2156 = vunpack.c.l.b16 %v2107
      %v2157 = vunpack.c.h.b16 %v2107
      %v2158 = vunpack.c.l.b16 %v2108
      %v2159 = vunpack.c.h.b16 %v2108
      %v2160 = vunpack.c.l.b16 %v2109
      %v2161 = vunpack.c.h.b16 %v2109
      %v2162 = vunpack.c.l.b16 %v2110
      %v2163 = vunpack.c.h.b16 %v2110
      %v2164 = vunpack.c.l.b16 %v2111
      %v2165 = vunpack.c.h.b16 %v2111
      %v2166 = vunpack.c.l.b16 %v2112
      %v2167 = vunpack.c.h.b16 %v2112
      %v2168 = vunpack.c.l.b16 %v2113
      %v2169 = vunpack.c.h.b16 %v2113
      %v2170 = vunpack.c.l.b16 %v2114
      %v2171 = vunpack.c.h.b16 %v2114
      %v2172 = vunpack.c.l.b16 %v2115
      %v2173 = vunpack.c.h.b16 %v2115
      %v2174 = vunpack.c.l.b16 %v2116
      %v2175 = vunpack.c.h.b16 %v2116
      %v2176 = vunpack.c.l.b16 %v2117
      %v2177 = vunpack.c.h.b16 %v2117
      %v2178 = vunpack.c.l.b16 %v2118
      %v2179 = vunpack.c.h.b16 %v2118
      %v2180 = vunpack.c.l.b16 %v2119
      %v2181 = vunpack.c.h.b16 %v2119
      %v2182 = vpack.c.b16 %v2152, %v2150
      %v2183 = vpack.c.b16 %v2153, %v2151
      %v2184 = vpack.c.b16 %v2156, %v2154
      %v2185 = vpack.c.b16 %v2157, %v2155
      %v2186 = vpack.c.b16 %v2160, %v2158
      %v2187 = vpack.c.b16 %v2161, %v2159
      %v2188 = vpack.c.b16 %v2164, %v2162
      %v2189 = vpack.c.b16 %v2165, %v2163
      %v2190 = vpack.c.b16 %v2168, %v2166
      %v2191 = vpack.c.b16 %v2169, %v2167
      %v2192 = vpack.c.b16 %v2172, %v2170
      %v2193 = vpack.c.b16 %v2173, %v2171
      %v2194 = vpack.c.b16 %v2176, %v2174
      %v2195 = vpack.c.b16 %v2177, %v2175
      %v2196 = vpack.c.b16 %v2180, %v2178
      %v2197 = vpack.c.b16 %v2181, %v2179
      %2214 = vmatpush.bf16.msra.mxu0 %v2196
      %2215 = vmatpush.bf16.msra.mxu0 %v2194
      %2216 = vmatpush.bf16.msra.mxu0 %v2192
      %2217 = vmatpush.bf16.msra.mxu0 %v2190
      %2218 = vmatpush.bf16.msra.mxu0 %v2188
      %2219 = vmatpush.bf16.msra.mxu0 %v2186
      %2220 = vmatpush.bf16.msra.mxu0 %v2184
      %2221 = vmatpush.bf16.msra.mxu0 %v2182
      %2222 = vmatmul.bf16.gmra.mxu0 %v2132
      %v2223 = vpop.f32.mrf.mxu0
      %v2224 = vadd.f32 0.0, %v2223
      %v2225 = vpop.f32.mrf.mxu0
      %2226 = vdwg.mxu0
      %2227 = vmatpush.bf16.msra.mxu0 %v2197
      %2228 = vmatpush.bf16.msra.mxu0 %v2195
      %2229 = vmatpush.bf16.msra.mxu0 %v2193
      %2230 = vmatpush.bf16.msra.mxu0 %v2191
      %2231 = vmatpush.bf16.msra.mxu0 %v2189
      %2232 = vmatpush.bf16.msra.mxu0 %v2187
      %2233 = vmatpush.bf16.msra.mxu0 %v2185
      %2234 = vmatpush.bf16.msra.mxu0 %v2183
      %2235 = vmatmul.bf16.gmra.mxu0 %v2132
      %v2236 = vpop.f32.mrf.mxu0
      %v2237 = vadd.f32 0.0, %v2236
      %v2238 = vpop.f32.mrf.mxu0
      %2239 = vdwg.mxu0
      %v2240 = vadd.f32 %v2099, %v2224
      %v2241 = vadd.f32 %v2100, %v2237
      %v2242 = vld [vmem:[%s1837] sm:$0xc]
      %s2243 = scalar_lea.vmem %s218, 1920
      %v2244 = vld [vmem:[%s2243] sm:$0xff]
      %v2245 = vld [vmem:[%s2243 + $0x8] sm:$0xff]
      %v2246 = vld [vmem:[%s2243 + $0x10] sm:$0xff]
      %v2247 = vld [vmem:[%s2243 + $0x18] sm:$0xff]
      %v2248 = vld [vmem:[%s2243 + $0x20] sm:$0xff]
      %v2249 = vld [vmem:[%s2243 + $0x28] sm:$0xff]
      %v2250 = vld [vmem:[%s2243 + $0x30] sm:$0xff]
      %v2251 = vld [vmem:[%s2243 + $0x38] sm:$0xff]
      %v2252 = vld [vmem:[%s2243 + $0x40] sm:$0xff]
      %v2253 = vld [vmem:[%s2243 + $0x48] sm:$0xff]
      %v2254 = vld [vmem:[%s2243 + $0x50] sm:$0xff]
      %v2255 = vld [vmem:[%s2243 + $0x58] sm:$0xff]
      %v2256 = vld [vmem:[%s2243 + $0x60] sm:$0xff]
      %v2257 = vld [vmem:[%s2243 + $0x68] sm:$0xff]
      %v2258 = vld [vmem:[%s2243 + $0x70] sm:$0xff]
      %v2259 = vld [vmem:[%s2243 + $0x78] sm:$0xff]
      %v2261 = vunpack.c.l.b16 %v2242
      %v2262 = vpack.c.b16 %v2123, %v2261
      %v2263 = vrot.slane %v2262, 2
      %v2281 = vunpack.c.l.b16 %v2244
      %v2282 = vunpack.c.h.b16 %v2244
      %v2283 = vunpack.c.l.b16 %v2245
      %v2284 = vunpack.c.h.b16 %v2245
      %v2285 = vunpack.c.l.b16 %v2246
      %v2286 = vunpack.c.h.b16 %v2246
      %v2287 = vunpack.c.l.b16 %v2247
      %v2288 = vunpack.c.h.b16 %v2247
      %v2289 = vunpack.c.l.b16 %v2248
      %v2290 = vunpack.c.h.b16 %v2248
      %v2291 = vunpack.c.l.b16 %v2249
      %v2292 = vunpack.c.h.b16 %v2249
      %v2293 = vunpack.c.l.b16 %v2250
      %v2294 = vunpack.c.h.b16 %v2250
      %v2295 = vunpack.c.l.b16 %v2251
      %v2296 = vunpack.c.h.b16 %v2251
      %v2297 = vunpack.c.l.b16 %v2252
      %v2298 = vunpack.c.h.b16 %v2252
      %v2299 = vunpack.c.l.b16 %v2253
      %v2300 = vunpack.c.h.b16 %v2253
      %v2301 = vunpack.c.l.b16 %v2254
      %v2302 = vunpack.c.h.b16 %v2254
      %v2303 = vunpack.c.l.b16 %v2255
      %v2304 = vunpack.c.h.b16 %v2255
      %v2305 = vunpack.c.l.b16 %v2256
      %v2306 = vunpack.c.h.b16 %v2256
      %v2307 = vunpack.c.l.b16 %v2257
      %v2308 = vunpack.c.h.b16 %v2257
      %v2309 = vunpack.c.l.b16 %v2258
      %v2310 = vunpack.c.h.b16 %v2258
      %v2311 = vunpack.c.l.b16 %v2259
      %v2312 = vunpack.c.h.b16 %v2259
      %v2313 = vpack.c.b16 %v2283, %v2281
      %v2314 = vpack.c.b16 %v2284, %v2282
      %v2315 = vpack.c.b16 %v2287, %v2285
      %v2316 = vpack.c.b16 %v2288, %v2286
      %v2317 = vpack.c.b16 %v2291, %v2289
      %v2318 = vpack.c.b16 %v2292, %v2290
      %v2319 = vpack.c.b16 %v2295, %v2293
      %v2320 = vpack.c.b16 %v2296, %v2294
      %v2321 = vpack.c.b16 %v2299, %v2297
      %v2322 = vpack.c.b16 %v2300, %v2298
      %v2323 = vpack.c.b16 %v2303, %v2301
      %v2324 = vpack.c.b16 %v2304, %v2302
      %v2325 = vpack.c.b16 %v2307, %v2305
      %v2326 = vpack.c.b16 %v2308, %v2306
      %v2327 = vpack.c.b16 %v2311, %v2309
      %v2328 = vpack.c.b16 %v2312, %v2310
      %2345 = vmatpush.bf16.msra.mxu0 %v2327
      %2346 = vmatpush.bf16.msra.mxu0 %v2325
      %2347 = vmatpush.bf16.msra.mxu0 %v2323
      %2348 = vmatpush.bf16.msra.mxu0 %v2321
      %2349 = vmatpush.bf16.msra.mxu0 %v2319
      %2350 = vmatpush.bf16.msra.mxu0 %v2317
      %2351 = vmatpush.bf16.msra.mxu0 %v2315
      %2352 = vmatpush.bf16.msra.mxu0 %v2313
      %2353 = vmatmul.bf16.gmra.mxu0 %v2263
      %v2354 = vpop.f32.mrf.mxu0
      %v2355 = vadd.f32 0.0, %v2354
      %v2356 = vpop.f32.mrf.mxu0
      %2357 = vdwg.mxu0
      %2358 = vmatpush.bf16.msra.mxu0 %v2328
      %2359 = vmatpush.bf16.msra.mxu0 %v2326
      %2360 = vmatpush.bf16.msra.mxu0 %v2324
      %2361 = vmatpush.bf16.msra.mxu0 %v2322
      %2362 = vmatpush.bf16.msra.mxu0 %v2320
      %2363 = vmatpush.bf16.msra.mxu0 %v2318
      %2364 = vmatpush.bf16.msra.mxu0 %v2316
      %2365 = vmatpush.bf16.msra.mxu0 %v2314
      %2366 = vmatmul.bf16.gmra.mxu0 %v2263
      %v2367 = vpop.f32.mrf.mxu0
      %v2368 = vadd.f32 0.0, %v2367
      %v2369 = vpop.f32.mrf.mxu0
      %2370 = vdwg.mxu0
      %v2371 = vadd.f32 %v2240, %v2355
      %v2372 = vadd.f32 %v2241, %v2368
      %v2373 = vld [vmem:[%s223] sm:$0x3]
      %v2375 = vperm.slane %v2373, 0
      %v2376 = vperm.slane %v2373, 1
      %v2379 = vadd.f32 %v2371, %v2375
      %v2380 = vadd.f32 %v2372, %v2376
      %vm2381 = vcmp.ge.f32.partialorder %v2379, 0.0
      %vm2382 = vcmp.ge.f32.partialorder %v2380, 0.0
      %v2383 = vmul.f32 %v2379, 0.01
      %v2384 = vmul.f32 %v2380, 0.01
      %v2385 = vsel %vm2381, %v2379, %v2383
      %v2386 = vsel %vm2382, %v2380, %v2384
      %v2387 = vpack.c.bf16 %v2386, %v2385
      %2388 = vst [vmem:[%s233] sm:$0x77] %v2387
      %s2389 = smul.u32 2, %s18
      %p2390 = scmp.lt.s32.totalorder %s19, 1
      %s2391 = scalar_select %p2390, %s19, 1
      %p2392 = scmp.lt.s32.totalorder %s2389, 1
      %s2393 = scalar_select %p2392, %s2389, 1
      %s2394 = smul.addr %s2391, 2
      %s2395 = sadd.s32 %s2393, %s2394
      %s2396 = smul.addr %s2395, 4
      %s2397 = scalar_lea.vmem %s3, %s2396
      // Predicated region
      $region33: #{discriminator_forward.7} parent=31 // pred_check
        %p2398 = pneg %p124
      $region34: #{discriminator_forward.7} parent=31 // pred_check_branch
        %2400 = sbr.rel (%p2398) target = $region36
      $region35: #{discriminator_forward.7} parent=31 // pred_region
        %s2401 = smul.u32 2, %s18
      $region36: #{discriminator_forward.7} parent=31 // pred_fallthru
        _
    $region32: #{discriminator_forward.7} parent=5 // pred_fallthru
      _
    %p2402 = scmp.le.s32.totalorder 2, %s9
    // Predicated region
    $region37: #{discriminator_forward.7} parent=5 // pred_check
      %p2403 = pneg %p2402
    $region38: #{discriminator_forward.7} parent=5 // pred_check_branch
      %2405 = sbr.rel (%p2403) target = $region40
    $region39: #{discriminator_forward.7} parent=5 // pred_region
      %s2406 = ssub.s32 %s9, 2
      // Predicated region
      $region41: #{discriminator_forward.7} parent=39 // pred_check
        %p2407 = pneg %p130
      $region42: #{discriminator_forward.7} parent=39 // pred_check_branch
        %2409 = sbr.rel (%p2407) target = $region44
      $region43: #{discriminator_forward.7} parent=39 // pred_region
        %s2410 = smul.u32 2, %s20
        %p2411 = scmp.lt.s32.totalorder %s21, 1
        %s2412 = scalar_select %p2411, %s21, 1
        %p2413 = scmp.lt.s32.totalorder %s2410, 1
        %s2414 = scalar_select %p2413, %s2410, 1
        %s2415 = smul.addr %s2412, 2
        %s2416 = sadd.s32 %s2414, %s2415
        %s2417 = smul.addr %s2416, 4
        %s2418 = scalar_lea.vmem %s3, %s2417
      $region44: #{discriminator_forward.7} parent=39 // pred_fallthru
        _
    $region40: #{discriminator_forward.7} parent=5 // pred_fallthru
      _
  $region6: #{discriminator_forward.7} parent=0 // loop_footer
    %s13 = sadd.s32 1, %s9
  $region7: #{discriminator_forward.7} parent=0 // loop_footer_branch
    %8 = sbr.rel target = $region3
  $region8: #{discriminator_forward.7} parent=0 // loop_exit
    _

// kernel: discriminator_forward.8
$region0: #{discriminator_forward.8}
  #allocation0 [shape = 'u32[]', space=smem, size = 0x4, offset = 0x4, fixed_abs, tag = 'smem constant byte address 0x4 - core index']
  #allocation1 [shape = 'u32[72,128]{1,0:T(1,128)}', space=vmem, size = 0x9000, scoped, tag = 'internal scratch']
  %s0 = inlined_call_operand.vmem [shape: bf16[2,1,20,256], index: 0, kind: input, shape index: {}]
  %s1 = inlined_call_operand.vmem [shape: bf16[9,256,128], index: 1, kind: input, shape index: {}]
  %s2 = inlined_call_operand.vmem [shape: f32[1,128], index: 2, kind: input, shape index: {}]
  %s3 = inlined_call_operand.vmem [shape: f32[2,8,128], index: 3, kind: output, shape index: {}]
  %s4 = sld [smem:[#allocation0]]
  $region45: #{discriminator_forward.8} parent=0
    _
  %s6 = ssub.s32 1, %s4
  %s7 = scalar_select 0, %s6, %s4
  loop: start=0, step=1, limit=4
  $region2: #{discriminator_forward.8} parent=0 // loop_pre_header
    _
  $region3: #{discriminator_forward.8} parent=0 // loop_header
    %s9 = sphi 0, %s13
    %p10 = scmp.ge.s32.totalorder %s9, 4
    %s16 = sphi 0, %s28
    %s17 = sphi 0, %s24
    %s18 = sphi 0, %s16
    %s19 = sphi 0, %s17
    %s20 = sphi 0, %s18
    %s21 = sphi 0, %s19
    %s31 = sphi 0, %s33
    %s34 = sphi 0, %s31
    %s35 = sphi 0, %s34
    %s51 = sphi 0, %s35
    %s57 = sphi 0, %s59
    %s60 = sphi 0, %s57
    %s61 = sphi 0, %s60
    %s77 = sphi 0, %s61
    %s83 = sphi 0, %s85
    %s86 = sphi 0, %s83
    %s87 = sphi 0, %s86
    %s103 = sphi 0, %s87
    %s111 = sphi 0, %s113
    %s114 = sphi 0, %s111
    %s115 = sphi 0, %s114
    %s131 = sphi 0, %s115
  $region4: #{discriminator_forward.8} parent=0 // loop_header_branch
    %12 = sbr.rel (%p10) target = $region8
  $region5: #{discriminator_forward.8} parent=0 // loop_body
    %s14 = ssub.s32 %s9, 1
    %s15 = ssub.s32 %s9, 2
    %s22 = sadd.s32 1, %s17
    %p23 = scmp.ge.s32.totalorder %s22, 2
    %s24 = scalar_select %p23, 0, %s22
    %s25 = sadd.s32 1, %s16
    %s26 = scalar_select %p23, %s25, %s16
    %p27 = scmp.ge.s32.totalorder %s26, 1
    %s28 = scalar_select %p27, 0, %s26
    %s29 = ssub.s32 %s17, %s24
    %p30 = scmp.eq.s32.totalorder %s29, 0
    %s32 = sadd.s32 %s31, 1
    %s33 = scalar_select %p30, %s31, %s32
    %p36 = pneg %p30
    %p37 = scmp.eq.s32.totalorder %s9, 1
    %p38 = por %p36, %p37
    %p39 = scmp.ne.s32.totalorder %s31, %s34
    %p40 = scmp.eq.s32.totalorder %s9, 0
    %p41 = por %p39, %p40
    %p42 = scmp.ne.s32.totalorder %s31, %s34
    %p43 = scmp.eq.s32.totalorder %s14, 1
    %p44 = por %p42, %p43
    %p45 = scmp.ne.s32.totalorder %s34, %s35
    %p46 = scmp.eq.s32.totalorder %s14, 0
    %p47 = por %p45, %p46
    %p48 = scmp.ne.s32.totalorder %s34, %s35
    %p49 = scmp.eq.s32.totalorder %s15, 1
    %p50 = por %p48, %p49
    %p52 = scmp.ne.s32.totalorder %s35, %s51
    %p53 = scmp.eq.s32.totalorder %s15, 0
    %p54 = por %p52, %p53
    %s55 = ssub.s32 %s16, %s28
    %p56 = scmp.eq.s32.totalorder %s55, 0
    %s58 = sadd.s32 %s57, 1
    %s59 = scalar_select %p56, %s57, %s58
    %p62 = pneg %p56
    %p63 = scmp.eq.s32.totalorder %s9, 1
    %p64 = por %p62, %p63
    %p65 = scmp.ne.s32.totalorder %s57, %s60
    %p66 = scmp.eq.s32.totalorder %s9, 0
    %p67 = por %p65, %p66
    %p68 = scmp.ne.s32.totalorder %s57, %s60
    %p69 = scmp.eq.s32.totalorder %s14, 1
    %p70 = por %p68, %p69
    %p71 = scmp.ne.s32.totalorder %s60, %s61
    %p72 = scmp.eq.s32.totalorder %s14, 0
    %p73 = por %p71, %p72
    %p74 = scmp.ne.s32.totalorder %s60, %s61
    %p75 = scmp.eq.s32.totalorder %s15, 1
    %p76 = por %p74, %p75
    %p78 = scmp.ne.s32.totalorder %s61, %s77
    %p79 = scmp.eq.s32.totalorder %s15, 0
    %p80 = por %p78, %p79
    %s81 = ssub.s32 %s16, %s28
    %p82 = scmp.eq.s32.totalorder %s81, 0
    %s84 = sadd.s32 %s83, 1
    %s85 = scalar_select %p82, %s83, %s84
    %p88 = pneg %p82
    %p89 = scmp.eq.s32.totalorder %s9, 1
    %p90 = por %p88, %p89
    %p91 = scmp.ne.s32.totalorder %s83, %s86
    %p92 = scmp.eq.s32.totalorder %s9, 0
    %p93 = por %p91, %p92
    %p94 = scmp.ne.s32.totalorder %s83, %s86
    %p95 = scmp.eq.s32.totalorder %s14, 1
    %p96 = por %p94, %p95
    %p97 = scmp.ne.s32.totalorder %s86, %s87
    %p98 = scmp.eq.s32.totalorder %s14, 0
    %p99 = por %p97, %p98
    %p100 = scmp.ne.s32.totalorder %s86, %s87
    %p101 = scmp.eq.s32.totalorder %s15, 1
    %p102 = por %p100, %p101
    %p104 = scmp.ne.s32.totalorder %s87, %s103
    %p105 = scmp.eq.s32.totalorder %s15, 0
    %p106 = por %p104, %p105
    %s107 = ssub.s32 %s17, %s24
    %s108 = ssub.s32 %s16, %s28
    %s109 = sor.u32 %s107, %s108
    %p110 = scmp.eq.s32.totalorder %s109, 0
    %s112 = sadd.s32 %s111, 1
    %s113 = scalar_select %p110, %s111, %s112
    %p116 = pneg %p110
    %p117 = scmp.eq.s32.totalorder %s9, 1
    %p118 = por %p116, %p117
    %p119 = scmp.ne.s32.totalorder %s111, %s114
    %p120 = scmp.eq.s32.totalorder %s9, 0
    %p121 = por %p119, %p120
    %p122 = scmp.ne.s32.totalorder %s111, %s114
    %p123 = scmp.eq.s32.totalorder %s14, 1
    %p124 = por %p122, %p123
    %p125 = scmp.ne.s32.totalorder %s114, %s115
    %p126 = scmp.eq.s32.totalorder %s14, 0
    %p127 = por %p125, %p126
    %p128 = scmp.ne.s32.totalorder %s114, %s115
    %p129 = scmp.eq.s32.totalorder %s15, 1
    %p130 = por %p128, %p129
    %p132 = scmp.ne.s32.totalorder %s115, %s131
    %p133 = scmp.eq.s32.totalorder %s15, 0
    %p134 = por %p132, %p133
    %p135 = scmp.le.s32.totalorder 1, %s9
    %p136 = scmp.lt.s32.totalorder %s9, 3
    %p137 = pnand %p135, %p136
    %p138 = pneg %p137
    // Predicated region
    $region9: #{discriminator_forward.8} parent=5 // pred_check
      _
    $region10: #{discriminator_forward.8} parent=5 // pred_check_branch
      %140 = sbr.rel (%p137) target = $region12
    $region11: #{discriminator_forward.8} parent=5 // pred_region
      %s141 = ssub.s32 %s9, 1
      // Predicated region
      $region13: #{discriminator_forward.8} parent=11 // pred_check
        %p142 = pneg %p73
      $region14: #{discriminator_forward.8} parent=11 // pred_check_branch
        %144 = sbr.rel (%p142) target = $region16
      $region15: #{discriminator_forward.8} parent=11 // pred_region
        %p145 = scmp.lt.s32.totalorder %s18, 0
        %s146 = scalar_select %p145, %s18, 0
        %s147 = smul.addr %s146, 4
        %s148 = scalar_lea.vmem %s1, %s147
      $region16: #{discriminator_forward.8} parent=11 // pred_fallthru
        _
      // Predicated region
      $region17: #{discriminator_forward.8} parent=11 // pred_check
        %p149 = pneg %p99
      $region18: #{discriminator_forward.8} parent=11 // pred_check_branch
        %151 = sbr.rel (%p149) target = $region20
      $region19: #{discriminator_forward.8} parent=11 // pred_region
        %p152 = scmp.lt.s32.totalorder %s18, 0
        %s153 = scalar_select %p152, %s18, 0
        %s154 = scalar_lea.vmem %s2, %s153
      $region20: #{discriminator_forward.8} parent=11 // pred_fallthru
        _
    $region12: #{discriminator_forward.8} parent=5 // pred_fallthru
      _
    %p155 = scmp.lt.s32.totalorder %s9, 2
    // Predicated region
    $region21: #{discriminator_forward.8} parent=5 // pred_check
      %p156 = pneg %p155
    $region22: #{discriminator_forward.8} parent=5 // pred_check_branch
      %158 = sbr.rel (%p156) target = $region24
    $region23: #{discriminator_forward.8} parent=5 // pred_region
      // Predicated region
      $region25: #{discriminator_forward.8} parent=23 // pred_check
        %p159 = pneg %p41
      $region26: #{discriminator_forward.8} parent=23 // pred_check_branch
        %161 = sbr.rel (%p159) target = $region28
      $region27: #{discriminator_forward.8} parent=23 // pred_region
        %p162 = scmp.lt.s32.totalorder %s17, 1
        %s163 = scalar_select %p162, %s17, 1
        %s164 = smul.addr %s163, 6
        %s165 = smul.addr %s164, 4
        %s166 = scalar_lea.vmem %s0, %s165
      $region28: #{discriminator_forward.8} parent=23 // pred_fallthru
        _
    $region24: #{discriminator_forward.8} parent=5 // pred_fallthru
      _
    %p167 = scmp.le.s32.totalorder 1, %s9
    %p168 = scmp.lt.s32.totalorder %s9, 3
    %p169 = pnand %p167, %p168
    %p170 = pneg %p169
    // Predicated region
    $region29: #{discriminator_forward.8} parent=5 // pred_check
      _
    $region30: #{discriminator_forward.8} parent=5 // pred_check_branch
      %172 = sbr.rel (%p169) target = $region32
    $region31: #{discriminator_forward.8} parent=5 // pred_region
      %s173 = ssub.s32 %s9, 1
      %p174 = scmp.lt.s32.totalorder %s19, 1
      %s175 = scalar_select %p174, %s19, 1
      %s176 = smul.addr %s175, 6
      %s177 = smul.addr %s176, 4
      %s178 = scalar_lea.vmem %s0, %s177
      %p179 = pneg %p47
      %p180 = pneg %p44
      %p181 = scmp.lt.s32.totalorder %s18, 0
      %s182 = scalar_select %p181, %s18, 0
      %s183 = smul.addr %s182, 4
      %s184 = scalar_lea.vmem %s1, %s183
      %p185 = pneg %p73
      %p186 = pneg %p70
      %p187 = scmp.lt.s32.totalorder %s18, 0
      %s188 = scalar_select %p187, %s18, 0
      %s189 = scalar_lea.vmem %s2, %s188
      %p190 = pneg %p99
      %p191 = pneg %p96
      %p192 = pneg %p127
      %p193 = pneg %p124
      %p194 = scmp.lt.s32.totalorder %s19, 1
      %s195 = scalar_select %p194, %s19, 1
      %p196 = scmp.lt.s32.totalorder %s18, 0
      %s197 = scalar_select %p196, %s18, 0
      %s198 = sadd.s32 %s197, %s195
      %s199 = smul.addr %s198, 8
      %s200 = scalar_lea.vmem %s3, %s199
      %p201 = scmp.lt.s32.totalorder %s19, 1
      %s202 = scalar_select %p201, %s19, 1
      %s203 = smul.addr %s202, 6
      %s204 = smul.addr %s203, 4
      %s205 = scalar_lea.vmem %s0, %s204
      %p206 = scmp.lt.s32.totalorder %s18, 0
      %s207 = scalar_select %p206, %s18, 0
      %s208 = smul.addr %s207, 4
      %s209 = scalar_lea.vmem %s1, %s208
      %p210 = scmp.lt.s32.totalorder %s18, 0
      %s211 = scalar_select %p210, %s18, 0
      %s212 = scalar_lea.vmem %s2, %s211
      %p213 = scmp.lt.s32.totalorder %s19, 1
      %s214 = scalar_select %p213, %s19, 1
      %p215 = scmp.lt.s32.totalorder %s18, 0
      %s216 = scalar_select %p215, %s18, 0
      %s217 = sadd.s32 %s216, %s214
      %s218 = smul.addr %s217, 8
      %s219 = scalar_lea.vmem %s3, %s218
      %v220 = vld [vmem:[%s205] sm:$0xff]
      %v221 = vld [vmem:[%s209] sm:$0xf]
      %v222 = vld [vmem:[%s209 + $0x4] sm:$0xf]
      %v223 = vld [vmem:[%s209 + $0x8] sm:$0xf]
      %v224 = vld [vmem:[%s209 + $0xc] sm:$0xf]
      %v225 = vld [vmem:[%s209 + $0x10] sm:$0xf]
      %v226 = vld [vmem:[%s209 + $0x14] sm:$0xf]
      %v227 = vld [vmem:[%s209 + $0x18] sm:$0xf]
      %v228 = vld [vmem:[%s209 + $0x1c] sm:$0xf]
      %v229 = vld [vmem:[%s209 + $0x20] sm:$0xf]
      %v230 = vld [vmem:[%s209 + $0x24] sm:$0xf]
      %v231 = vld [vmem:[%s209 + $0x28] sm:$0xf]
      %v232 = vld [vmem:[%s209 + $0x2c] sm:$0xf]
      %v233 = vld [vmem:[%s209 + $0x30] sm:$0xf]
      %v234 = vld [vmem:[%s209 + $0x34] sm:$0xf]
      %v235 = vld [vmem:[%s209 + $0x38] sm:$0xf]
      %v236 = vld [vmem:[%s209 + $0x3c] sm:$0xf]
      %v237 = vld [vmem:[%s209 + $0x40] sm:$0xf]
      %v238 = vld [vmem:[%s209 + $0x44] sm:$0xf]
      %v239 = vld [vmem:[%s209 + $0x48] sm:$0xf]
      %v240 = vld [vmem:[%s209 + $0x4c] sm:$0xf]
      %v241 = vld [vmem:[%s209 + $0x50] sm:$0xf]
      %v242 = vld [vmem:[%s209 + $0x54] sm:$0xf]
      %v243 = vld [vmem:[%s209 + $0x58] sm:$0xf]
      %v244 = vld [vmem:[%s209 + $0x5c] sm:$0xf]
      %v245 = vld [vmem:[%s209 + $0x60] sm:$0xf]
      %v246 = vld [vmem:[%s209 + $0x64] sm:$0xf]
      %v247 = vld [vmem:[%s209 + $0x68] sm:$0xf]
      %v248 = vld [vmem:[%s209 + $0x6c] sm:$0xf]
      %v249 = vld [vmem:[%s209 + $0x70] sm:$0xf]
      %v250 = vld [vmem:[%s209 + $0x74] sm:$0xf]
      %v251 = vld [vmem:[%s209 + $0x78] sm:$0xf]
      %v252 = vld [vmem:[%s209 + $0x7c] sm:$0xf]
      %v253 = vld [vmem:[%s205 + $0x8] sm:$0x11]
      %s254 = scalar_lea.vmem %s209, 128
      %v255 = vld [vmem:[%s254] sm:$0xf]
      %v256 = vld [vmem:[%s254 + $0x4] sm:$0xf]
      %v257 = vld [vmem:[%s254 + $0x8] sm:$0xf]
      %v258 = vld [vmem:[%s254 + $0xc] sm:$0xf]
      %v259 = vld [vmem:[%s254 + $0x10] sm:$0xf]
      %v260 = vld [vmem:[%s254 + $0x14] sm:$0xf]
      %v261 = vld [vmem:[%s254 + $0x18] sm:$0xf]
      %v262 = vld [vmem:[%s254 + $0x1c] sm:$0xf]
      %v263 = vld [vmem:[%s254 + $0x20] sm:$0xf]
      %v264 = vld [vmem:[%s254 + $0x24] sm:$0xf]
      %v265 = vld [vmem:[%s254 + $0x28] sm:$0xf]
      %v266 = vld [vmem:[%s254 + $0x2c] sm:$0xf]
      %v267 = vld [vmem:[%s254 + $0x30] sm:$0xf]
      %v268 = vld [vmem:[%s254 + $0x34] sm:$0xf]
      %v269 = vld [vmem:[%s254 + $0x38] sm:$0xf]
      %v270 = vld [vmem:[%s254 + $0x3c] sm:$0xf]
      %v271 = vld [vmem:[%s254 + $0x40] sm:$0xf]
      %v272 = vld [vmem:[%s254 + $0x44] sm:$0xf]
      %v273 = vld [vmem:[%s254 + $0x48] sm:$0xf]
      %v274 = vld [vmem:[%s254 + $0x4c] sm:$0xf]
      %v275 = vld [vmem:[%s254 + $0x50] sm:$0xf]
      %v276 = vld [vmem:[%s254 + $0x54] sm:$0xf]
      %v277 = vld [vmem:[%s254 + $0x58] sm:$0xf]
      %v278 = vld [vmem:[%s254 + $0x5c] sm:$0xf]
      %v279 = vld [vmem:[%s254 + $0x60] sm:$0xf]
      %v280 = vld [vmem:[%s254 + $0x64] sm:$0xf]
      %v281 = vld [vmem:[%s254 + $0x68] sm:$0xf]
      %v282 = vld [vmem:[%s254 + $0x6c] sm:$0xf]
      %v283 = vld [vmem:[%s254 + $0x70] sm:$0xf]
      %v284 = vld [vmem:[%s254 + $0x74] sm:$0xf]
      %v285 = vld [vmem:[%s254 + $0x78] sm:$0xf]
      %v286 = vld [vmem:[%s254 + $0x7c] sm:$0xf]
      %v289 = vunpack.c.l.b16 %v220
      %v290 = vunpack.c.h.b16 %v220
      %v291 = vunpack.c.l.b16 %v253
      %v292 = vunpack.c.h.b16 %v253
      %v293 = vpack.c.b16 %v291, %v289
      %v294 = vpack.c.b16 %v292, %v290
      %v296 = vshrl.u32 %v293, 16
      %v298 = vshll.u32 %v293, 16
      %v300 = vrot.slane %v298, 1
      %v301 = vor.u32 %v296, %v300
      %v303 = vshrl.u32 %v294, 16
      %v305 = vshll.u32 %v294, 16
      %v307 = vrot.slane %v305, 1
      %v308 = vor.u32 %v303, %v307
      %v343 = vunpack.c.l.b16 %v255
      %v344 = vunpack.c.l.b16 %v256
      %v345 = vunpack.c.l.b16 %v257
      %v346 = vunpack.c.l.b16 %v258
      %v347 = vunpack.c.l.b16 %v259
      %v348 = vunpack.c.l.b16 %v260
      %v349 = vunpack.c.l.b16 %v261
      %v350 = vunpack.c.l.b16 %v262
      %v351 = vunpack.c.l.b16 %v263
      %v352 = vunpack.c.l.b16 %v264
      %v353 = vunpack.c.l.b16 %v265
      %v354 = vunpack.c.l.b16 %v266
      %v355 = vunpack.c.l.b16 %v267
      %v356 = vunpack.c.l.b16 %v268
      %v357 = vunpack.c.l.b16 %v269
      %v358 = vunpack.c.l.b16 %v270
      %v359 = vunpack.c.l.b16 %v271
      %v360 = vunpack.c.l.b16 %v272
      %v361 = vunpack.c.l.b16 %v273
      %v362 = vunpack.c.l.b16 %v274
      %v363 = vunpack.c.l.b16 %v275
      %v364 = vunpack.c.l.b16 %v276
      %v365 = vunpack.c.l.b16 %v277
      %v366 = vunpack.c.l.b16 %v278
      %v367 = vunpack.c.l.b16 %v279
      %v368 = vunpack.c.l.b16 %v280
      %v369 = vunpack.c.l.b16 %v281
      %v370 = vunpack.c.l.b16 %v282
      %v371 = vunpack.c.l.b16 %v283
      %v372 = vunpack.c.l.b16 %v284
      %v373 = vunpack.c.l.b16 %v285
      %v374 = vunpack.c.l.b16 %v286
      %v375 = vpack.c.b16 %v344, %v343
      %v376 = vpack.c.b16 %v346, %v345
      %v377 = vpack.c.b16 %v348, %v347
      %v378 = vpack.c.b16 %v350, %v349
      %v379 = vpack.c.b16 %v352, %v351
      %v380 = vpack.c.b16 %v354, %v353
      %v381 = vpack.c.b16 %v356, %v355
      %v382 = vpack.c.b16 %v358, %v357
      %v383 = vpack.c.b16 %v360, %v359
      %v384 = vpack.c.b16 %v362, %v361
      %v385 = vpack.c.b16 %v364, %v363
      %v386 = vpack.c.b16 %v366, %v365
      %v387 = vpack.c.b16 %v368, %v367
      %v388 = vpack.c.b16 %v370, %v369
      %v389 = vpack.c.b16 %v372, %v371
      %v390 = vpack.c.b16 %v374, %v373
      %407 = vmatpush.bf16.msra.mxu0 %v382
      %408 = vmatpush.bf16.msra.mxu0 %v381
      %409 = vmatpush.bf16.msra.mxu0 %v380
      %410 = vmatpush.bf16.msra.mxu0 %v379
      %411 = vmatpush.bf16.msra.mxu0 %v378
      %412 = vmatpush.bf16.msra.mxu0 %v377
      %413 = vmatpush.bf16.msra.mxu0 %v376
      %414 = vmatpush.bf16.msra.mxu0 %v375
      %415 = vmatmul.bf16.gmra.mxu0 %v301
      %v416 = vpop.f32.mrf.mxu0
      %v417 = vadd.f32 0.0, %v416
      %v418 = vpop.f32.mrf.mxu0
      %419 = vdwg.mxu0
      %420 = vmatpush.bf16.msra.mxu0 %v390
      %421 = vmatpush.bf16.msra.mxu0 %v389
      %422 = vmatpush.bf16.msra.mxu0 %v388
      %423 = vmatpush.bf16.msra.mxu0 %v387
      %424 = vmatpush.bf16.msra.mxu0 %v386
      %425 = vmatpush.bf16.msra.mxu0 %v385
      %426 = vmatpush.bf16.msra.mxu0 %v384
      %427 = vmatpush.bf16.msra.mxu0 %v383
      %428 = vmatmul.bf16.gmra.mxu0 %v308
      %v429 = vpop.f32.mrf.mxu0
      %v430 = vadd.f32 %v417, %v429
      %v431 = vpop.f32.mrf.mxu0
      %432 = vdwg.mxu0
      %v433 = vpack.c.b16 %v289, %v289
      %v434 = vpack.c.b16 %v290, %v290
      %v469 = vunpack.c.l.b16 %v221
      %v470 = vunpack.c.l.b16 %v222
      %v471 = vunpack.c.l.b16 %v223
      %v472 = vunpack.c.l.b16 %v224
      %v473 = vunpack.c.l.b16 %v225
      %v474 = vunpack.c.l.b16 %v226
      %v475 = vunpack.c.l.b16 %v227
      %v476 = vunpack.c.l.b16 %v228
      %v477 = vunpack.c.l.b16 %v229
      %v478 = vunpack.c.l.b16 %v230
      %v479 = vunpack.c.l.b16 %v231
      %v480 = vunpack.c.l.b16 %v232
      %v481 = vunpack.c.l.b16 %v233
      %v482 = vunpack.c.l.b16 %v234
      %v483 = vunpack.c.l.b16 %v235
      %v484 = vunpack.c.l.b16 %v236
      %v485 = vunpack.c.l.b16 %v237
      %v486 = vunpack.c.l.b16 %v238
      %v487 = vunpack.c.l.b16 %v239
      %v488 = vunpack.c.l.b16 %v240
      %v489 = vunpack.c.l.b16 %v241
      %v490 = vunpack.c.l.b16 %v242
      %v491 = vunpack.c.l.b16 %v243
      %v492 = vunpack.c.l.b16 %v244
      %v493 = vunpack.c.l.b16 %v245
      %v494 = vunpack.c.l.b16 %v246
      %v495 = vunpack.c.l.b16 %v247
      %v496 = vunpack.c.l.b16 %v248
      %v497 = vunpack.c.l.b16 %v249
      %v498 = vunpack.c.l.b16 %v250
      %v499 = vunpack.c.l.b16 %v251
      %v500 = vunpack.c.l.b16 %v252
      %v501 = vpack.c.b16 %v470, %v469
      %v502 = vpack.c.b16 %v472, %v471
      %v503 = vpack.c.b16 %v474, %v473
      %v504 = vpack.c.b16 %v476, %v475
      %v505 = vpack.c.b16 %v478, %v477
      %v506 = vpack.c.b16 %v480, %v479
      %v507 = vpack.c.b16 %v482, %v481
      %v508 = vpack.c.b16 %v484, %v483
      %v509 = vpack.c.b16 %v486, %v485
      %v510 = vpack.c.b16 %v488, %v487
      %v511 = vpack.c.b16 %v490, %v489
      %v512 = vpack.c.b16 %v492, %v491
      %v513 = vpack.c.b16 %v494, %v493
      %v514 = vpack.c.b16 %v496, %v495
      %v515 = vpack.c.b16 %v498, %v497
      %v516 = vpack.c.b16 %v500, %v499
      %533 = vmatpush.bf16.msra.mxu0 %v508
      %534 = vmatpush.bf16.msra.mxu0 %v507
      %535 = vmatpush.bf16.msra.mxu0 %v506
      %536 = vmatpush.bf16.msra.mxu0 %v505
      %537 = vmatpush.bf16.msra.mxu0 %v504
      %538 = vmatpush.bf16.msra.mxu0 %v503
      %539 = vmatpush.bf16.msra.mxu0 %v502
      %540 = vmatpush.bf16.msra.mxu0 %v501
      %541 = vmatmul.bf16.gmra.mxu0 %v433
      %v542 = vpop.f32.mrf.mxu0
      %v543 = vadd.f32 %v430, %v542
      %v544 = vpop.f32.mrf.mxu0
      %545 = vdwg.mxu0
      %546 = vmatpush.bf16.msra.mxu0 %v516
      %547 = vmatpush.bf16.msra.mxu0 %v515
      %548 = vmatpush.bf16.msra.mxu0 %v514
      %549 = vmatpush.bf16.msra.mxu0 %v513
      %550 = vmatpush.bf16.msra.mxu0 %v512
      %551 = vmatpush.bf16.msra.mxu0 %v511
      %552 = vmatpush.bf16.msra.mxu0 %v510
      %553 = vmatpush.bf16.msra.mxu0 %v509
      %554 = vmatmul.bf16.gmra.mxu0 %v434
      %v555 = vpop.f32.mrf.mxu0
      %v556 = vadd.f32 %v543, %v555
      %v557 = vpop.f32.mrf.mxu0
      %558 = vdwg.mxu0
      %v559 = vld [vmem:[%s205] sm:$0xee]
      %s560 = scalar_lea.vmem %s209, 256
      %v561 = vld [vmem:[%s560] sm:$0xf]
      %v562 = vld [vmem:[%s560 + $0x4] sm:$0xf]
      %v563 = vld [vmem:[%s560 + $0x8] sm:$0xf]
      %v564 = vld [vmem:[%s560 + $0xc] sm:$0xf]
      %v565 = vld [vmem:[%s560 + $0x10] sm:$0xf]
      %v566 = vld [vmem:[%s560 + $0x14] sm:$0xf]
      %v567 = vld [vmem:[%s560 + $0x18] sm:$0xf]
      %v568 = vld [vmem:[%s560 + $0x1c] sm:$0xf]
      %v569 = vld [vmem:[%s560 + $0x20] sm:$0xf]
      %v570 = vld [vmem:[%s560 + $0x24] sm:$0xf]
      %v571 = vld [vmem:[%s560 + $0x28] sm:$0xf]
      %v572 = vld [vmem:[%s560 + $0x2c] sm:$0xf]
      %v573 = vld [vmem:[%s560 + $0x30] sm:$0xf]
      %v574 = vld [vmem:[%s560 + $0x34] sm:$0xf]
      %v575 = vld [vmem:[%s560 + $0x38] sm:$0xf]
      %v576 = vld [vmem:[%s560 + $0x3c] sm:$0xf]
      %v577 = vld [vmem:[%s560 + $0x40] sm:$0xf]
      %v578 = vld [vmem:[%s560 + $0x44] sm:$0xf]
      %v579 = vld [vmem:[%s560 + $0x48] sm:$0xf]
      %v580 = vld [vmem:[%s560 + $0x4c] sm:$0xf]
      %v581 = vld [vmem:[%s560 + $0x50] sm:$0xf]
      %v582 = vld [vmem:[%s560 + $0x54] sm:$0xf]
      %v583 = vld [vmem:[%s560 + $0x58] sm:$0xf]
      %v584 = vld [vmem:[%s560 + $0x5c] sm:$0xf]
      %v585 = vld [vmem:[%s560 + $0x60] sm:$0xf]
      %v586 = vld [vmem:[%s560 + $0x64] sm:$0xf]
      %v587 = vld [vmem:[%s560 + $0x68] sm:$0xf]
      %v588 = vld [vmem:[%s560 + $0x6c] sm:$0xf]
      %v589 = vld [vmem:[%s560 + $0x70] sm:$0xf]
      %v590 = vld [vmem:[%s560 + $0x74] sm:$0xf]
      %v591 = vld [vmem:[%s560 + $0x78] sm:$0xf]
      %v592 = vld [vmem:[%s560 + $0x7c] sm:$0xf]
      %v594 = vunpack.c.l.b16 %v559
      %v595 = vunpack.c.h.b16 %v559
      %v596 = vpack.c.b16 %v291, %v594
      %v597 = vpack.c.b16 %v292, %v595
      %v598 = vrot.slane %v596, 1
      %v599 = vrot.slane %v597, 1
      %v634 = vunpack.c.l.b16 %v561
      %v635 = vunpack.c.l.b16 %v562
      %v636 = vunpack.c.l.b16 %v563
      %v637 = vunpack.c.l.b16 %v564
      %v638 = vunpack.c.l.b16 %v565
      %v639 = vunpack.c.l.b16 %v566
      %v640 = vunpack.c.l.b16 %v567
      %v641 = vunpack.c.l.b16 %v568
      %v642 = vunpack.c.l.b16 %v569
      %v643 = vunpack.c.l.b16 %v570
      %v644 = vunpack.c.l.b16 %v571
      %v645 = vunpack.c.l.b16 %v572
      %v646 = vunpack.c.l.b16 %v573
      %v647 = vunpack.c.l.b16 %v574
      %v648 = vunpack.c.l.b16 %v575
      %v649 = vunpack.c.l.b16 %v576
      %v650 = vunpack.c.l.b16 %v577
      %v651 = vunpack.c.l.b16 %v578
      %v652 = vunpack.c.l.b16 %v579
      %v653 = vunpack.c.l.b16 %v580
      %v654 = vunpack.c.l.b16 %v581
      %v655 = vunpack.c.l.b16 %v582
      %v656 = vunpack.c.l.b16 %v583
      %v657 = vunpack.c.l.b16 %v584
      %v658 = vunpack.c.l.b16 %v585
      %v659 = vunpack.c.l.b16 %v586
      %v660 = vunpack.c.l.b16 %v587
      %v661 = vunpack.c.l.b16 %v588
      %v662 = vunpack.c.l.b16 %v589
      %v663 = vunpack.c.l.b16 %v590
      %v664 = vunpack.c.l.b16 %v591
      %v665 = vunpack.c.l.b16 %v592
      %v666 = vpack.c.b16 %v635, %v634
      %v667 = vpack.c.b16 %v637, %v636
      %v668 = vpack.c.b16 %v639, %v638
      %v669 = vpack.c.b16 %v641, %v640
      %v670 = vpack.c.b16 %v643, %v642
      %v671 = vpack.c.b16 %v645, %v644
      %v672 = vpack.c.b16 %v647, %v646
      %v673 = vpack.c.b16 %v649, %v648
      %v674 = vpack.c.b16 %v651, %v650
      %v675 = vpack.c.b16 %v653, %v652
      %v676 = vpack.c.b16 %v655, %v654
      %v677 = vpack.c.b16 %v657, %v656
      %v678 = vpack.c.b16 %v659, %v658
      %v679 = vpack.c.b16 %v661, %v660
      %v680 = vpack.c.b16 %v663, %v662
      %v681 = vpack.c.b16 %v665, %v664
      %698 = vmatpush.bf16.msra.mxu0 %v673
      %699 = vmatpush.bf16.msra.mxu0 %v672
      %700 = vmatpush.bf16.msra.mxu0 %v671
      %701 = vmatpush.bf16.msra.mxu0 %v670
      %702 = vmatpush.bf16.msra.mxu0 %v669
      %703 = vmatpush.bf16.msra.mxu0 %v668
      %704 = vmatpush.bf16.msra.mxu0 %v667
      %705 = vmatpush.bf16.msra.mxu0 %v666
      %706 = vmatmul.bf16.gmra.mxu0 %v598
      %v707 = vpop.f32.mrf.mxu0
      %v708 = vadd.f32 0.0, %v707
      %v709 = vpop.f32.mrf.mxu0
      %710 = vdwg.mxu0
      %711 = vmatpush.bf16.msra.mxu0 %v681
      %712 = vmatpush.bf16.msra.mxu0 %v680
      %713 = vmatpush.bf16.msra.mxu0 %v679
      %714 = vmatpush.bf16.msra.mxu0 %v678
      %715 = vmatpush.bf16.msra.mxu0 %v677
      %716 = vmatpush.bf16.msra.mxu0 %v676
      %717 = vmatpush.bf16.msra.mxu0 %v675
      %718 = vmatpush.bf16.msra.mxu0 %v674
      %719 = vmatmul.bf16.gmra.mxu0 %v599
      %v720 = vpop.f32.mrf.mxu0
      %v721 = vadd.f32 %v708, %v720
      %v722 = vpop.f32.mrf.mxu0
      %723 = vdwg.mxu0
      %v724 = vadd.f32 %v556, %v721
      %v725 = vld [vmem:[%s205] sm:$0xcc]
      %v726 = vld [vmem:[%s205 + $0x8] sm:$0x33]
      %s727 = scalar_lea.vmem %s209, 384
      %v728 = vld [vmem:[%s727] sm:$0xf]
      %v729 = vld [vmem:[%s727 + $0x4] sm:$0xf]
      %v730 = vld [vmem:[%s727 + $0x8] sm:$0xf]
      %v731 = vld [vmem:[%s727 + $0xc] sm:$0xf]
      %v732 = vld [vmem:[%s727 + $0x10] sm:$0xf]
      %v733 = vld [vmem:[%s727 + $0x14] sm:$0xf]
      %v734 = vld [vmem:[%s727 + $0x18] sm:$0xf]
      %v735 = vld [vmem:[%s727 + $0x1c] sm:$0xf]
      %v736 = vld [vmem:[%s727 + $0x20] sm:$0xf]
      %v737 = vld [vmem:[%s727 + $0x24] sm:$0xf]
      %v738 = vld [vmem:[%s727 + $0x28] sm:$0xf]
      %v739 = vld [vmem:[%s727 + $0x2c] sm:$0xf]
      %v740 = vld [vmem:[%s727 + $0x30] sm:$0xf]
      %v741 = vld [vmem:[%s727 + $0x34] sm:$0xf]
      %v742 = vld [vmem:[%s727 + $0x38] sm:$0xf]
      %v743 = vld [vmem:[%s727 + $0x3c] sm:$0xf]
      %v744 = vld [vmem:[%s727 + $0x40] sm:$0xf]
      %v745 = vld [vmem:[%s727 + $0x44] sm:$0xf]
      %v746 = vld [vmem:[%s727 + $0x48] sm:$0xf]
      %v747 = vld [vmem:[%s727 + $0x4c] sm:$0xf]
      %v748 = vld [vmem:[%s727 + $0x50] sm:$0xf]
      %v749 = vld [vmem:[%s727 + $0x54] sm:$0xf]
      %v750 = vld [vmem:[%s727 + $0x58] sm:$0xf]
      %v751 = vld [vmem:[%s727 + $0x5c] sm:$0xf]
      %v752 = vld [vmem:[%s727 + $0x60] sm:$0xf]
      %v753 = vld [vmem:[%s727 + $0x64] sm:$0xf]
      %v754 = vld [vmem:[%s727 + $0x68] sm:$0xf]
      %v755 = vld [vmem:[%s727 + $0x6c] sm:$0xf]
      %v756 = vld [vmem:[%s727 + $0x70] sm:$0xf]
      %v757 = vld [vmem:[%s727 + $0x74] sm:$0xf]
      %v758 = vld [vmem:[%s727 + $0x78] sm:$0xf]
      %v759 = vld [vmem:[%s727 + $0x7c] sm:$0xf]
      %v762 = vunpack.c.l.b16 %v725
      %v763 = vunpack.c.h.b16 %v725
      %v764 = vunpack.c.l.b16 %v726
      %v765 = vunpack.c.h.b16 %v726
      %v766 = vpack.c.b16 %v764, %v762
      %v767 = vpack.c.b16 %v765, %v763
      %v768 = vrot.slane %v766, 2
      %v769 = vrot.slane %v767, 2
      %v804 = vunpack.c.l.b16 %v728
      %v805 = vunpack.c.l.b16 %v729
      %v806 = vunpack.c.l.b16 %v730
      %v807 = vunpack.c.l.b16 %v731
      %v808 = vunpack.c.l.b16 %v732
      %v809 = vunpack.c.l.b16 %v733
      %v810 = vunpack.c.l.b16 %v734
      %v811 = vunpack.c.l.b16 %v735
      %v812 = vunpack.c.l.b16 %v736
      %v813 = vunpack.c.l.b16 %v737
      %v814 = vunpack.c.l.b16 %v738
      %v815 = vunpack.c.l.b16 %v739
      %v816 = vunpack.c.l.b16 %v740
      %v817 = vunpack.c.l.b16 %v741
      %v818 = vunpack.c.l.b16 %v742
      %v819 = vunpack.c.l.b16 %v743
      %v820 = vunpack.c.l.b16 %v744
      %v821 = vunpack.c.l.b16 %v745
      %v822 = vunpack.c.l.b16 %v746
      %v823 = vunpack.c.l.b16 %v747
      %v824 = vunpack.c.l.b16 %v748
      %v825 = vunpack.c.l.b16 %v749
      %v826 = vunpack.c.l.b16 %v750
      %v827 = vunpack.c.l.b16 %v751
      %v828 = vunpack.c.l.b16 %v752
      %v829 = vunpack.c.l.b16 %v753
      %v830 = vunpack.c.l.b16 %v754
      %v831 = vunpack.c.l.b16 %v755
      %v832 = vunpack.c.l.b16 %v756
      %v833 = vunpack.c.l.b16 %v757
      %v834 = vunpack.c.l.b16 %v758
      %v835 = vunpack.c.l.b16 %v759
      %v836 = vpack.c.b16 %v805, %v804
      %v837 = vpack.c.b16 %v807, %v806
      %v838 = vpack.c.b16 %v809, %v808
      %v839 = vpack.c.b16 %v811, %v810
      %v840 = vpack.c.b16 %v813, %v812
      %v841 = vpack.c.b16 %v815, %v814
      %v842 = vpack.c.b16 %v817, %v816
      %v843 = vpack.c.b16 %v819, %v818
      %v844 = vpack.c.b16 %v821, %v820
      %v845 = vpack.c.b16 %v823, %v822
      %v846 = vpack.c.b16 %v825, %v824
      %v847 = vpack.c.b16 %v827, %v826
      %v848 = vpack.c.b16 %v829, %v828
      %v849 = vpack.c.b16 %v831, %v830
      %v850 = vpack.c.b16 %v833, %v832
      %v851 = vpack.c.b16 %v835, %v834
      %868 = vmatpush.bf16.msra.mxu0 %v843
      %869 = vmatpush.bf16.msra.mxu0 %v842
      %870 = vmatpush.bf16.msra.mxu0 %v841
      %871 = vmatpush.bf16.msra.mxu0 %v840
      %872 = vmatpush.bf16.msra.mxu0 %v839
      %873 = vmatpush.bf16.msra.mxu0 %v838
      %874 = vmatpush.bf16.msra.mxu0 %v837
      %875 = vmatpush.bf16.msra.mxu0 %v836
      %876 = vmatmul.bf16.gmra.mxu0 %v768
      %v877 = vpop.f32.mrf.mxu0
      %v878 = vadd.f32 0.0, %v877
      %v879 = vpop.f32.mrf.mxu0
      %880 = vdwg.mxu0
      %881 = vmatpush.bf16.msra.mxu0 %v851
      %882 = vmatpush.bf16.msra.mxu0 %v850
      %883 = vmatpush.bf16.msra.mxu0 %v849
      %884 = vmatpush.bf16.msra.mxu0 %v848
      %885 = vmatpush.bf16.msra.mxu0 %v847
      %886 = vmatpush.bf16.msra.mxu0 %v846
      %887 = vmatpush.bf16.msra.mxu0 %v845
      %888 = vmatpush.bf16.msra.mxu0 %v844
      %889 = vmatmul.bf16.gmra.mxu0 %v769
      %v890 = vpop.f32.mrf.mxu0
      %v891 = vadd.f32 %v878, %v890
      %v892 = vpop.f32.mrf.mxu0
      %893 = vdwg.mxu0
      %v894 = vadd.f32 %v724, %v891
      %v895 = vld [vmem:[%s205 + $0x8] sm:$0x77]
      %s896 = scalar_lea.vmem %s209, 512
      %v897 = vld [vmem:[%s896] sm:$0xf]
      %v898 = vld [vmem:[%s896 + $0x4] sm:$0xf]
      %v899 = vld [vmem:[%s896 + $0x8] sm:$0xf]
      %v900 = vld [vmem:[%s896 + $0xc] sm:$0xf]
      %v901 = vld [vmem:[%s896 + $0x10] sm:$0xf]
      %v902 = vld [vmem:[%s896 + $0x14] sm:$0xf]
      %v903 = vld [vmem:[%s896 + $0x18] sm:$0xf]
      %v904 = vld [vmem:[%s896 + $0x1c] sm:$0xf]
      %v905 = vld [vmem:[%s896 + $0x20] sm:$0xf]
      %v906 = vld [vmem:[%s896 + $0x24] sm:$0xf]
      %v907 = vld [vmem:[%s896 + $0x28] sm:$0xf]
      %v908 = vld [vmem:[%s896 + $0x2c] sm:$0xf]
      %v909 = vld [vmem:[%s896 + $0x30] sm:$0xf]
      %v910 = vld [vmem:[%s896 + $0x34] sm:$0xf]
      %v911 = vld [vmem:[%s896 + $0x38] sm:$0xf]
      %v912 = vld [vmem:[%s896 + $0x3c] sm:$0xf]
      %v913 = vld [vmem:[%s896 + $0x40] sm:$0xf]
      %v914 = vld [vmem:[%s896 + $0x44] sm:$0xf]
      %v915 = vld [vmem:[%s896 + $0x48] sm:$0xf]
      %v916 = vld [vmem:[%s896 + $0x4c] sm:$0xf]
      %v917 = vld [vmem:[%s896 + $0x50] sm:$0xf]
      %v918 = vld [vmem:[%s896 + $0x54] sm:$0xf]
      %v919 = vld [vmem:[%s896 + $0x58] sm:$0xf]
      %v920 = vld [vmem:[%s896 + $0x5c] sm:$0xf]
      %v921 = vld [vmem:[%s896 + $0x60] sm:$0xf]
      %v922 = vld [vmem:[%s896 + $0x64] sm:$0xf]
      %v923 = vld [vmem:[%s896 + $0x68] sm:$0xf]
      %v924 = vld [vmem:[%s896 + $0x6c] sm:$0xf]
      %v925 = vld [vmem:[%s896 + $0x70] sm:$0xf]
      %v926 = vld [vmem:[%s896 + $0x74] sm:$0xf]
      %v927 = vld [vmem:[%s896 + $0x78] sm:$0xf]
      %v928 = vld [vmem:[%s896 + $0x7c] sm:$0xf]
      %v930 = vunpack.c.l.b16 %v895
      %v931 = vunpack.c.h.b16 %v895
      %v932 = vpack.c.b16 %v930, %v762
      %v933 = vpack.c.b16 %v931, %v763
      %v935 = vshrl.u32 %v932, 16
      %v937 = vrot.slane %v935, 2
      %v938 = vshll.u32 %v932, 16
      %v940 = vrot.slane %v938, 3
      %v941 = vor.u32 %v937, %v940
      %v943 = vshrl.u32 %v933, 16
      %v945 = vrot.slane %v943, 2
      %v946 = vshll.u32 %v933, 16
      %v948 = vrot.slane %v946, 3
      %v949 = vor.u32 %v945, %v948
      %v984 = vunpack.c.l.b16 %v897
      %v985 = vunpack.c.l.b16 %v898
      %v986 = vunpack.c.l.b16 %v899
      %v987 = vunpack.c.l.b16 %v900
      %v988 = vunpack.c.l.b16 %v901
      %v989 = vunpack.c.l.b16 %v902
      %v990 = vunpack.c.l.b16 %v903
      %v991 = vunpack.c.l.b16 %v904
      %v992 = vunpack.c.l.b16 %v905
      %v993 = vunpack.c.l.b16 %v906
      %v994 = vunpack.c.l.b16 %v907
      %v995 = vunpack.c.l.b16 %v908
      %v996 = vunpack.c.l.b16 %v909
      %v997 = vunpack.c.l.b16 %v910
      %v998 = vunpack.c.l.b16 %v911
      %v999 = vunpack.c.l.b16 %v912
      %v1000 = vunpack.c.l.b16 %v913
      %v1001 = vunpack.c.l.b16 %v914
      %v1002 = vunpack.c.l.b16 %v915
      %v1003 = vunpack.c.l.b16 %v916
      %v1004 = vunpack.c.l.b16 %v917
      %v1005 = vunpack.c.l.b16 %v918
      %v1006 = vunpack.c.l.b16 %v919
      %v1007 = vunpack.c.l.b16 %v920
      %v1008 = vunpack.c.l.b16 %v921
      %v1009 = vunpack.c.l.b16 %v922
      %v1010 = vunpack.c.l.b16 %v923
      %v1011 = vunpack.c.l.b16 %v924
      %v1012 = vunpack.c.l.b16 %v925
      %v1013 = vunpack.c.l.b16 %v926
      %v1014 = vunpack.c.l.b16 %v927
      %v1015 = vunpack.c.l.b16 %v928
      %v1016 = vpack.c.b16 %v985, %v984
      %v1017 = vpack.c.b16 %v987, %v986
      %v1018 = vpack.c.b16 %v989, %v988
      %v1019 = vpack.c.b16 %v991, %v990
      %v1020 = vpack.c.b16 %v993, %v992
      %v1021 = vpack.c.b16 %v995, %v994
      %v1022 = vpack.c.b16 %v997, %v996
      %v1023 = vpack.c.b16 %v999, %v998
      %v1024 = vpack.c.b16 %v1001, %v1000
      %v1025 = vpack.c.b16 %v1003, %v1002
      %v1026 = vpack.c.b16 %v1005, %v1004
      %v1027 = vpack.c.b16 %v1007, %v1006
      %v1028 = vpack.c.b16 %v1009, %v1008
      %v1029 = vpack.c.b16 %v1011, %v1010
      %v1030 = vpack.c.b16 %v1013, %v1012
      %v1031 = vpack.c.b16 %v1015, %v1014
      %1048 = vmatpush.bf16.msra.mxu0 %v1023
      %1049 = vmatpush.bf16.msra.mxu0 %v1022
      %1050 = vmatpush.bf16.msra.mxu0 %v1021
      %1051 = vmatpush.bf16.msra.mxu0 %v1020
      %1052 = vmatpush.bf16.msra.mxu0 %v1019
      %1053 = vmatpush.bf16.msra.mxu0 %v1018
      %1054 = vmatpush.bf16.msra.mxu0 %v1017
      %1055 = vmatpush.bf16.msra.mxu0 %v1016
      %1056 = vmatmul.bf16.gmra.mxu0 %v941
      %v1057 = vpop.f32.mrf.mxu0
      %v1058 = vadd.f32 0.0, %v1057
      %v1059 = vpop.f32.mrf.mxu0
      %1060 = vdwg.mxu0
      %1061 = vmatpush.bf16.msra.mxu0 %v1031
      %1062 = vmatpush.bf16.msra.mxu0 %v1030
      %1063 = vmatpush.bf16.msra.mxu0 %v1029
      %1064 = vmatpush.bf16.msra.mxu0 %v1028
      %1065 = vmatpush.bf16.msra.mxu0 %v1027
      %1066 = vmatpush.bf16.msra.mxu0 %v1026
      %1067 = vmatpush.bf16.msra.mxu0 %v1025
      %1068 = vmatpush.bf16.msra.mxu0 %v1024
      %1069 = vmatmul.bf16.gmra.mxu0 %v949
      %v1070 = vpop.f32.mrf.mxu0
      %v1071 = vadd.f32 %v1058, %v1070
      %v1072 = vpop.f32.mrf.mxu0
      %1073 = vdwg.mxu0
      %v1074 = vadd.f32 %v894, %v1071
      %v1075 = vld [vmem:[%s205] sm:$0x88]
      %s1076 = scalar_lea.vmem %s209, 640
      %v1077 = vld [vmem:[%s1076] sm:$0xf]
      %v1078 = vld [vmem:[%s1076 + $0x4] sm:$0xf]
      %v1079 = vld [vmem:[%s1076 + $0x8] sm:$0xf]
      %v1080 = vld [vmem:[%s1076 + $0xc] sm:$0xf]
      %v1081 = vld [vmem:[%s1076 + $0x10] sm:$0xf]
      %v1082 = vld [vmem:[%s1076 + $0x14] sm:$0xf]
      %v1083 = vld [vmem:[%s1076 + $0x18] sm:$0xf]
      %v1084 = vld [vmem:[%s1076 + $0x1c] sm:$0xf]
      %v1085 = vld [vmem:[%s1076 + $0x20] sm:$0xf]
      %v1086 = vld [vmem:[%s1076 + $0x24] sm:$0xf]
      %v1087 = vld [vmem:[%s1076 + $0x28] sm:$0xf]
      %v1088 = vld [vmem:[%s1076 + $0x2c] sm:$0xf]
      %v1089 = vld [vmem:[%s1076 + $0x30] sm:$0xf]
      %v1090 = vld [vmem:[%s1076 + $0x34] sm:$0xf]
      %v1091 = vld [vmem:[%s1076 + $0x38] sm:$0xf]
      %v1092 = vld [vmem:[%s1076 + $0x3c] sm:$0xf]
      %v1093 = vld [vmem:[%s1076 + $0x40] sm:$0xf]
      %v1094 = vld [vmem:[%s1076 + $0x44] sm:$0xf]
      %v1095 = vld [vmem:[%s1076 + $0x48] sm:$0xf]
      %v1096 = vld [vmem:[%s1076 + $0x4c] sm:$0xf]
      %v1097 = vld [vmem:[%s1076 + $0x50] sm:$0xf]
      %v1098 = vld [vmem:[%s1076 + $0x54] sm:$0xf]
      %v1099 = vld [vmem:[%s1076 + $0x58] sm:$0xf]
      %v1100 = vld [vmem:[%s1076 + $0x5c] sm:$0xf]
      %v1101 = vld [vmem:[%s1076 + $0x60] sm:$0xf]
      %v1102 = vld [vmem:[%s1076 + $0x64] sm:$0xf]
      %v1103 = vld [vmem:[%s1076 + $0x68] sm:$0xf]
      %v1104 = vld [vmem:[%s1076 + $0x6c] sm:$0xf]
      %v1105 = vld [vmem:[%s1076 + $0x70] sm:$0xf]
      %v1106 = vld [vmem:[%s1076 + $0x74] sm:$0xf]
      %v1107 = vld [vmem:[%s1076 + $0x78] sm:$0xf]
      %v1108 = vld [vmem:[%s1076 + $0x7c] sm:$0xf]
      %v1110 = vunpack.c.l.b16 %v1075
      %v1111 = vunpack.c.h.b16 %v1075
      %v1112 = vpack.c.b16 %v930, %v1110
      %v1113 = vpack.c.b16 %v931, %v1111
      %v1114 = vrot.slane %v1112, 3
      %v1115 = vrot.slane %v1113, 3
      %v1150 = vunpack.c.l.b16 %v1077
      %v1151 = vunpack.c.l.b16 %v1078
      %v1152 = vunpack.c.l.b16 %v1079
      %v1153 = vunpack.c.l.b16 %v1080
      %v1154 = vunpack.c.l.b16 %v1081
      %v1155 = vunpack.c.l.b16 %v1082
      %v1156 = vunpack.c.l.b16 %v1083
      %v1157 = vunpack.c.l.b16 %v1084
      %v1158 = vunpack.c.l.b16 %v1085
      %v1159 = vunpack.c.l.b16 %v1086
      %v1160 = vunpack.c.l.b16 %v1087
      %v1161 = vunpack.c.l.b16 %v1088
      %v1162 = vunpack.c.l.b16 %v1089
      %v1163 = vunpack.c.l.b16 %v1090
      %v1164 = vunpack.c.l.b16 %v1091
      %v1165 = vunpack.c.l.b16 %v1092
      %v1166 = vunpack.c.l.b16 %v1093
      %v1167 = vunpack.c.l.b16 %v1094
      %v1168 = vunpack.c.l.b16 %v1095
      %v1169 = vunpack.c.l.b16 %v1096
      %v1170 = vunpack.c.l.b16 %v1097
      %v1171 = vunpack.c.l.b16 %v1098
      %v1172 = vunpack.c.l.b16 %v1099
      %v1173 = vunpack.c.l.b16 %v1100
      %v1174 = vunpack.c.l.b16 %v1101
      %v1175 = vunpack.c.l.b16 %v1102
      %v1176 = vunpack.c.l.b16 %v1103
      %v1177 = vunpack.c.l.b16 %v1104
      %v1178 = vunpack.c.l.b16 %v1105
      %v1179 = vunpack.c.l.b16 %v1106
      %v1180 = vunpack.c.l.b16 %v1107
      %v1181 = vunpack.c.l.b16 %v1108
      %v1182 = vpack.c.b16 %v1151, %v1150
      %v1183 = vpack.c.b16 %v1153, %v1152
      %v1184 = vpack.c.b16 %v1155, %v1154
      %v1185 = vpack.c.b16 %v1157, %v1156
      %v1186 = vpack.c.b16 %v1159, %v1158
      %v1187 = vpack.c.b16 %v1161, %v1160
      %v1188 = vpack.c.b16 %v1163, %v1162
      %v1189 = vpack.c.b16 %v1165, %v1164
      %v1190 = vpack.c.b16 %v1167, %v1166
      %v1191 = vpack.c.b16 %v1169, %v1168
      %v1192 = vpack.c.b16 %v1171, %v1170
      %v1193 = vpack.c.b16 %v1173, %v1172
      %v1194 = vpack.c.b16 %v1175, %v1174
      %v1195 = vpack.c.b16 %v1177, %v1176
      %v1196 = vpack.c.b16 %v1179, %v1178
      %v1197 = vpack.c.b16 %v1181, %v1180
      %1214 = vmatpush.bf16.msra.mxu0 %v1189
      %1215 = vmatpush.bf16.msra.mxu0 %v1188
      %1216 = vmatpush.bf16.msra.mxu0 %v1187
      %1217 = vmatpush.bf16.msra.mxu0 %v1186
      %1218 = vmatpush.bf16.msra.mxu0 %v1185
      %1219 = vmatpush.bf16.msra.mxu0 %v1184
      %1220 = vmatpush.bf16.msra.mxu0 %v1183
      %1221 = vmatpush.bf16.msra.mxu0 %v1182
      %1222 = vmatmul.bf16.gmra.mxu0 %v1114
      %v1223 = vpop.f32.mrf.mxu0
      %v1224 = vadd.f32 0.0, %v1223
      %v1225 = vpop.f32.mrf.mxu0
      %1226 = vdwg.mxu0
      %1227 = vmatpush.bf16.msra.mxu0 %v1197
      %1228 = vmatpush.bf16.msra.mxu0 %v1196
      %1229 = vmatpush.bf16.msra.mxu0 %v1195
      %1230 = vmatpush.bf16.msra.mxu0 %v1194
      %1231 = vmatpush.bf16.msra.mxu0 %v1193
      %1232 = vmatpush.bf16.msra.mxu0 %v1192
      %1233 = vmatpush.bf16.msra.mxu0 %v1191
      %1234 = vmatpush.bf16.msra.mxu0 %v1190
      %1235 = vmatmul.bf16.gmra.mxu0 %v1115
      %v1236 = vpop.f32.mrf.mxu0
      %v1237 = vadd.f32 %v1224, %v1236
      %v1238 = vpop.f32.mrf.mxu0
      %1239 = vdwg.mxu0
      %v1240 = vadd.f32 %v1074, %v1237
      %v1241 = vld [vmem:[%s205 + $0x8] sm:$0xff]
      %s1242 = scalar_lea.vmem %s209, 768
      %v1243 = vld [vmem:[%s1242] sm:$0xf]
      %v1244 = vld [vmem:[%s1242 + $0x4] sm:$0xf]
      %v1245 = vld [vmem:[%s1242 + $0x8] sm:$0xf]
      %v1246 = vld [vmem:[%s1242 + $0xc] sm:$0xf]
      %v1247 = vld [vmem:[%s1242 + $0x10] sm:$0xf]
      %v1248 = vld [vmem:[%s1242 + $0x14] sm:$0xf]
      %v1249 = vld [vmem:[%s1242 + $0x18] sm:$0xf]
      %v1250 = vld [vmem:[%s1242 + $0x1c] sm:$0xf]
      %v1251 = vld [vmem:[%s1242 + $0x20] sm:$0xf]
      %v1252 = vld [vmem:[%s1242 + $0x24] sm:$0xf]
      %v1253 = vld [vmem:[%s1242 + $0x28] sm:$0xf]
      %v1254 = vld [vmem:[%s1242 + $0x2c] sm:$0xf]
      %v1255 = vld [vmem:[%s1242 + $0x30] sm:$0xf]
      %v1256 = vld [vmem:[%s1242 + $0x34] sm:$0xf]
      %v1257 = vld [vmem:[%s1242 + $0x38] sm:$0xf]
      %v1258 = vld [vmem:[%s1242 + $0x3c] sm:$0xf]
      %v1259 = vld [vmem:[%s1242 + $0x40] sm:$0xf]
      %v1260 = vld [vmem:[%s1242 + $0x44] sm:$0xf]
      %v1261 = vld [vmem:[%s1242 + $0x48] sm:$0xf]
      %v1262 = vld [vmem:[%s1242 + $0x4c] sm:$0xf]
      %v1263 = vld [vmem:[%s1242 + $0x50] sm:$0xf]
      %v1264 = vld [vmem:[%s1242 + $0x54] sm:$0xf]
      %v1265 = vld [vmem:[%s1242 + $0x58] sm:$0xf]
      %v1266 = vld [vmem:[%s1242 + $0x5c] sm:$0xf]
      %v1267 = vld [vmem:[%s1242 + $0x60] sm:$0xf]
      %v1268 = vld [vmem:[%s1242 + $0x64] sm:$0xf]
      %v1269 = vld [vmem:[%s1242 + $0x68] sm:$0xf]
      %v1270 = vld [vmem:[%s1242 + $0x6c] sm:$0xf]
      %v1271 = vld [vmem:[%s1242 + $0x70] sm:$0xf]
      %v1272 = vld [vmem:[%s1242 + $0x74] sm:$0xf]
      %v1273 = vld [vmem:[%s1242 + $0x78] sm:$0xf]
      %v1274 = vld [vmem:[%s1242 + $0x7c] sm:$0xf]
      %v1276 = vunpack.c.l.b16 %v1241
      %v1277 = vunpack.c.h.b16 %v1241
      %v1278 = vpack.c.b16 %v1276, %v1276
      %v1279 = vpack.c.b16 %v1277, %v1277
      %v1314 = vunpack.c.l.b16 %v1243
      %v1315 = vunpack.c.l.b16 %v1244
      %v1316 = vunpack.c.l.b16 %v1245
      %v1317 = vunpack.c.l.b16 %v1246
      %v1318 = vunpack.c.l.b16 %v1247
      %v1319 = vunpack.c.l.b16 %v1248
      %v1320 = vunpack.c.l.b16 %v1249
      %v1321 = vunpack.c.l.b16 %v1250
      %v1322 = vunpack.c.l.b16 %v1251
      %v1323 = vunpack.c.l.b16 %v1252
      %v1324 = vunpack.c.l.b16 %v1253
      %v1325 = vunpack.c.l.b16 %v1254
      %v1326 = vunpack.c.l.b16 %v1255
      %v1327 = vunpack.c.l.b16 %v1256
      %v1328 = vunpack.c.l.b16 %v1257
      %v1329 = vunpack.c.l.b16 %v1258
      %v1330 = vunpack.c.l.b16 %v1259
      %v1331 = vunpack.c.l.b16 %v1260
      %v1332 = vunpack.c.l.b16 %v1261
      %v1333 = vunpack.c.l.b16 %v1262
      %v1334 = vunpack.c.l.b16 %v1263
      %v1335 = vunpack.c.l.b16 %v1264
      %v1336 = vunpack.c.l.b16 %v1265
      %v1337 = vunpack.c.l.b16 %v1266
      %v1338 = vunpack.c.l.b16 %v1267
      %v1339 = vunpack.c.l.b16 %v1268
      %v1340 = vunpack.c.l.b16 %v1269
      %v1341 = vunpack.c.l.b16 %v1270
      %v1342 = vunpack.c.l.b16 %v1271
      %v1343 = vunpack.c.l.b16 %v1272
      %v1344 = vunpack.c.l.b16 %v1273
      %v1345 = vunpack.c.l.b16 %v1274
      %v1346 = vpack.c.b16 %v1315, %v1314
      %v1347 = vpack.c.b16 %v1317, %v1316
      %v1348 = vpack.c.b16 %v1319, %v1318
      %v1349 = vpack.c.b16 %v1321, %v1320
      %v1350 = vpack.c.b16 %v1323, %v1322
      %v1351 = vpack.c.b16 %v1325, %v1324
      %v1352 = vpack.c.b16 %v1327, %v1326
      %v1353 = vpack.c.b16 %v1329, %v1328
      %v1354 = vpack.c.b16 %v1331, %v1330
      %v1355 = vpack.c.b16 %v1333, %v1332
      %v1356 = vpack.c.b16 %v1335, %v1334
      %v1357 = vpack.c.b16 %v1337, %v1336
      %v1358 = vpack.c.b16 %v1339, %v1338
      %v1359 = vpack.c.b16 %v1341, %v1340
      %v1360 = vpack.c.b16 %v1343, %v1342
      %v1361 = vpack.c.b16 %v1345, %v1344
      %1378 = vmatpush.bf16.msra.mxu0 %v1353
      %1379 = vmatpush.bf16.msra.mxu0 %v1352
      %1380 = vmatpush.bf16.msra.mxu0 %v1351
      %1381 = vmatpush.bf16.msra.mxu0 %v1350
      %1382 = vmatpush.bf16.msra.mxu0 %v1349
      %1383 = vmatpush.bf16.msra.mxu0 %v1348
      %1384 = vmatpush.bf16.msra.mxu0 %v1347
      %1385 = vmatpush.bf16.msra.mxu0 %v1346
      %1386 = vmatmul.bf16.gmra.mxu0 %v1278
      %v1387 = vpop.f32.mrf.mxu0
      %v1388 = vadd.f32 0.0, %v1387
      %v1389 = vpop.f32.mrf.mxu0
      %1390 = vdwg.mxu0
      %1391 = vmatpush.bf16.msra.mxu0 %v1361
      %1392 = vmatpush.bf16.msra.mxu0 %v1360
      %1393 = vmatpush.bf16.msra.mxu0 %v1359
      %1394 = vmatpush.bf16.msra.mxu0 %v1358
      %1395 = vmatpush.bf16.msra.mxu0 %v1357
      %1396 = vmatpush.bf16.msra.mxu0 %v1356
      %1397 = vmatpush.bf16.msra.mxu0 %v1355
      %1398 = vmatpush.bf16.msra.mxu0 %v1354
      %1399 = vmatmul.bf16.gmra.mxu0 %v1279
      %v1400 = vpop.f32.mrf.mxu0
      %v1401 = vadd.f32 %v1388, %v1400
      %v1402 = vpop.f32.mrf.mxu0
      %1403 = vdwg.mxu0
      %v1404 = vadd.f32 %v1240, %v1401
      %v1405 = vld [vmem:[%s205 + $0x8] sm:$0xff]
      %v1406 = vld [vmem:[%s205 + $0x10] sm:$0x11]
      %s1407 = scalar_lea.vmem %s209, 896
      %v1408 = vld [vmem:[%s1407] sm:$0xf]
      %v1409 = vld [vmem:[%s1407 + $0x4] sm:$0xf]
      %v1410 = vld [vmem:[%s1407 + $0x8] sm:$0xf]
      %v1411 = vld [vmem:[%s1407 + $0xc] sm:$0xf]
      %v1412 = vld [vmem:[%s1407 + $0x10] sm:$0xf]
      %v1413 = vld [vmem:[%s1407 + $0x14] sm:$0xf]
      %v1414 = vld [vmem:[%s1407 + $0x18] sm:$0xf]
      %v1415 = vld [vmem:[%s1407 + $0x1c] sm:$0xf]
      %v1416 = vld [vmem:[%s1407 + $0x20] sm:$0xf]
      %v1417 = vld [vmem:[%s1407 + $0x24] sm:$0xf]
      %v1418 = vld [vmem:[%s1407 + $0x28] sm:$0xf]
      %v1419 = vld [vmem:[%s1407 + $0x2c] sm:$0xf]
      %v1420 = vld [vmem:[%s1407 + $0x30] sm:$0xf]
      %v1421 = vld [vmem:[%s1407 + $0x34] sm:$0xf]
      %v1422 = vld [vmem:[%s1407 + $0x38] sm:$0xf]
      %v1423 = vld [vmem:[%s1407 + $0x3c] sm:$0xf]
      %v1424 = vld [vmem:[%s1407 + $0x40] sm:$0xf]
      %v1425 = vld [vmem:[%s1407 + $0x44] sm:$0xf]
      %v1426 = vld [vmem:[%s1407 + $0x48] sm:$0xf]
      %v1427 = vld [vmem:[%s1407 + $0x4c] sm:$0xf]
      %v1428 = vld [vmem:[%s1407 + $0x50] sm:$0xf]
      %v1429 = vld [vmem:[%s1407 + $0x54] sm:$0xf]
      %v1430 = vld [vmem:[%s1407 + $0x58] sm:$0xf]
      %v1431 = vld [vmem:[%s1407 + $0x5c] sm:$0xf]
      %v1432 = vld [vmem:[%s1407 + $0x60] sm:$0xf]
      %v1433 = vld [vmem:[%s1407 + $0x64] sm:$0xf]
      %v1434 = vld [vmem:[%s1407 + $0x68] sm:$0xf]
      %v1435 = vld [vmem:[%s1407 + $0x6c] sm:$0xf]
      %v1436 = vld [vmem:[%s1407 + $0x70] sm:$0xf]
      %v1437 = vld [vmem:[%s1407 + $0x74] sm:$0xf]
      %v1438 = vld [vmem:[%s1407 + $0x78] sm:$0xf]
      %v1439 = vld [vmem:[%s1407 + $0x7c] sm:$0xf]
      %v1442 = vunpack.c.l.b16 %v1405
      %v1443 = vunpack.c.h.b16 %v1405
      %v1444 = vunpack.c.l.b16 %v1406
      %v1445 = vunpack.c.h.b16 %v1406
      %v1446 = vpack.c.b16 %v1444, %v1442
      %v1447 = vpack.c.b16 %v1445, %v1443
      %v1449 = vshrl.u32 %v1446, 16
      %v1451 = vshll.u32 %v1446, 16
      %v1453 = vrot.slane %v1451, 1
      %v1454 = vor.u32 %v1449, %v1453
      %v1456 = vshrl.u32 %v1447, 16
      %v1458 = vshll.u32 %v1447, 16
      %v1460 = vrot.slane %v1458, 1
      %v1461 = vor.u32 %v1456, %v1460
      %v1496 = vunpack.c.l.b16 %v1408
      %v1497 = vunpack.c.l.b16 %v1409
      %v1498 = vunpack.c.l.b16 %v1410
      %v1499 = vunpack.c.l.b16 %v1411
      %v1500 = vunpack.c.l.b16 %v1412
      %v1501 = vunpack.c.l.b16 %v1413
      %v1502 = vunpack.c.l.b16 %v1414
      %v1503 = vunpack.c.l.b16 %v1415
      %v1504 = vunpack.c.l.b16 %v1416
      %v1505 = vunpack.c.l.b16 %v1417
      %v1506 = vunpack.c.l.b16 %v1418
      %v1507 = vunpack.c.l.b16 %v1419
      %v1508 = vunpack.c.l.b16 %v1420
      %v1509 = vunpack.c.l.b16 %v1421
      %v1510 = vunpack.c.l.b16 %v1422
      %v1511 = vunpack.c.l.b16 %v1423
      %v1512 = vunpack.c.l.b16 %v1424
      %v1513 = vunpack.c.l.b16 %v1425
      %v1514 = vunpack.c.l.b16 %v1426
      %v1515 = vunpack.c.l.b16 %v1427
      %v1516 = vunpack.c.l.b16 %v1428
      %v1517 = vunpack.c.l.b16 %v1429
      %v1518 = vunpack.c.l.b16 %v1430
      %v1519 = vunpack.c.l.b16 %v1431
      %v1520 = vunpack.c.l.b16 %v1432
      %v1521 = vunpack.c.l.b16 %v1433
      %v1522 = vunpack.c.l.b16 %v1434
      %v1523 = vunpack.c.l.b16 %v1435
      %v1524 = vunpack.c.l.b16 %v1436
      %v1525 = vunpack.c.l.b16 %v1437
      %v1526 = vunpack.c.l.b16 %v1438
      %v1527 = vunpack.c.l.b16 %v1439
      %v1528 = vpack.c.b16 %v1497, %v1496
      %v1529 = vpack.c.b16 %v1499, %v1498
      %v1530 = vpack.c.b16 %v1501, %v1500
      %v1531 = vpack.c.b16 %v1503, %v1502
      %v1532 = vpack.c.b16 %v1505, %v1504
      %v1533 = vpack.c.b16 %v1507, %v1506
      %v1534 = vpack.c.b16 %v1509, %v1508
      %v1535 = vpack.c.b16 %v1511, %v1510
      %v1536 = vpack.c.b16 %v1513, %v1512
      %v1537 = vpack.c.b16 %v1515, %v1514
      %v1538 = vpack.c.b16 %v1517, %v1516
      %v1539 = vpack.c.b16 %v1519, %v1518
      %v1540 = vpack.c.b16 %v1521, %v1520
      %v1541 = vpack.c.b16 %v1523, %v1522
      %v1542 = vpack.c.b16 %v1525, %v1524
      %v1543 = vpack.c.b16 %v1527, %v1526
      %1560 = vmatpush.bf16.msra.mxu0 %v1535
      %1561 = vmatpush.bf16.msra.mxu0 %v1534
      %1562 = vmatpush.bf16.msra.mxu0 %v1533
      %1563 = vmatpush.bf16.msra.mxu0 %v1532
      %1564 = vmatpush.bf16.msra.mxu0 %v1531
      %1565 = vmatpush.bf16.msra.mxu0 %v1530
      %1566 = vmatpush.bf16.msra.mxu0 %v1529
      %1567 = vmatpush.bf16.msra.mxu0 %v1528
      %1568 = vmatmul.bf16.gmra.mxu0 %v1454
      %v1569 = vpop.f32.mrf.mxu0
      %v1570 = vadd.f32 0.0, %v1569
      %v1571 = vpop.f32.mrf.mxu0
      %1572 = vdwg.mxu0
      %1573 = vmatpush.bf16.msra.mxu0 %v1543
      %1574 = vmatpush.bf16.msra.mxu0 %v1542
      %1575 = vmatpush.bf16.msra.mxu0 %v1541
      %1576 = vmatpush.bf16.msra.mxu0 %v1540
      %1577 = vmatpush.bf16.msra.mxu0 %v1539
      %1578 = vmatpush.bf16.msra.mxu0 %v1538
      %1579 = vmatpush.bf16.msra.mxu0 %v1537
      %1580 = vmatpush.bf16.msra.mxu0 %v1536
      %1581 = vmatmul.bf16.gmra.mxu0 %v1461
      %v1582 = vpop.f32.mrf.mxu0
      %v1583 = vadd.f32 %v1570, %v1582
      %v1584 = vpop.f32.mrf.mxu0
      %1585 = vdwg.mxu0
      %v1586 = vadd.f32 %v1404, %v1583
      %v1587 = vld [vmem:[%s205 + $0x8] sm:$0xee]
      %s1588 = scalar_lea.vmem %s209, 1024
      %v1589 = vld [vmem:[%s1588] sm:$0xf]
      %v1590 = vld [vmem:[%s1588 + $0x4] sm:$0xf]
      %v1591 = vld [vmem:[%s1588 + $0x8] sm:$0xf]
      %v1592 = vld [vmem:[%s1588 + $0xc] sm:$0xf]
      %v1593 = vld [vmem:[%s1588 + $0x10] sm:$0xf]
      %v1594 = vld [vmem:[%s1588 + $0x14] sm:$0xf]
      %v1595 = vld [vmem:[%s1588 + $0x18] sm:$0xf]
      %v1596 = vld [vmem:[%s1588 + $0x1c] sm:$0xf]
      %v1597 = vld [vmem:[%s1588 + $0x20] sm:$0xf]
      %v1598 = vld [vmem:[%s1588 + $0x24] sm:$0xf]
      %v1599 = vld [vmem:[%s1588 + $0x28] sm:$0xf]
      %v1600 = vld [vmem:[%s1588 + $0x2c] sm:$0xf]
      %v1601 = vld [vmem:[%s1588 + $0x30] sm:$0xf]
      %v1602 = vld [vmem:[%s1588 + $0x34] sm:$0xf]
      %v1603 = vld [vmem:[%s1588 + $0x38] sm:$0xf]
      %v1604 = vld [vmem:[%s1588 + $0x3c] sm:$0xf]
      %v1605 = vld [vmem:[%s1588 + $0x40] sm:$0xf]
      %v1606 = vld [vmem:[%s1588 + $0x44] sm:$0xf]
      %v1607 = vld [vmem:[%s1588 + $0x48] sm:$0xf]
      %v1608 = vld [vmem:[%s1588 + $0x4c] sm:$0xf]
      %v1609 = vld [vmem:[%s1588 + $0x50] sm:$0xf]
      %v1610 = vld [vmem:[%s1588 + $0x54] sm:$0xf]
      %v1611 = vld [vmem:[%s1588 + $0x58] sm:$0xf]
      %v1612 = vld [vmem:[%s1588 + $0x5c] sm:$0xf]
      %v1613 = vld [vmem:[%s1588 + $0x60] sm:$0xf]
      %v1614 = vld [vmem:[%s1588 + $0x64] sm:$0xf]
      %v1615 = vld [vmem:[%s1588 + $0x68] sm:$0xf]
      %v1616 = vld [vmem:[%s1588 + $0x6c] sm:$0xf]
      %v1617 = vld [vmem:[%s1588 + $0x70] sm:$0xf]
      %v1618 = vld [vmem:[%s1588 + $0x74] sm:$0xf]
      %v1619 = vld [vmem:[%s1588 + $0x78] sm:$0xf]
      %v1620 = vld [vmem:[%s1588 + $0x7c] sm:$0xf]
      %v1622 = vunpack.c.l.b16 %v1587
      %v1623 = vunpack.c.h.b16 %v1587
      %v1624 = vpack.c.b16 %v1444, %v1622
      %v1625 = vpack.c.b16 %v1445, %v1623
      %v1626 = vrot.slane %v1624, 1
      %v1627 = vrot.slane %v1625, 1
      %v1662 = vunpack.c.l.b16 %v1589
      %v1663 = vunpack.c.l.b16 %v1590
      %v1664 = vunpack.c.l.b16 %v1591
      %v1665 = vunpack.c.l.b16 %v1592
      %v1666 = vunpack.c.l.b16 %v1593
      %v1667 = vunpack.c.l.b16 %v1594
      %v1668 = vunpack.c.l.b16 %v1595
      %v1669 = vunpack.c.l.b16 %v1596
      %v1670 = vunpack.c.l.b16 %v1597
      %v1671 = vunpack.c.l.b16 %v1598
      %v1672 = vunpack.c.l.b16 %v1599
      %v1673 = vunpack.c.l.b16 %v1600
      %v1674 = vunpack.c.l.b16 %v1601
      %v1675 = vunpack.c.l.b16 %v1602
      %v1676 = vunpack.c.l.b16 %v1603
      %v1677 = vunpack.c.l.b16 %v1604
      %v1678 = vunpack.c.l.b16 %v1605
      %v1679 = vunpack.c.l.b16 %v1606
      %v1680 = vunpack.c.l.b16 %v1607
      %v1681 = vunpack.c.l.b16 %v1608
      %v1682 = vunpack.c.l.b16 %v1609
      %v1683 = vunpack.c.l.b16 %v1610
      %v1684 = vunpack.c.l.b16 %v1611
      %v1685 = vunpack.c.l.b16 %v1612
      %v1686 = vunpack.c.l.b16 %v1613
      %v1687 = vunpack.c.l.b16 %v1614
      %v1688 = vunpack.c.l.b16 %v1615
      %v1689 = vunpack.c.l.b16 %v1616
      %v1690 = vunpack.c.l.b16 %v1617
      %v1691 = vunpack.c.l.b16 %v1618
      %v1692 = vunpack.c.l.b16 %v1619
      %v1693 = vunpack.c.l.b16 %v1620
      %v1694 = vpack.c.b16 %v1663, %v1662
      %v1695 = vpack.c.b16 %v1665, %v1664
      %v1696 = vpack.c.b16 %v1667, %v1666
      %v1697 = vpack.c.b16 %v1669, %v1668
      %v1698 = vpack.c.b16 %v1671, %v1670
      %v1699 = vpack.c.b16 %v1673, %v1672
      %v1700 = vpack.c.b16 %v1675, %v1674
      %v1701 = vpack.c.b16 %v1677, %v1676
      %v1702 = vpack.c.b16 %v1679, %v1678
      %v1703 = vpack.c.b16 %v1681, %v1680
      %v1704 = vpack.c.b16 %v1683, %v1682
      %v1705 = vpack.c.b16 %v1685, %v1684
      %v1706 = vpack.c.b16 %v1687, %v1686
      %v1707 = vpack.c.b16 %v1689, %v1688
      %v1708 = vpack.c.b16 %v1691, %v1690
      %v1709 = vpack.c.b16 %v1693, %v1692
      %1726 = vmatpush.bf16.msra.mxu0 %v1701
      %1727 = vmatpush.bf16.msra.mxu0 %v1700
      %1728 = vmatpush.bf16.msra.mxu0 %v1699
      %1729 = vmatpush.bf16.msra.mxu0 %v1698
      %1730 = vmatpush.bf16.msra.mxu0 %v1697
      %1731 = vmatpush.bf16.msra.mxu0 %v1696
      %1732 = vmatpush.bf16.msra.mxu0 %v1695
      %1733 = vmatpush.bf16.msra.mxu0 %v1694
      %1734 = vmatmul.bf16.gmra.mxu0 %v1626
      %v1735 = vpop.f32.mrf.mxu0
      %v1736 = vadd.f32 0.0, %v1735
      %v1737 = vpop.f32.mrf.mxu0
      %1738 = vdwg.mxu0
      %1739 = vmatpush.bf16.msra.mxu0 %v1709
      %1740 = vmatpush.bf16.msra.mxu0 %v1708
      %1741 = vmatpush.bf16.msra.mxu0 %v1707
      %1742 = vmatpush.bf16.msra.mxu0 %v1706
      %1743 = vmatpush.bf16.msra.mxu0 %v1705
      %1744 = vmatpush.bf16.msra.mxu0 %v1704
      %1745 = vmatpush.bf16.msra.mxu0 %v1703
      %1746 = vmatpush.bf16.msra.mxu0 %v1702
      %1747 = vmatmul.bf16.gmra.mxu0 %v1627
      %v1748 = vpop.f32.mrf.mxu0
      %v1749 = vadd.f32 %v1736, %v1748
      %v1750 = vpop.f32.mrf.mxu0
      %1751 = vdwg.mxu0
      %v1752 = vadd.f32 %v1586, %v1749
      %v1753 = vld [vmem:[%s212] sm:$0x1]
      %v1755 = vperm.slane %v1753, 0
      %v1757 = vadd.f32 %v1752, %v1755
      %1758 = vst [vmem:[%s219] sm:$0xff] %v1757
      %p1759 = scmp.lt.s32.totalorder %s19, 1
      %s1760 = scalar_select %p1759, %s19, 1
      %p1761 = scmp.lt.s32.totalorder %s18, 0
      %s1762 = scalar_select %p1761, %s18, 0
      %s1763 = sadd.s32 %s1762, %s1760
      %s1764 = smul.addr %s1763, 8
      %s1765 = scalar_lea.vmem %s3, %s1764
      // Predicated region
      $region33: #{discriminator_forward.8} parent=31 // pred_check
        %p1766 = pneg %p124
      $region34: #{discriminator_forward.8} parent=31 // pred_check_branch
        %1768 = sbr.rel (%p1766) target = $region36
      $region35: #{discriminator_forward.8} parent=31 // pred_region
        _
      $region36: #{discriminator_forward.8} parent=31 // pred_fallthru
        _
    $region32: #{discriminator_forward.8} parent=5 // pred_fallthru
      _
    %p1769 = scmp.le.s32.totalorder 2, %s9
    // Predicated region
    $region37: #{discriminator_forward.8} parent=5 // pred_check
      %p1770 = pneg %p1769
    $region38: #{discriminator_forward.8} parent=5 // pred_check_branch
      %1772 = sbr.rel (%p1770) target = $region40
    $region39: #{discriminator_forward.8} parent=5 // pred_region
      %s1773 = ssub.s32 %s9, 2
      // Predicated region
      $region41: #{discriminator_forward.8} parent=39 // pred_check
        %p1774 = pneg %p130
      $region42: #{discriminator_forward.8} parent=39 // pred_check_branch
        %1776 = sbr.rel (%p1774) target = $region44
      $region43: #{discriminator_forward.8} parent=39 // pred_region
        %p1777 = scmp.lt.s32.totalorder %s21, 1
        %s1778 = scalar_select %p1777, %s21, 1
        %p1779 = scmp.lt.s32.totalorder %s20, 0
        %s1780 = scalar_select %p1779, %s20, 0
        %s1781 = sadd.s32 %s1780, %s1778
        %s1782 = smul.addr %s1781, 8
        %s1783 = scalar_lea.vmem %s3, %s1782
      $region44: #{discriminator_forward.8} parent=39 // pred_fallthru
        _
    $region40: #{discriminator_forward.8} parent=5 // pred_fallthru
      _
  $region6: #{discriminator_forward.8} parent=0 // loop_footer
    %s13 = sadd.s32 1, %s9
  $region7: #{discriminator_forward.8} parent=0 // loop_footer_branch
    %8 = sbr.rel target = $region3
  $region8: #{discriminator_forward.8} parent=0 // loop_exit
    _

</llo_original>
